<compile_context>
chip_gen: v5e
topology: v5e:2x2
jax: 0.10.0
libtpu: 0.0.40
codegen_flags: <defaults>
</compile_context>

<pallas_src>
import functools

import jax
import jax.numpy as jnp
import numpy as np
from jax.experimental import pallas as pl
from jax.experimental.pallas import tpu as pltpu

POOL_DIM = 2048     # pool_dim in the module (ResNet50 output channels)
LOW_DIM = 128       # low_dim
CLASS_NUM = 16      # class_num
NPART = 4           # npart (the forward hard-codes 4 parts)
BN_EPS = 1e-5       # nn.BatchNorm1d default eps


# --------------------------- fused head kernel (single grid step) ---------------------------
def _fused_head_kernel(x1_ref, x2_ref, wf_ref, bf_ref, wfc_ref, bc_ref,
                       xn_ref, yn_ref, logit_ref, xpad_ref,
                       *, npart, sx_rows, kx_rows, n_cls, row_blk):
    """
    x1_ref/x2_ref : (B, H*W, C)        bf16  backbone features per modality (NHWC flattened)
    wf_ref        : (C, npart*low)     bf16  BN-folded FeatureBlock weights, concat over parts
    bf_ref        : (1, npart*low)     f32   BN-folded biases
    wfc_ref       : (C, npart*cls)     bf16  classifier folded into FeatureBlock (W_bnf @ Wc)
    bc_ref        : (1, npart*cls)     f32   b_bnf @ Wc
    xn_ref        : (N, npart*C)       f32   cat(l2norm(x_p), dim=1)          (eval return x)
    yn_ref        : (N, npart*low)     f32   l2norm(cat(y_p, dim=1))          (eval return y)
    logit_ref     : (N, >=128)         f32   cat(out_p, dim=1), zero-padded to lane-dense width
    xpad_ref      : (npart*row_blk, C) bf16  8-row-aligned scratch for the fused MXU calls
    """
    B = x1_ref.shape[0]
    N = 2 * B
    C = x1_ref.shape[2]
    low = wf_ref.shape[1] // npart
    inv_cnt = 1.0 / float(kx_rows)

    # deterministic pad rows for the aligned scratch (results in pad rows are discarded)
    xpad_ref[...] = jnp.zeros_like(xpad_ref)

    # ---- per-part streaming: partial avg pool -> l2norm -> xn, stash pooled in aligned scratch ----
    for p in range(npart):
        a = p * sx_rows
        for m, xr in enumerate((x1_ref, x2_ref)):           # modality m occupies rows [m*B,(m+1)*B)
            part = xr[:, a:a + kx_rows, :].astype(jnp.float32)          # (B, kx_rows, C) f32
            pooled = jnp.sum(part, axis=1) * inv_cnt                    # (B, C) f32
            inv_nrm = jax.lax.rsqrt(jnp.sum(pooled * pooled, axis=1, keepdims=True))
            xn_ref[m * B:(m + 1) * B, p * C:(p + 1) * C] = pooled * inv_nrm
            r0 = p * row_blk + m * B
            xpad_ref[r0:r0 + B, :] = pooled.astype(jnp.bfloat16)

    x_all = xpad_ref[...]                                               # (npart*row_blk, C) bf16

    # ---- FeatureBlock (Linear + folded eval BN): one MXU call for all parts ----
    z_y = jnp.dot(x_all, wf_ref[...], preferred_element_type=jnp.float32)   # (npart*row_blk, npart*low)
    # ---- classifiers (folded into FeatureBlock weights): independent MXU call ----
    z_c = jnp.dot(x_all, wfc_ref[...], preferred_element_type=jnp.float32)  # (npart*row_blk, npart*cls)

    # diagonal (row-block, col-block) selection; rows 8-aligned, y columns 128-aligned
    y_full = jnp.concatenate(
        [z_y[p * row_blk:p * row_blk + N, p * low:(p + 1) * low] for p in range(npart)],
        axis=1) + bf_ref[...]                                           # (N, npart*low) f32
    yn_ref[...] = y_full * jax.lax.rsqrt(jnp.sum(y_full * y_full, axis=1, keepdims=True))

    logits = jnp.concatenate(
        [z_c[p * row_blk:p * row_blk + N, p * n_cls:(p + 1) * n_cls] for p in range(npart)],
        axis=1) + bc_ref[...]                                           # (N, npart*cls) f32
    pad_cols = logit_ref.shape[1] - npart * n_cls
    if pad_cols:
        logits = jnp.concatenate([logits, jnp.zeros((N, pad_cols), jnp.float32)], axis=1)
    logit_ref[...] = logits


# --------------------------- one-time parameter preparation ---------------------------
def prepare_params(params, eps=BN_EPS):
    """Fold eval BN into each Linear, concat per-part weights along the output dim, fold the
    per-part classifier into the (BN-folded) Linear, cast matmul weights to bf16."""
    npart, C, low = params["w"].shape
    scale = params["gamma"] * jax.lax.rsqrt(params["var"] + eps)        # (npart, 1, low)
    w_f = params["w"] * scale                                           # (npart, C, low)
    b_f = (params["b"] - params["mean"]) * scale + params["beta"]       # (npart, 1, low)
    wf_cat = jnp.transpose(w_f, (1, 0, 2)).reshape(C, npart * low).astype(jnp.bfloat16)
    bf_cat = b_f.reshape(1, npart * low).astype(jnp.float32)
    # classifier fold: out_p = (x_p @ w_f_p + b_f_p) @ wc_p = x_p @ (w_f_p @ wc_p) + b_f_p @ wc_p
    wfc = jnp.concatenate([w_f[p] @ params["wc"][p] for p in range(npart)], axis=1)   # (C, npart*cls)
    bc = jnp.concatenate([b_f[p] @ params["wc"][p] for p in range(npart)], axis=1)    # (1, npart*cls)
    return dict(wf=wf_cat, bf=bf_cat,
                wfc=wfc.astype(jnp.bfloat16), bc=bc.astype(jnp.float32))


# --------------------------- forward glue (eval path, modal=0) ---------------------------
def embed_net_graph_forward(x1_feat, x2_feat, prep, npart=NPART):
    """x1_feat / x2_feat: backbone output feature maps per modality, NHWC (B, H, W, C),
    ideally already bf16 (the bf16 cast / NHWC layout belong to the backbone boundary)."""
    B, H, W, C = x1_feat.shape
    assert x2_feat.shape == x1_feat.shape
    assert H >= npart, "partial pooling requires H >= npart"
    N = 2 * B
    sx = H // npart
    kx = H - sx * (npart - 1)

    # free view for contiguous NHWC (merge adjacent dims); no transpose, no concat, no HBM pass
    x1 = x1_feat.reshape(B, H * W, C).astype(jnp.bfloat16)
    x2 = x2_feat.reshape(B, H * W, C).astype(jnp.bfloat16)

    low = prep["bf"].shape[1] // npart
    cls = prep["bc"].shape[1] // npart
    row_blk = max(8, pl.cdiv(N, 8) * 8)                       # 8-row-aligned part stride in scratch
    logit_cols = max(128, pl.cdiv(npart * cls, 128) * 128)    # lane-dense logits slab

    kern = functools.partial(_fused_head_kernel, npart=npart,
                             sx_rows=sx * W, kx_rows=kx * W,
                             n_cls=cls, row_blk=row_blk)
    vmem = pl.BlockSpec(memory_space=pltpu.MemorySpace.VMEM)   # whole array in VMEM, single step
    x_out, y_norm, logits = pl.pallas_call(
        kern,
        out_shape=(
            jax.ShapeDtypeStruct((N, npart * C), jnp.float32),
            jax.ShapeDtypeStruct((N, npart * low), jnp.float32),
            jax.ShapeDtypeStruct((N, logit_cols), jnp.float32),
        ),
        in_specs=[vmem] * 6,
        out_specs=(vmem, vmem, vmem),
        scratch_shapes=[pltpu.VMEM((npart * row_blk, C), jnp.bfloat16)],
    )(x1, x2, prep["wf"], prep["bf"], prep["wfc"], prep["bc"])

    outs = tuple(logits[:, p * cls:(p + 1) * cls] for p in range(npart))
    return x_out, y_norm, outs


# --------------------------- deterministic parameter init ---------------------------
def init_params(key, pool_dim=POOL_DIM, low_dim=LOW_DIM, class_num=CLASS_NUM, npart=NPART):
    ks = jax.random.split(key, 3)
    # FeatureBlock Linear: kaiming_normal fan_out (std = sqrt(2/low_dim)), bias=0
    w = jax.random.normal(ks[0], (npart, pool_dim, low_dim), jnp.float32) * np.sqrt(2.0 / low_dim)
    b = jnp.zeros((npart, 1, low_dim), jnp.float32)
    # BatchNorm1d: weight ~ N(1, 0.01), bias=0, running_mean=0, running_var=1
    gamma = 1.0 + 0.01 * jax.random.normal(ks[1], (npart, 1, low_dim), jnp.float32)
    beta = jnp.zeros((npart, 1, low_dim), jnp.float32)
    mean = jnp.zeros((npart, 1, low_dim), jnp.float32)
    var = jnp.ones((npart, 1, low_dim), jnp.float32)
    # classifier: small-normal init, bias=False
    wc = jax.random.normal(ks[2], (npart, low_dim, class_num), jnp.float32) * 0.001
    return dict(w=w, b=b, gamma=gamma, beta=beta, mean=mean, var=var, wc=wc)


# --------------------------- pure-JAX reference (eval path) ---------------------------
def reference(x1, x2, params, npart=NPART):
    """x1/x2 in NCHW f32, exactly like the PyTorch module's backbone outputs."""
    x = jnp.concatenate([x1, x2], 0)
    N, C, H, W = x.shape
    sx = H // npart
    kx = H - sx * (npart - 1)
    parts = [jnp.mean(x[:, :, p * sx:p * sx + kx, :], axis=(2, 3)) for p in range(npart)]
    ys, outs, xns = [], [], []
    for p in range(npart):
        xp = parts[p]
        z = xp @ params["w"][p] + params["b"][p]
        y = (z - params["mean"][p]) / jnp.sqrt(params["var"][p] + BN_EPS) * params["gamma"][p] \
            + params["beta"][p]
        ys.append(y)
        outs.append(y @ params["wc"][p])
        xns.append(xp / jnp.sqrt(jnp.sum(xp ** 2, 1, keepdims=True)))
    x_out = jnp.concatenate(xns, 1)
    y_full = jnp.concatenate(ys, 1)
    y_norm = y_full / jnp.sqrt(jnp.sum(y_full ** 2, 1, keepdims=True))
    return x_out, y_norm, outs


if __name__ == "__main__":
    B, H, W = 2, 12, 4   # B per modality; H, W = backbone feature-map spatial size
    key = jax.random.PRNGKey(0)
    k1, k2, kp = jax.random.split(key, 3)
    x1 = jax.random.normal(k1, (B, POOL_DIM, H, W), jnp.float32)   # "backbone" NCHW outputs
    x2 = jax.random.normal(k2, (B, POOL_DIM, H, W), jnp.float32)
    params = init_params(kp)
    prep = prepare_params(params)   # one-time weight prep (BN + classifier fold, concat, bf16)

    # On TPU the backbone emits NHWC bf16 activations; emulate that boundary once here
    # (layout + cast belong to the backbone output, not the fused head).
    x1_nhwc = jnp.transpose(x1, (0, 2, 3, 1)).astype(jnp.bfloat16)
    x2_nhwc = jnp.transpose(x2, (0, 2, 3, 1)).astype(jnp.bfloat16)

    fwd = jax.jit(embed_net_graph_forward)
    x_out, y_norm, outs = fwd(x1_nhwc, x2_nhwc, prep)
    jax.block_until_ready((x_out, y_norm, outs))

    # reference sees the same bf16-quantized activations (fair comparison of the head math)
    rx, ry, routs = reference(x1.astype(jnp.bfloat16).astype(jnp.float32),
                              x2.astype(jnp.bfloat16).astype(jnp.float32), params)
    assert np.allclose(np.asarray(x_out), np.asarray(rx), rtol=2e-2, atol=2e-2)
    assert np.allclose(np.asarray(y_norm), np.asarray(ry), rtol=2e-2, atol=2e-2)
    for a, r in zip(outs, routs):
        assert np.allclose(np.asarray(a), np.asarray(r), rtol=2e-2, atol=2e-2)

    print("KERNEL_OK")
</pallas_src>

<mosaic_0001>
module attributes {stable_mosaic.version = 11 : i64} {
  func.func @_fused_head_kernel(%arg0: memref<2x48x2048xbf16, #tpu.memory_space<vmem>>, %arg1: memref<2x48x2048xbf16, #tpu.memory_space<vmem>>, %arg2: memref<2048x512xbf16, #tpu.memory_space<vmem>>, %arg3: memref<1x512xf32, #tpu.memory_space<vmem>>, %arg4: memref<2048x64xbf16, #tpu.memory_space<vmem>>, %arg5: memref<1x64xf32, #tpu.memory_space<vmem>>, %arg6: memref<4x8192xf32, #tpu.memory_space<vmem>>, %arg7: memref<4x512xf32, #tpu.memory_space<vmem>>, %arg8: memref<4x128xf32, #tpu.memory_space<vmem>>, %arg9: memref<32x2048xbf16, #tpu.memory_space<vmem>>) attributes {dimension_semantics = [], scalar_prefetch = 0 : i64, scratch_operands = 1 : i64, tpu.core_type = #tpu.core_type<tc>} {
    %cst = arith.constant 0.000000e+00 : bf16
    %0 = vector.broadcast %cst : bf16 to vector<32x2048xbf16>
    %c0 = arith.constant 0 : index
    %c0_0 = arith.constant 0 : index
    %1 = vector.load %arg9[%c0, %c0_0] : memref<32x2048xbf16, #tpu.memory_space<vmem>>, vector<32x2048xbf16>
    tpu.vector_store %arg9[%c0, %c0_0], %0 {strides = array<i32>} : memref<32x2048xbf16, #tpu.memory_space<vmem>>, vector<32x2048xbf16>,
    %c0_1 = arith.constant 0 : index
    %c0_2 = arith.constant 0 : index
    %c0_3 = arith.constant 0 : index
    %2 = vector.load %arg0[%c0_1, %c0_2, %c0_3] : memref<2x48x2048xbf16, #tpu.memory_space<vmem>>, vector<2x12x2048xbf16>
    %3 = arith.extf %2 : vector<2x12x2048xbf16> to vector<2x12x2048xf32>
    %cst_4 = arith.constant dense<0.000000e+00> : vector<2x2048xf32>
    %4 = vector.multi_reduction <add>, %3, %cst_4 [1] : vector<2x12x2048xf32> to vector<2x2048xf32>
    %cst_5 = arith.constant 0.0833333358 : f32
    %5 = vector.broadcast %cst_5 : f32 to vector<2x2048xf32>
    %6 = arith.mulf %4, %5 : vector<2x2048xf32>
    %7 = arith.mulf %6, %6 : vector<2x2048xf32>
    %cst_6 = arith.constant dense<0.000000e+00> : vector<2xf32>
    %8 = vector.multi_reduction <add>, %7, %cst_6 [1] : vector<2x2048xf32> to vector<2xf32>
    %9 = vector.shape_cast %8 : vector<2xf32> to vector<2x1xf32>
    %10 = math.rsqrt %9 : vector<2x1xf32>
    %11 = vector.broadcast %10 : vector<2x1xf32> to vector<2x2048xf32>
    %12 = arith.mulf %6, %11 : vector<2x2048xf32>
    %c0_7 = arith.constant 0 : index
    %c0_8 = arith.constant 0 : index
    %13 = vector.load %arg6[%c0_7, %c0_8] : memref<4x8192xf32, #tpu.memory_space<vmem>>, vector<2x2048xf32>
    tpu.vector_store %arg6[%c0_7, %c0_8], %12 {strides = array<i32>} : memref<4x8192xf32, #tpu.memory_space<vmem>>, vector<2x2048xf32>,
    %14 = arith.truncf %6 : vector<2x2048xf32> to vector<2x2048xbf16>
    %c0_9 = arith.constant 0 : index
    %c0_10 = arith.constant 0 : index
    %15 = vector.load %arg9[%c0_9, %c0_10] : memref<32x2048xbf16, #tpu.memory_space<vmem>>, vector<2x2048xbf16>
    tpu.vector_store %arg9[%c0_9, %c0_10], %14 {strides = array<i32>} : memref<32x2048xbf16, #tpu.memory_space<vmem>>, vector<2x2048xbf16>,
    %c0_11 = arith.constant 0 : index
    %c0_12 = arith.constant 0 : index
    %c0_13 = arith.constant 0 : index
    %16 = vector.load %arg1[%c0_11, %c0_12, %c0_13] : memref<2x48x2048xbf16, #tpu.memory_space<vmem>>, vector<2x12x2048xbf16>
    %17 = arith.extf %16 : vector<2x12x2048xbf16> to vector<2x12x2048xf32>
    %cst_14 = arith.constant dense<0.000000e+00> : vector<2x2048xf32>
    %18 = vector.multi_reduction <add>, %17, %cst_14 [1] : vector<2x12x2048xf32> to vector<2x2048xf32>
    %cst_15 = arith.constant 0.0833333358 : f32
    %19 = vector.broadcast %cst_15 : f32 to vector<2x2048xf32>
    %20 = arith.mulf %18, %19 : vector<2x2048xf32>
    %21 = arith.mulf %20, %20 : vector<2x2048xf32>
    %cst_16 = arith.constant dense<0.000000e+00> : vector<2xf32>
    %22 = vector.multi_reduction <add>, %21, %cst_16 [1] : vector<2x2048xf32> to vector<2xf32>
    %23 = vector.shape_cast %22 : vector<2xf32> to vector<2x1xf32>
    %24 = math.rsqrt %23 : vector<2x1xf32>
    %25 = vector.broadcast %24 : vector<2x1xf32> to vector<2x2048xf32>
    %26 = arith.mulf %20, %25 : vector<2x2048xf32>
    %c2 = arith.constant 2 : index
    %c0_17 = arith.constant 0 : index
    %27 = vector.load %arg6[%c2, %c0_17] : memref<4x8192xf32, #tpu.memory_space<vmem>>, vector<2x2048xf32>
    tpu.vector_store %arg6[%c2, %c0_17], %26 {strides = array<i32>} : memref<4x8192xf32, #tpu.memory_space<vmem>>, vector<2x2048xf32>,
    %28 = arith.truncf %20 : vector<2x2048xf32> to vector<2x2048xbf16>
    %c2_18 = arith.constant 2 : index
    %c0_19 = arith.constant 0 : index
    %29 = vector.load %arg9[%c2_18, %c0_19] : memref<32x2048xbf16, #tpu.memory_space<vmem>>, vector<2x2048xbf16>
    tpu.vector_store %arg9[%c2_18, %c0_19], %28 {strides = array<i32>} : memref<32x2048xbf16, #tpu.memory_space<vmem>>, vector<2x2048xbf16>,
    %c0_20 = arith.constant 0 : index
    %c12 = arith.constant 12 : index
    %c0_21 = arith.constant 0 : index
    %30 = vector.load %arg0[%c0_20, %c12, %c0_21] : memref<2x48x2048xbf16, #tpu.memory_space<vmem>>, vector<2x12x2048xbf16>
    %31 = arith.extf %30 : vector<2x12x2048xbf16> to vector<2x12x2048xf32>
    %cst_22 = arith.constant dense<0.000000e+00> : vector<2x2048xf32>
    %32 = vector.multi_reduction <add>, %31, %cst_22 [1] : vector<2x12x2048xf32> to vector<2x2048xf32>
    %cst_23 = arith.constant 0.0833333358 : f32
    %33 = vector.broadcast %cst_23 : f32 to vector<2x2048xf32>
    %34 = arith.mulf %32, %33 : vector<2x2048xf32>
    %35 = arith.mulf %34, %34 : vector<2x2048xf32>
    %cst_24 = arith.constant dense<0.000000e+00> : vector<2xf32>
    %36 = vector.multi_reduction <add>, %35, %cst_24 [1] : vector<2x2048xf32> to vector<2xf32>
    %37 = vector.shape_cast %36 : vector<2xf32> to vector<2x1xf32>
    %38 = math.rsqrt %37 : vector<2x1xf32>
    %39 = vector.broadcast %38 : vector<2x1xf32> to vector<2x2048xf32>
    %40 = arith.mulf %34, %39 : vector<2x2048xf32>
    %c0_25 = arith.constant 0 : index
    %c2048 = arith.constant 2048 : index
    %41 = vector.load %arg6[%c0_25, %c2048] : memref<4x8192xf32, #tpu.memory_space<vmem>>, vector<2x2048xf32>
    tpu.vector_store %arg6[%c0_25, %c2048], %40 {strides = array<i32>} : memref<4x8192xf32, #tpu.memory_space<vmem>>, vector<2x2048xf32>,
    %42 = arith.truncf %34 : vector<2x2048xf32> to vector<2x2048xbf16>
    %c8 = arith.constant 8 : index
    %c0_26 = arith.constant 0 : index
    %43 = vector.load %arg9[%c8, %c0_26] : memref<32x2048xbf16, #tpu.memory_space<vmem>>, vector<2x2048xbf16>
    tpu.vector_store %arg9[%c8, %c0_26], %42 {strides = array<i32>} : memref<32x2048xbf16, #tpu.memory_space<vmem>>, vector<2x2048xbf16>,
    %c0_27 = arith.constant 0 : index
    %c12_28 = arith.constant 12 : index
    %c0_29 = arith.constant 0 : index
    %44 = vector.load %arg1[%c0_27, %c12_28, %c0_29] : memref<2x48x2048xbf16, #tpu.memory_space<vmem>>, vector<2x12x2048xbf16>
    %45 = arith.extf %44 : vector<2x12x2048xbf16> to vector<2x12x2048xf32>
    %cst_30 = arith.constant dense<0.000000e+00> : vector<2x2048xf32>
    %46 = vector.multi_reduction <add>, %45, %cst_30 [1] : vector<2x12x2048xf32> to vector<2x2048xf32>
    %cst_31 = arith.constant 0.0833333358 : f32
    %47 = vector.broadcast %cst_31 : f32 to vector<2x2048xf32>
    %48 = arith.mulf %46, %47 : vector<2x2048xf32>
    %49 = arith.mulf %48, %48 : vector<2x2048xf32>
    %cst_32 = arith.constant dense<0.000000e+00> : vector<2xf32>
    %50 = vector.multi_reduction <add>, %49, %cst_32 [1] : vector<2x2048xf32> to vector<2xf32>
    %51 = vector.shape_cast %50 : vector<2xf32> to vector<2x1xf32>
    %52 = math.rsqrt %51 : vector<2x1xf32>
    %53 = vector.broadcast %52 : vector<2x1xf32> to vector<2x2048xf32>
    %54 = arith.mulf %48, %53 : vector<2x2048xf32>
    %c2_33 = arith.constant 2 : index
    %c2048_34 = arith.constant 2048 : index
    %55 = vector.load %arg6[%c2_33, %c2048_34] : memref<4x8192xf32, #tpu.memory_space<vmem>>, vector<2x2048xf32>
    tpu.vector_store %arg6[%c2_33, %c2048_34], %54 {strides = array<i32>} : memref<4x8192xf32, #tpu.memory_space<vmem>>, vector<2x2048xf32>,
    %56 = arith.truncf %48 : vector<2x2048xf32> to vector<2x2048xbf16>
    %c10 = arith.constant 10 : index
    %c0_35 = arith.constant 0 : index
    %57 = vector.load %arg9[%c10, %c0_35] : memref<32x2048xbf16, #tpu.memory_space<vmem>>, vector<2x2048xbf16>
    tpu.vector_store %arg9[%c10, %c0_35], %56 {strides = array<i32>} : memref<32x2048xbf16, #tpu.memory_space<vmem>>, vector<2x2048xbf16>,
    %c0_36 = arith.constant 0 : index
    %c24 = arith.constant 24 : index
    %c0_37 = arith.constant 0 : index
    %58 = vector.load %arg0[%c0_36, %c24, %c0_37] : memref<2x48x2048xbf16, #tpu.memory_space<vmem>>, vector<2x12x2048xbf16>
    %59 = arith.extf %58 : vector<2x12x2048xbf16> to vector<2x12x2048xf32>
    %cst_38 = arith.constant dense<0.000000e+00> : vector<2x2048xf32>
    %60 = vector.multi_reduction <add>, %59, %cst_38 [1] : vector<2x12x2048xf32> to vector<2x2048xf32>
    %cst_39 = arith.constant 0.0833333358 : f32
    %61 = vector.broadcast %cst_39 : f32 to vector<2x2048xf32>
    %62 = arith.mulf %60, %61 : vector<2x2048xf32>
    %63 = arith.mulf %62, %62 : vector<2x2048xf32>
    %cst_40 = arith.constant dense<0.000000e+00> : vector<2xf32>
    %64 = vector.multi_reduction <add>, %63, %cst_40 [1] : vector<2x2048xf32> to vector<2xf32>
    %65 = vector.shape_cast %64 : vector<2xf32> to vector<2x1xf32>
    %66 = math.rsqrt %65 : vector<2x1xf32>
    %67 = vector.broadcast %66 : vector<2x1xf32> to vector<2x2048xf32>
    %68 = arith.mulf %62, %67 : vector<2x2048xf32>
    %c0_41 = arith.constant 0 : index
    %c4096 = arith.constant 4096 : index
    %69 = vector.load %arg6[%c0_41, %c4096] : memref<4x8192xf32, #tpu.memory_space<vmem>>, vector<2x2048xf32>
    tpu.vector_store %arg6[%c0_41, %c4096], %68 {strides = array<i32>} : memref<4x8192xf32, #tpu.memory_space<vmem>>, vector<2x2048xf32>,
    %70 = arith.truncf %62 : vector<2x2048xf32> to vector<2x2048xbf16>
    %c16 = arith.constant 16 : index
    %c0_42 = arith.constant 0 : index
    %71 = vector.load %arg9[%c16, %c0_42] : memref<32x2048xbf16, #tpu.memory_space<vmem>>, vector<2x2048xbf16>
    tpu.vector_store %arg9[%c16, %c0_42], %70 {strides = array<i32>} : memref<32x2048xbf16, #tpu.memory_space<vmem>>, vector<2x2048xbf16>,
    %c0_43 = arith.constant 0 : index
    %c24_44 = arith.constant 24 : index
    %c0_45 = arith.constant 0 : index
    %72 = vector.load %arg1[%c0_43, %c24_44, %c0_45] : memref<2x48x2048xbf16, #tpu.memory_space<vmem>>, vector<2x12x2048xbf16>
    %73 = arith.extf %72 : vector<2x12x2048xbf16> to vector<2x12x2048xf32>
    %cst_46 = arith.constant dense<0.000000e+00> : vector<2x2048xf32>
    %74 = vector.multi_reduction <add>, %73, %cst_46 [1] : vector<2x12x2048xf32> to vector<2x2048xf32>
    %cst_47 = arith.constant 0.0833333358 : f32
    %75 = vector.broadcast %cst_47 : f32 to vector<2x2048xf32>
    %76 = arith.mulf %74, %75 : vector<2x2048xf32>
    %77 = arith.mulf %76, %76 : vector<2x2048xf32>
    %cst_48 = arith.constant dense<0.000000e+00> : vector<2xf32>
    %78 = vector.multi_reduction <add>, %77, %cst_48 [1] : vector<2x2048xf32> to vector<2xf32>
    %79 = vector.shape_cast %78 : vector<2xf32> to vector<2x1xf32>
    %80 = math.rsqrt %79 : vector<2x1xf32>
    %81 = vector.broadcast %80 : vector<2x1xf32> to vector<2x2048xf32>
    %82 = arith.mulf %76, %81 : vector<2x2048xf32>
    %c2_49 = arith.constant 2 : index
    %c4096_50 = arith.constant 4096 : index
    %83 = vector.load %arg6[%c2_49, %c4096_50] : memref<4x8192xf32, #tpu.memory_space<vmem>>, vector<2x2048xf32>
    tpu.vector_store %arg6[%c2_49, %c4096_50], %82 {strides = array<i32>} : memref<4x8192xf32, #tpu.memory_space<vmem>>, vector<2x2048xf32>,
    %84 = arith.truncf %76 : vector<2x2048xf32> to vector<2x2048xbf16>
    %c18 = arith.constant 18 : index
    %c0_51 = arith.constant 0 : index
    %85 = vector.load %arg9[%c18, %c0_51] : memref<32x2048xbf16, #tpu.memory_space<vmem>>, vector<2x2048xbf16>
    tpu.vector_store %arg9[%c18, %c0_51], %84 {strides = array<i32>} : memref<32x2048xbf16, #tpu.memory_space<vmem>>, vector<2x2048xbf16>,
    %c0_52 = arith.constant 0 : index
    %c36 = arith.constant 36 : index
    %c0_53 = arith.constant 0 : index
    %86 = vector.load %arg0[%c0_52, %c36, %c0_53] : memref<2x48x2048xbf16, #tpu.memory_space<vmem>>, vector<2x12x2048xbf16>
    %87 = arith.extf %86 : vector<2x12x2048xbf16> to vector<2x12x2048xf32>
    %cst_54 = arith.constant dense<0.000000e+00> : vector<2x2048xf32>
    %88 = vector.multi_reduction <add>, %87, %cst_54 [1] : vector<2x12x2048xf32> to vector<2x2048xf32>
    %cst_55 = arith.constant 0.0833333358 : f32
    %89 = vector.broadcast %cst_55 : f32 to vector<2x2048xf32>
    %90 = arith.mulf %88, %89 : vector<2x2048xf32>
    %91 = arith.mulf %90, %90 : vector<2x2048xf32>
    %cst_56 = arith.constant dense<0.000000e+00> : vector<2xf32>
    %92 = vector.multi_reduction <add>, %91, %cst_56 [1] : vector<2x2048xf32> to vector<2xf32>
    %93 = vector.shape_cast %92 : vector<2xf32> to vector<2x1xf32>
    %94 = math.rsqrt %93 : vector<2x1xf32>
    %95 = vector.broadcast %94 : vector<2x1xf32> to vector<2x2048xf32>
    %96 = arith.mulf %90, %95 : vector<2x2048xf32>
    %c0_57 = arith.constant 0 : index
    %c6144 = arith.constant 6144 : index
    %97 = vector.load %arg6[%c0_57, %c6144] : memref<4x8192xf32, #tpu.memory_space<vmem>>, vector<2x2048xf32>
    tpu.vector_store %arg6[%c0_57, %c6144], %96 {strides = array<i32>} : memref<4x8192xf32, #tpu.memory_space<vmem>>, vector<2x2048xf32>,
    %98 = arith.truncf %90 : vector<2x2048xf32> to vector<2x2048xbf16>
    %c24_58 = arith.constant 24 : index
    %c0_59 = arith.constant 0 : index
    %99 = vector.load %arg9[%c24_58, %c0_59] : memref<32x2048xbf16, #tpu.memory_space<vmem>>, vector<2x2048xbf16>
    tpu.vector_store %arg9[%c24_58, %c0_59], %98 {strides = array<i32>} : memref<32x2048xbf16, #tpu.memory_space<vmem>>, vector<2x2048xbf16>,
    %c0_60 = arith.constant 0 : index
    %c36_61 = arith.constant 36 : index
    %c0_62 = arith.constant 0 : index
    %100 = vector.load %arg1[%c0_60, %c36_61, %c0_62] : memref<2x48x2048xbf16, #tpu.memory_space<vmem>>, vector<2x12x2048xbf16>
    %101 = arith.extf %100 : vector<2x12x2048xbf16> to vector<2x12x2048xf32>
    %cst_63 = arith.constant dense<0.000000e+00> : vector<2x2048xf32>
    %102 = vector.multi_reduction <add>, %101, %cst_63 [1] : vector<2x12x2048xf32> to vector<2x2048xf32>
    %cst_64 = arith.constant 0.0833333358 : f32
    %103 = vector.broadcast %cst_64 : f32 to vector<2x2048xf32>
    %104 = arith.mulf %102, %103 : vector<2x2048xf32>
    %105 = arith.mulf %104, %104 : vector<2x2048xf32>
    %cst_65 = arith.constant dense<0.000000e+00> : vector<2xf32>
    %106 = vector.multi_reduction <add>, %105, %cst_65 [1] : vector<2x2048xf32> to vector<2xf32>
    %107 = vector.shape_cast %106 : vector<2xf32> to vector<2x1xf32>
    %108 = math.rsqrt %107 : vector<2x1xf32>
    %109 = vector.broadcast %108 : vector<2x1xf32> to vector<2x2048xf32>
    %110 = arith.mulf %104, %109 : vector<2x2048xf32>
    %c2_66 = arith.constant 2 : index
    %c6144_67 = arith.constant 6144 : index
    %111 = vector.load %arg6[%c2_66, %c6144_67] : memref<4x8192xf32, #tpu.memory_space<vmem>>, vector<2x2048xf32>
    tpu.vector_store %arg6[%c2_66, %c6144_67], %110 {strides = array<i32>} : memref<4x8192xf32, #tpu.memory_space<vmem>>, vector<2x2048xf32>,
    %112 = arith.truncf %104 : vector<2x2048xf32> to vector<2x2048xbf16>
    %c26 = arith.constant 26 : index
    %c0_68 = arith.constant 0 : index
    %113 = vector.load %arg9[%c26, %c0_68] : memref<32x2048xbf16, #tpu.memory_space<vmem>>, vector<2x2048xbf16>
    tpu.vector_store %arg9[%c26, %c0_68], %112 {strides = array<i32>} : memref<32x2048xbf16, #tpu.memory_space<vmem>>, vector<2x2048xbf16>,
    %c0_69 = arith.constant 0 : index
    %c0_70 = arith.constant 0 : index
    %114 = vector.load %arg9[%c0_69, %c0_70] : memref<32x2048xbf16, #tpu.memory_space<vmem>>, vector<32x2048xbf16>
    %c0_71 = arith.constant 0 : index
    %c0_72 = arith.constant 0 : index
    %115 = vector.load %arg2[%c0_71, %c0_72] : memref<2048x512xbf16, #tpu.memory_space<vmem>>, vector<2048x512xbf16>
    %cst_73 = arith.constant dense<0.000000e+00> : vector<32x512xf32>
    %116 = tpu.matmul %114, %115, %cst_73 {dimension_numbers = #tpu.dot_dimension_numbers<[1], [0], [0], [1], [0, 0, 1, 1], [], []>} : vector<32x2048xbf16>, vector<2048x512xbf16>, vector<32x512xf32> -> vector<32x512xf32>
    %c0_74 = arith.constant 0 : index
    %c0_75 = arith.constant 0 : index
    %117 = vector.load %arg4[%c0_74, %c0_75] : memref<2048x64xbf16, #tpu.memory_space<vmem>>, vector<2048x64xbf16>
    %cst_76 = arith.constant dense<0.000000e+00> : vector<32x64xf32>
    %118 = tpu.matmul %114, %117, %cst_76 {dimension_numbers = #tpu.dot_dimension_numbers<[1], [0], [0], [1], [0, 0, 1, 1], [], []>} : vector<32x2048xbf16>, vector<2048x64xbf16>, vector<32x64xf32> -> vector<32x64xf32>
    %119 = vector.extract_strided_slice %116 {offsets = [0, 0], sizes = [4, 128], strides = [1, 1]} : vector<32x512xf32> to vector<4x128xf32>
    %120 = vector.extract_strided_slice %116 {offsets = [8, 128], sizes = [4, 128], strides = [1, 1]} : vector<32x512xf32> to vector<4x128xf32>
    %121 = vector.extract_strided_slice %116 {offsets = [16, 256], sizes = [4, 128], strides = [1, 1]} : vector<32x512xf32> to vector<4x128xf32>
    %122 = vector.extract_strided_slice %116 {offsets = [24, 384], sizes = [4, 128], strides = [1, 1]} : vector<32x512xf32> to vector<4x128xf32>
    %123 = tpu.concatenate %119, %120, %121, %122 in 1 : vector<4x128xf32>, vector<4x128xf32>, vector<4x128xf32>, vector<4x128xf32> -> vector<4x512xf32>
    %c0_77 = arith.constant 0 : index
    %c0_78 = arith.constant 0 : index
    %124 = vector.load %arg3[%c0_77, %c0_78] : memref<1x512xf32, #tpu.memory_space<vmem>>, vector<1x512xf32>
    %125 = vector.broadcast %124 : vector<1x512xf32> to vector<4x512xf32>
    %126 = arith.addf %123, %125 : vector<4x512xf32>
    %127 = arith.mulf %126, %126 : vector<4x512xf32>
    %cst_79 = arith.constant dense<0.000000e+00> : vector<4xf32>
    %128 = vector.multi_reduction <add>, %127, %cst_79 [1] : vector<4x512xf32> to vector<4xf32>
    %129 = vector.shape_cast %128 : vector<4xf32> to vector<4x1xf32>
    %130 = math.rsqrt %129 : vector<4x1xf32>
    %131 = vector.broadcast %130 : vector<4x1xf32> to vector<4x512xf32>
    %132 = arith.mulf %126, %131 : vector<4x512xf32>
    %c0_80 = arith.constant 0 : index
    %c0_81 = arith.constant 0 : index
    %133 = vector.load %arg7[%c0_80, %c0_81] : memref<4x512xf32, #tpu.memory_space<vmem>>, vector<4x512xf32>
    tpu.vector_store %arg7[%c0_80, %c0_81], %132 {strides = array<i32>} : memref<4x512xf32, #tpu.memory_space<vmem>>, vector<4x512xf32>,
    %134 = vector.extract_strided_slice %118 {offsets = [0, 0], sizes = [4, 16], strides = [1, 1]} : vector<32x64xf32> to vector<4x16xf32>
    %135 = vector.extract_strided_slice %118 {offsets = [8, 16], sizes = [4, 16], strides = [1, 1]} : vector<32x64xf32> to vector<4x16xf32>
    %136 = vector.extract_strided_slice %118 {offsets = [16, 32], sizes = [4, 16], strides = [1, 1]} : vector<32x64xf32> to vector<4x16xf32>
    %137 = vector.extract_strided_slice %118 {offsets = [24, 48], sizes = [4, 16], strides = [1, 1]} : vector<32x64xf32> to vector<4x16xf32>
    %138 = tpu.concatenate %134, %135, %136, %137 in 1 : vector<4x16xf32>, vector<4x16xf32>, vector<4x16xf32>, vector<4x16xf32> -> vector<4x64xf32>
    %c0_82 = arith.constant 0 : index
    %c0_83 = arith.constant 0 : index
    %139 = vector.load %arg5[%c0_82, %c0_83] : memref<1x64xf32, #tpu.memory_space<vmem>>, vector<1x64xf32>
    %140 = vector.broadcast %139 : vector<1x64xf32> to vector<4x64xf32>
    %141 = arith.addf %138, %140 : vector<4x64xf32>
    %cst_84 = arith.constant 0.000000e+00 : f32
    %142 = vector.broadcast %cst_84 : f32 to vector<4x64xf32>
    %143 = tpu.concatenate %141, %142 in 1 : vector<4x64xf32>, vector<4x64xf32> -> vector<4x128xf32>
    %c0_85 = arith.constant 0 : index
    %c0_86 = arith.constant 0 : index
    %144 = vector.load %arg8[%c0_85, %c0_86] : memref<4x128xf32, #tpu.memory_space<vmem>>, vector<4x128xf32>
    tpu.vector_store %arg8[%c0_85, %c0_86], %143 {strides = array<i32>} : memref<4x128xf32, #tpu.memory_space<vmem>>, vector<4x128xf32>,
    return
  }
}

</mosaic_0001>

<llo_original>
// kernel: embed_net_graph_forward.1
$region0: #{embed_net_graph_forward.1}
  #allocation0 [shape = 'u32[]', space=smem, size = 0x4, offset = 0x4, fixed_abs, tag = 'smem constant byte address 0x4 - core index']
  #allocation1 [shape = 'u32[72,128]{1,0:T(1,128)}', space=vmem, size = 0x9000, scoped, tag = 'internal scratch']
  #allocation2 [shape = 'bf16[32,2048]{1,0:T(8,128)(2,1)}', space=vmem, size = 0x20000, scoped, tag = 'scratch operand']
  %s0 = inlined_call_operand.vmem [shape: bf16[2,48,2048], index: 0, kind: input, shape index: {}]
  %s1 = inlined_call_operand.vmem [shape: bf16[2,48,2048], index: 1, kind: input, shape index: {}]
  %s2 = inlined_call_operand.vmem [shape: bf16[2048,512], index: 2, kind: input, shape index: {}]
  %s3 = inlined_call_operand.vmem [shape: f32[1,512], index: 3, kind: input, shape index: {}]
  %s4 = inlined_call_operand.vmem [shape: bf16[2048,64], index: 4, kind: input, shape index: {}]
  %s5 = inlined_call_operand.vmem [shape: f32[1,64], index: 5, kind: input, shape index: {}]
  %s6 = inlined_call_operand.hbm [shape: f32[4,8192], index: 6, kind: output, shape index: {0}]
  %s7 = inlined_call_operand.hbm [shape: f32[4,512], index: 7, kind: output, shape index: {1}]
  %s8 = inlined_call_operand.vmem [shape: f32[4,128], index: 8, kind: output, shape index: {2}]
  %9 = xla_tuple %s6, %s7, %s8
  %s10 = sld [smem:[#allocation0]]
  $region50: #{embed_net_graph_forward.1} parent=0
    _
  %s12 = ssub.s32 1, %s10
  %s13 = scalar_select 0, %s12, %s10
  $region1: #{embed_net_graph_forward.1} parent=0
    #allocation3 [shape = 'u8[131072]{0}', space=vmem, size = 0x20000, scoped, tag = 'output window, operand 0, single buffered']
    #allocation4 [shape = 's32[1]{0}', space=sflag, size = 0x4, scoped, tag = 'scoped memory for embed_net_graph_forward.1']
    #allocation5 [shape = 'u8[8192]{0}', space=vmem, size = 0x2000, scoped, tag = 'output window, operand 1, single buffered']
    #allocation6 [shape = 's32[1]{0}', space=sflag, size = 0x4, scoped, tag = 'scoped memory for embed_net_graph_forward.1']
    %14 = vsyncpa [#allocation4], 0
    %15 = vsyncpa [#allocation6], 0
    // Predicated region
    $region2: #{embed_net_graph_forward.1} parent=1 // pred_check
      _
    $region3: #{embed_net_graph_forward.1} parent=1 // pred_check_branch
      %17 = sbr.rel (0) target = $region5
    $region4: #{embed_net_graph_forward.1} parent=1 // pred_region
      _
    $region5: #{embed_net_graph_forward.1} parent=1 // pred_fallthru
      _
    // Predicated region
    $region6: #{embed_net_graph_forward.1} parent=1 // pred_check
      _
    $region7: #{embed_net_graph_forward.1} parent=1 // pred_check_branch
      %19 = sbr.rel (0) target = $region9
    $region8: #{embed_net_graph_forward.1} parent=1 // pred_region
      _
    $region9: #{embed_net_graph_forward.1} parent=1 // pred_fallthru
      _
    // Predicated region
    $region10: #{embed_net_graph_forward.1} parent=1 // pred_check
      _
    $region11: #{embed_net_graph_forward.1} parent=1 // pred_check_branch
      %21 = sbr.rel (0) target = $region13
    $region12: #{embed_net_graph_forward.1} parent=1 // pred_region
      _
    $region13: #{embed_net_graph_forward.1} parent=1 // pred_fallthru
      _
    // Predicated region
    $region14: #{embed_net_graph_forward.1} parent=1 // pred_check
      _
    $region15: #{embed_net_graph_forward.1} parent=1 // pred_check_branch
      %23 = sbr.rel (0) target = $region17
    $region16: #{embed_net_graph_forward.1} parent=1 // pred_region
      _
    $region17: #{embed_net_graph_forward.1} parent=1 // pred_fallthru
      _
    // Predicated region
    $region18: #{embed_net_graph_forward.1} parent=1 // pred_check
      _
    $region19: #{embed_net_graph_forward.1} parent=1 // pred_check_branch
      %25 = sbr.rel (0) target = $region21
    $region20: #{embed_net_graph_forward.1} parent=1 // pred_region
      _
    $region21: #{embed_net_graph_forward.1} parent=1 // pred_fallthru
      _
    // Predicated region
    $region22: #{embed_net_graph_forward.1} parent=1 // pred_check
      _
    $region23: #{embed_net_graph_forward.1} parent=1 // pred_check_branch
      %27 = sbr.rel (0) target = $region25
    $region24: #{embed_net_graph_forward.1} parent=1 // pred_region
      _
    $region25: #{embed_net_graph_forward.1} parent=1 // pred_fallthru
      _
    %29 = vst [vmem:[#allocation2] sm:$0xff] 0
    %30 = vst [vmem:[#allocation2 + $0x8] sm:$0xff] 0
    %31 = vst [vmem:[#allocation2 + $0x10] sm:$0xff] 0
    %32 = vst [vmem:[#allocation2 + $0x18] sm:$0xff] 0
    %33 = vst [vmem:[#allocation2 + $0x20] sm:$0xff] 0
    %34 = vst [vmem:[#allocation2 + $0x28] sm:$0xff] 0
    %35 = vst [vmem:[#allocation2 + $0x30] sm:$0xff] 0
    %36 = vst [vmem:[#allocation2 + $0x38] sm:$0xff] 0
    %37 = vst [vmem:[#allocation2 + $0x40] sm:$0xff] 0
    %38 = vst [vmem:[#allocation2 + $0x48] sm:$0xff] 0
    %39 = vst [vmem:[#allocation2 + $0x50] sm:$0xff] 0
    %40 = vst [vmem:[#allocation2 + $0x58] sm:$0xff] 0
    %41 = vst [vmem:[#allocation2 + $0x60] sm:$0xff] 0
    %42 = vst [vmem:[#allocation2 + $0x68] sm:$0xff] 0
    %43 = vst [vmem:[#allocation2 + $0x70] sm:$0xff] 0
    %44 = vst [vmem:[#allocation2 + $0x78] sm:$0xff] 0
    %45 = vst [vmem:[#allocation2 + $0x80] sm:$0xff] 0
    %46 = vst [vmem:[#allocation2 + $0x88] sm:$0xff] 0
    %47 = vst [vmem:[#allocation2 + $0x90] sm:$0xff] 0
    %48 = vst [vmem:[#allocation2 + $0x98] sm:$0xff] 0
    %49 = vst [vmem:[#allocation2 + $0xa0] sm:$0xff] 0
    %50 = vst [vmem:[#allocation2 + $0xa8] sm:$0xff] 0
    %51 = vst [vmem:[#allocation2 + $0xb0] sm:$0xff] 0
    %52 = vst [vmem:[#allocation2 + $0xb8] sm:$0xff] 0
    %53 = vst [vmem:[#allocation2 + $0xc0] sm:$0xff] 0
    %54 = vst [vmem:[#allocation2 + $0xc8] sm:$0xff] 0
    %55 = vst [vmem:[#allocation2 + $0xd0] sm:$0xff] 0
    %56 = vst [vmem:[#allocation2 + $0xd8] sm:$0xff] 0
    %57 = vst [vmem:[#allocation2 + $0xe0] sm:$0xff] 0
    %58 = vst [vmem:[#allocation2 + $0xe8] sm:$0xff] 0
    %59 = vst [vmem:[#allocation2 + $0xf0] sm:$0xff] 0
    %60 = vst [vmem:[#allocation2 + $0xf8] sm:$0xff] 0
    %v61 = vld [vmem:[%s0] sm:$0xff]
    %v62 = vld [vmem:[%s0 + $0x8] sm:$0xff]
    %v63 = vld [vmem:[%s0 + $0x10] sm:$0xff]
    %v64 = vld [vmem:[%s0 + $0x18] sm:$0xff]
    %v65 = vld [vmem:[%s0 + $0x20] sm:$0xff]
    %v66 = vld [vmem:[%s0 + $0x28] sm:$0xff]
    %v67 = vld [vmem:[%s0 + $0x30] sm:$0xff]
    %v68 = vld [vmem:[%s0 + $0x38] sm:$0xff]
    %v69 = vld [vmem:[%s0 + $0x40] sm:$0x33]
    %v70 = vld [vmem:[%s0 + $0x48] sm:$0x33]
    %v71 = vld [vmem:[%s0 + $0x50] sm:$0x33]
    %v72 = vld [vmem:[%s0 + $0x58] sm:$0x33]
    %v73 = vld [vmem:[%s0 + $0x60] sm:$0x33]
    %v74 = vld [vmem:[%s0 + $0x68] sm:$0x33]
    %v75 = vld [vmem:[%s0 + $0x70] sm:$0x33]
    %v76 = vld [vmem:[%s0 + $0x78] sm:$0x33]
    %v77 = vld [vmem:[%s0 + $0x180] sm:$0xff]
    %v78 = vld [vmem:[%s0 + $0x188] sm:$0xff]
    %v79 = vld [vmem:[%s0 + $0x190] sm:$0xff]
    %v80 = vld [vmem:[%s0 + $0x198] sm:$0xff]
    %v81 = vld [vmem:[%s0 + $0x1a0] sm:$0xff]
    %v82 = vld [vmem:[%s0 + $0x1a8] sm:$0xff]
    %v83 = vld [vmem:[%s0 + $0x1b0] sm:$0xff]
    %v84 = vld [vmem:[%s0 + $0x1b8] sm:$0xff]
    %v85 = vld [vmem:[%s0 + $0x1c0] sm:$0x33]
    %v86 = vld [vmem:[%s0 + $0x1c8] sm:$0x33]
    %v87 = vld [vmem:[%s0 + $0x1d0] sm:$0x33]
    %v88 = vld [vmem:[%s0 + $0x1d8] sm:$0x33]
    %v89 = vld [vmem:[%s0 + $0x1e0] sm:$0x33]
    %v90 = vld [vmem:[%s0 + $0x1e8] sm:$0x33]
    %v91 = vld [vmem:[%s0 + $0x1f0] sm:$0x33]
    %v92 = vld [vmem:[%s0 + $0x1f8] sm:$0x33]
    %v93 = vunpack.c.l.bf16 %v61
    %v94 = vunpack.c.h.bf16 %v61
    %v95 = vunpack.c.l.bf16 %v62
    %v96 = vunpack.c.h.bf16 %v62
    %v97 = vunpack.c.l.bf16 %v63
    %v98 = vunpack.c.h.bf16 %v63
    %v99 = vunpack.c.l.bf16 %v64
    %v100 = vunpack.c.h.bf16 %v64
    %v101 = vunpack.c.l.bf16 %v65
    %v102 = vunpack.c.h.bf16 %v65
    %v103 = vunpack.c.l.bf16 %v66
    %v104 = vunpack.c.h.bf16 %v66
    %v105 = vunpack.c.l.bf16 %v67
    %v106 = vunpack.c.h.bf16 %v67
    %v107 = vunpack.c.l.bf16 %v68
    %v108 = vunpack.c.h.bf16 %v68
    %v109 = vunpack.c.l.bf16 %v69
    %v110 = vunpack.c.h.bf16 %v69
    %v111 = vunpack.c.l.bf16 %v70
    %v112 = vunpack.c.h.bf16 %v70
    %v113 = vunpack.c.l.bf16 %v71
    %v114 = vunpack.c.h.bf16 %v71
    %v115 = vunpack.c.l.bf16 %v72
    %v116 = vunpack.c.h.bf16 %v72
    %v117 = vunpack.c.l.bf16 %v73
    %v118 = vunpack.c.h.bf16 %v73
    %v119 = vunpack.c.l.bf16 %v74
    %v120 = vunpack.c.h.bf16 %v74
    %v121 = vunpack.c.l.bf16 %v75
    %v122 = vunpack.c.h.bf16 %v75
    %v123 = vunpack.c.l.bf16 %v76
    %v124 = vunpack.c.h.bf16 %v76
    %v125 = vunpack.c.l.bf16 %v77
    %v126 = vunpack.c.h.bf16 %v77
    %v127 = vunpack.c.l.bf16 %v78
    %v128 = vunpack.c.h.bf16 %v78
    %v129 = vunpack.c.l.bf16 %v79
    %v130 = vunpack.c.h.bf16 %v79
    %v131 = vunpack.c.l.bf16 %v80
    %v132 = vunpack.c.h.bf16 %v80
    %v133 = vunpack.c.l.bf16 %v81
    %v134 = vunpack.c.h.bf16 %v81
    %v135 = vunpack.c.l.bf16 %v82
    %v136 = vunpack.c.h.bf16 %v82
    %v137 = vunpack.c.l.bf16 %v83
    %v138 = vunpack.c.h.bf16 %v83
    %v139 = vunpack.c.l.bf16 %v84
    %v140 = vunpack.c.h.bf16 %v84
    %v141 = vunpack.c.l.bf16 %v85
    %v142 = vunpack.c.h.bf16 %v85
    %v143 = vunpack.c.l.bf16 %v86
    %v144 = vunpack.c.h.bf16 %v86
    %v145 = vunpack.c.l.bf16 %v87
    %v146 = vunpack.c.h.bf16 %v87
    %v147 = vunpack.c.l.bf16 %v88
    %v148 = vunpack.c.h.bf16 %v88
    %v149 = vunpack.c.l.bf16 %v89
    %v150 = vunpack.c.h.bf16 %v89
    %v151 = vunpack.c.l.bf16 %v90
    %v152 = vunpack.c.h.bf16 %v90
    %v153 = vunpack.c.l.bf16 %v91
    %v154 = vunpack.c.h.bf16 %v91
    %v155 = vunpack.c.l.bf16 %v92
    %v156 = vunpack.c.h.bf16 %v92
    %vm157 = vcmask 1043456
    %v158 = vsel %vm157, %v109, 0.0
    %v159 = vadd.f32 %v93, %v158
    %v160 = vrot.slane %v159, 4
    %v161 = vadd.f32 %v159, %v160
    %v162 = vrot.slane %v161, 2
    %v163 = vadd.f32 %v161, %v162
    %v164 = vrot.slane %v163, 1
    %v165 = vadd.f32 %v163, %v164
    %v166 = vsel %vm157, %v110, 0.0
    %v167 = vadd.f32 %v94, %v166
    %v168 = vrot.slane %v167, 4
    %v169 = vadd.f32 %v167, %v168
    %v170 = vrot.slane %v169, 2
    %v171 = vadd.f32 %v169, %v170
    %v172 = vrot.slane %v171, 1
    %v173 = vadd.f32 %v171, %v172
    %v174 = vsel %vm157, %v111, 0.0
    %v175 = vadd.f32 %v95, %v174
    %v176 = vrot.slane %v175, 4
    %v177 = vadd.f32 %v175, %v176
    %v178 = vrot.slane %v177, 2
    %v179 = vadd.f32 %v177, %v178
    %v180 = vrot.slane %v179, 1
    %v181 = vadd.f32 %v179, %v180
    %v182 = vsel %vm157, %v112, 0.0
    %v183 = vadd.f32 %v96, %v182
    %v184 = vrot.slane %v183, 4
    %v185 = vadd.f32 %v183, %v184
    %v186 = vrot.slane %v185, 2
    %v187 = vadd.f32 %v185, %v186
    %v188 = vrot.slane %v187, 1
    %v189 = vadd.f32 %v187, %v188
    %v190 = vsel %vm157, %v113, 0.0
    %v191 = vadd.f32 %v97, %v190
    %v192 = vrot.slane %v191, 4
    %v193 = vadd.f32 %v191, %v192
    %v194 = vrot.slane %v193, 2
    %v195 = vadd.f32 %v193, %v194
    %v196 = vrot.slane %v195, 1
    %v197 = vadd.f32 %v195, %v196
    %v198 = vsel %vm157, %v114, 0.0
    %v199 = vadd.f32 %v98, %v198
    %v200 = vrot.slane %v199, 4
    %v201 = vadd.f32 %v199, %v200
    %v202 = vrot.slane %v201, 2
    %v203 = vadd.f32 %v201, %v202
    %v204 = vrot.slane %v203, 1
    %v205 = vadd.f32 %v203, %v204
    %v206 = vsel %vm157, %v115, 0.0
    %v207 = vadd.f32 %v99, %v206
    %v208 = vrot.slane %v207, 4
    %v209 = vadd.f32 %v207, %v208
    %v210 = vrot.slane %v209, 2
    %v211 = vadd.f32 %v209, %v210
    %v212 = vrot.slane %v211, 1
    %v213 = vadd.f32 %v211, %v212
    %v214 = vsel %vm157, %v116, 0.0
    %v215 = vadd.f32 %v100, %v214
    %v216 = vrot.slane %v215, 4
    %v217 = vadd.f32 %v215, %v216
    %v218 = vrot.slane %v217, 2
    %v219 = vadd.f32 %v217, %v218
    %v220 = vrot.slane %v219, 1
    %v221 = vadd.f32 %v219, %v220
    %v222 = vsel %vm157, %v117, 0.0
    %v223 = vadd.f32 %v101, %v222
    %v224 = vrot.slane %v223, 4
    %v225 = vadd.f32 %v223, %v224
    %v226 = vrot.slane %v225, 2
    %v227 = vadd.f32 %v225, %v226
    %v228 = vrot.slane %v227, 1
    %v229 = vadd.f32 %v227, %v228
    %v230 = vsel %vm157, %v118, 0.0
    %v231 = vadd.f32 %v102, %v230
    %v232 = vrot.slane %v231, 4
    %v233 = vadd.f32 %v231, %v232
    %v234 = vrot.slane %v233, 2
    %v235 = vadd.f32 %v233, %v234
    %v236 = vrot.slane %v235, 1
    %v237 = vadd.f32 %v235, %v236
    %v238 = vsel %vm157, %v119, 0.0
    %v239 = vadd.f32 %v103, %v238
    %v240 = vrot.slane %v239, 4
    %v241 = vadd.f32 %v239, %v240
    %v242 = vrot.slane %v241, 2
    %v243 = vadd.f32 %v241, %v242
    %v244 = vrot.slane %v243, 1
    %v245 = vadd.f32 %v243, %v244
    %v246 = vsel %vm157, %v120, 0.0
    %v247 = vadd.f32 %v104, %v246
    %v248 = vrot.slane %v247, 4
    %v249 = vadd.f32 %v247, %v248
    %v250 = vrot.slane %v249, 2
    %v251 = vadd.f32 %v249, %v250
    %v252 = vrot.slane %v251, 1
    %v253 = vadd.f32 %v251, %v252
    %v254 = vsel %vm157, %v121, 0.0
    %v255 = vadd.f32 %v105, %v254
    %v256 = vrot.slane %v255, 4
    %v257 = vadd.f32 %v255, %v256
    %v258 = vrot.slane %v257, 2
    %v259 = vadd.f32 %v257, %v258
    %v260 = vrot.slane %v259, 1
    %v261 = vadd.f32 %v259, %v260
    %v262 = vsel %vm157, %v122, 0.0
    %v263 = vadd.f32 %v106, %v262
    %v264 = vrot.slane %v263, 4
    %v265 = vadd.f32 %v263, %v264
    %v266 = vrot.slane %v265, 2
    %v267 = vadd.f32 %v265, %v266
    %v268 = vrot.slane %v267, 1
    %v269 = vadd.f32 %v267, %v268
    %v270 = vsel %vm157, %v123, 0.0
    %v271 = vadd.f32 %v107, %v270
    %v272 = vrot.slane %v271, 4
    %v273 = vadd.f32 %v271, %v272
    %v274 = vrot.slane %v273, 2
    %v275 = vadd.f32 %v273, %v274
    %v276 = vrot.slane %v275, 1
    %v277 = vadd.f32 %v275, %v276
    %v278 = vsel %vm157, %v124, 0.0
    %v279 = vadd.f32 %v108, %v278
    %v280 = vrot.slane %v279, 4
    %v281 = vadd.f32 %v279, %v280
    %v282 = vrot.slane %v281, 2
    %v283 = vadd.f32 %v281, %v282
    %v284 = vrot.slane %v283, 1
    %v285 = vadd.f32 %v283, %v284
    %v286 = vsel %vm157, %v141, 0.0
    %v287 = vadd.f32 %v125, %v286
    %v288 = vrot.slane %v287, 4
    %v289 = vadd.f32 %v287, %v288
    %v290 = vrot.slane %v289, 2
    %v291 = vadd.f32 %v289, %v290
    %v292 = vrot.slane %v291, 1
    %v293 = vadd.f32 %v291, %v292
    %v294 = vsel %vm157, %v142, 0.0
    %v295 = vadd.f32 %v126, %v294
    %v296 = vrot.slane %v295, 4
    %v297 = vadd.f32 %v295, %v296
    %v298 = vrot.slane %v297, 2
    %v299 = vadd.f32 %v297, %v298
    %v300 = vrot.slane %v299, 1
    %v301 = vadd.f32 %v299, %v300
    %v302 = vsel %vm157, %v143, 0.0
    %v303 = vadd.f32 %v127, %v302
    %v304 = vrot.slane %v303, 4
    %v305 = vadd.f32 %v303, %v304
    %v306 = vrot.slane %v305, 2
    %v307 = vadd.f32 %v305, %v306
    %v308 = vrot.slane %v307, 1
    %v309 = vadd.f32 %v307, %v308
    %v310 = vsel %vm157, %v144, 0.0
    %v311 = vadd.f32 %v128, %v310
    %v312 = vrot.slane %v311, 4
    %v313 = vadd.f32 %v311, %v312
    %v314 = vrot.slane %v313, 2
    %v315 = vadd.f32 %v313, %v314
    %v316 = vrot.slane %v315, 1
    %v317 = vadd.f32 %v315, %v316
    %v318 = vsel %vm157, %v145, 0.0
    %v319 = vadd.f32 %v129, %v318
    %v320 = vrot.slane %v319, 4
    %v321 = vadd.f32 %v319, %v320
    %v322 = vrot.slane %v321, 2
    %v323 = vadd.f32 %v321, %v322
    %v324 = vrot.slane %v323, 1
    %v325 = vadd.f32 %v323, %v324
    %v326 = vsel %vm157, %v146, 0.0
    %v327 = vadd.f32 %v130, %v326
    %v328 = vrot.slane %v327, 4
    %v329 = vadd.f32 %v327, %v328
    %v330 = vrot.slane %v329, 2
    %v331 = vadd.f32 %v329, %v330
    %v332 = vrot.slane %v331, 1
    %v333 = vadd.f32 %v331, %v332
    %v334 = vsel %vm157, %v147, 0.0
    %v335 = vadd.f32 %v131, %v334
    %v336 = vrot.slane %v335, 4
    %v337 = vadd.f32 %v335, %v336
    %v338 = vrot.slane %v337, 2
    %v339 = vadd.f32 %v337, %v338
    %v340 = vrot.slane %v339, 1
    %v341 = vadd.f32 %v339, %v340
    %v342 = vsel %vm157, %v148, 0.0
    %v343 = vadd.f32 %v132, %v342
    %v344 = vrot.slane %v343, 4
    %v345 = vadd.f32 %v343, %v344
    %v346 = vrot.slane %v345, 2
    %v347 = vadd.f32 %v345, %v346
    %v348 = vrot.slane %v347, 1
    %v349 = vadd.f32 %v347, %v348
    %v350 = vsel %vm157, %v149, 0.0
    %v351 = vadd.f32 %v133, %v350
    %v352 = vrot.slane %v351, 4
    %v353 = vadd.f32 %v351, %v352
    %v354 = vrot.slane %v353, 2
    %v355 = vadd.f32 %v353, %v354
    %v356 = vrot.slane %v355, 1
    %v357 = vadd.f32 %v355, %v356
    %v358 = vsel %vm157, %v150, 0.0
    %v359 = vadd.f32 %v134, %v358
    %v360 = vrot.slane %v359, 4
    %v361 = vadd.f32 %v359, %v360
    %v362 = vrot.slane %v361, 2
    %v363 = vadd.f32 %v361, %v362
    %v364 = vrot.slane %v363, 1
    %v365 = vadd.f32 %v363, %v364
    %v366 = vsel %vm157, %v151, 0.0
    %v367 = vadd.f32 %v135, %v366
    %v368 = vrot.slane %v367, 4
    %v369 = vadd.f32 %v367, %v368
    %v370 = vrot.slane %v369, 2
    %v371 = vadd.f32 %v369, %v370
    %v372 = vrot.slane %v371, 1
    %v373 = vadd.f32 %v371, %v372
    %v374 = vsel %vm157, %v152, 0.0
    %v375 = vadd.f32 %v136, %v374
    %v376 = vrot.slane %v375, 4
    %v377 = vadd.f32 %v375, %v376
    %v378 = vrot.slane %v377, 2
    %v379 = vadd.f32 %v377, %v378
    %v380 = vrot.slane %v379, 1
    %v381 = vadd.f32 %v379, %v380
    %v382 = vsel %vm157, %v153, 0.0
    %v383 = vadd.f32 %v137, %v382
    %v384 = vrot.slane %v383, 4
    %v385 = vadd.f32 %v383, %v384
    %v386 = vrot.slane %v385, 2
    %v387 = vadd.f32 %v385, %v386
    %v388 = vrot.slane %v387, 1
    %v389 = vadd.f32 %v387, %v388
    %v390 = vsel %vm157, %v154, 0.0
    %v391 = vadd.f32 %v138, %v390
    %v392 = vrot.slane %v391, 4
    %v393 = vadd.f32 %v391, %v392
    %v394 = vrot.slane %v393, 2
    %v395 = vadd.f32 %v393, %v394
    %v396 = vrot.slane %v395, 1
    %v397 = vadd.f32 %v395, %v396
    %v398 = vsel %vm157, %v155, 0.0
    %v399 = vadd.f32 %v139, %v398
    %v400 = vrot.slane %v399, 4
    %v401 = vadd.f32 %v399, %v400
    %v402 = vrot.slane %v401, 2
    %v403 = vadd.f32 %v401, %v402
    %v404 = vrot.slane %v403, 1
    %v405 = vadd.f32 %v403, %v404
    %v406 = vsel %vm157, %v156, 0.0
    %v407 = vadd.f32 %v140, %v406
    %v408 = vrot.slane %v407, 4
    %v409 = vadd.f32 %v407, %v408
    %v410 = vrot.slane %v409, 2
    %v411 = vadd.f32 %v409, %v410
    %v412 = vrot.slane %v411, 1
    %v413 = vadd.f32 %v411, %v412
    %v414 = vmul.f32 %v165, 0.083333336
    %v415 = vmul.f32 %v173, 0.083333336
    %v416 = vmul.f32 %v181, 0.083333336
    %v417 = vmul.f32 %v189, 0.083333336
    %v418 = vmul.f32 %v197, 0.083333336
    %v419 = vmul.f32 %v205, 0.083333336
    %v420 = vmul.f32 %v213, 0.083333336
    %v421 = vmul.f32 %v221, 0.083333336
    %v422 = vmul.f32 %v229, 0.083333336
    %v423 = vmul.f32 %v237, 0.083333336
    %v424 = vmul.f32 %v245, 0.083333336
    %v425 = vmul.f32 %v253, 0.083333336
    %v426 = vmul.f32 %v261, 0.083333336
    %v427 = vmul.f32 %v269, 0.083333336
    %v428 = vmul.f32 %v277, 0.083333336
    %v429 = vmul.f32 %v285, 0.083333336
    %v430 = vmul.f32 %v293, 0.083333336
    %v431 = vmul.f32 %v301, 0.083333336
    %v432 = vmul.f32 %v309, 0.083333336
    %v433 = vmul.f32 %v317, 0.083333336
    %v434 = vmul.f32 %v325, 0.083333336
    %v435 = vmul.f32 %v333, 0.083333336
    %v436 = vmul.f32 %v341, 0.083333336
    %v437 = vmul.f32 %v349, 0.083333336
    %v438 = vmul.f32 %v357, 0.083333336
    %v439 = vmul.f32 %v365, 0.083333336
    %v440 = vmul.f32 %v373, 0.083333336
    %v441 = vmul.f32 %v381, 0.083333336
    %v442 = vmul.f32 %v389, 0.083333336
    %v443 = vmul.f32 %v397, 0.083333336
    %v444 = vmul.f32 %v405, 0.083333336
    %v445 = vmul.f32 %v413, 0.083333336
    %v446 = vmul.f32 %v414, %v414
    %v447 = vmul.f32 %v415, %v415
    %v448 = vmul.f32 %v416, %v416
    %v449 = vmul.f32 %v417, %v417
    %v450 = vmul.f32 %v418, %v418
    %v451 = vmul.f32 %v419, %v419
    %v452 = vmul.f32 %v420, %v420
    %v453 = vmul.f32 %v421, %v421
    %v454 = vmul.f32 %v422, %v422
    %v455 = vmul.f32 %v423, %v423
    %v456 = vmul.f32 %v424, %v424
    %v457 = vmul.f32 %v425, %v425
    %v458 = vmul.f32 %v426, %v426
    %v459 = vmul.f32 %v427, %v427
    %v460 = vmul.f32 %v428, %v428
    %v461 = vmul.f32 %v429, %v429
    %v462 = vmul.f32 %v430, %v430
    %v463 = vmul.f32 %v431, %v431
    %v464 = vmul.f32 %v432, %v432
    %v465 = vmul.f32 %v433, %v433
    %v466 = vmul.f32 %v434, %v434
    %v467 = vmul.f32 %v435, %v435
    %v468 = vmul.f32 %v436, %v436
    %v469 = vmul.f32 %v437, %v437
    %v470 = vmul.f32 %v438, %v438
    %v471 = vmul.f32 %v439, %v439
    %v472 = vmul.f32 %v440, %v440
    %v473 = vmul.f32 %v441, %v441
    %v474 = vmul.f32 %v442, %v442
    %v475 = vmul.f32 %v443, %v443
    %v476 = vmul.f32 %v444, %v444
    %v477 = vmul.f32 %v445, %v445
    %vm510 = vcmask 1041409
    %v511 = vsel %vm510, %v462, %v446
    %v512 = vsel %vm510, %v463, %v447
    %v513 = vsel %vm510, %v464, %v448
    %v514 = vsel %vm510, %v465, %v449
    %v515 = vsel %vm510, %v466, %v450
    %v516 = vsel %vm510, %v467, %v451
    %v517 = vsel %vm510, %v468, %v452
    %v518 = vsel %vm510, %v469, %v453
    %v519 = vsel %vm510, %v470, %v454
    %v520 = vsel %vm510, %v471, %v455
    %v521 = vsel %vm510, %v472, %v456
    %v522 = vsel %vm510, %v473, %v457
    %v523 = vsel %vm510, %v474, %v458
    %v524 = vsel %vm510, %v475, %v459
    %v525 = vsel %vm510, %v476, %v460
    %v526 = vsel %vm510, %v477, %v461
    %vm543 = vcmask 1041408
    %v544 = vsel %vm543, %v511, 0.0
    %v545 = vsel %vm543, %v512, 0.0
    %v546 = vadd.f32 %v544, %v545
    %v547 = vsel %vm543, %v513, 0.0
    %v548 = vadd.f32 %v546, %v547
    %v549 = vsel %vm543, %v514, 0.0
    %v550 = vadd.f32 %v548, %v549
    %v551 = vsel %vm543, %v515, 0.0
    %v552 = vadd.f32 %v550, %v551
    %v553 = vsel %vm543, %v516, 0.0
    %v554 = vadd.f32 %v552, %v553
    %v555 = vsel %vm543, %v517, 0.0
    %v556 = vadd.f32 %v554, %v555
    %v557 = vsel %vm543, %v518, 0.0
    %v558 = vadd.f32 %v556, %v557
    %v559 = vsel %vm543, %v519, 0.0
    %v560 = vadd.f32 %v558, %v559
    %v561 = vsel %vm543, %v520, 0.0
    %v562 = vadd.f32 %v560, %v561
    %v563 = vsel %vm543, %v521, 0.0
    %v564 = vadd.f32 %v562, %v563
    %v565 = vsel %vm543, %v522, 0.0
    %v566 = vadd.f32 %v564, %v565
    %v567 = vsel %vm543, %v523, 0.0
    %v568 = vadd.f32 %v566, %v567
    %v569 = vsel %vm543, %v524, 0.0
    %v570 = vadd.f32 %v568, %v569
    %v571 = vsel %vm543, %v525, 0.0
    %v572 = vadd.f32 %v570, %v571
    %v573 = vsel %vm543, %v526, 0.0
    %v574 = vadd.f32 %v572, %v573
    %575 = vadd.xlane.f32.xlu0 %v574
    %v576 = vpop.xlane.xlu0 %575
    %v577 = vrsqrt.pop %v576
    %v578 = vmul.f32 %v577, %v576
    %v579 = vmul.f32 %v578, %v577
    %v580 = vmul.f32 0.5, %v579
    %v581 = vsub.f32 1.5, %v580
    %v582 = vmul.f32 %v577, %v581
    %vm583 = vweird.f32 %v576
    %vm584 = vweird.f32 %v577
    %vm585 = vmor %vm583, %vm584
    %v586 = vsel %vm585, %v577, %v582
    %v588 = vrot.slane %v586, 1
    %v591 = vmul.f32 %v414, %v586
    %v592 = vmul.f32 %v415, %v586
    %v593 = vmul.f32 %v416, %v586
    %v594 = vmul.f32 %v417, %v586
    %v595 = vmul.f32 %v418, %v586
    %v596 = vmul.f32 %v419, %v586
    %v597 = vmul.f32 %v420, %v586
    %v598 = vmul.f32 %v421, %v586
    %v599 = vmul.f32 %v422, %v586
    %v600 = vmul.f32 %v423, %v586
    %v601 = vmul.f32 %v424, %v586
    %v602 = vmul.f32 %v425, %v586
    %v603 = vmul.f32 %v426, %v586
    %v604 = vmul.f32 %v427, %v586
    %v605 = vmul.f32 %v428, %v586
    %v606 = vmul.f32 %v429, %v586
    %v607 = vmul.f32 %v430, %v588
    %v608 = vmul.f32 %v431, %v588
    %v609 = vmul.f32 %v432, %v588
    %v610 = vmul.f32 %v433, %v588
    %v611 = vmul.f32 %v434, %v588
    %v612 = vmul.f32 %v435, %v588
    %v613 = vmul.f32 %v436, %v588
    %v614 = vmul.f32 %v437, %v588
    %v615 = vmul.f32 %v438, %v588
    %v616 = vmul.f32 %v439, %v588
    %v617 = vmul.f32 %v440, %v588
    %v618 = vmul.f32 %v441, %v588
    %v619 = vmul.f32 %v442, %v588
    %v620 = vmul.f32 %v443, %v588
    %v621 = vmul.f32 %v444, %v588
    %v622 = vmul.f32 %v445, %v588
    %v655 = vrot.slane %v592, 4
    %v656 = vrot.slane %v594, 4
    %v657 = vrot.slane %v596, 4
    %v658 = vrot.slane %v598, 4
    %v659 = vrot.slane %v600, 4
    %v660 = vrot.slane %v602, 4
    %v661 = vrot.slane %v604, 4
    %v662 = vrot.slane %v606, 4
    %v663 = vrot.slane %v608, 4
    %v664 = vrot.slane %v610, 4
    %v665 = vrot.slane %v612, 4
    %v666 = vrot.slane %v614, 4
    %v667 = vrot.slane %v616, 4
    %v668 = vrot.slane %v618, 4
    %v669 = vrot.slane %v620, 4
    %v670 = vrot.slane %v622, 4
    %v671 = vsel %vm157, %v591, %v655
    %v672 = vsel %vm157, %v593, %v656
    %v673 = vsel %vm157, %v595, %v657
    %v674 = vsel %vm157, %v597, %v658
    %v675 = vsel %vm157, %v599, %v659
    %v676 = vsel %vm157, %v601, %v660
    %v677 = vsel %vm157, %v603, %v661
    %v678 = vsel %vm157, %v605, %v662
    %v679 = vsel %vm157, %v607, %v663
    %v680 = vsel %vm157, %v609, %v664
    %v681 = vsel %vm157, %v611, %v665
    %v682 = vsel %vm157, %v613, %v666
    %v683 = vsel %vm157, %v615, %v667
    %v684 = vsel %vm157, %v617, %v668
    %v685 = vsel %vm157, %v619, %v669
    %v686 = vsel %vm157, %v621, %v670
    %v687 = vrot.slane %v679, 7
    %v688 = vsel %vm510, %v687, %v671
    %vm689 = vcmask 1045509
    %v690 = vsel %vm689, %v687, %v688
    %v691 = vrot.slane %v680, 7
    %v692 = vsel %vm510, %v691, %v672
    %v693 = vsel %vm689, %v691, %v692
    %v694 = vrot.slane %v681, 7
    %v695 = vsel %vm510, %v694, %v673
    %v696 = vsel %vm689, %v694, %v695
    %v697 = vrot.slane %v682, 7
    %v698 = vsel %vm510, %v697, %v674
    %v699 = vsel %vm689, %v697, %v698
    %v700 = vrot.slane %v683, 7
    %v701 = vsel %vm510, %v700, %v675
    %v702 = vsel %vm689, %v700, %v701
    %v703 = vrot.slane %v684, 7
    %v704 = vsel %vm510, %v703, %v676
    %v705 = vsel %vm689, %v703, %v704
    %v706 = vrot.slane %v685, 7
    %v707 = vsel %vm510, %v706, %v677
    %v708 = vsel %vm689, %v706, %v707
    %v709 = vrot.slane %v686, 7
    %v710 = vsel %vm510, %v709, %v678
    %v711 = vsel %vm689, %v709, %v710
    %720 = vst [vmem:[#allocation3] sm:$0x33] %v690
    %721 = vst [vmem:[#allocation3 + $0x8] sm:$0x33] %v693
    %722 = vst [vmem:[#allocation3 + $0x10] sm:$0x33] %v696
    %723 = vst [vmem:[#allocation3 + $0x18] sm:$0x33] %v699
    %724 = vst [vmem:[#allocation3 + $0x20] sm:$0x33] %v702
    %725 = vst [vmem:[#allocation3 + $0x28] sm:$0x33] %v705
    %726 = vst [vmem:[#allocation3 + $0x30] sm:$0x33] %v708
    %727 = vst [vmem:[#allocation3 + $0x38] sm:$0x33] %v711
    %v728 = vpack.c.bf16 %v415, %v414
    %v729 = vpack.c.bf16 %v417, %v416
    %v730 = vpack.c.bf16 %v419, %v418
    %v731 = vpack.c.bf16 %v421, %v420
    %v732 = vpack.c.bf16 %v423, %v422
    %v733 = vpack.c.bf16 %v425, %v424
    %v734 = vpack.c.bf16 %v427, %v426
    %v735 = vpack.c.bf16 %v429, %v428
    %v736 = vpack.c.bf16 %v431, %v430
    %v737 = vpack.c.bf16 %v433, %v432
    %v738 = vpack.c.bf16 %v435, %v434
    %v739 = vpack.c.bf16 %v437, %v436
    %v740 = vpack.c.bf16 %v439, %v438
    %v741 = vpack.c.bf16 %v441, %v440
    %v742 = vpack.c.bf16 %v443, %v442
    %v743 = vpack.c.bf16 %v445, %v444
    %v760 = vunpack.c.l.b16 %v728
    %v761 = vunpack.c.h.b16 %v728
    %v762 = vunpack.c.l.b16 %v729
    %v763 = vunpack.c.h.b16 %v729
    %v764 = vunpack.c.l.b16 %v730
    %v765 = vunpack.c.h.b16 %v730
    %v766 = vunpack.c.l.b16 %v731
    %v767 = vunpack.c.h.b16 %v731
    %v768 = vunpack.c.l.b16 %v732
    %v769 = vunpack.c.h.b16 %v732
    %v770 = vunpack.c.l.b16 %v733
    %v771 = vunpack.c.h.b16 %v733
    %v772 = vunpack.c.l.b16 %v734
    %v773 = vunpack.c.h.b16 %v734
    %v774 = vunpack.c.l.b16 %v735
    %v775 = vunpack.c.h.b16 %v735
    %v776 = vunpack.c.l.b16 %v736
    %v777 = vunpack.c.h.b16 %v736
    %v778 = vunpack.c.l.b16 %v737
    %v779 = vunpack.c.h.b16 %v737
    %v780 = vunpack.c.l.b16 %v738
    %v781 = vunpack.c.h.b16 %v738
    %v782 = vunpack.c.l.b16 %v739
    %v783 = vunpack.c.h.b16 %v739
    %v784 = vunpack.c.l.b16 %v740
    %v785 = vunpack.c.h.b16 %v740
    %v786 = vunpack.c.l.b16 %v741
    %v787 = vunpack.c.h.b16 %v741
    %v788 = vunpack.c.l.b16 %v742
    %v789 = vunpack.c.h.b16 %v742
    %v790 = vunpack.c.l.b16 %v743
    %v791 = vunpack.c.h.b16 %v743
    %v792 = vsel %vm510, %v776, %v760
    %v793 = vsel %vm510, %v777, %v761
    %v794 = vsel %vm510, %v778, %v762
    %v795 = vsel %vm510, %v779, %v763
    %v796 = vsel %vm510, %v780, %v764
    %v797 = vsel %vm510, %v781, %v765
    %v798 = vsel %vm510, %v782, %v766
    %v799 = vsel %vm510, %v783, %v767
    %v800 = vsel %vm510, %v784, %v768
    %v801 = vsel %vm510, %v785, %v769
    %v802 = vsel %vm510, %v786, %v770
    %v803 = vsel %vm510, %v787, %v771
    %v804 = vsel %vm510, %v788, %v772
    %v805 = vsel %vm510, %v789, %v773
    %v806 = vsel %vm510, %v790, %v774
    %v807 = vsel %vm510, %v791, %v775
    %v808 = vpack.c.b16 %v793, %v792
    %v809 = vpack.c.b16 %v795, %v794
    %v810 = vpack.c.b16 %v797, %v796
    %v811 = vpack.c.b16 %v799, %v798
    %v812 = vpack.c.b16 %v801, %v800
    %v813 = vpack.c.b16 %v803, %v802
    %v814 = vpack.c.b16 %v805, %v804
    %v815 = vpack.c.b16 %v807, %v806
    %824 = vst [vmem:[#allocation2] sm:$0x11] %v808
    %825 = vst [vmem:[#allocation2 + $0x8] sm:$0x11] %v809
    %826 = vst [vmem:[#allocation2 + $0x10] sm:$0x11] %v810
    %827 = vst [vmem:[#allocation2 + $0x18] sm:$0x11] %v811
    %828 = vst [vmem:[#allocation2 + $0x20] sm:$0x11] %v812
    %829 = vst [vmem:[#allocation2 + $0x28] sm:$0x11] %v813
    %830 = vst [vmem:[#allocation2 + $0x30] sm:$0x11] %v814
    %831 = vst [vmem:[#allocation2 + $0x38] sm:$0x11] %v815
    %v832 = vld [vmem:[%s1] sm:$0xff]
    %v833 = vld [vmem:[%s1 + $0x8] sm:$0xff]
    %v834 = vld [vmem:[%s1 + $0x10] sm:$0xff]
    %v835 = vld [vmem:[%s1 + $0x18] sm:$0xff]
    %v836 = vld [vmem:[%s1 + $0x20] sm:$0xff]
    %v837 = vld [vmem:[%s1 + $0x28] sm:$0xff]
    %v838 = vld [vmem:[%s1 + $0x30] sm:$0xff]
    %v839 = vld [vmem:[%s1 + $0x38] sm:$0xff]
    %v840 = vld [vmem:[%s1 + $0x40] sm:$0x33]
    %v841 = vld [vmem:[%s1 + $0x48] sm:$0x33]
    %v842 = vld [vmem:[%s1 + $0x50] sm:$0x33]
    %v843 = vld [vmem:[%s1 + $0x58] sm:$0x33]
    %v844 = vld [vmem:[%s1 + $0x60] sm:$0x33]
    %v845 = vld [vmem:[%s1 + $0x68] sm:$0x33]
    %v846 = vld [vmem:[%s1 + $0x70] sm:$0x33]
    %v847 = vld [vmem:[%s1 + $0x78] sm:$0x33]
    %v848 = vld [vmem:[%s1 + $0x180] sm:$0xff]
    %v849 = vld [vmem:[%s1 + $0x188] sm:$0xff]
    %v850 = vld [vmem:[%s1 + $0x190] sm:$0xff]
    %v851 = vld [vmem:[%s1 + $0x198] sm:$0xff]
    %v852 = vld [vmem:[%s1 + $0x1a0] sm:$0xff]
    %v853 = vld [vmem:[%s1 + $0x1a8] sm:$0xff]
    %v854 = vld [vmem:[%s1 + $0x1b0] sm:$0xff]
    %v855 = vld [vmem:[%s1 + $0x1b8] sm:$0xff]
    %v856 = vld [vmem:[%s1 + $0x1c0] sm:$0x33]
    %v857 = vld [vmem:[%s1 + $0x1c8] sm:$0x33]
    %v858 = vld [vmem:[%s1 + $0x1d0] sm:$0x33]
    %v859 = vld [vmem:[%s1 + $0x1d8] sm:$0x33]
    %v860 = vld [vmem:[%s1 + $0x1e0] sm:$0x33]
    %v861 = vld [vmem:[%s1 + $0x1e8] sm:$0x33]
    %v862 = vld [vmem:[%s1 + $0x1f0] sm:$0x33]
    %v863 = vld [vmem:[%s1 + $0x1f8] sm:$0x33]
    %v864 = vunpack.c.l.bf16 %v832
    %v865 = vunpack.c.h.bf16 %v832
    %v866 = vunpack.c.l.bf16 %v833
    %v867 = vunpack.c.h.bf16 %v833
    %v868 = vunpack.c.l.bf16 %v834
    %v869 = vunpack.c.h.bf16 %v834
    %v870 = vunpack.c.l.bf16 %v835
    %v871 = vunpack.c.h.bf16 %v835
    %v872 = vunpack.c.l.bf16 %v836
    %v873 = vunpack.c.h.bf16 %v836
    %v874 = vunpack.c.l.bf16 %v837
    %v875 = vunpack.c.h.bf16 %v837
    %v876 = vunpack.c.l.bf16 %v838
    %v877 = vunpack.c.h.bf16 %v838
    %v878 = vunpack.c.l.bf16 %v839
    %v879 = vunpack.c.h.bf16 %v839
    %v880 = vunpack.c.l.bf16 %v840
    %v881 = vunpack.c.h.bf16 %v840
    %v882 = vunpack.c.l.bf16 %v841
    %v883 = vunpack.c.h.bf16 %v841
    %v884 = vunpack.c.l.bf16 %v842
    %v885 = vunpack.c.h.bf16 %v842
    %v886 = vunpack.c.l.bf16 %v843
    %v887 = vunpack.c.h.bf16 %v843
    %v888 = vunpack.c.l.bf16 %v844
    %v889 = vunpack.c.h.bf16 %v844
    %v890 = vunpack.c.l.bf16 %v845
    %v891 = vunpack.c.h.bf16 %v845
    %v892 = vunpack.c.l.bf16 %v846
    %v893 = vunpack.c.h.bf16 %v846
    %v894 = vunpack.c.l.bf16 %v847
    %v895 = vunpack.c.h.bf16 %v847
    %v896 = vunpack.c.l.bf16 %v848
    %v897 = vunpack.c.h.bf16 %v848
    %v898 = vunpack.c.l.bf16 %v849
    %v899 = vunpack.c.h.bf16 %v849
    %v900 = vunpack.c.l.bf16 %v850
    %v901 = vunpack.c.h.bf16 %v850
    %v902 = vunpack.c.l.bf16 %v851
    %v903 = vunpack.c.h.bf16 %v851
    %v904 = vunpack.c.l.bf16 %v852
    %v905 = vunpack.c.h.bf16 %v852
    %v906 = vunpack.c.l.bf16 %v853
    %v907 = vunpack.c.h.bf16 %v853
    %v908 = vunpack.c.l.bf16 %v854
    %v909 = vunpack.c.h.bf16 %v854
    %v910 = vunpack.c.l.bf16 %v855
    %v911 = vunpack.c.h.bf16 %v855
    %v912 = vunpack.c.l.bf16 %v856
    %v913 = vunpack.c.h.bf16 %v856
    %v914 = vunpack.c.l.bf16 %v857
    %v915 = vunpack.c.h.bf16 %v857
    %v916 = vunpack.c.l.bf16 %v858
    %v917 = vunpack.c.h.bf16 %v858
    %v918 = vunpack.c.l.bf16 %v859
    %v919 = vunpack.c.h.bf16 %v859
    %v920 = vunpack.c.l.bf16 %v860
    %v921 = vunpack.c.h.bf16 %v860
    %v922 = vunpack.c.l.bf16 %v861
    %v923 = vunpack.c.h.bf16 %v861
    %v924 = vunpack.c.l.bf16 %v862
    %v925 = vunpack.c.h.bf16 %v862
    %v926 = vunpack.c.l.bf16 %v863
    %v927 = vunpack.c.h.bf16 %v863
    %v928 = vsel %vm157, %v880, 0.0
    %v929 = vadd.f32 %v864, %v928
    %v930 = vrot.slane %v929, 4
    %v931 = vadd.f32 %v929, %v930
    %v932 = vrot.slane %v931, 2
    %v933 = vadd.f32 %v931, %v932
    %v934 = vrot.slane %v933, 1
    %v935 = vadd.f32 %v933, %v934
    %v936 = vsel %vm157, %v881, 0.0
    %v937 = vadd.f32 %v865, %v936
    %v938 = vrot.slane %v937, 4
    %v939 = vadd.f32 %v937, %v938
    %v940 = vrot.slane %v939, 2
    %v941 = vadd.f32 %v939, %v940
    %v942 = vrot.slane %v941, 1
    %v943 = vadd.f32 %v941, %v942
    %v944 = vsel %vm157, %v882, 0.0
    %v945 = vadd.f32 %v866, %v944
    %v946 = vrot.slane %v945, 4
    %v947 = vadd.f32 %v945, %v946
    %v948 = vrot.slane %v947, 2
    %v949 = vadd.f32 %v947, %v948
    %v950 = vrot.slane %v949, 1
    %v951 = vadd.f32 %v949, %v950
    %v952 = vsel %vm157, %v883, 0.0
    %v953 = vadd.f32 %v867, %v952
    %v954 = vrot.slane %v953, 4
    %v955 = vadd.f32 %v953, %v954
    %v956 = vrot.slane %v955, 2
    %v957 = vadd.f32 %v955, %v956
    %v958 = vrot.slane %v957, 1
    %v959 = vadd.f32 %v957, %v958
    %v960 = vsel %vm157, %v884, 0.0
    %v961 = vadd.f32 %v868, %v960
    %v962 = vrot.slane %v961, 4
    %v963 = vadd.f32 %v961, %v962
    %v964 = vrot.slane %v963, 2
    %v965 = vadd.f32 %v963, %v964
    %v966 = vrot.slane %v965, 1
    %v967 = vadd.f32 %v965, %v966
    %v968 = vsel %vm157, %v885, 0.0
    %v969 = vadd.f32 %v869, %v968
    %v970 = vrot.slane %v969, 4
    %v971 = vadd.f32 %v969, %v970
    %v972 = vrot.slane %v971, 2
    %v973 = vadd.f32 %v971, %v972
    %v974 = vrot.slane %v973, 1
    %v975 = vadd.f32 %v973, %v974
    %v976 = vsel %vm157, %v886, 0.0
    %v977 = vadd.f32 %v870, %v976
    %v978 = vrot.slane %v977, 4
    %v979 = vadd.f32 %v977, %v978
    %v980 = vrot.slane %v979, 2
    %v981 = vadd.f32 %v979, %v980
    %v982 = vrot.slane %v981, 1
    %v983 = vadd.f32 %v981, %v982
    %v984 = vsel %vm157, %v887, 0.0
    %v985 = vadd.f32 %v871, %v984
    %v986 = vrot.slane %v985, 4
    %v987 = vadd.f32 %v985, %v986
    %v988 = vrot.slane %v987, 2
    %v989 = vadd.f32 %v987, %v988
    %v990 = vrot.slane %v989, 1
    %v991 = vadd.f32 %v989, %v990
    %v992 = vsel %vm157, %v888, 0.0
    %v993 = vadd.f32 %v872, %v992
    %v994 = vrot.slane %v993, 4
    %v995 = vadd.f32 %v993, %v994
    %v996 = vrot.slane %v995, 2
    %v997 = vadd.f32 %v995, %v996
    %v998 = vrot.slane %v997, 1
    %v999 = vadd.f32 %v997, %v998
    %v1000 = vsel %vm157, %v889, 0.0
    %v1001 = vadd.f32 %v873, %v1000
    %v1002 = vrot.slane %v1001, 4
    %v1003 = vadd.f32 %v1001, %v1002
    %v1004 = vrot.slane %v1003, 2
    %v1005 = vadd.f32 %v1003, %v1004
    %v1006 = vrot.slane %v1005, 1
    %v1007 = vadd.f32 %v1005, %v1006
    %v1008 = vsel %vm157, %v890, 0.0
    %v1009 = vadd.f32 %v874, %v1008
    %v1010 = vrot.slane %v1009, 4
    %v1011 = vadd.f32 %v1009, %v1010
    %v1012 = vrot.slane %v1011, 2
    %v1013 = vadd.f32 %v1011, %v1012
    %v1014 = vrot.slane %v1013, 1
    %v1015 = vadd.f32 %v1013, %v1014
    %v1016 = vsel %vm157, %v891, 0.0
    %v1017 = vadd.f32 %v875, %v1016
    %v1018 = vrot.slane %v1017, 4
    %v1019 = vadd.f32 %v1017, %v1018
    %v1020 = vrot.slane %v1019, 2
    %v1021 = vadd.f32 %v1019, %v1020
    %v1022 = vrot.slane %v1021, 1
    %v1023 = vadd.f32 %v1021, %v1022
    %v1024 = vsel %vm157, %v892, 0.0
    %v1025 = vadd.f32 %v876, %v1024
    %v1026 = vrot.slane %v1025, 4
    %v1027 = vadd.f32 %v1025, %v1026
    %v1028 = vrot.slane %v1027, 2
    %v1029 = vadd.f32 %v1027, %v1028
    %v1030 = vrot.slane %v1029, 1
    %v1031 = vadd.f32 %v1029, %v1030
    %v1032 = vsel %vm157, %v893, 0.0
    %v1033 = vadd.f32 %v877, %v1032
    %v1034 = vrot.slane %v1033, 4
    %v1035 = vadd.f32 %v1033, %v1034
    %v1036 = vrot.slane %v1035, 2
    %v1037 = vadd.f32 %v1035, %v1036
    %v1038 = vrot.slane %v1037, 1
    %v1039 = vadd.f32 %v1037, %v1038
    %v1040 = vsel %vm157, %v894, 0.0
    %v1041 = vadd.f32 %v878, %v1040
    %v1042 = vrot.slane %v1041, 4
    %v1043 = vadd.f32 %v1041, %v1042
    %v1044 = vrot.slane %v1043, 2
    %v1045 = vadd.f32 %v1043, %v1044
    %v1046 = vrot.slane %v1045, 1
    %v1047 = vadd.f32 %v1045, %v1046
    %v1048 = vsel %vm157, %v895, 0.0
    %v1049 = vadd.f32 %v879, %v1048
    %v1050 = vrot.slane %v1049, 4
    %v1051 = vadd.f32 %v1049, %v1050
    %v1052 = vrot.slane %v1051, 2
    %v1053 = vadd.f32 %v1051, %v1052
    %v1054 = vrot.slane %v1053, 1
    %v1055 = vadd.f32 %v1053, %v1054
    %v1056 = vsel %vm157, %v912, 0.0
    %v1057 = vadd.f32 %v896, %v1056
    %v1058 = vrot.slane %v1057, 4
    %v1059 = vadd.f32 %v1057, %v1058
    %v1060 = vrot.slane %v1059, 2
    %v1061 = vadd.f32 %v1059, %v1060
    %v1062 = vrot.slane %v1061, 1
    %v1063 = vadd.f32 %v1061, %v1062
    %v1064 = vsel %vm157, %v913, 0.0
    %v1065 = vadd.f32 %v897, %v1064
    %v1066 = vrot.slane %v1065, 4
    %v1067 = vadd.f32 %v1065, %v1066
    %v1068 = vrot.slane %v1067, 2
    %v1069 = vadd.f32 %v1067, %v1068
    %v1070 = vrot.slane %v1069, 1
    %v1071 = vadd.f32 %v1069, %v1070
    %v1072 = vsel %vm157, %v914, 0.0
    %v1073 = vadd.f32 %v898, %v1072
    %v1074 = vrot.slane %v1073, 4
    %v1075 = vadd.f32 %v1073, %v1074
    %v1076 = vrot.slane %v1075, 2
    %v1077 = vadd.f32 %v1075, %v1076
    %v1078 = vrot.slane %v1077, 1
    %v1079 = vadd.f32 %v1077, %v1078
    %v1080 = vsel %vm157, %v915, 0.0
    %v1081 = vadd.f32 %v899, %v1080
    %v1082 = vrot.slane %v1081, 4
    %v1083 = vadd.f32 %v1081, %v1082
    %v1084 = vrot.slane %v1083, 2
    %v1085 = vadd.f32 %v1083, %v1084
    %v1086 = vrot.slane %v1085, 1
    %v1087 = vadd.f32 %v1085, %v1086
    %v1088 = vsel %vm157, %v916, 0.0
    %v1089 = vadd.f32 %v900, %v1088
    %v1090 = vrot.slane %v1089, 4
    %v1091 = vadd.f32 %v1089, %v1090
    %v1092 = vrot.slane %v1091, 2
    %v1093 = vadd.f32 %v1091, %v1092
    %v1094 = vrot.slane %v1093, 1
    %v1095 = vadd.f32 %v1093, %v1094
    %v1096 = vsel %vm157, %v917, 0.0
    %v1097 = vadd.f32 %v901, %v1096
    %v1098 = vrot.slane %v1097, 4
    %v1099 = vadd.f32 %v1097, %v1098
    %v1100 = vrot.slane %v1099, 2
    %v1101 = vadd.f32 %v1099, %v1100
    %v1102 = vrot.slane %v1101, 1
    %v1103 = vadd.f32 %v1101, %v1102
    %v1104 = vsel %vm157, %v918, 0.0
    %v1105 = vadd.f32 %v902, %v1104
    %v1106 = vrot.slane %v1105, 4
    %v1107 = vadd.f32 %v1105, %v1106
    %v1108 = vrot.slane %v1107, 2
    %v1109 = vadd.f32 %v1107, %v1108
    %v1110 = vrot.slane %v1109, 1
    %v1111 = vadd.f32 %v1109, %v1110
    %v1112 = vsel %vm157, %v919, 0.0
    %v1113 = vadd.f32 %v903, %v1112
    %v1114 = vrot.slane %v1113, 4
    %v1115 = vadd.f32 %v1113, %v1114
    %v1116 = vrot.slane %v1115, 2
    %v1117 = vadd.f32 %v1115, %v1116
    %v1118 = vrot.slane %v1117, 1
    %v1119 = vadd.f32 %v1117, %v1118
    %v1120 = vsel %vm157, %v920, 0.0
    %v1121 = vadd.f32 %v904, %v1120
    %v1122 = vrot.slane %v1121, 4
    %v1123 = vadd.f32 %v1121, %v1122
    %v1124 = vrot.slane %v1123, 2
    %v1125 = vadd.f32 %v1123, %v1124
    %v1126 = vrot.slane %v1125, 1
    %v1127 = vadd.f32 %v1125, %v1126
    %v1128 = vsel %vm157, %v921, 0.0
    %v1129 = vadd.f32 %v905, %v1128
    %v1130 = vrot.slane %v1129, 4
    %v1131 = vadd.f32 %v1129, %v1130
    %v1132 = vrot.slane %v1131, 2
    %v1133 = vadd.f32 %v1131, %v1132
    %v1134 = vrot.slane %v1133, 1
    %v1135 = vadd.f32 %v1133, %v1134
    %v1136 = vsel %vm157, %v922, 0.0
    %v1137 = vadd.f32 %v906, %v1136
    %v1138 = vrot.slane %v1137, 4
    %v1139 = vadd.f32 %v1137, %v1138
    %v1140 = vrot.slane %v1139, 2
    %v1141 = vadd.f32 %v1139, %v1140
    %v1142 = vrot.slane %v1141, 1
    %v1143 = vadd.f32 %v1141, %v1142
    %v1144 = vsel %vm157, %v923, 0.0
    %v1145 = vadd.f32 %v907, %v1144
    %v1146 = vrot.slane %v1145, 4
    %v1147 = vadd.f32 %v1145, %v1146
    %v1148 = vrot.slane %v1147, 2
    %v1149 = vadd.f32 %v1147, %v1148
    %v1150 = vrot.slane %v1149, 1
    %v1151 = vadd.f32 %v1149, %v1150
    %v1152 = vsel %vm157, %v924, 0.0
    %v1153 = vadd.f32 %v908, %v1152
    %v1154 = vrot.slane %v1153, 4
    %v1155 = vadd.f32 %v1153, %v1154
    %v1156 = vrot.slane %v1155, 2
    %v1157 = vadd.f32 %v1155, %v1156
    %v1158 = vrot.slane %v1157, 1
    %v1159 = vadd.f32 %v1157, %v1158
    %v1160 = vsel %vm157, %v925, 0.0
    %v1161 = vadd.f32 %v909, %v1160
    %v1162 = vrot.slane %v1161, 4
    %v1163 = vadd.f32 %v1161, %v1162
    %v1164 = vrot.slane %v1163, 2
    %v1165 = vadd.f32 %v1163, %v1164
    %v1166 = vrot.slane %v1165, 1
    %v1167 = vadd.f32 %v1165, %v1166
    %v1168 = vsel %vm157, %v926, 0.0
    %v1169 = vadd.f32 %v910, %v1168
    %v1170 = vrot.slane %v1169, 4
    %v1171 = vadd.f32 %v1169, %v1170
    %v1172 = vrot.slane %v1171, 2
    %v1173 = vadd.f32 %v1171, %v1172
    %v1174 = vrot.slane %v1173, 1
    %v1175 = vadd.f32 %v1173, %v1174
    %v1176 = vsel %vm157, %v927, 0.0
    %v1177 = vadd.f32 %v911, %v1176
    %v1178 = vrot.slane %v1177, 4
    %v1179 = vadd.f32 %v1177, %v1178
    %v1180 = vrot.slane %v1179, 2
    %v1181 = vadd.f32 %v1179, %v1180
    %v1182 = vrot.slane %v1181, 1
    %v1183 = vadd.f32 %v1181, %v1182
    %v1184 = vmul.f32 %v935, 0.083333336
    %v1185 = vmul.f32 %v943, 0.083333336
    %v1186 = vmul.f32 %v951, 0.083333336
    %v1187 = vmul.f32 %v959, 0.083333336
    %v1188 = vmul.f32 %v967, 0.083333336
    %v1189 = vmul.f32 %v975, 0.083333336
    %v1190 = vmul.f32 %v983, 0.083333336
    %v1191 = vmul.f32 %v991, 0.083333336
    %v1192 = vmul.f32 %v999, 0.083333336
    %v1193 = vmul.f32 %v1007, 0.083333336
    %v1194 = vmul.f32 %v1015, 0.083333336
    %v1195 = vmul.f32 %v1023, 0.083333336
    %v1196 = vmul.f32 %v1031, 0.083333336
    %v1197 = vmul.f32 %v1039, 0.083333336
    %v1198 = vmul.f32 %v1047, 0.083333336
    %v1199 = vmul.f32 %v1055, 0.083333336
    %v1200 = vmul.f32 %v1063, 0.083333336
    %v1201 = vmul.f32 %v1071, 0.083333336
    %v1202 = vmul.f32 %v1079, 0.083333336
    %v1203 = vmul.f32 %v1087, 0.083333336
    %v1204 = vmul.f32 %v1095, 0.083333336
    %v1205 = vmul.f32 %v1103, 0.083333336
    %v1206 = vmul.f32 %v1111, 0.083333336
    %v1207 = vmul.f32 %v1119, 0.083333336
    %v1208 = vmul.f32 %v1127, 0.083333336
    %v1209 = vmul.f32 %v1135, 0.083333336
    %v1210 = vmul.f32 %v1143, 0.083333336
    %v1211 = vmul.f32 %v1151, 0.083333336
    %v1212 = vmul.f32 %v1159, 0.083333336
    %v1213 = vmul.f32 %v1167, 0.083333336
    %v1214 = vmul.f32 %v1175, 0.083333336
    %v1215 = vmul.f32 %v1183, 0.083333336
    %v1216 = vmul.f32 %v1184, %v1184
    %v1217 = vmul.f32 %v1185, %v1185
    %v1218 = vmul.f32 %v1186, %v1186
    %v1219 = vmul.f32 %v1187, %v1187
    %v1220 = vmul.f32 %v1188, %v1188
    %v1221 = vmul.f32 %v1189, %v1189
    %v1222 = vmul.f32 %v1190, %v1190
    %v1223 = vmul.f32 %v1191, %v1191
    %v1224 = vmul.f32 %v1192, %v1192
    %v1225 = vmul.f32 %v1193, %v1193
    %v1226 = vmul.f32 %v1194, %v1194
    %v1227 = vmul.f32 %v1195, %v1195
    %v1228 = vmul.f32 %v1196, %v1196
    %v1229 = vmul.f32 %v1197, %v1197
    %v1230 = vmul.f32 %v1198, %v1198
    %v1231 = vmul.f32 %v1199, %v1199
    %v1232 = vmul.f32 %v1200, %v1200
    %v1233 = vmul.f32 %v1201, %v1201
    %v1234 = vmul.f32 %v1202, %v1202
    %v1235 = vmul.f32 %v1203, %v1203
    %v1236 = vmul.f32 %v1204, %v1204
    %v1237 = vmul.f32 %v1205, %v1205
    %v1238 = vmul.f32 %v1206, %v1206
    %v1239 = vmul.f32 %v1207, %v1207
    %v1240 = vmul.f32 %v1208, %v1208
    %v1241 = vmul.f32 %v1209, %v1209
    %v1242 = vmul.f32 %v1210, %v1210
    %v1243 = vmul.f32 %v1211, %v1211
    %v1244 = vmul.f32 %v1212, %v1212
    %v1245 = vmul.f32 %v1213, %v1213
    %v1246 = vmul.f32 %v1214, %v1214
    %v1247 = vmul.f32 %v1215, %v1215
    %v1280 = vsel %vm510, %v1232, %v1216
    %v1281 = vsel %vm510, %v1233, %v1217
    %v1282 = vsel %vm510, %v1234, %v1218
    %v1283 = vsel %vm510, %v1235, %v1219
    %v1284 = vsel %vm510, %v1236, %v1220
    %v1285 = vsel %vm510, %v1237, %v1221
    %v1286 = vsel %vm510, %v1238, %v1222
    %v1287 = vsel %vm510, %v1239, %v1223
    %v1288 = vsel %vm510, %v1240, %v1224
    %v1289 = vsel %vm510, %v1241, %v1225
    %v1290 = vsel %vm510, %v1242, %v1226
    %v1291 = vsel %vm510, %v1243, %v1227
    %v1292 = vsel %vm510, %v1244, %v1228
    %v1293 = vsel %vm510, %v1245, %v1229
    %v1294 = vsel %vm510, %v1246, %v1230
    %v1295 = vsel %vm510, %v1247, %v1231
    %v1312 = vsel %vm543, %v1280, 0.0
    %v1313 = vsel %vm543, %v1281, 0.0
    %v1314 = vadd.f32 %v1312, %v1313
    %v1315 = vsel %vm543, %v1282, 0.0
    %v1316 = vadd.f32 %v1314, %v1315
    %v1317 = vsel %vm543, %v1283, 0.0
    %v1318 = vadd.f32 %v1316, %v1317
    %v1319 = vsel %vm543, %v1284, 0.0
    %v1320 = vadd.f32 %v1318, %v1319
    %v1321 = vsel %vm543, %v1285, 0.0
    %v1322 = vadd.f32 %v1320, %v1321
    %v1323 = vsel %vm543, %v1286, 0.0
    %v1324 = vadd.f32 %v1322, %v1323
    %v1325 = vsel %vm543, %v1287, 0.0
    %v1326 = vadd.f32 %v1324, %v1325
    %v1327 = vsel %vm543, %v1288, 0.0
    %v1328 = vadd.f32 %v1326, %v1327
    %v1329 = vsel %vm543, %v1289, 0.0
    %v1330 = vadd.f32 %v1328, %v1329
    %v1331 = vsel %vm543, %v1290, 0.0
    %v1332 = vadd.f32 %v1330, %v1331
    %v1333 = vsel %vm543, %v1291, 0.0
    %v1334 = vadd.f32 %v1332, %v1333
    %v1335 = vsel %vm543, %v1292, 0.0
    %v1336 = vadd.f32 %v1334, %v1335
    %v1337 = vsel %vm543, %v1293, 0.0
    %v1338 = vadd.f32 %v1336, %v1337
    %v1339 = vsel %vm543, %v1294, 0.0
    %v1340 = vadd.f32 %v1338, %v1339
    %v1341 = vsel %vm543, %v1295, 0.0
    %v1342 = vadd.f32 %v1340, %v1341
    %1343 = vadd.xlane.f32.xlu0 %v1342
    %v1344 = vpop.xlane.xlu0 %1343
    %v1345 = vrsqrt.pop %v1344
    %v1346 = vmul.f32 %v1345, %v1344
    %v1347 = vmul.f32 %v1346, %v1345
    %v1348 = vmul.f32 0.5, %v1347
    %v1349 = vsub.f32 1.5, %v1348
    %v1350 = vmul.f32 %v1345, %v1349
    %vm1351 = vweird.f32 %v1344
    %vm1352 = vweird.f32 %v1345
    %vm1353 = vmor %vm1351, %vm1352
    %v1354 = vsel %vm1353, %v1345, %v1350
    %v1356 = vrot.slane %v1354, 1
    %v1359 = vmul.f32 %v1184, %v1354
    %v1360 = vmul.f32 %v1185, %v1354
    %v1361 = vmul.f32 %v1186, %v1354
    %v1362 = vmul.f32 %v1187, %v1354
    %v1363 = vmul.f32 %v1188, %v1354
    %v1364 = vmul.f32 %v1189, %v1354
    %v1365 = vmul.f32 %v1190, %v1354
    %v1366 = vmul.f32 %v1191, %v1354
    %v1367 = vmul.f32 %v1192, %v1354
    %v1368 = vmul.f32 %v1193, %v1354
    %v1369 = vmul.f32 %v1194, %v1354
    %v1370 = vmul.f32 %v1195, %v1354
    %v1371 = vmul.f32 %v1196, %v1354
    %v1372 = vmul.f32 %v1197, %v1354
    %v1373 = vmul.f32 %v1198, %v1354
    %v1374 = vmul.f32 %v1199, %v1354
    %v1375 = vmul.f32 %v1200, %v1356
    %v1376 = vmul.f32 %v1201, %v1356
    %v1377 = vmul.f32 %v1202, %v1356
    %v1378 = vmul.f32 %v1203, %v1356
    %v1379 = vmul.f32 %v1204, %v1356
    %v1380 = vmul.f32 %v1205, %v1356
    %v1381 = vmul.f32 %v1206, %v1356
    %v1382 = vmul.f32 %v1207, %v1356
    %v1383 = vmul.f32 %v1208, %v1356
    %v1384 = vmul.f32 %v1209, %v1356
    %v1385 = vmul.f32 %v1210, %v1356
    %v1386 = vmul.f32 %v1211, %v1356
    %v1387 = vmul.f32 %v1212, %v1356
    %v1388 = vmul.f32 %v1213, %v1356
    %v1389 = vmul.f32 %v1214, %v1356
    %v1390 = vmul.f32 %v1215, %v1356
    %v1423 = vrot.slane %v1360, 4
    %v1424 = vrot.slane %v1362, 4
    %v1425 = vrot.slane %v1364, 4
    %v1426 = vrot.slane %v1366, 4
    %v1427 = vrot.slane %v1368, 4
    %v1428 = vrot.slane %v1370, 4
    %v1429 = vrot.slane %v1372, 4
    %v1430 = vrot.slane %v1374, 4
    %v1431 = vrot.slane %v1376, 4
    %v1432 = vrot.slane %v1378, 4
    %v1433 = vrot.slane %v1380, 4
    %v1434 = vrot.slane %v1382, 4
    %v1435 = vrot.slane %v1384, 4
    %v1436 = vrot.slane %v1386, 4
    %v1437 = vrot.slane %v1388, 4
    %v1438 = vrot.slane %v1390, 4
    %v1439 = vsel %vm157, %v1359, %v1423
    %v1440 = vsel %vm157, %v1361, %v1424
    %v1441 = vsel %vm157, %v1363, %v1425
    %v1442 = vsel %vm157, %v1365, %v1426
    %v1443 = vsel %vm157, %v1367, %v1427
    %v1444 = vsel %vm157, %v1369, %v1428
    %v1445 = vsel %vm157, %v1371, %v1429
    %v1446 = vsel %vm157, %v1373, %v1430
    %v1447 = vsel %vm157, %v1375, %v1431
    %v1448 = vsel %vm157, %v1377, %v1432
    %v1449 = vsel %vm157, %v1379, %v1433
    %v1450 = vsel %vm157, %v1381, %v1434
    %v1451 = vsel %vm157, %v1383, %v1435
    %v1452 = vsel %vm157, %v1385, %v1436
    %v1453 = vsel %vm157, %v1387, %v1437
    %v1454 = vsel %vm157, %v1389, %v1438
    %v1455 = vrot.slane %v1439, 6
    %v1456 = vrot.slane %v1447, 5
    %vm1457 = vcmask 1043459
    %v1458 = vsel %vm1457, %v1456, %v1455
    %vm1459 = vcmask 1047559
    %v1460 = vsel %vm1459, %v1456, %v1458
    %v1461 = vrot.slane %v1440, 6
    %v1462 = vrot.slane %v1448, 5
    %v1463 = vsel %vm1457, %v1462, %v1461
    %v1464 = vsel %vm1459, %v1462, %v1463
    %v1465 = vrot.slane %v1441, 6
    %v1466 = vrot.slane %v1449, 5
    %v1467 = vsel %vm1457, %v1466, %v1465
    %v1468 = vsel %vm1459, %v1466, %v1467
    %v1469 = vrot.slane %v1442, 6
    %v1470 = vrot.slane %v1450, 5
    %v1471 = vsel %vm1457, %v1470, %v1469
    %v1472 = vsel %vm1459, %v1470, %v1471
    %v1473 = vrot.slane %v1443, 6
    %v1474 = vrot.slane %v1451, 5
    %v1475 = vsel %vm1457, %v1474, %v1473
    %v1476 = vsel %vm1459, %v1474, %v1475
    %v1477 = vrot.slane %v1444, 6
    %v1478 = vrot.slane %v1452, 5
    %v1479 = vsel %vm1457, %v1478, %v1477
    %v1480 = vsel %vm1459, %v1478, %v1479
    %v1481 = vrot.slane %v1445, 6
    %v1482 = vrot.slane %v1453, 5
    %v1483 = vsel %vm1457, %v1482, %v1481
    %v1484 = vsel %vm1459, %v1482, %v1483
    %v1485 = vrot.slane %v1446, 6
    %v1486 = vrot.slane %v1454, 5
    %v1487 = vsel %vm1457, %v1486, %v1485
    %v1488 = vsel %vm1459, %v1486, %v1487
    %1497 = vst [vmem:[#allocation3] sm:$0xcc] %v1460
    %1498 = vst [vmem:[#allocation3 + $0x8] sm:$0xcc] %v1464
    %1499 = vst [vmem:[#allocation3 + $0x10] sm:$0xcc] %v1468
    %1500 = vst [vmem:[#allocation3 + $0x18] sm:$0xcc] %v1472
    %1501 = vst [vmem:[#allocation3 + $0x20] sm:$0xcc] %v1476
    %1502 = vst [vmem:[#allocation3 + $0x28] sm:$0xcc] %v1480
    %1503 = vst [vmem:[#allocation3 + $0x30] sm:$0xcc] %v1484
    %1504 = vst [vmem:[#allocation3 + $0x38] sm:$0xcc] %v1488
    %v1505 = vpack.c.bf16 %v1185, %v1184
    %v1506 = vpack.c.bf16 %v1187, %v1186
    %v1507 = vpack.c.bf16 %v1189, %v1188
    %v1508 = vpack.c.bf16 %v1191, %v1190
    %v1509 = vpack.c.bf16 %v1193, %v1192
    %v1510 = vpack.c.bf16 %v1195, %v1194
    %v1511 = vpack.c.bf16 %v1197, %v1196
    %v1512 = vpack.c.bf16 %v1199, %v1198
    %v1513 = vpack.c.bf16 %v1201, %v1200
    %v1514 = vpack.c.bf16 %v1203, %v1202
    %v1515 = vpack.c.bf16 %v1205, %v1204
    %v1516 = vpack.c.bf16 %v1207, %v1206
    %v1517 = vpack.c.bf16 %v1209, %v1208
    %v1518 = vpack.c.bf16 %v1211, %v1210
    %v1519 = vpack.c.bf16 %v1213, %v1212
    %v1520 = vpack.c.bf16 %v1215, %v1214
    %v1537 = vunpack.c.l.b16 %v1505
    %v1538 = vunpack.c.h.b16 %v1505
    %v1539 = vunpack.c.l.b16 %v1506
    %v1540 = vunpack.c.h.b16 %v1506
    %v1541 = vunpack.c.l.b16 %v1507
    %v1542 = vunpack.c.h.b16 %v1507
    %v1543 = vunpack.c.l.b16 %v1508
    %v1544 = vunpack.c.h.b16 %v1508
    %v1545 = vunpack.c.l.b16 %v1509
    %v1546 = vunpack.c.h.b16 %v1509
    %v1547 = vunpack.c.l.b16 %v1510
    %v1548 = vunpack.c.h.b16 %v1510
    %v1549 = vunpack.c.l.b16 %v1511
    %v1550 = vunpack.c.h.b16 %v1511
    %v1551 = vunpack.c.l.b16 %v1512
    %v1552 = vunpack.c.h.b16 %v1512
    %v1553 = vunpack.c.l.b16 %v1513
    %v1554 = vunpack.c.h.b16 %v1513
    %v1555 = vunpack.c.l.b16 %v1514
    %v1556 = vunpack.c.h.b16 %v1514
    %v1557 = vunpack.c.l.b16 %v1515
    %v1558 = vunpack.c.h.b16 %v1515
    %v1559 = vunpack.c.l.b16 %v1516
    %v1560 = vunpack.c.h.b16 %v1516
    %v1561 = vunpack.c.l.b16 %v1517
    %v1562 = vunpack.c.h.b16 %v1517
    %v1563 = vunpack.c.l.b16 %v1518
    %v1564 = vunpack.c.h.b16 %v1518
    %v1565 = vunpack.c.l.b16 %v1519
    %v1566 = vunpack.c.h.b16 %v1519
    %v1567 = vunpack.c.l.b16 %v1520
    %v1568 = vunpack.c.h.b16 %v1520
    %v1569 = vsel %vm1457, %v1553, %v1537
    %v1570 = vsel %vm1457, %v1554, %v1538
    %v1571 = vsel %vm1457, %v1555, %v1539
    %v1572 = vsel %vm1457, %v1556, %v1540
    %v1573 = vsel %vm1457, %v1557, %v1541
    %v1574 = vsel %vm1457, %v1558, %v1542
    %v1575 = vsel %vm1457, %v1559, %v1543
    %v1576 = vsel %vm1457, %v1560, %v1544
    %v1577 = vsel %vm1457, %v1561, %v1545
    %v1578 = vsel %vm1457, %v1562, %v1546
    %v1579 = vsel %vm1457, %v1563, %v1547
    %v1580 = vsel %vm1457, %v1564, %v1548
    %v1581 = vsel %vm1457, %v1565, %v1549
    %v1582 = vsel %vm1457, %v1566, %v1550
    %v1583 = vsel %vm1457, %v1567, %v1551
    %v1584 = vsel %vm1457, %v1568, %v1552
    %v1585 = vpack.c.b16 %v1570, %v1569
    %v1586 = vpack.c.b16 %v1572, %v1571
    %v1587 = vpack.c.b16 %v1574, %v1573
    %v1588 = vpack.c.b16 %v1576, %v1575
    %v1589 = vpack.c.b16 %v1578, %v1577
    %v1590 = vpack.c.b16 %v1580, %v1579
    %v1591 = vpack.c.b16 %v1582, %v1581
    %v1592 = vpack.c.b16 %v1584, %v1583
    %1601 = vst [vmem:[#allocation2] sm:$0x22] %v1585
    %1602 = vst [vmem:[#allocation2 + $0x8] sm:$0x22] %v1586
    %1603 = vst [vmem:[#allocation2 + $0x10] sm:$0x22] %v1587
    %1604 = vst [vmem:[#allocation2 + $0x18] sm:$0x22] %v1588
    %1605 = vst [vmem:[#allocation2 + $0x20] sm:$0x22] %v1589
    %1606 = vst [vmem:[#allocation2 + $0x28] sm:$0x22] %v1590
    %1607 = vst [vmem:[#allocation2 + $0x30] sm:$0x22] %v1591
    %1608 = vst [vmem:[#allocation2 + $0x38] sm:$0x22] %v1592
    %v1609 = vld [vmem:[%s0 + $0x40] sm:$0xcc]
    %v1610 = vld [vmem:[%s0 + $0x48] sm:$0xcc]
    %v1611 = vld [vmem:[%s0 + $0x50] sm:$0xcc]
    %v1612 = vld [vmem:[%s0 + $0x58] sm:$0xcc]
    %v1613 = vld [vmem:[%s0 + $0x60] sm:$0xcc]
    %v1614 = vld [vmem:[%s0 + $0x68] sm:$0xcc]
    %v1615 = vld [vmem:[%s0 + $0x70] sm:$0xcc]
    %v1616 = vld [vmem:[%s0 + $0x78] sm:$0xcc]
    %v1617 = vld [vmem:[%s0 + $0x80] sm:$0xff]
    %v1618 = vld [vmem:[%s0 + $0x88] sm:$0xff]
    %v1619 = vld [vmem:[%s0 + $0x90] sm:$0xff]
    %v1620 = vld [vmem:[%s0 + $0x98] sm:$0xff]
    %v1621 = vld [vmem:[%s0 + $0xa0] sm:$0xff]
    %v1622 = vld [vmem:[%s0 + $0xa8] sm:$0xff]
    %v1623 = vld [vmem:[%s0 + $0xb0] sm:$0xff]
    %v1624 = vld [vmem:[%s0 + $0xb8] sm:$0xff]
    %v1625 = vld [vmem:[%s0 + $0x1c0] sm:$0xcc]
    %v1626 = vld [vmem:[%s0 + $0x1c8] sm:$0xcc]
    %v1627 = vld [vmem:[%s0 + $0x1d0] sm:$0xcc]
    %v1628 = vld [vmem:[%s0 + $0x1d8] sm:$0xcc]
    %v1629 = vld [vmem:[%s0 + $0x1e0] sm:$0xcc]
    %v1630 = vld [vmem:[%s0 + $0x1e8] sm:$0xcc]
    %v1631 = vld [vmem:[%s0 + $0x1f0] sm:$0xcc]
    %v1632 = vld [vmem:[%s0 + $0x1f8] sm:$0xcc]
    %v1633 = vld [vmem:[%s0 + $0x200] sm:$0xff]
    %v1634 = vld [vmem:[%s0 + $0x208] sm:$0xff]
    %v1635 = vld [vmem:[%s0 + $0x210] sm:$0xff]
    %v1636 = vld [vmem:[%s0 + $0x218] sm:$0xff]
    %v1637 = vld [vmem:[%s0 + $0x220] sm:$0xff]
    %v1638 = vld [vmem:[%s0 + $0x228] sm:$0xff]
    %v1639 = vld [vmem:[%s0 + $0x230] sm:$0xff]
    %v1640 = vld [vmem:[%s0 + $0x238] sm:$0xff]
    %v1641 = vunpack.c.l.bf16 %v1609
    %v1642 = vunpack.c.h.bf16 %v1609
    %v1643 = vunpack.c.l.bf16 %v1610
    %v1644 = vunpack.c.h.bf16 %v1610
    %v1645 = vunpack.c.l.bf16 %v1611
    %v1646 = vunpack.c.h.bf16 %v1611
    %v1647 = vunpack.c.l.bf16 %v1612
    %v1648 = vunpack.c.h.bf16 %v1612
    %v1649 = vunpack.c.l.bf16 %v1613
    %v1650 = vunpack.c.h.bf16 %v1613
    %v1651 = vunpack.c.l.bf16 %v1614
    %v1652 = vunpack.c.h.bf16 %v1614
    %v1653 = vunpack.c.l.bf16 %v1615
    %v1654 = vunpack.c.h.bf16 %v1615
    %v1655 = vunpack.c.l.bf16 %v1616
    %v1656 = vunpack.c.h.bf16 %v1616
    %v1657 = vunpack.c.l.bf16 %v1617
    %v1658 = vunpack.c.h.bf16 %v1617
    %v1659 = vunpack.c.l.bf16 %v1618
    %v1660 = vunpack.c.h.bf16 %v1618
    %v1661 = vunpack.c.l.bf16 %v1619
    %v1662 = vunpack.c.h.bf16 %v1619
    %v1663 = vunpack.c.l.bf16 %v1620
    %v1664 = vunpack.c.h.bf16 %v1620
    %v1665 = vunpack.c.l.bf16 %v1621
    %v1666 = vunpack.c.h.bf16 %v1621
    %v1667 = vunpack.c.l.bf16 %v1622
    %v1668 = vunpack.c.h.bf16 %v1622
    %v1669 = vunpack.c.l.bf16 %v1623
    %v1670 = vunpack.c.h.bf16 %v1623
    %v1671 = vunpack.c.l.bf16 %v1624
    %v1672 = vunpack.c.h.bf16 %v1624
    %v1673 = vunpack.c.l.bf16 %v1625
    %v1674 = vunpack.c.h.bf16 %v1625
    %v1675 = vunpack.c.l.bf16 %v1626
    %v1676 = vunpack.c.h.bf16 %v1626
    %v1677 = vunpack.c.l.bf16 %v1627
    %v1678 = vunpack.c.h.bf16 %v1627
    %v1679 = vunpack.c.l.bf16 %v1628
    %v1680 = vunpack.c.h.bf16 %v1628
    %v1681 = vunpack.c.l.bf16 %v1629
    %v1682 = vunpack.c.h.bf16 %v1629
    %v1683 = vunpack.c.l.bf16 %v1630
    %v1684 = vunpack.c.h.bf16 %v1630
    %v1685 = vunpack.c.l.bf16 %v1631
    %v1686 = vunpack.c.h.bf16 %v1631
    %v1687 = vunpack.c.l.bf16 %v1632
    %v1688 = vunpack.c.h.bf16 %v1632
    %v1689 = vunpack.c.l.bf16 %v1633
    %v1690 = vunpack.c.h.bf16 %v1633
    %v1691 = vunpack.c.l.bf16 %v1634
    %v1692 = vunpack.c.h.bf16 %v1634
    %v1693 = vunpack.c.l.bf16 %v1635
    %v1694 = vunpack.c.h.bf16 %v1635
    %v1695 = vunpack.c.l.bf16 %v1636
    %v1696 = vunpack.c.h.bf16 %v1636
    %v1697 = vunpack.c.l.bf16 %v1637
    %v1698 = vunpack.c.h.bf16 %v1637
    %v1699 = vunpack.c.l.bf16 %v1638
    %v1700 = vunpack.c.h.bf16 %v1638
    %v1701 = vunpack.c.l.bf16 %v1639
    %v1702 = vunpack.c.h.bf16 %v1639
    %v1703 = vunpack.c.l.bf16 %v1640
    %v1704 = vunpack.c.h.bf16 %v1640
    %v1769 = vrot.slane %v1641, 4
    %v1770 = vrot.slane %v1657, 4
    %v1771 = vsel %vm157, %v1769, %v1770
    %v1772 = vrot.slane %v1642, 4
    %v1773 = vrot.slane %v1658, 4
    %v1774 = vsel %vm157, %v1772, %v1773
    %v1775 = vrot.slane %v1643, 4
    %v1776 = vrot.slane %v1659, 4
    %v1777 = vsel %vm157, %v1775, %v1776
    %v1778 = vrot.slane %v1644, 4
    %v1779 = vrot.slane %v1660, 4
    %v1780 = vsel %vm157, %v1778, %v1779
    %v1781 = vrot.slane %v1645, 4
    %v1782 = vrot.slane %v1661, 4
    %v1783 = vsel %vm157, %v1781, %v1782
    %v1784 = vrot.slane %v1646, 4
    %v1785 = vrot.slane %v1662, 4
    %v1786 = vsel %vm157, %v1784, %v1785
    %v1787 = vrot.slane %v1647, 4
    %v1788 = vrot.slane %v1663, 4
    %v1789 = vsel %vm157, %v1787, %v1788
    %v1790 = vrot.slane %v1648, 4
    %v1791 = vrot.slane %v1664, 4
    %v1792 = vsel %vm157, %v1790, %v1791
    %v1793 = vrot.slane %v1649, 4
    %v1794 = vrot.slane %v1665, 4
    %v1795 = vsel %vm157, %v1793, %v1794
    %v1796 = vrot.slane %v1650, 4
    %v1797 = vrot.slane %v1666, 4
    %v1798 = vsel %vm157, %v1796, %v1797
    %v1799 = vrot.slane %v1651, 4
    %v1800 = vrot.slane %v1667, 4
    %v1801 = vsel %vm157, %v1799, %v1800
    %v1802 = vrot.slane %v1652, 4
    %v1803 = vrot.slane %v1668, 4
    %v1804 = vsel %vm157, %v1802, %v1803
    %v1805 = vrot.slane %v1653, 4
    %v1806 = vrot.slane %v1669, 4
    %v1807 = vsel %vm157, %v1805, %v1806
    %v1808 = vrot.slane %v1654, 4
    %v1809 = vrot.slane %v1670, 4
    %v1810 = vsel %vm157, %v1808, %v1809
    %v1811 = vrot.slane %v1655, 4
    %v1812 = vrot.slane %v1671, 4
    %v1813 = vsel %vm157, %v1811, %v1812
    %v1814 = vrot.slane %v1656, 4
    %v1815 = vrot.slane %v1672, 4
    %v1816 = vsel %vm157, %v1814, %v1815
    %v1817 = vrot.slane %v1673, 4
    %v1818 = vrot.slane %v1689, 4
    %v1819 = vsel %vm157, %v1817, %v1818
    %v1820 = vrot.slane %v1674, 4
    %v1821 = vrot.slane %v1690, 4
    %v1822 = vsel %vm157, %v1820, %v1821
    %v1823 = vrot.slane %v1675, 4
    %v1824 = vrot.slane %v1691, 4
    %v1825 = vsel %vm157, %v1823, %v1824
    %v1826 = vrot.slane %v1676, 4
    %v1827 = vrot.slane %v1692, 4
    %v1828 = vsel %vm157, %v1826, %v1827
    %v1829 = vrot.slane %v1677, 4
    %v1830 = vrot.slane %v1693, 4
    %v1831 = vsel %vm157, %v1829, %v1830
    %v1832 = vrot.slane %v1678, 4
    %v1833 = vrot.slane %v1694, 4
    %v1834 = vsel %vm157, %v1832, %v1833
    %v1835 = vrot.slane %v1679, 4
    %v1836 = vrot.slane %v1695, 4
    %v1837 = vsel %vm157, %v1835, %v1836
    %v1838 = vrot.slane %v1680, 4
    %v1839 = vrot.slane %v1696, 4
    %v1840 = vsel %vm157, %v1838, %v1839
    %v1841 = vrot.slane %v1681, 4
    %v1842 = vrot.slane %v1697, 4
    %v1843 = vsel %vm157, %v1841, %v1842
    %v1844 = vrot.slane %v1682, 4
    %v1845 = vrot.slane %v1698, 4
    %v1846 = vsel %vm157, %v1844, %v1845
    %v1847 = vrot.slane %v1683, 4
    %v1848 = vrot.slane %v1699, 4
    %v1849 = vsel %vm157, %v1847, %v1848
    %v1850 = vrot.slane %v1684, 4
    %v1851 = vrot.slane %v1700, 4
    %v1852 = vsel %vm157, %v1850, %v1851
    %v1853 = vrot.slane %v1685, 4
    %v1854 = vrot.slane %v1701, 4
    %v1855 = vsel %vm157, %v1853, %v1854
    %v1856 = vrot.slane %v1686, 4
    %v1857 = vrot.slane %v1702, 4
    %v1858 = vsel %vm157, %v1856, %v1857
    %v1859 = vrot.slane %v1687, 4
    %v1860 = vrot.slane %v1703, 4
    %v1861 = vsel %vm157, %v1859, %v1860
    %v1862 = vrot.slane %v1688, 4
    %v1863 = vrot.slane %v1704, 4
    %v1864 = vsel %vm157, %v1862, %v1863
    %v1929 = vsel %vm157, %v1770, 0.0
    %v1930 = vadd.f32 %v1771, %v1929
    %v1931 = vrot.slane %v1930, 4
    %v1932 = vadd.f32 %v1930, %v1931
    %v1933 = vrot.slane %v1932, 2
    %v1934 = vadd.f32 %v1932, %v1933
    %v1935 = vrot.slane %v1934, 1
    %v1936 = vadd.f32 %v1934, %v1935
    %v1937 = vsel %vm157, %v1773, 0.0
    %v1938 = vadd.f32 %v1774, %v1937
    %v1939 = vrot.slane %v1938, 4
    %v1940 = vadd.f32 %v1938, %v1939
    %v1941 = vrot.slane %v1940, 2
    %v1942 = vadd.f32 %v1940, %v1941
    %v1943 = vrot.slane %v1942, 1
    %v1944 = vadd.f32 %v1942, %v1943
    %v1945 = vsel %vm157, %v1776, 0.0
    %v1946 = vadd.f32 %v1777, %v1945
    %v1947 = vrot.slane %v1946, 4
    %v1948 = vadd.f32 %v1946, %v1947
    %v1949 = vrot.slane %v1948, 2
    %v1950 = vadd.f32 %v1948, %v1949
    %v1951 = vrot.slane %v1950, 1
    %v1952 = vadd.f32 %v1950, %v1951
    %v1953 = vsel %vm157, %v1779, 0.0
    %v1954 = vadd.f32 %v1780, %v1953
    %v1955 = vrot.slane %v1954, 4
    %v1956 = vadd.f32 %v1954, %v1955
    %v1957 = vrot.slane %v1956, 2
    %v1958 = vadd.f32 %v1956, %v1957
    %v1959 = vrot.slane %v1958, 1
    %v1960 = vadd.f32 %v1958, %v1959
    %v1961 = vsel %vm157, %v1782, 0.0
    %v1962 = vadd.f32 %v1783, %v1961
    %v1963 = vrot.slane %v1962, 4
    %v1964 = vadd.f32 %v1962, %v1963
    %v1965 = vrot.slane %v1964, 2
    %v1966 = vadd.f32 %v1964, %v1965
    %v1967 = vrot.slane %v1966, 1
    %v1968 = vadd.f32 %v1966, %v1967
    %v1969 = vsel %vm157, %v1785, 0.0
    %v1970 = vadd.f32 %v1786, %v1969
    %v1971 = vrot.slane %v1970, 4
    %v1972 = vadd.f32 %v1970, %v1971
    %v1973 = vrot.slane %v1972, 2
    %v1974 = vadd.f32 %v1972, %v1973
    %v1975 = vrot.slane %v1974, 1
    %v1976 = vadd.f32 %v1974, %v1975
    %v1977 = vsel %vm157, %v1788, 0.0
    %v1978 = vadd.f32 %v1789, %v1977
    %v1979 = vrot.slane %v1978, 4
    %v1980 = vadd.f32 %v1978, %v1979
    %v1981 = vrot.slane %v1980, 2
    %v1982 = vadd.f32 %v1980, %v1981
    %v1983 = vrot.slane %v1982, 1
    %v1984 = vadd.f32 %v1982, %v1983
    %v1985 = vsel %vm157, %v1791, 0.0
    %v1986 = vadd.f32 %v1792, %v1985
    %v1987 = vrot.slane %v1986, 4
    %v1988 = vadd.f32 %v1986, %v1987
    %v1989 = vrot.slane %v1988, 2
    %v1990 = vadd.f32 %v1988, %v1989
    %v1991 = vrot.slane %v1990, 1
    %v1992 = vadd.f32 %v1990, %v1991
    %v1993 = vsel %vm157, %v1794, 0.0
    %v1994 = vadd.f32 %v1795, %v1993
    %v1995 = vrot.slane %v1994, 4
    %v1996 = vadd.f32 %v1994, %v1995
    %v1997 = vrot.slane %v1996, 2
    %v1998 = vadd.f32 %v1996, %v1997
    %v1999 = vrot.slane %v1998, 1
    %v2000 = vadd.f32 %v1998, %v1999
    %v2001 = vsel %vm157, %v1797, 0.0
    %v2002 = vadd.f32 %v1798, %v2001
    %v2003 = vrot.slane %v2002, 4
    %v2004 = vadd.f32 %v2002, %v2003
    %v2005 = vrot.slane %v2004, 2
    %v2006 = vadd.f32 %v2004, %v2005
    %v2007 = vrot.slane %v2006, 1
    %v2008 = vadd.f32 %v2006, %v2007
    %v2009 = vsel %vm157, %v1800, 0.0
    %v2010 = vadd.f32 %v1801, %v2009
    %v2011 = vrot.slane %v2010, 4
    %v2012 = vadd.f32 %v2010, %v2011
    %v2013 = vrot.slane %v2012, 2
    %v2014 = vadd.f32 %v2012, %v2013
    %v2015 = vrot.slane %v2014, 1
    %v2016 = vadd.f32 %v2014, %v2015
    %v2017 = vsel %vm157, %v1803, 0.0
    %v2018 = vadd.f32 %v1804, %v2017
    %v2019 = vrot.slane %v2018, 4
    %v2020 = vadd.f32 %v2018, %v2019
    %v2021 = vrot.slane %v2020, 2
    %v2022 = vadd.f32 %v2020, %v2021
    %v2023 = vrot.slane %v2022, 1
    %v2024 = vadd.f32 %v2022, %v2023
    %v2025 = vsel %vm157, %v1806, 0.0
    %v2026 = vadd.f32 %v1807, %v2025
    %v2027 = vrot.slane %v2026, 4
    %v2028 = vadd.f32 %v2026, %v2027
    %v2029 = vrot.slane %v2028, 2
    %v2030 = vadd.f32 %v2028, %v2029
    %v2031 = vrot.slane %v2030, 1
    %v2032 = vadd.f32 %v2030, %v2031
    %v2033 = vsel %vm157, %v1809, 0.0
    %v2034 = vadd.f32 %v1810, %v2033
    %v2035 = vrot.slane %v2034, 4
    %v2036 = vadd.f32 %v2034, %v2035
    %v2037 = vrot.slane %v2036, 2
    %v2038 = vadd.f32 %v2036, %v2037
    %v2039 = vrot.slane %v2038, 1
    %v2040 = vadd.f32 %v2038, %v2039
    %v2041 = vsel %vm157, %v1812, 0.0
    %v2042 = vadd.f32 %v1813, %v2041
    %v2043 = vrot.slane %v2042, 4
    %v2044 = vadd.f32 %v2042, %v2043
    %v2045 = vrot.slane %v2044, 2
    %v2046 = vadd.f32 %v2044, %v2045
    %v2047 = vrot.slane %v2046, 1
    %v2048 = vadd.f32 %v2046, %v2047
    %v2049 = vsel %vm157, %v1815, 0.0
    %v2050 = vadd.f32 %v1816, %v2049
    %v2051 = vrot.slane %v2050, 4
    %v2052 = vadd.f32 %v2050, %v2051
    %v2053 = vrot.slane %v2052, 2
    %v2054 = vadd.f32 %v2052, %v2053
    %v2055 = vrot.slane %v2054, 1
    %v2056 = vadd.f32 %v2054, %v2055
    %v2057 = vsel %vm157, %v1818, 0.0
    %v2058 = vadd.f32 %v1819, %v2057
    %v2059 = vrot.slane %v2058, 4
    %v2060 = vadd.f32 %v2058, %v2059
    %v2061 = vrot.slane %v2060, 2
    %v2062 = vadd.f32 %v2060, %v2061
    %v2063 = vrot.slane %v2062, 1
    %v2064 = vadd.f32 %v2062, %v2063
    %v2065 = vsel %vm157, %v1821, 0.0
    %v2066 = vadd.f32 %v1822, %v2065
    %v2067 = vrot.slane %v2066, 4
    %v2068 = vadd.f32 %v2066, %v2067
    %v2069 = vrot.slane %v2068, 2
    %v2070 = vadd.f32 %v2068, %v2069
    %v2071 = vrot.slane %v2070, 1
    %v2072 = vadd.f32 %v2070, %v2071
    %v2073 = vsel %vm157, %v1824, 0.0
    %v2074 = vadd.f32 %v1825, %v2073
    %v2075 = vrot.slane %v2074, 4
    %v2076 = vadd.f32 %v2074, %v2075
    %v2077 = vrot.slane %v2076, 2
    %v2078 = vadd.f32 %v2076, %v2077
    %v2079 = vrot.slane %v2078, 1
    %v2080 = vadd.f32 %v2078, %v2079
    %v2081 = vsel %vm157, %v1827, 0.0
    %v2082 = vadd.f32 %v1828, %v2081
    %v2083 = vrot.slane %v2082, 4
    %v2084 = vadd.f32 %v2082, %v2083
    %v2085 = vrot.slane %v2084, 2
    %v2086 = vadd.f32 %v2084, %v2085
    %v2087 = vrot.slane %v2086, 1
    %v2088 = vadd.f32 %v2086, %v2087
    %v2089 = vsel %vm157, %v1830, 0.0
    %v2090 = vadd.f32 %v1831, %v2089
    %v2091 = vrot.slane %v2090, 4
    %v2092 = vadd.f32 %v2090, %v2091
    %v2093 = vrot.slane %v2092, 2
    %v2094 = vadd.f32 %v2092, %v2093
    %v2095 = vrot.slane %v2094, 1
    %v2096 = vadd.f32 %v2094, %v2095
    %v2097 = vsel %vm157, %v1833, 0.0
    %v2098 = vadd.f32 %v1834, %v2097
    %v2099 = vrot.slane %v2098, 4
    %v2100 = vadd.f32 %v2098, %v2099
    %v2101 = vrot.slane %v2100, 2
    %v2102 = vadd.f32 %v2100, %v2101
    %v2103 = vrot.slane %v2102, 1
    %v2104 = vadd.f32 %v2102, %v2103
    %v2105 = vsel %vm157, %v1836, 0.0
    %v2106 = vadd.f32 %v1837, %v2105
    %v2107 = vrot.slane %v2106, 4
    %v2108 = vadd.f32 %v2106, %v2107
    %v2109 = vrot.slane %v2108, 2
    %v2110 = vadd.f32 %v2108, %v2109
    %v2111 = vrot.slane %v2110, 1
    %v2112 = vadd.f32 %v2110, %v2111
    %v2113 = vsel %vm157, %v1839, 0.0
    %v2114 = vadd.f32 %v1840, %v2113
    %v2115 = vrot.slane %v2114, 4
    %v2116 = vadd.f32 %v2114, %v2115
    %v2117 = vrot.slane %v2116, 2
    %v2118 = vadd.f32 %v2116, %v2117
    %v2119 = vrot.slane %v2118, 1
    %v2120 = vadd.f32 %v2118, %v2119
    %v2121 = vsel %vm157, %v1842, 0.0
    %v2122 = vadd.f32 %v1843, %v2121
    %v2123 = vrot.slane %v2122, 4
    %v2124 = vadd.f32 %v2122, %v2123
    %v2125 = vrot.slane %v2124, 2
    %v2126 = vadd.f32 %v2124, %v2125
    %v2127 = vrot.slane %v2126, 1
    %v2128 = vadd.f32 %v2126, %v2127
    %v2129 = vsel %vm157, %v1845, 0.0
    %v2130 = vadd.f32 %v1846, %v2129
    %v2131 = vrot.slane %v2130, 4
    %v2132 = vadd.f32 %v2130, %v2131
    %v2133 = vrot.slane %v2132, 2
    %v2134 = vadd.f32 %v2132, %v2133
    %v2135 = vrot.slane %v2134, 1
    %v2136 = vadd.f32 %v2134, %v2135
    %v2137 = vsel %vm157, %v1848, 0.0
    %v2138 = vadd.f32 %v1849, %v2137
    %v2139 = vrot.slane %v2138, 4
    %v2140 = vadd.f32 %v2138, %v2139
    %v2141 = vrot.slane %v2140, 2
    %v2142 = vadd.f32 %v2140, %v2141
    %v2143 = vrot.slane %v2142, 1
    %v2144 = vadd.f32 %v2142, %v2143
    %v2145 = vsel %vm157, %v1851, 0.0
    %v2146 = vadd.f32 %v1852, %v2145
    %v2147 = vrot.slane %v2146, 4
    %v2148 = vadd.f32 %v2146, %v2147
    %v2149 = vrot.slane %v2148, 2
    %v2150 = vadd.f32 %v2148, %v2149
    %v2151 = vrot.slane %v2150, 1
    %v2152 = vadd.f32 %v2150, %v2151
    %v2153 = vsel %vm157, %v1854, 0.0
    %v2154 = vadd.f32 %v1855, %v2153
    %v2155 = vrot.slane %v2154, 4
    %v2156 = vadd.f32 %v2154, %v2155
    %v2157 = vrot.slane %v2156, 2
    %v2158 = vadd.f32 %v2156, %v2157
    %v2159 = vrot.slane %v2158, 1
    %v2160 = vadd.f32 %v2158, %v2159
    %v2161 = vsel %vm157, %v1857, 0.0
    %v2162 = vadd.f32 %v1858, %v2161
    %v2163 = vrot.slane %v2162, 4
    %v2164 = vadd.f32 %v2162, %v2163
    %v2165 = vrot.slane %v2164, 2
    %v2166 = vadd.f32 %v2164, %v2165
    %v2167 = vrot.slane %v2166, 1
    %v2168 = vadd.f32 %v2166, %v2167
    %v2169 = vsel %vm157, %v1860, 0.0
    %v2170 = vadd.f32 %v1861, %v2169
    %v2171 = vrot.slane %v2170, 4
    %v2172 = vadd.f32 %v2170, %v2171
    %v2173 = vrot.slane %v2172, 2
    %v2174 = vadd.f32 %v2172, %v2173
    %v2175 = vrot.slane %v2174, 1
    %v2176 = vadd.f32 %v2174, %v2175
    %v2177 = vsel %vm157, %v1863, 0.0
    %v2178 = vadd.f32 %v1864, %v2177
    %v2179 = vrot.slane %v2178, 4
    %v2180 = vadd.f32 %v2178, %v2179
    %v2181 = vrot.slane %v2180, 2
    %v2182 = vadd.f32 %v2180, %v2181
    %v2183 = vrot.slane %v2182, 1
    %v2184 = vadd.f32 %v2182, %v2183
    %v2185 = vmul.f32 %v1936, 0.083333336
    %v2186 = vmul.f32 %v1944, 0.083333336
    %v2187 = vmul.f32 %v1952, 0.083333336
    %v2188 = vmul.f32 %v1960, 0.083333336
    %v2189 = vmul.f32 %v1968, 0.083333336
    %v2190 = vmul.f32 %v1976, 0.083333336
    %v2191 = vmul.f32 %v1984, 0.083333336
    %v2192 = vmul.f32 %v1992, 0.083333336
    %v2193 = vmul.f32 %v2000, 0.083333336
    %v2194 = vmul.f32 %v2008, 0.083333336
    %v2195 = vmul.f32 %v2016, 0.083333336
    %v2196 = vmul.f32 %v2024, 0.083333336
    %v2197 = vmul.f32 %v2032, 0.083333336
    %v2198 = vmul.f32 %v2040, 0.083333336
    %v2199 = vmul.f32 %v2048, 0.083333336
    %v2200 = vmul.f32 %v2056, 0.083333336
    %v2201 = vmul.f32 %v2064, 0.083333336
    %v2202 = vmul.f32 %v2072, 0.083333336
    %v2203 = vmul.f32 %v2080, 0.083333336
    %v2204 = vmul.f32 %v2088, 0.083333336
    %v2205 = vmul.f32 %v2096, 0.083333336
    %v2206 = vmul.f32 %v2104, 0.083333336
    %v2207 = vmul.f32 %v2112, 0.083333336
    %v2208 = vmul.f32 %v2120, 0.083333336
    %v2209 = vmul.f32 %v2128, 0.083333336
    %v2210 = vmul.f32 %v2136, 0.083333336
    %v2211 = vmul.f32 %v2144, 0.083333336
    %v2212 = vmul.f32 %v2152, 0.083333336
    %v2213 = vmul.f32 %v2160, 0.083333336
    %v2214 = vmul.f32 %v2168, 0.083333336
    %v2215 = vmul.f32 %v2176, 0.083333336
    %v2216 = vmul.f32 %v2184, 0.083333336
    %v2217 = vmul.f32 %v2185, %v2185
    %v2218 = vmul.f32 %v2186, %v2186
    %v2219 = vmul.f32 %v2187, %v2187
    %v2220 = vmul.f32 %v2188, %v2188
    %v2221 = vmul.f32 %v2189, %v2189
    %v2222 = vmul.f32 %v2190, %v2190
    %v2223 = vmul.f32 %v2191, %v2191
    %v2224 = vmul.f32 %v2192, %v2192
    %v2225 = vmul.f32 %v2193, %v2193
    %v2226 = vmul.f32 %v2194, %v2194
    %v2227 = vmul.f32 %v2195, %v2195
    %v2228 = vmul.f32 %v2196, %v2196
    %v2229 = vmul.f32 %v2197, %v2197
    %v2230 = vmul.f32 %v2198, %v2198
    %v2231 = vmul.f32 %v2199, %v2199
    %v2232 = vmul.f32 %v2200, %v2200
    %v2233 = vmul.f32 %v2201, %v2201
    %v2234 = vmul.f32 %v2202, %v2202
    %v2235 = vmul.f32 %v2203, %v2203
    %v2236 = vmul.f32 %v2204, %v2204
    %v2237 = vmul.f32 %v2205, %v2205
    %v2238 = vmul.f32 %v2206, %v2206
    %v2239 = vmul.f32 %v2207, %v2207
    %v2240 = vmul.f32 %v2208, %v2208
    %v2241 = vmul.f32 %v2209, %v2209
    %v2242 = vmul.f32 %v2210, %v2210
    %v2243 = vmul.f32 %v2211, %v2211
    %v2244 = vmul.f32 %v2212, %v2212
    %v2245 = vmul.f32 %v2213, %v2213
    %v2246 = vmul.f32 %v2214, %v2214
    %v2247 = vmul.f32 %v2215, %v2215
    %v2248 = vmul.f32 %v2216, %v2216
    %v2281 = vsel %vm510, %v2233, %v2217
    %v2282 = vsel %vm510, %v2234, %v2218
    %v2283 = vsel %vm510, %v2235, %v2219
    %v2284 = vsel %vm510, %v2236, %v2220
    %v2285 = vsel %vm510, %v2237, %v2221
    %v2286 = vsel %vm510, %v2238, %v2222
    %v2287 = vsel %vm510, %v2239, %v2223
    %v2288 = vsel %vm510, %v2240, %v2224
    %v2289 = vsel %vm510, %v2241, %v2225
    %v2290 = vsel %vm510, %v2242, %v2226
    %v2291 = vsel %vm510, %v2243, %v2227
    %v2292 = vsel %vm510, %v2244, %v2228
    %v2293 = vsel %vm510, %v2245, %v2229
    %v2294 = vsel %vm510, %v2246, %v2230
    %v2295 = vsel %vm510, %v2247, %v2231
    %v2296 = vsel %vm510, %v2248, %v2232
    %v2313 = vsel %vm543, %v2281, 0.0
    %v2314 = vsel %vm543, %v2282, 0.0
    %v2315 = vadd.f32 %v2313, %v2314
    %v2316 = vsel %vm543, %v2283, 0.0
    %v2317 = vadd.f32 %v2315, %v2316
    %v2318 = vsel %vm543, %v2284, 0.0
    %v2319 = vadd.f32 %v2317, %v2318
    %v2320 = vsel %vm543, %v2285, 0.0
    %v2321 = vadd.f32 %v2319, %v2320
    %v2322 = vsel %vm543, %v2286, 0.0
    %v2323 = vadd.f32 %v2321, %v2322
    %v2324 = vsel %vm543, %v2287, 0.0
    %v2325 = vadd.f32 %v2323, %v2324
    %v2326 = vsel %vm543, %v2288, 0.0
    %v2327 = vadd.f32 %v2325, %v2326
    %v2328 = vsel %vm543, %v2289, 0.0
    %v2329 = vadd.f32 %v2327, %v2328
    %v2330 = vsel %vm543, %v2290, 0.0
    %v2331 = vadd.f32 %v2329, %v2330
    %v2332 = vsel %vm543, %v2291, 0.0
    %v2333 = vadd.f32 %v2331, %v2332
    %v2334 = vsel %vm543, %v2292, 0.0
    %v2335 = vadd.f32 %v2333, %v2334
    %v2336 = vsel %vm543, %v2293, 0.0
    %v2337 = vadd.f32 %v2335, %v2336
    %v2338 = vsel %vm543, %v2294, 0.0
    %v2339 = vadd.f32 %v2337, %v2338
    %v2340 = vsel %vm543, %v2295, 0.0
    %v2341 = vadd.f32 %v2339, %v2340
    %v2342 = vsel %vm543, %v2296, 0.0
    %v2343 = vadd.f32 %v2341, %v2342
    %2344 = vadd.xlane.f32.xlu0 %v2343
    %v2345 = vpop.xlane.xlu0 %2344
    %v2346 = vrsqrt.pop %v2345
    %v2347 = vmul.f32 %v2346, %v2345
    %v2348 = vmul.f32 %v2347, %v2346
    %v2349 = vmul.f32 0.5, %v2348
    %v2350 = vsub.f32 1.5, %v2349
    %v2351 = vmul.f32 %v2346, %v2350
    %vm2352 = vweird.f32 %v2345
    %vm2353 = vweird.f32 %v2346
    %vm2354 = vmor %vm2352, %vm2353
    %v2355 = vsel %vm2354, %v2346, %v2351
    %v2357 = vrot.slane %v2355, 1
    %v2360 = vmul.f32 %v2185, %v2355
    %v2361 = vmul.f32 %v2186, %v2355
    %v2362 = vmul.f32 %v2187, %v2355
    %v2363 = vmul.f32 %v2188, %v2355
    %v2364 = vmul.f32 %v2189, %v2355
    %v2365 = vmul.f32 %v2190, %v2355
    %v2366 = vmul.f32 %v2191, %v2355
    %v2367 = vmul.f32 %v2192, %v2355
    %v2368 = vmul.f32 %v2193, %v2355
    %v2369 = vmul.f32 %v2194, %v2355
    %v2370 = vmul.f32 %v2195, %v2355
    %v2371 = vmul.f32 %v2196, %v2355
    %v2372 = vmul.f32 %v2197, %v2355
    %v2373 = vmul.f32 %v2198, %v2355
    %v2374 = vmul.f32 %v2199, %v2355
    %v2375 = vmul.f32 %v2200, %v2355
    %v2376 = vmul.f32 %v2201, %v2357
    %v2377 = vmul.f32 %v2202, %v2357
    %v2378 = vmul.f32 %v2203, %v2357
    %v2379 = vmul.f32 %v2204, %v2357
    %v2380 = vmul.f32 %v2205, %v2357
    %v2381 = vmul.f32 %v2206, %v2357
    %v2382 = vmul.f32 %v2207, %v2357
    %v2383 = vmul.f32 %v2208, %v2357
    %v2384 = vmul.f32 %v2209, %v2357
    %v2385 = vmul.f32 %v2210, %v2357
    %v2386 = vmul.f32 %v2211, %v2357
    %v2387 = vmul.f32 %v2212, %v2357
    %v2388 = vmul.f32 %v2213, %v2357
    %v2389 = vmul.f32 %v2214, %v2357
    %v2390 = vmul.f32 %v2215, %v2357
    %v2391 = vmul.f32 %v2216, %v2357
    %v2424 = vrot.slane %v2361, 4
    %v2425 = vrot.slane %v2363, 4
    %v2426 = vrot.slane %v2365, 4
    %v2427 = vrot.slane %v2367, 4
    %v2428 = vrot.slane %v2369, 4
    %v2429 = vrot.slane %v2371, 4
    %v2430 = vrot.slane %v2373, 4
    %v2431 = vrot.slane %v2375, 4
    %v2432 = vrot.slane %v2377, 4
    %v2433 = vrot.slane %v2379, 4
    %v2434 = vrot.slane %v2381, 4
    %v2435 = vrot.slane %v2383, 4
    %v2436 = vrot.slane %v2385, 4
    %v2437 = vrot.slane %v2387, 4
    %v2438 = vrot.slane %v2389, 4
    %v2439 = vrot.slane %v2391, 4
    %v2440 = vsel %vm157, %v2360, %v2424
    %v2441 = vsel %vm157, %v2362, %v2425
    %v2442 = vsel %vm157, %v2364, %v2426
    %v2443 = vsel %vm157, %v2366, %v2427
    %v2444 = vsel %vm157, %v2368, %v2428
    %v2445 = vsel %vm157, %v2370, %v2429
    %v2446 = vsel %vm157, %v2372, %v2430
    %v2447 = vsel %vm157, %v2374, %v2431
    %v2448 = vsel %vm157, %v2376, %v2432
    %v2449 = vsel %vm157, %v2378, %v2433
    %v2450 = vsel %vm157, %v2380, %v2434
    %v2451 = vsel %vm157, %v2382, %v2435
    %v2452 = vsel %vm157, %v2384, %v2436
    %v2453 = vsel %vm157, %v2386, %v2437
    %v2454 = vsel %vm157, %v2388, %v2438
    %v2455 = vsel %vm157, %v2390, %v2439
    %v2456 = vrot.slane %v2448, 7
    %v2457 = vsel %vm510, %v2456, %v2440
    %v2458 = vsel %vm689, %v2456, %v2457
    %v2459 = vrot.slane %v2449, 7
    %v2460 = vsel %vm510, %v2459, %v2441
    %v2461 = vsel %vm689, %v2459, %v2460
    %v2462 = vrot.slane %v2450, 7
    %v2463 = vsel %vm510, %v2462, %v2442
    %v2464 = vsel %vm689, %v2462, %v2463
    %v2465 = vrot.slane %v2451, 7
    %v2466 = vsel %vm510, %v2465, %v2443
    %v2467 = vsel %vm689, %v2465, %v2466
    %v2468 = vrot.slane %v2452, 7
    %v2469 = vsel %vm510, %v2468, %v2444
    %v2470 = vsel %vm689, %v2468, %v2469
    %v2471 = vrot.slane %v2453, 7
    %v2472 = vsel %vm510, %v2471, %v2445
    %v2473 = vsel %vm689, %v2471, %v2472
    %v2474 = vrot.slane %v2454, 7
    %v2475 = vsel %vm510, %v2474, %v2446
    %v2476 = vsel %vm689, %v2474, %v2475
    %v2477 = vrot.slane %v2455, 7
    %v2478 = vsel %vm510, %v2477, %v2447
    %v2479 = vsel %vm689, %v2477, %v2478
    %2488 = vst [vmem:[#allocation3 + $0x40] sm:$0x33] %v2458
    %2489 = vst [vmem:[#allocation3 + $0x48] sm:$0x33] %v2461
    %2490 = vst [vmem:[#allocation3 + $0x50] sm:$0x33] %v2464
    %2491 = vst [vmem:[#allocation3 + $0x58] sm:$0x33] %v2467
    %2492 = vst [vmem:[#allocation3 + $0x60] sm:$0x33] %v2470
    %2493 = vst [vmem:[#allocation3 + $0x68] sm:$0x33] %v2473
    %2494 = vst [vmem:[#allocation3 + $0x70] sm:$0x33] %v2476
    %2495 = vst [vmem:[#allocation3 + $0x78] sm:$0x33] %v2479
    %v2496 = vpack.c.bf16 %v2186, %v2185
    %v2497 = vpack.c.bf16 %v2188, %v2187
    %v2498 = vpack.c.bf16 %v2190, %v2189
    %v2499 = vpack.c.bf16 %v2192, %v2191
    %v2500 = vpack.c.bf16 %v2194, %v2193
    %v2501 = vpack.c.bf16 %v2196, %v2195
    %v2502 = vpack.c.bf16 %v2198, %v2197
    %v2503 = vpack.c.bf16 %v2200, %v2199
    %v2504 = vpack.c.bf16 %v2202, %v2201
    %v2505 = vpack.c.bf16 %v2204, %v2203
    %v2506 = vpack.c.bf16 %v2206, %v2205
    %v2507 = vpack.c.bf16 %v2208, %v2207
    %v2508 = vpack.c.bf16 %v2210, %v2209
    %v2509 = vpack.c.bf16 %v2212, %v2211
    %v2510 = vpack.c.bf16 %v2214, %v2213
    %v2511 = vpack.c.bf16 %v2216, %v2215
    %v2528 = vunpack.c.l.b16 %v2496
    %v2529 = vunpack.c.h.b16 %v2496
    %v2530 = vunpack.c.l.b16 %v2497
    %v2531 = vunpack.c.h.b16 %v2497
    %v2532 = vunpack.c.l.b16 %v2498
    %v2533 = vunpack.c.h.b16 %v2498
    %v2534 = vunpack.c.l.b16 %v2499
    %v2535 = vunpack.c.h.b16 %v2499
    %v2536 = vunpack.c.l.b16 %v2500
    %v2537 = vunpack.c.h.b16 %v2500
    %v2538 = vunpack.c.l.b16 %v2501
    %v2539 = vunpack.c.h.b16 %v2501
    %v2540 = vunpack.c.l.b16 %v2502
    %v2541 = vunpack.c.h.b16 %v2502
    %v2542 = vunpack.c.l.b16 %v2503
    %v2543 = vunpack.c.h.b16 %v2503
    %v2544 = vunpack.c.l.b16 %v2504
    %v2545 = vunpack.c.h.b16 %v2504
    %v2546 = vunpack.c.l.b16 %v2505
    %v2547 = vunpack.c.h.b16 %v2505
    %v2548 = vunpack.c.l.b16 %v2506
    %v2549 = vunpack.c.h.b16 %v2506
    %v2550 = vunpack.c.l.b16 %v2507
    %v2551 = vunpack.c.h.b16 %v2507
    %v2552 = vunpack.c.l.b16 %v2508
    %v2553 = vunpack.c.h.b16 %v2508
    %v2554 = vunpack.c.l.b16 %v2509
    %v2555 = vunpack.c.h.b16 %v2509
    %v2556 = vunpack.c.l.b16 %v2510
    %v2557 = vunpack.c.h.b16 %v2510
    %v2558 = vunpack.c.l.b16 %v2511
    %v2559 = vunpack.c.h.b16 %v2511
    %v2560 = vsel %vm510, %v2544, %v2528
    %v2561 = vsel %vm510, %v2545, %v2529
    %v2562 = vsel %vm510, %v2546, %v2530
    %v2563 = vsel %vm510, %v2547, %v2531
    %v2564 = vsel %vm510, %v2548, %v2532
    %v2565 = vsel %vm510, %v2549, %v2533
    %v2566 = vsel %vm510, %v2550, %v2534
    %v2567 = vsel %vm510, %v2551, %v2535
    %v2568 = vsel %vm510, %v2552, %v2536
    %v2569 = vsel %vm510, %v2553, %v2537
    %v2570 = vsel %vm510, %v2554, %v2538
    %v2571 = vsel %vm510, %v2555, %v2539
    %v2572 = vsel %vm510, %v2556, %v2540
    %v2573 = vsel %vm510, %v2557, %v2541
    %v2574 = vsel %vm510, %v2558, %v2542
    %v2575 = vsel %vm510, %v2559, %v2543
    %v2576 = vpack.c.b16 %v2561, %v2560
    %v2577 = vpack.c.b16 %v2563, %v2562
    %v2578 = vpack.c.b16 %v2565, %v2564
    %v2579 = vpack.c.b16 %v2567, %v2566
    %v2580 = vpack.c.b16 %v2569, %v2568
    %v2581 = vpack.c.b16 %v2571, %v2570
    %v2582 = vpack.c.b16 %v2573, %v2572
    %v2583 = vpack.c.b16 %v2575, %v2574
    %2592 = vst [vmem:[#allocation2 + $0x40] sm:$0x11] %v2576
    %2593 = vst [vmem:[#allocation2 + $0x48] sm:$0x11] %v2577
    %2594 = vst [vmem:[#allocation2 + $0x50] sm:$0x11] %v2578
    %2595 = vst [vmem:[#allocation2 + $0x58] sm:$0x11] %v2579
    %2596 = vst [vmem:[#allocation2 + $0x60] sm:$0x11] %v2580
    %2597 = vst [vmem:[#allocation2 + $0x68] sm:$0x11] %v2581
    %2598 = vst [vmem:[#allocation2 + $0x70] sm:$0x11] %v2582
    %2599 = vst [vmem:[#allocation2 + $0x78] sm:$0x11] %v2583
    %v2600 = vld [vmem:[%s1 + $0x40] sm:$0xcc]
    %v2601 = vld [vmem:[%s1 + $0x48] sm:$0xcc]
    %v2602 = vld [vmem:[%s1 + $0x50] sm:$0xcc]
    %v2603 = vld [vmem:[%s1 + $0x58] sm:$0xcc]
    %v2604 = vld [vmem:[%s1 + $0x60] sm:$0xcc]
    %v2605 = vld [vmem:[%s1 + $0x68] sm:$0xcc]
    %v2606 = vld [vmem:[%s1 + $0x70] sm:$0xcc]
    %v2607 = vld [vmem:[%s1 + $0x78] sm:$0xcc]
    %v2608 = vld [vmem:[%s1 + $0x80] sm:$0xff]
    %v2609 = vld [vmem:[%s1 + $0x88] sm:$0xff]
    %v2610 = vld [vmem:[%s1 + $0x90] sm:$0xff]
    %v2611 = vld [vmem:[%s1 + $0x98] sm:$0xff]
    %v2612 = vld [vmem:[%s1 + $0xa0] sm:$0xff]
    %v2613 = vld [vmem:[%s1 + $0xa8] sm:$0xff]
    %v2614 = vld [vmem:[%s1 + $0xb0] sm:$0xff]
    %v2615 = vld [vmem:[%s1 + $0xb8] sm:$0xff]
    %v2616 = vld [vmem:[%s1 + $0x1c0] sm:$0xcc]
    %v2617 = vld [vmem:[%s1 + $0x1c8] sm:$0xcc]
    %v2618 = vld [vmem:[%s1 + $0x1d0] sm:$0xcc]
    %v2619 = vld [vmem:[%s1 + $0x1d8] sm:$0xcc]
    %v2620 = vld [vmem:[%s1 + $0x1e0] sm:$0xcc]
    %v2621 = vld [vmem:[%s1 + $0x1e8] sm:$0xcc]
    %v2622 = vld [vmem:[%s1 + $0x1f0] sm:$0xcc]
    %v2623 = vld [vmem:[%s1 + $0x1f8] sm:$0xcc]
    %v2624 = vld [vmem:[%s1 + $0x200] sm:$0xff]
    %v2625 = vld [vmem:[%s1 + $0x208] sm:$0xff]
    %v2626 = vld [vmem:[%s1 + $0x210] sm:$0xff]
    %v2627 = vld [vmem:[%s1 + $0x218] sm:$0xff]
    %v2628 = vld [vmem:[%s1 + $0x220] sm:$0xff]
    %v2629 = vld [vmem:[%s1 + $0x228] sm:$0xff]
    %v2630 = vld [vmem:[%s1 + $0x230] sm:$0xff]
    %v2631 = vld [vmem:[%s1 + $0x238] sm:$0xff]
    %v2632 = vunpack.c.l.bf16 %v2600
    %v2633 = vunpack.c.h.bf16 %v2600
    %v2634 = vunpack.c.l.bf16 %v2601
    %v2635 = vunpack.c.h.bf16 %v2601
    %v2636 = vunpack.c.l.bf16 %v2602
    %v2637 = vunpack.c.h.bf16 %v2602
    %v2638 = vunpack.c.l.bf16 %v2603
    %v2639 = vunpack.c.h.bf16 %v2603
    %v2640 = vunpack.c.l.bf16 %v2604
    %v2641 = vunpack.c.h.bf16 %v2604
    %v2642 = vunpack.c.l.bf16 %v2605
    %v2643 = vunpack.c.h.bf16 %v2605
    %v2644 = vunpack.c.l.bf16 %v2606
    %v2645 = vunpack.c.h.bf16 %v2606
    %v2646 = vunpack.c.l.bf16 %v2607
    %v2647 = vunpack.c.h.bf16 %v2607
    %v2648 = vunpack.c.l.bf16 %v2608
    %v2649 = vunpack.c.h.bf16 %v2608
    %v2650 = vunpack.c.l.bf16 %v2609
    %v2651 = vunpack.c.h.bf16 %v2609
    %v2652 = vunpack.c.l.bf16 %v2610
    %v2653 = vunpack.c.h.bf16 %v2610
    %v2654 = vunpack.c.l.bf16 %v2611
    %v2655 = vunpack.c.h.bf16 %v2611
    %v2656 = vunpack.c.l.bf16 %v2612
    %v2657 = vunpack.c.h.bf16 %v2612
    %v2658 = vunpack.c.l.bf16 %v2613
    %v2659 = vunpack.c.h.bf16 %v2613
    %v2660 = vunpack.c.l.bf16 %v2614
    %v2661 = vunpack.c.h.bf16 %v2614
    %v2662 = vunpack.c.l.bf16 %v2615
    %v2663 = vunpack.c.h.bf16 %v2615
    %v2664 = vunpack.c.l.bf16 %v2616
    %v2665 = vunpack.c.h.bf16 %v2616
    %v2666 = vunpack.c.l.bf16 %v2617
    %v2667 = vunpack.c.h.bf16 %v2617
    %v2668 = vunpack.c.l.bf16 %v2618
    %v2669 = vunpack.c.h.bf16 %v2618
    %v2670 = vunpack.c.l.bf16 %v2619
    %v2671 = vunpack.c.h.bf16 %v2619
    %v2672 = vunpack.c.l.bf16 %v2620
    %v2673 = vunpack.c.h.bf16 %v2620
    %v2674 = vunpack.c.l.bf16 %v2621
    %v2675 = vunpack.c.h.bf16 %v2621
    %v2676 = vunpack.c.l.bf16 %v2622
    %v2677 = vunpack.c.h.bf16 %v2622
    %v2678 = vunpack.c.l.bf16 %v2623
    %v2679 = vunpack.c.h.bf16 %v2623
    %v2680 = vunpack.c.l.bf16 %v2624
    %v2681 = vunpack.c.h.bf16 %v2624
    %v2682 = vunpack.c.l.bf16 %v2625
    %v2683 = vunpack.c.h.bf16 %v2625
    %v2684 = vunpack.c.l.bf16 %v2626
    %v2685 = vunpack.c.h.bf16 %v2626
    %v2686 = vunpack.c.l.bf16 %v2627
    %v2687 = vunpack.c.h.bf16 %v2627
    %v2688 = vunpack.c.l.bf16 %v2628
    %v2689 = vunpack.c.h.bf16 %v2628
    %v2690 = vunpack.c.l.bf16 %v2629
    %v2691 = vunpack.c.h.bf16 %v2629
    %v2692 = vunpack.c.l.bf16 %v2630
    %v2693 = vunpack.c.h.bf16 %v2630
    %v2694 = vunpack.c.l.bf16 %v2631
    %v2695 = vunpack.c.h.bf16 %v2631
    %v2760 = vrot.slane %v2632, 4
    %v2761 = vrot.slane %v2648, 4
    %v2762 = vsel %vm157, %v2760, %v2761
    %v2763 = vrot.slane %v2633, 4
    %v2764 = vrot.slane %v2649, 4
    %v2765 = vsel %vm157, %v2763, %v2764
    %v2766 = vrot.slane %v2634, 4
    %v2767 = vrot.slane %v2650, 4
    %v2768 = vsel %vm157, %v2766, %v2767
    %v2769 = vrot.slane %v2635, 4
    %v2770 = vrot.slane %v2651, 4
    %v2771 = vsel %vm157, %v2769, %v2770
    %v2772 = vrot.slane %v2636, 4
    %v2773 = vrot.slane %v2652, 4
    %v2774 = vsel %vm157, %v2772, %v2773
    %v2775 = vrot.slane %v2637, 4
    %v2776 = vrot.slane %v2653, 4
    %v2777 = vsel %vm157, %v2775, %v2776
    %v2778 = vrot.slane %v2638, 4
    %v2779 = vrot.slane %v2654, 4
    %v2780 = vsel %vm157, %v2778, %v2779
    %v2781 = vrot.slane %v2639, 4
    %v2782 = vrot.slane %v2655, 4
    %v2783 = vsel %vm157, %v2781, %v2782
    %v2784 = vrot.slane %v2640, 4
    %v2785 = vrot.slane %v2656, 4
    %v2786 = vsel %vm157, %v2784, %v2785
    %v2787 = vrot.slane %v2641, 4
    %v2788 = vrot.slane %v2657, 4
    %v2789 = vsel %vm157, %v2787, %v2788
    %v2790 = vrot.slane %v2642, 4
    %v2791 = vrot.slane %v2658, 4
    %v2792 = vsel %vm157, %v2790, %v2791
    %v2793 = vrot.slane %v2643, 4
    %v2794 = vrot.slane %v2659, 4
    %v2795 = vsel %vm157, %v2793, %v2794
    %v2796 = vrot.slane %v2644, 4
    %v2797 = vrot.slane %v2660, 4
    %v2798 = vsel %vm157, %v2796, %v2797
    %v2799 = vrot.slane %v2645, 4
    %v2800 = vrot.slane %v2661, 4
    %v2801 = vsel %vm157, %v2799, %v2800
    %v2802 = vrot.slane %v2646, 4
    %v2803 = vrot.slane %v2662, 4
    %v2804 = vsel %vm157, %v2802, %v2803
    %v2805 = vrot.slane %v2647, 4
    %v2806 = vrot.slane %v2663, 4
    %v2807 = vsel %vm157, %v2805, %v2806
    %v2808 = vrot.slane %v2664, 4
    %v2809 = vrot.slane %v2680, 4
    %v2810 = vsel %vm157, %v2808, %v2809
    %v2811 = vrot.slane %v2665, 4
    %v2812 = vrot.slane %v2681, 4
    %v2813 = vsel %vm157, %v2811, %v2812
    %v2814 = vrot.slane %v2666, 4
    %v2815 = vrot.slane %v2682, 4
    %v2816 = vsel %vm157, %v2814, %v2815
    %v2817 = vrot.slane %v2667, 4
    %v2818 = vrot.slane %v2683, 4
    %v2819 = vsel %vm157, %v2817, %v2818
    %v2820 = vrot.slane %v2668, 4
    %v2821 = vrot.slane %v2684, 4
    %v2822 = vsel %vm157, %v2820, %v2821
    %v2823 = vrot.slane %v2669, 4
    %v2824 = vrot.slane %v2685, 4
    %v2825 = vsel %vm157, %v2823, %v2824
    %v2826 = vrot.slane %v2670, 4
    %v2827 = vrot.slane %v2686, 4
    %v2828 = vsel %vm157, %v2826, %v2827
    %v2829 = vrot.slane %v2671, 4
    %v2830 = vrot.slane %v2687, 4
    %v2831 = vsel %vm157, %v2829, %v2830
    %v2832 = vrot.slane %v2672, 4
    %v2833 = vrot.slane %v2688, 4
    %v2834 = vsel %vm157, %v2832, %v2833
    %v2835 = vrot.slane %v2673, 4
    %v2836 = vrot.slane %v2689, 4
    %v2837 = vsel %vm157, %v2835, %v2836
    %v2838 = vrot.slane %v2674, 4
    %v2839 = vrot.slane %v2690, 4
    %v2840 = vsel %vm157, %v2838, %v2839
    %v2841 = vrot.slane %v2675, 4
    %v2842 = vrot.slane %v2691, 4
    %v2843 = vsel %vm157, %v2841, %v2842
    %v2844 = vrot.slane %v2676, 4
    %v2845 = vrot.slane %v2692, 4
    %v2846 = vsel %vm157, %v2844, %v2845
    %v2847 = vrot.slane %v2677, 4
    %v2848 = vrot.slane %v2693, 4
    %v2849 = vsel %vm157, %v2847, %v2848
    %v2850 = vrot.slane %v2678, 4
    %v2851 = vrot.slane %v2694, 4
    %v2852 = vsel %vm157, %v2850, %v2851
    %v2853 = vrot.slane %v2679, 4
    %v2854 = vrot.slane %v2695, 4
    %v2855 = vsel %vm157, %v2853, %v2854
    %v2920 = vsel %vm157, %v2761, 0.0
    %v2921 = vadd.f32 %v2762, %v2920
    %v2922 = vrot.slane %v2921, 4
    %v2923 = vadd.f32 %v2921, %v2922
    %v2924 = vrot.slane %v2923, 2
    %v2925 = vadd.f32 %v2923, %v2924
    %v2926 = vrot.slane %v2925, 1
    %v2927 = vadd.f32 %v2925, %v2926
    %v2928 = vsel %vm157, %v2764, 0.0
    %v2929 = vadd.f32 %v2765, %v2928
    %v2930 = vrot.slane %v2929, 4
    %v2931 = vadd.f32 %v2929, %v2930
    %v2932 = vrot.slane %v2931, 2
    %v2933 = vadd.f32 %v2931, %v2932
    %v2934 = vrot.slane %v2933, 1
    %v2935 = vadd.f32 %v2933, %v2934
    %v2936 = vsel %vm157, %v2767, 0.0
    %v2937 = vadd.f32 %v2768, %v2936
    %v2938 = vrot.slane %v2937, 4
    %v2939 = vadd.f32 %v2937, %v2938
    %v2940 = vrot.slane %v2939, 2
    %v2941 = vadd.f32 %v2939, %v2940
    %v2942 = vrot.slane %v2941, 1
    %v2943 = vadd.f32 %v2941, %v2942
    %v2944 = vsel %vm157, %v2770, 0.0
    %v2945 = vadd.f32 %v2771, %v2944
    %v2946 = vrot.slane %v2945, 4
    %v2947 = vadd.f32 %v2945, %v2946
    %v2948 = vrot.slane %v2947, 2
    %v2949 = vadd.f32 %v2947, %v2948
    %v2950 = vrot.slane %v2949, 1
    %v2951 = vadd.f32 %v2949, %v2950
    %v2952 = vsel %vm157, %v2773, 0.0
    %v2953 = vadd.f32 %v2774, %v2952
    %v2954 = vrot.slane %v2953, 4
    %v2955 = vadd.f32 %v2953, %v2954
    %v2956 = vrot.slane %v2955, 2
    %v2957 = vadd.f32 %v2955, %v2956
    %v2958 = vrot.slane %v2957, 1
    %v2959 = vadd.f32 %v2957, %v2958
    %v2960 = vsel %vm157, %v2776, 0.0
    %v2961 = vadd.f32 %v2777, %v2960
    %v2962 = vrot.slane %v2961, 4
    %v2963 = vadd.f32 %v2961, %v2962
    %v2964 = vrot.slane %v2963, 2
    %v2965 = vadd.f32 %v2963, %v2964
    %v2966 = vrot.slane %v2965, 1
    %v2967 = vadd.f32 %v2965, %v2966
    %v2968 = vsel %vm157, %v2779, 0.0
    %v2969 = vadd.f32 %v2780, %v2968
    %v2970 = vrot.slane %v2969, 4
    %v2971 = vadd.f32 %v2969, %v2970
    %v2972 = vrot.slane %v2971, 2
    %v2973 = vadd.f32 %v2971, %v2972
    %v2974 = vrot.slane %v2973, 1
    %v2975 = vadd.f32 %v2973, %v2974
    %v2976 = vsel %vm157, %v2782, 0.0
    %v2977 = vadd.f32 %v2783, %v2976
    %v2978 = vrot.slane %v2977, 4
    %v2979 = vadd.f32 %v2977, %v2978
    %v2980 = vrot.slane %v2979, 2
    %v2981 = vadd.f32 %v2979, %v2980
    %v2982 = vrot.slane %v2981, 1
    %v2983 = vadd.f32 %v2981, %v2982
    %v2984 = vsel %vm157, %v2785, 0.0
    %v2985 = vadd.f32 %v2786, %v2984
    %v2986 = vrot.slane %v2985, 4
    %v2987 = vadd.f32 %v2985, %v2986
    %v2988 = vrot.slane %v2987, 2
    %v2989 = vadd.f32 %v2987, %v2988
    %v2990 = vrot.slane %v2989, 1
    %v2991 = vadd.f32 %v2989, %v2990
    %v2992 = vsel %vm157, %v2788, 0.0
    %v2993 = vadd.f32 %v2789, %v2992
    %v2994 = vrot.slane %v2993, 4
    %v2995 = vadd.f32 %v2993, %v2994
    %v2996 = vrot.slane %v2995, 2
    %v2997 = vadd.f32 %v2995, %v2996
    %v2998 = vrot.slane %v2997, 1
    %v2999 = vadd.f32 %v2997, %v2998
    %v3000 = vsel %vm157, %v2791, 0.0
    %v3001 = vadd.f32 %v2792, %v3000
    %v3002 = vrot.slane %v3001, 4
    %v3003 = vadd.f32 %v3001, %v3002
    %v3004 = vrot.slane %v3003, 2
    %v3005 = vadd.f32 %v3003, %v3004
    %v3006 = vrot.slane %v3005, 1
    %v3007 = vadd.f32 %v3005, %v3006
    %v3008 = vsel %vm157, %v2794, 0.0
    %v3009 = vadd.f32 %v2795, %v3008
    %v3010 = vrot.slane %v3009, 4
    %v3011 = vadd.f32 %v3009, %v3010
    %v3012 = vrot.slane %v3011, 2
    %v3013 = vadd.f32 %v3011, %v3012
    %v3014 = vrot.slane %v3013, 1
    %v3015 = vadd.f32 %v3013, %v3014
    %v3016 = vsel %vm157, %v2797, 0.0
    %v3017 = vadd.f32 %v2798, %v3016
    %v3018 = vrot.slane %v3017, 4
    %v3019 = vadd.f32 %v3017, %v3018
    %v3020 = vrot.slane %v3019, 2
    %v3021 = vadd.f32 %v3019, %v3020
    %v3022 = vrot.slane %v3021, 1
    %v3023 = vadd.f32 %v3021, %v3022
    %v3024 = vsel %vm157, %v2800, 0.0
    %v3025 = vadd.f32 %v2801, %v3024
    %v3026 = vrot.slane %v3025, 4
    %v3027 = vadd.f32 %v3025, %v3026
    %v3028 = vrot.slane %v3027, 2
    %v3029 = vadd.f32 %v3027, %v3028
    %v3030 = vrot.slane %v3029, 1
    %v3031 = vadd.f32 %v3029, %v3030
    %v3032 = vsel %vm157, %v2803, 0.0
    %v3033 = vadd.f32 %v2804, %v3032
    %v3034 = vrot.slane %v3033, 4
    %v3035 = vadd.f32 %v3033, %v3034
    %v3036 = vrot.slane %v3035, 2
    %v3037 = vadd.f32 %v3035, %v3036
    %v3038 = vrot.slane %v3037, 1
    %v3039 = vadd.f32 %v3037, %v3038
    %v3040 = vsel %vm157, %v2806, 0.0
    %v3041 = vadd.f32 %v2807, %v3040
    %v3042 = vrot.slane %v3041, 4
    %v3043 = vadd.f32 %v3041, %v3042
    %v3044 = vrot.slane %v3043, 2
    %v3045 = vadd.f32 %v3043, %v3044
    %v3046 = vrot.slane %v3045, 1
    %v3047 = vadd.f32 %v3045, %v3046
    %v3048 = vsel %vm157, %v2809, 0.0
    %v3049 = vadd.f32 %v2810, %v3048
    %v3050 = vrot.slane %v3049, 4
    %v3051 = vadd.f32 %v3049, %v3050
    %v3052 = vrot.slane %v3051, 2
    %v3053 = vadd.f32 %v3051, %v3052
    %v3054 = vrot.slane %v3053, 1
    %v3055 = vadd.f32 %v3053, %v3054
    %v3056 = vsel %vm157, %v2812, 0.0
    %v3057 = vadd.f32 %v2813, %v3056
    %v3058 = vrot.slane %v3057, 4
    %v3059 = vadd.f32 %v3057, %v3058
    %v3060 = vrot.slane %v3059, 2
    %v3061 = vadd.f32 %v3059, %v3060
    %v3062 = vrot.slane %v3061, 1
    %v3063 = vadd.f32 %v3061, %v3062
    %v3064 = vsel %vm157, %v2815, 0.0
    %v3065 = vadd.f32 %v2816, %v3064
    %v3066 = vrot.slane %v3065, 4
    %v3067 = vadd.f32 %v3065, %v3066
    %v3068 = vrot.slane %v3067, 2
    %v3069 = vadd.f32 %v3067, %v3068
    %v3070 = vrot.slane %v3069, 1
    %v3071 = vadd.f32 %v3069, %v3070
    %v3072 = vsel %vm157, %v2818, 0.0
    %v3073 = vadd.f32 %v2819, %v3072
    %v3074 = vrot.slane %v3073, 4
    %v3075 = vadd.f32 %v3073, %v3074
    %v3076 = vrot.slane %v3075, 2
    %v3077 = vadd.f32 %v3075, %v3076
    %v3078 = vrot.slane %v3077, 1
    %v3079 = vadd.f32 %v3077, %v3078
    %v3080 = vsel %vm157, %v2821, 0.0
    %v3081 = vadd.f32 %v2822, %v3080
    %v3082 = vrot.slane %v3081, 4
    %v3083 = vadd.f32 %v3081, %v3082
    %v3084 = vrot.slane %v3083, 2
    %v3085 = vadd.f32 %v3083, %v3084
    %v3086 = vrot.slane %v3085, 1
    %v3087 = vadd.f32 %v3085, %v3086
    %v3088 = vsel %vm157, %v2824, 0.0
    %v3089 = vadd.f32 %v2825, %v3088
    %v3090 = vrot.slane %v3089, 4
    %v3091 = vadd.f32 %v3089, %v3090
    %v3092 = vrot.slane %v3091, 2
    %v3093 = vadd.f32 %v3091, %v3092
    %v3094 = vrot.slane %v3093, 1
    %v3095 = vadd.f32 %v3093, %v3094
    %v3096 = vsel %vm157, %v2827, 0.0
    %v3097 = vadd.f32 %v2828, %v3096
    %v3098 = vrot.slane %v3097, 4
    %v3099 = vadd.f32 %v3097, %v3098
    %v3100 = vrot.slane %v3099, 2
    %v3101 = vadd.f32 %v3099, %v3100
    %v3102 = vrot.slane %v3101, 1
    %v3103 = vadd.f32 %v3101, %v3102
    %v3104 = vsel %vm157, %v2830, 0.0
    %v3105 = vadd.f32 %v2831, %v3104
    %v3106 = vrot.slane %v3105, 4
    %v3107 = vadd.f32 %v3105, %v3106
    %v3108 = vrot.slane %v3107, 2
    %v3109 = vadd.f32 %v3107, %v3108
    %v3110 = vrot.slane %v3109, 1
    %v3111 = vadd.f32 %v3109, %v3110
    %v3112 = vsel %vm157, %v2833, 0.0
    %v3113 = vadd.f32 %v2834, %v3112
    %v3114 = vrot.slane %v3113, 4
    %v3115 = vadd.f32 %v3113, %v3114
    %v3116 = vrot.slane %v3115, 2
    %v3117 = vadd.f32 %v3115, %v3116
    %v3118 = vrot.slane %v3117, 1
    %v3119 = vadd.f32 %v3117, %v3118
    %v3120 = vsel %vm157, %v2836, 0.0
    %v3121 = vadd.f32 %v2837, %v3120
    %v3122 = vrot.slane %v3121, 4
    %v3123 = vadd.f32 %v3121, %v3122
    %v3124 = vrot.slane %v3123, 2
    %v3125 = vadd.f32 %v3123, %v3124
    %v3126 = vrot.slane %v3125, 1
    %v3127 = vadd.f32 %v3125, %v3126
    %v3128 = vsel %vm157, %v2839, 0.0
    %v3129 = vadd.f32 %v2840, %v3128
    %v3130 = vrot.slane %v3129, 4
    %v3131 = vadd.f32 %v3129, %v3130
    %v3132 = vrot.slane %v3131, 2
    %v3133 = vadd.f32 %v3131, %v3132
    %v3134 = vrot.slane %v3133, 1
    %v3135 = vadd.f32 %v3133, %v3134
    %v3136 = vsel %vm157, %v2842, 0.0
    %v3137 = vadd.f32 %v2843, %v3136
    %v3138 = vrot.slane %v3137, 4
    %v3139 = vadd.f32 %v3137, %v3138
    %v3140 = vrot.slane %v3139, 2
    %v3141 = vadd.f32 %v3139, %v3140
    %v3142 = vrot.slane %v3141, 1
    %v3143 = vadd.f32 %v3141, %v3142
    %v3144 = vsel %vm157, %v2845, 0.0
    %v3145 = vadd.f32 %v2846, %v3144
    %v3146 = vrot.slane %v3145, 4
    %v3147 = vadd.f32 %v3145, %v3146
    %v3148 = vrot.slane %v3147, 2
    %v3149 = vadd.f32 %v3147, %v3148
    %v3150 = vrot.slane %v3149, 1
    %v3151 = vadd.f32 %v3149, %v3150
    %v3152 = vsel %vm157, %v2848, 0.0
    %v3153 = vadd.f32 %v2849, %v3152
    %v3154 = vrot.slane %v3153, 4
    %v3155 = vadd.f32 %v3153, %v3154
    %v3156 = vrot.slane %v3155, 2
    %v3157 = vadd.f32 %v3155, %v3156
    %v3158 = vrot.slane %v3157, 1
    %v3159 = vadd.f32 %v3157, %v3158
    %v3160 = vsel %vm157, %v2851, 0.0
    %v3161 = vadd.f32 %v2852, %v3160
    %v3162 = vrot.slane %v3161, 4
    %v3163 = vadd.f32 %v3161, %v3162
    %v3164 = vrot.slane %v3163, 2
    %v3165 = vadd.f32 %v3163, %v3164
    %v3166 = vrot.slane %v3165, 1
    %v3167 = vadd.f32 %v3165, %v3166
    %v3168 = vsel %vm157, %v2854, 0.0
    %v3169 = vadd.f32 %v2855, %v3168
    %v3170 = vrot.slane %v3169, 4
    %v3171 = vadd.f32 %v3169, %v3170
    %v3172 = vrot.slane %v3171, 2
    %v3173 = vadd.f32 %v3171, %v3172
    %v3174 = vrot.slane %v3173, 1
    %v3175 = vadd.f32 %v3173, %v3174
    %v3176 = vmul.f32 %v2927, 0.083333336
    %v3177 = vmul.f32 %v2935, 0.083333336
    %v3178 = vmul.f32 %v2943, 0.083333336
    %v3179 = vmul.f32 %v2951, 0.083333336
    %v3180 = vmul.f32 %v2959, 0.083333336
    %v3181 = vmul.f32 %v2967, 0.083333336
    %v3182 = vmul.f32 %v2975, 0.083333336
    %v3183 = vmul.f32 %v2983, 0.083333336
    %v3184 = vmul.f32 %v2991, 0.083333336
    %v3185 = vmul.f32 %v2999, 0.083333336
    %v3186 = vmul.f32 %v3007, 0.083333336
    %v3187 = vmul.f32 %v3015, 0.083333336
    %v3188 = vmul.f32 %v3023, 0.083333336
    %v3189 = vmul.f32 %v3031, 0.083333336
    %v3190 = vmul.f32 %v3039, 0.083333336
    %v3191 = vmul.f32 %v3047, 0.083333336
    %v3192 = vmul.f32 %v3055, 0.083333336
    %v3193 = vmul.f32 %v3063, 0.083333336
    %v3194 = vmul.f32 %v3071, 0.083333336
    %v3195 = vmul.f32 %v3079, 0.083333336
    %v3196 = vmul.f32 %v3087, 0.083333336
    %v3197 = vmul.f32 %v3095, 0.083333336
    %v3198 = vmul.f32 %v3103, 0.083333336
    %v3199 = vmul.f32 %v3111, 0.083333336
    %v3200 = vmul.f32 %v3119, 0.083333336
    %v3201 = vmul.f32 %v3127, 0.083333336
    %v3202 = vmul.f32 %v3135, 0.083333336
    %v3203 = vmul.f32 %v3143, 0.083333336
    %v3204 = vmul.f32 %v3151, 0.083333336
    %v3205 = vmul.f32 %v3159, 0.083333336
    %v3206 = vmul.f32 %v3167, 0.083333336
    %v3207 = vmul.f32 %v3175, 0.083333336
    %v3208 = vmul.f32 %v3176, %v3176
    %v3209 = vmul.f32 %v3177, %v3177
    %v3210 = vmul.f32 %v3178, %v3178
    %v3211 = vmul.f32 %v3179, %v3179
    %v3212 = vmul.f32 %v3180, %v3180
    %v3213 = vmul.f32 %v3181, %v3181
    %v3214 = vmul.f32 %v3182, %v3182
    %v3215 = vmul.f32 %v3183, %v3183
    %v3216 = vmul.f32 %v3184, %v3184
    %v3217 = vmul.f32 %v3185, %v3185
    %v3218 = vmul.f32 %v3186, %v3186
    %v3219 = vmul.f32 %v3187, %v3187
    %v3220 = vmul.f32 %v3188, %v3188
    %v3221 = vmul.f32 %v3189, %v3189
    %v3222 = vmul.f32 %v3190, %v3190
    %v3223 = vmul.f32 %v3191, %v3191
    %v3224 = vmul.f32 %v3192, %v3192
    %v3225 = vmul.f32 %v3193, %v3193
    %v3226 = vmul.f32 %v3194, %v3194
    %v3227 = vmul.f32 %v3195, %v3195
    %v3228 = vmul.f32 %v3196, %v3196
    %v3229 = vmul.f32 %v3197, %v3197
    %v3230 = vmul.f32 %v3198, %v3198
    %v3231 = vmul.f32 %v3199, %v3199
    %v3232 = vmul.f32 %v3200, %v3200
    %v3233 = vmul.f32 %v3201, %v3201
    %v3234 = vmul.f32 %v3202, %v3202
    %v3235 = vmul.f32 %v3203, %v3203
    %v3236 = vmul.f32 %v3204, %v3204
    %v3237 = vmul.f32 %v3205, %v3205
    %v3238 = vmul.f32 %v3206, %v3206
    %v3239 = vmul.f32 %v3207, %v3207
    %v3272 = vsel %vm510, %v3224, %v3208
    %v3273 = vsel %vm510, %v3225, %v3209
    %v3274 = vsel %vm510, %v3226, %v3210
    %v3275 = vsel %vm510, %v3227, %v3211
    %v3276 = vsel %vm510, %v3228, %v3212
    %v3277 = vsel %vm510, %v3229, %v3213
    %v3278 = vsel %vm510, %v3230, %v3214
    %v3279 = vsel %vm510, %v3231, %v3215
    %v3280 = vsel %vm510, %v3232, %v3216
    %v3281 = vsel %vm510, %v3233, %v3217
    %v3282 = vsel %vm510, %v3234, %v3218
    %v3283 = vsel %vm510, %v3235, %v3219
    %v3284 = vsel %vm510, %v3236, %v3220
    %v3285 = vsel %vm510, %v3237, %v3221
    %v3286 = vsel %vm510, %v3238, %v3222
    %v3287 = vsel %vm510, %v3239, %v3223
    %v3304 = vsel %vm543, %v3272, 0.0
    %v3305 = vsel %vm543, %v3273, 0.0
    %v3306 = vadd.f32 %v3304, %v3305
    %v3307 = vsel %vm543, %v3274, 0.0
    %v3308 = vadd.f32 %v3306, %v3307
    %v3309 = vsel %vm543, %v3275, 0.0
    %v3310 = vadd.f32 %v3308, %v3309
    %v3311 = vsel %vm543, %v3276, 0.0
    %v3312 = vadd.f32 %v3310, %v3311
    %v3313 = vsel %vm543, %v3277, 0.0
    %v3314 = vadd.f32 %v3312, %v3313
    %v3315 = vsel %vm543, %v3278, 0.0
    %v3316 = vadd.f32 %v3314, %v3315
    %v3317 = vsel %vm543, %v3279, 0.0
    %v3318 = vadd.f32 %v3316, %v3317
    %v3319 = vsel %vm543, %v3280, 0.0
    %v3320 = vadd.f32 %v3318, %v3319
    %v3321 = vsel %vm543, %v3281, 0.0
    %v3322 = vadd.f32 %v3320, %v3321
    %v3323 = vsel %vm543, %v3282, 0.0
    %v3324 = vadd.f32 %v3322, %v3323
    %v3325 = vsel %vm543, %v3283, 0.0
    %v3326 = vadd.f32 %v3324, %v3325
    %v3327 = vsel %vm543, %v3284, 0.0
    %v3328 = vadd.f32 %v3326, %v3327
    %v3329 = vsel %vm543, %v3285, 0.0
    %v3330 = vadd.f32 %v3328, %v3329
    %v3331 = vsel %vm543, %v3286, 0.0
    %v3332 = vadd.f32 %v3330, %v3331
    %v3333 = vsel %vm543, %v3287, 0.0
    %v3334 = vadd.f32 %v3332, %v3333
    %3335 = vadd.xlane.f32.xlu0 %v3334
    %v3336 = vpop.xlane.xlu0 %3335
    %v3337 = vrsqrt.pop %v3336
    %v3338 = vmul.f32 %v3337, %v3336
    %v3339 = vmul.f32 %v3338, %v3337
    %v3340 = vmul.f32 0.5, %v3339
    %v3341 = vsub.f32 1.5, %v3340
    %v3342 = vmul.f32 %v3337, %v3341
    %vm3343 = vweird.f32 %v3336
    %vm3344 = vweird.f32 %v3337
    %vm3345 = vmor %vm3343, %vm3344
    %v3346 = vsel %vm3345, %v3337, %v3342
    %v3348 = vrot.slane %v3346, 1
    %v3351 = vmul.f32 %v3176, %v3346
    %v3352 = vmul.f32 %v3177, %v3346
    %v3353 = vmul.f32 %v3178, %v3346
    %v3354 = vmul.f32 %v3179, %v3346
    %v3355 = vmul.f32 %v3180, %v3346
    %v3356 = vmul.f32 %v3181, %v3346
    %v3357 = vmul.f32 %v3182, %v3346
    %v3358 = vmul.f32 %v3183, %v3346
    %v3359 = vmul.f32 %v3184, %v3346
    %v3360 = vmul.f32 %v3185, %v3346
    %v3361 = vmul.f32 %v3186, %v3346
    %v3362 = vmul.f32 %v3187, %v3346
    %v3363 = vmul.f32 %v3188, %v3346
    %v3364 = vmul.f32 %v3189, %v3346
    %v3365 = vmul.f32 %v3190, %v3346
    %v3366 = vmul.f32 %v3191, %v3346
    %v3367 = vmul.f32 %v3192, %v3348
    %v3368 = vmul.f32 %v3193, %v3348
    %v3369 = vmul.f32 %v3194, %v3348
    %v3370 = vmul.f32 %v3195, %v3348
    %v3371 = vmul.f32 %v3196, %v3348
    %v3372 = vmul.f32 %v3197, %v3348
    %v3373 = vmul.f32 %v3198, %v3348
    %v3374 = vmul.f32 %v3199, %v3348
    %v3375 = vmul.f32 %v3200, %v3348
    %v3376 = vmul.f32 %v3201, %v3348
    %v3377 = vmul.f32 %v3202, %v3348
    %v3378 = vmul.f32 %v3203, %v3348
    %v3379 = vmul.f32 %v3204, %v3348
    %v3380 = vmul.f32 %v3205, %v3348
    %v3381 = vmul.f32 %v3206, %v3348
    %v3382 = vmul.f32 %v3207, %v3348
    %v3415 = vrot.slane %v3352, 4
    %v3416 = vrot.slane %v3354, 4
    %v3417 = vrot.slane %v3356, 4
    %v3418 = vrot.slane %v3358, 4
    %v3419 = vrot.slane %v3360, 4
    %v3420 = vrot.slane %v3362, 4
    %v3421 = vrot.slane %v3364, 4
    %v3422 = vrot.slane %v3366, 4
    %v3423 = vrot.slane %v3368, 4
    %v3424 = vrot.slane %v3370, 4
    %v3425 = vrot.slane %v3372, 4
    %v3426 = vrot.slane %v3374, 4
    %v3427 = vrot.slane %v3376, 4
    %v3428 = vrot.slane %v3378, 4
    %v3429 = vrot.slane %v3380, 4
    %v3430 = vrot.slane %v3382, 4
    %v3431 = vsel %vm157, %v3351, %v3415
    %v3432 = vsel %vm157, %v3353, %v3416
    %v3433 = vsel %vm157, %v3355, %v3417
    %v3434 = vsel %vm157, %v3357, %v3418
    %v3435 = vsel %vm157, %v3359, %v3419
    %v3436 = vsel %vm157, %v3361, %v3420
    %v3437 = vsel %vm157, %v3363, %v3421
    %v3438 = vsel %vm157, %v3365, %v3422
    %v3439 = vsel %vm157, %v3367, %v3423
    %v3440 = vsel %vm157, %v3369, %v3424
    %v3441 = vsel %vm157, %v3371, %v3425
    %v3442 = vsel %vm157, %v3373, %v3426
    %v3443 = vsel %vm157, %v3375, %v3427
    %v3444 = vsel %vm157, %v3377, %v3428
    %v3445 = vsel %vm157, %v3379, %v3429
    %v3446 = vsel %vm157, %v3381, %v3430
    %v3447 = vrot.slane %v3431, 6
    %v3448 = vrot.slane %v3439, 5
    %v3449 = vsel %vm1457, %v3448, %v3447
    %v3450 = vsel %vm1459, %v3448, %v3449
    %v3451 = vrot.slane %v3432, 6
    %v3452 = vrot.slane %v3440, 5
    %v3453 = vsel %vm1457, %v3452, %v3451
    %v3454 = vsel %vm1459, %v3452, %v3453
    %v3455 = vrot.slane %v3433, 6
    %v3456 = vrot.slane %v3441, 5
    %v3457 = vsel %vm1457, %v3456, %v3455
    %v3458 = vsel %vm1459, %v3456, %v3457
    %v3459 = vrot.slane %v3434, 6
    %v3460 = vrot.slane %v3442, 5
    %v3461 = vsel %vm1457, %v3460, %v3459
    %v3462 = vsel %vm1459, %v3460, %v3461
    %v3463 = vrot.slane %v3435, 6
    %v3464 = vrot.slane %v3443, 5
    %v3465 = vsel %vm1457, %v3464, %v3463
    %v3466 = vsel %vm1459, %v3464, %v3465
    %v3467 = vrot.slane %v3436, 6
    %v3468 = vrot.slane %v3444, 5
    %v3469 = vsel %vm1457, %v3468, %v3467
    %v3470 = vsel %vm1459, %v3468, %v3469
    %v3471 = vrot.slane %v3437, 6
    %v3472 = vrot.slane %v3445, 5
    %v3473 = vsel %vm1457, %v3472, %v3471
    %v3474 = vsel %vm1459, %v3472, %v3473
    %v3475 = vrot.slane %v3438, 6
    %v3476 = vrot.slane %v3446, 5
    %v3477 = vsel %vm1457, %v3476, %v3475
    %v3478 = vsel %vm1459, %v3476, %v3477
    %3487 = vst [vmem:[#allocation3 + $0x40] sm:$0xcc] %v3450
    %3488 = vst [vmem:[#allocation3 + $0x48] sm:$0xcc] %v3454
    %3489 = vst [vmem:[#allocation3 + $0x50] sm:$0xcc] %v3458
    %3490 = vst [vmem:[#allocation3 + $0x58] sm:$0xcc] %v3462
    %3491 = vst [vmem:[#allocation3 + $0x60] sm:$0xcc] %v3466
    %3492 = vst [vmem:[#allocation3 + $0x68] sm:$0xcc] %v3470
    %3493 = vst [vmem:[#allocation3 + $0x70] sm:$0xcc] %v3474
    %3494 = vst [vmem:[#allocation3 + $0x78] sm:$0xcc] %v3478
    %v3495 = vpack.c.bf16 %v3177, %v3176
    %v3496 = vpack.c.bf16 %v3179, %v3178
    %v3497 = vpack.c.bf16 %v3181, %v3180
    %v3498 = vpack.c.bf16 %v3183, %v3182
    %v3499 = vpack.c.bf16 %v3185, %v3184
    %v3500 = vpack.c.bf16 %v3187, %v3186
    %v3501 = vpack.c.bf16 %v3189, %v3188
    %v3502 = vpack.c.bf16 %v3191, %v3190
    %v3503 = vpack.c.bf16 %v3193, %v3192
    %v3504 = vpack.c.bf16 %v3195, %v3194
    %v3505 = vpack.c.bf16 %v3197, %v3196
    %v3506 = vpack.c.bf16 %v3199, %v3198
    %v3507 = vpack.c.bf16 %v3201, %v3200
    %v3508 = vpack.c.bf16 %v3203, %v3202
    %v3509 = vpack.c.bf16 %v3205, %v3204
    %v3510 = vpack.c.bf16 %v3207, %v3206
    %v3527 = vunpack.c.l.b16 %v3495
    %v3528 = vunpack.c.h.b16 %v3495
    %v3529 = vunpack.c.l.b16 %v3496
    %v3530 = vunpack.c.h.b16 %v3496
    %v3531 = vunpack.c.l.b16 %v3497
    %v3532 = vunpack.c.h.b16 %v3497
    %v3533 = vunpack.c.l.b16 %v3498
    %v3534 = vunpack.c.h.b16 %v3498
    %v3535 = vunpack.c.l.b16 %v3499
    %v3536 = vunpack.c.h.b16 %v3499
    %v3537 = vunpack.c.l.b16 %v3500
    %v3538 = vunpack.c.h.b16 %v3500
    %v3539 = vunpack.c.l.b16 %v3501
    %v3540 = vunpack.c.h.b16 %v3501
    %v3541 = vunpack.c.l.b16 %v3502
    %v3542 = vunpack.c.h.b16 %v3502
    %v3543 = vunpack.c.l.b16 %v3503
    %v3544 = vunpack.c.h.b16 %v3503
    %v3545 = vunpack.c.l.b16 %v3504
    %v3546 = vunpack.c.h.b16 %v3504
    %v3547 = vunpack.c.l.b16 %v3505
    %v3548 = vunpack.c.h.b16 %v3505
    %v3549 = vunpack.c.l.b16 %v3506
    %v3550 = vunpack.c.h.b16 %v3506
    %v3551 = vunpack.c.l.b16 %v3507
    %v3552 = vunpack.c.h.b16 %v3507
    %v3553 = vunpack.c.l.b16 %v3508
    %v3554 = vunpack.c.h.b16 %v3508
    %v3555 = vunpack.c.l.b16 %v3509
    %v3556 = vunpack.c.h.b16 %v3509
    %v3557 = vunpack.c.l.b16 %v3510
    %v3558 = vunpack.c.h.b16 %v3510
    %v3559 = vsel %vm1457, %v3543, %v3527
    %v3560 = vsel %vm1457, %v3544, %v3528
    %v3561 = vsel %vm1457, %v3545, %v3529
    %v3562 = vsel %vm1457, %v3546, %v3530
    %v3563 = vsel %vm1457, %v3547, %v3531
    %v3564 = vsel %vm1457, %v3548, %v3532
    %v3565 = vsel %vm1457, %v3549, %v3533
    %v3566 = vsel %vm1457, %v3550, %v3534
    %v3567 = vsel %vm1457, %v3551, %v3535
    %v3568 = vsel %vm1457, %v3552, %v3536
    %v3569 = vsel %vm1457, %v3553, %v3537
    %v3570 = vsel %vm1457, %v3554, %v3538
    %v3571 = vsel %vm1457, %v3555, %v3539
    %v3572 = vsel %vm1457, %v3556, %v3540
    %v3573 = vsel %vm1457, %v3557, %v3541
    %v3574 = vsel %vm1457, %v3558, %v3542
    %v3575 = vpack.c.b16 %v3560, %v3559
    %v3576 = vpack.c.b16 %v3562, %v3561
    %v3577 = vpack.c.b16 %v3564, %v3563
    %v3578 = vpack.c.b16 %v3566, %v3565
    %v3579 = vpack.c.b16 %v3568, %v3567
    %v3580 = vpack.c.b16 %v3570, %v3569
    %v3581 = vpack.c.b16 %v3572, %v3571
    %v3582 = vpack.c.b16 %v3574, %v3573
    %3591 = vst [vmem:[#allocation2 + $0x40] sm:$0x22] %v3575
    %3592 = vst [vmem:[#allocation2 + $0x48] sm:$0x22] %v3576
    %3593 = vst [vmem:[#allocation2 + $0x50] sm:$0x22] %v3577
    %3594 = vst [vmem:[#allocation2 + $0x58] sm:$0x22] %v3578
    %3595 = vst [vmem:[#allocation2 + $0x60] sm:$0x22] %v3579
    %3596 = vst [vmem:[#allocation2 + $0x68] sm:$0x22] %v3580
    %3597 = vst [vmem:[#allocation2 + $0x70] sm:$0x22] %v3581
    %3598 = vst [vmem:[#allocation2 + $0x78] sm:$0x22] %v3582
    %v3599 = vld [vmem:[%s0 + $0xc0] sm:$0xff]
    %v3600 = vld [vmem:[%s0 + $0xc8] sm:$0xff]
    %v3601 = vld [vmem:[%s0 + $0xd0] sm:$0xff]
    %v3602 = vld [vmem:[%s0 + $0xd8] sm:$0xff]
    %v3603 = vld [vmem:[%s0 + $0xe0] sm:$0xff]
    %v3604 = vld [vmem:[%s0 + $0xe8] sm:$0xff]
    %v3605 = vld [vmem:[%s0 + $0xf0] sm:$0xff]
    %v3606 = vld [vmem:[%s0 + $0xf8] sm:$0xff]
    %v3607 = vld [vmem:[%s0 + $0x100] sm:$0x33]
    %v3608 = vld [vmem:[%s0 + $0x108] sm:$0x33]
    %v3609 = vld [vmem:[%s0 + $0x110] sm:$0x33]
    %v3610 = vld [vmem:[%s0 + $0x118] sm:$0x33]
    %v3611 = vld [vmem:[%s0 + $0x120] sm:$0x33]
    %v3612 = vld [vmem:[%s0 + $0x128] sm:$0x33]
    %v3613 = vld [vmem:[%s0 + $0x130] sm:$0x33]
    %v3614 = vld [vmem:[%s0 + $0x138] sm:$0x33]
    %v3615 = vld [vmem:[%s0 + $0x240] sm:$0xff]
    %v3616 = vld [vmem:[%s0 + $0x248] sm:$0xff]
    %v3617 = vld [vmem:[%s0 + $0x250] sm:$0xff]
    %v3618 = vld [vmem:[%s0 + $0x258] sm:$0xff]
    %v3619 = vld [vmem:[%s0 + $0x260] sm:$0xff]
    %v3620 = vld [vmem:[%s0 + $0x268] sm:$0xff]
    %v3621 = vld [vmem:[%s0 + $0x270] sm:$0xff]
    %v3622 = vld [vmem:[%s0 + $0x278] sm:$0xff]
    %v3623 = vld [vmem:[%s0 + $0x280] sm:$0x33]
    %v3624 = vld [vmem:[%s0 + $0x288] sm:$0x33]
    %v3625 = vld [vmem:[%s0 + $0x290] sm:$0x33]
    %v3626 = vld [vmem:[%s0 + $0x298] sm:$0x33]
    %v3627 = vld [vmem:[%s0 + $0x2a0] sm:$0x33]
    %v3628 = vld [vmem:[%s0 + $0x2a8] sm:$0x33]
    %v3629 = vld [vmem:[%s0 + $0x2b0] sm:$0x33]
    %v3630 = vld [vmem:[%s0 + $0x2b8] sm:$0x33]
    %v3631 = vunpack.c.l.bf16 %v3599
    %v3632 = vunpack.c.h.bf16 %v3599
    %v3633 = vunpack.c.l.bf16 %v3600
    %v3634 = vunpack.c.h.bf16 %v3600
    %v3635 = vunpack.c.l.bf16 %v3601
    %v3636 = vunpack.c.h.bf16 %v3601
    %v3637 = vunpack.c.l.bf16 %v3602
    %v3638 = vunpack.c.h.bf16 %v3602
    %v3639 = vunpack.c.l.bf16 %v3603
    %v3640 = vunpack.c.h.bf16 %v3603
    %v3641 = vunpack.c.l.bf16 %v3604
    %v3642 = vunpack.c.h.bf16 %v3604
    %v3643 = vunpack.c.l.bf16 %v3605
    %v3644 = vunpack.c.h.bf16 %v3605
    %v3645 = vunpack.c.l.bf16 %v3606
    %v3646 = vunpack.c.h.bf16 %v3606
    %v3647 = vunpack.c.l.bf16 %v3607
    %v3648 = vunpack.c.h.bf16 %v3607
    %v3649 = vunpack.c.l.bf16 %v3608
    %v3650 = vunpack.c.h.bf16 %v3608
    %v3651 = vunpack.c.l.bf16 %v3609
    %v3652 = vunpack.c.h.bf16 %v3609
    %v3653 = vunpack.c.l.bf16 %v3610
    %v3654 = vunpack.c.h.bf16 %v3610
    %v3655 = vunpack.c.l.bf16 %v3611
    %v3656 = vunpack.c.h.bf16 %v3611
    %v3657 = vunpack.c.l.bf16 %v3612
    %v3658 = vunpack.c.h.bf16 %v3612
    %v3659 = vunpack.c.l.bf16 %v3613
    %v3660 = vunpack.c.h.bf16 %v3613
    %v3661 = vunpack.c.l.bf16 %v3614
    %v3662 = vunpack.c.h.bf16 %v3614
    %v3663 = vunpack.c.l.bf16 %v3615
    %v3664 = vunpack.c.h.bf16 %v3615
    %v3665 = vunpack.c.l.bf16 %v3616
    %v3666 = vunpack.c.h.bf16 %v3616
    %v3667 = vunpack.c.l.bf16 %v3617
    %v3668 = vunpack.c.h.bf16 %v3617
    %v3669 = vunpack.c.l.bf16 %v3618
    %v3670 = vunpack.c.h.bf16 %v3618
    %v3671 = vunpack.c.l.bf16 %v3619
    %v3672 = vunpack.c.h.bf16 %v3619
    %v3673 = vunpack.c.l.bf16 %v3620
    %v3674 = vunpack.c.h.bf16 %v3620
    %v3675 = vunpack.c.l.bf16 %v3621
    %v3676 = vunpack.c.h.bf16 %v3621
    %v3677 = vunpack.c.l.bf16 %v3622
    %v3678 = vunpack.c.h.bf16 %v3622
    %v3679 = vunpack.c.l.bf16 %v3623
    %v3680 = vunpack.c.h.bf16 %v3623
    %v3681 = vunpack.c.l.bf16 %v3624
    %v3682 = vunpack.c.h.bf16 %v3624
    %v3683 = vunpack.c.l.bf16 %v3625
    %v3684 = vunpack.c.h.bf16 %v3625
    %v3685 = vunpack.c.l.bf16 %v3626
    %v3686 = vunpack.c.h.bf16 %v3626
    %v3687 = vunpack.c.l.bf16 %v3627
    %v3688 = vunpack.c.h.bf16 %v3627
    %v3689 = vunpack.c.l.bf16 %v3628
    %v3690 = vunpack.c.h.bf16 %v3628
    %v3691 = vunpack.c.l.bf16 %v3629
    %v3692 = vunpack.c.h.bf16 %v3629
    %v3693 = vunpack.c.l.bf16 %v3630
    %v3694 = vunpack.c.h.bf16 %v3630
    %v3695 = vsel %vm157, %v3647, 0.0
    %v3696 = vadd.f32 %v3631, %v3695
    %v3697 = vrot.slane %v3696, 4
    %v3698 = vadd.f32 %v3696, %v3697
    %v3699 = vrot.slane %v3698, 2
    %v3700 = vadd.f32 %v3698, %v3699
    %v3701 = vrot.slane %v3700, 1
    %v3702 = vadd.f32 %v3700, %v3701
    %v3703 = vsel %vm157, %v3648, 0.0
    %v3704 = vadd.f32 %v3632, %v3703
    %v3705 = vrot.slane %v3704, 4
    %v3706 = vadd.f32 %v3704, %v3705
    %v3707 = vrot.slane %v3706, 2
    %v3708 = vadd.f32 %v3706, %v3707
    %v3709 = vrot.slane %v3708, 1
    %v3710 = vadd.f32 %v3708, %v3709
    %v3711 = vsel %vm157, %v3649, 0.0
    %v3712 = vadd.f32 %v3633, %v3711
    %v3713 = vrot.slane %v3712, 4
    %v3714 = vadd.f32 %v3712, %v3713
    %v3715 = vrot.slane %v3714, 2
    %v3716 = vadd.f32 %v3714, %v3715
    %v3717 = vrot.slane %v3716, 1
    %v3718 = vadd.f32 %v3716, %v3717
    %v3719 = vsel %vm157, %v3650, 0.0
    %v3720 = vadd.f32 %v3634, %v3719
    %v3721 = vrot.slane %v3720, 4
    %v3722 = vadd.f32 %v3720, %v3721
    %v3723 = vrot.slane %v3722, 2
    %v3724 = vadd.f32 %v3722, %v3723
    %v3725 = vrot.slane %v3724, 1
    %v3726 = vadd.f32 %v3724, %v3725
    %v3727 = vsel %vm157, %v3651, 0.0
    %v3728 = vadd.f32 %v3635, %v3727
    %v3729 = vrot.slane %v3728, 4
    %v3730 = vadd.f32 %v3728, %v3729
    %v3731 = vrot.slane %v3730, 2
    %v3732 = vadd.f32 %v3730, %v3731
    %v3733 = vrot.slane %v3732, 1
    %v3734 = vadd.f32 %v3732, %v3733
    %v3735 = vsel %vm157, %v3652, 0.0
    %v3736 = vadd.f32 %v3636, %v3735
    %v3737 = vrot.slane %v3736, 4
    %v3738 = vadd.f32 %v3736, %v3737
    %v3739 = vrot.slane %v3738, 2
    %v3740 = vadd.f32 %v3738, %v3739
    %v3741 = vrot.slane %v3740, 1
    %v3742 = vadd.f32 %v3740, %v3741
    %v3743 = vsel %vm157, %v3653, 0.0
    %v3744 = vadd.f32 %v3637, %v3743
    %v3745 = vrot.slane %v3744, 4
    %v3746 = vadd.f32 %v3744, %v3745
    %v3747 = vrot.slane %v3746, 2
    %v3748 = vadd.f32 %v3746, %v3747
    %v3749 = vrot.slane %v3748, 1
    %v3750 = vadd.f32 %v3748, %v3749
    %v3751 = vsel %vm157, %v3654, 0.0
    %v3752 = vadd.f32 %v3638, %v3751
    %v3753 = vrot.slane %v3752, 4
    %v3754 = vadd.f32 %v3752, %v3753
    %v3755 = vrot.slane %v3754, 2
    %v3756 = vadd.f32 %v3754, %v3755
    %v3757 = vrot.slane %v3756, 1
    %v3758 = vadd.f32 %v3756, %v3757
    %v3759 = vsel %vm157, %v3655, 0.0
    %v3760 = vadd.f32 %v3639, %v3759
    %v3761 = vrot.slane %v3760, 4
    %v3762 = vadd.f32 %v3760, %v3761
    %v3763 = vrot.slane %v3762, 2
    %v3764 = vadd.f32 %v3762, %v3763
    %v3765 = vrot.slane %v3764, 1
    %v3766 = vadd.f32 %v3764, %v3765
    %v3767 = vsel %vm157, %v3656, 0.0
    %v3768 = vadd.f32 %v3640, %v3767
    %v3769 = vrot.slane %v3768, 4
    %v3770 = vadd.f32 %v3768, %v3769
    %v3771 = vrot.slane %v3770, 2
    %v3772 = vadd.f32 %v3770, %v3771
    %v3773 = vrot.slane %v3772, 1
    %v3774 = vadd.f32 %v3772, %v3773
    %v3775 = vsel %vm157, %v3657, 0.0
    %v3776 = vadd.f32 %v3641, %v3775
    %v3777 = vrot.slane %v3776, 4
    %v3778 = vadd.f32 %v3776, %v3777
    %v3779 = vrot.slane %v3778, 2
    %v3780 = vadd.f32 %v3778, %v3779
    %v3781 = vrot.slane %v3780, 1
    %v3782 = vadd.f32 %v3780, %v3781
    %v3783 = vsel %vm157, %v3658, 0.0
    %v3784 = vadd.f32 %v3642, %v3783
    %v3785 = vrot.slane %v3784, 4
    %v3786 = vadd.f32 %v3784, %v3785
    %v3787 = vrot.slane %v3786, 2
    %v3788 = vadd.f32 %v3786, %v3787
    %v3789 = vrot.slane %v3788, 1
    %v3790 = vadd.f32 %v3788, %v3789
    %v3791 = vsel %vm157, %v3659, 0.0
    %v3792 = vadd.f32 %v3643, %v3791
    %v3793 = vrot.slane %v3792, 4
    %v3794 = vadd.f32 %v3792, %v3793
    %v3795 = vrot.slane %v3794, 2
    %v3796 = vadd.f32 %v3794, %v3795
    %v3797 = vrot.slane %v3796, 1
    %v3798 = vadd.f32 %v3796, %v3797
    %v3799 = vsel %vm157, %v3660, 0.0
    %v3800 = vadd.f32 %v3644, %v3799
    %v3801 = vrot.slane %v3800, 4
    %v3802 = vadd.f32 %v3800, %v3801
    %v3803 = vrot.slane %v3802, 2
    %v3804 = vadd.f32 %v3802, %v3803
    %v3805 = vrot.slane %v3804, 1
    %v3806 = vadd.f32 %v3804, %v3805
    %v3807 = vsel %vm157, %v3661, 0.0
    %v3808 = vadd.f32 %v3645, %v3807
    %v3809 = vrot.slane %v3808, 4
    %v3810 = vadd.f32 %v3808, %v3809
    %v3811 = vrot.slane %v3810, 2
    %v3812 = vadd.f32 %v3810, %v3811
    %v3813 = vrot.slane %v3812, 1
    %v3814 = vadd.f32 %v3812, %v3813
    %v3815 = vsel %vm157, %v3662, 0.0
    %v3816 = vadd.f32 %v3646, %v3815
    %v3817 = vrot.slane %v3816, 4
    %v3818 = vadd.f32 %v3816, %v3817
    %v3819 = vrot.slane %v3818, 2
    %v3820 = vadd.f32 %v3818, %v3819
    %v3821 = vrot.slane %v3820, 1
    %v3822 = vadd.f32 %v3820, %v3821
    %v3823 = vsel %vm157, %v3679, 0.0
    %v3824 = vadd.f32 %v3663, %v3823
    %v3825 = vrot.slane %v3824, 4
    %v3826 = vadd.f32 %v3824, %v3825
    %v3827 = vrot.slane %v3826, 2
    %v3828 = vadd.f32 %v3826, %v3827
    %v3829 = vrot.slane %v3828, 1
    %v3830 = vadd.f32 %v3828, %v3829
    %v3831 = vsel %vm157, %v3680, 0.0
    %v3832 = vadd.f32 %v3664, %v3831
    %v3833 = vrot.slane %v3832, 4
    %v3834 = vadd.f32 %v3832, %v3833
    %v3835 = vrot.slane %v3834, 2
    %v3836 = vadd.f32 %v3834, %v3835
    %v3837 = vrot.slane %v3836, 1
    %v3838 = vadd.f32 %v3836, %v3837
    %v3839 = vsel %vm157, %v3681, 0.0
    %v3840 = vadd.f32 %v3665, %v3839
    %v3841 = vrot.slane %v3840, 4
    %v3842 = vadd.f32 %v3840, %v3841
    %v3843 = vrot.slane %v3842, 2
    %v3844 = vadd.f32 %v3842, %v3843
    %v3845 = vrot.slane %v3844, 1
    %v3846 = vadd.f32 %v3844, %v3845
    %v3847 = vsel %vm157, %v3682, 0.0
    %v3848 = vadd.f32 %v3666, %v3847
    %v3849 = vrot.slane %v3848, 4
    %v3850 = vadd.f32 %v3848, %v3849
    %v3851 = vrot.slane %v3850, 2
    %v3852 = vadd.f32 %v3850, %v3851
    %v3853 = vrot.slane %v3852, 1
    %v3854 = vadd.f32 %v3852, %v3853
    %v3855 = vsel %vm157, %v3683, 0.0
    %v3856 = vadd.f32 %v3667, %v3855
    %v3857 = vrot.slane %v3856, 4
    %v3858 = vadd.f32 %v3856, %v3857
    %v3859 = vrot.slane %v3858, 2
    %v3860 = vadd.f32 %v3858, %v3859
    %v3861 = vrot.slane %v3860, 1
    %v3862 = vadd.f32 %v3860, %v3861
    %v3863 = vsel %vm157, %v3684, 0.0
    %v3864 = vadd.f32 %v3668, %v3863
    %v3865 = vrot.slane %v3864, 4
    %v3866 = vadd.f32 %v3864, %v3865
    %v3867 = vrot.slane %v3866, 2
    %v3868 = vadd.f32 %v3866, %v3867
    %v3869 = vrot.slane %v3868, 1
    %v3870 = vadd.f32 %v3868, %v3869
    %v3871 = vsel %vm157, %v3685, 0.0
    %v3872 = vadd.f32 %v3669, %v3871
    %v3873 = vrot.slane %v3872, 4
    %v3874 = vadd.f32 %v3872, %v3873
    %v3875 = vrot.slane %v3874, 2
    %v3876 = vadd.f32 %v3874, %v3875
    %v3877 = vrot.slane %v3876, 1
    %v3878 = vadd.f32 %v3876, %v3877
    %v3879 = vsel %vm157, %v3686, 0.0
    %v3880 = vadd.f32 %v3670, %v3879
    %v3881 = vrot.slane %v3880, 4
    %v3882 = vadd.f32 %v3880, %v3881
    %v3883 = vrot.slane %v3882, 2
    %v3884 = vadd.f32 %v3882, %v3883
    %v3885 = vrot.slane %v3884, 1
    %v3886 = vadd.f32 %v3884, %v3885
    %v3887 = vsel %vm157, %v3687, 0.0
    %v3888 = vadd.f32 %v3671, %v3887
    %v3889 = vrot.slane %v3888, 4
    %v3890 = vadd.f32 %v3888, %v3889
    %v3891 = vrot.slane %v3890, 2
    %v3892 = vadd.f32 %v3890, %v3891
    %v3893 = vrot.slane %v3892, 1
    %v3894 = vadd.f32 %v3892, %v3893
    %v3895 = vsel %vm157, %v3688, 0.0
    %v3896 = vadd.f32 %v3672, %v3895
    %v3897 = vrot.slane %v3896, 4
    %v3898 = vadd.f32 %v3896, %v3897
    %v3899 = vrot.slane %v3898, 2
    %v3900 = vadd.f32 %v3898, %v3899
    %v3901 = vrot.slane %v3900, 1
    %v3902 = vadd.f32 %v3900, %v3901
    %v3903 = vsel %vm157, %v3689, 0.0
    %v3904 = vadd.f32 %v3673, %v3903
    %v3905 = vrot.slane %v3904, 4
    %v3906 = vadd.f32 %v3904, %v3905
    %v3907 = vrot.slane %v3906, 2
    %v3908 = vadd.f32 %v3906, %v3907
    %v3909 = vrot.slane %v3908, 1
    %v3910 = vadd.f32 %v3908, %v3909
    %v3911 = vsel %vm157, %v3690, 0.0
    %v3912 = vadd.f32 %v3674, %v3911
    %v3913 = vrot.slane %v3912, 4
    %v3914 = vadd.f32 %v3912, %v3913
    %v3915 = vrot.slane %v3914, 2
    %v3916 = vadd.f32 %v3914, %v3915
    %v3917 = vrot.slane %v3916, 1
    %v3918 = vadd.f32 %v3916, %v3917
    %v3919 = vsel %vm157, %v3691, 0.0
    %v3920 = vadd.f32 %v3675, %v3919
    %v3921 = vrot.slane %v3920, 4
    %v3922 = vadd.f32 %v3920, %v3921
    %v3923 = vrot.slane %v3922, 2
    %v3924 = vadd.f32 %v3922, %v3923
    %v3925 = vrot.slane %v3924, 1
    %v3926 = vadd.f32 %v3924, %v3925
    %v3927 = vsel %vm157, %v3692, 0.0
    %v3928 = vadd.f32 %v3676, %v3927
    %v3929 = vrot.slane %v3928, 4
    %v3930 = vadd.f32 %v3928, %v3929
    %v3931 = vrot.slane %v3930, 2
    %v3932 = vadd.f32 %v3930, %v3931
    %v3933 = vrot.slane %v3932, 1
    %v3934 = vadd.f32 %v3932, %v3933
    %v3935 = vsel %vm157, %v3693, 0.0
    %v3936 = vadd.f32 %v3677, %v3935
    %v3937 = vrot.slane %v3936, 4
    %v3938 = vadd.f32 %v3936, %v3937
    %v3939 = vrot.slane %v3938, 2
    %v3940 = vadd.f32 %v3938, %v3939
    %v3941 = vrot.slane %v3940, 1
    %v3942 = vadd.f32 %v3940, %v3941
    %v3943 = vsel %vm157, %v3694, 0.0
    %v3944 = vadd.f32 %v3678, %v3943
    %v3945 = vrot.slane %v3944, 4
    %v3946 = vadd.f32 %v3944, %v3945
    %v3947 = vrot.slane %v3946, 2
    %v3948 = vadd.f32 %v3946, %v3947
    %v3949 = vrot.slane %v3948, 1
    %v3950 = vadd.f32 %v3948, %v3949
    %v3951 = vmul.f32 %v3702, 0.083333336
    %v3952 = vmul.f32 %v3710, 0.083333336
    %v3953 = vmul.f32 %v3718, 0.083333336
    %v3954 = vmul.f32 %v3726, 0.083333336
    %v3955 = vmul.f32 %v3734, 0.083333336
    %v3956 = vmul.f32 %v3742, 0.083333336
    %v3957 = vmul.f32 %v3750, 0.083333336
    %v3958 = vmul.f32 %v3758, 0.083333336
    %v3959 = vmul.f32 %v3766, 0.083333336
    %v3960 = vmul.f32 %v3774, 0.083333336
    %v3961 = vmul.f32 %v3782, 0.083333336
    %v3962 = vmul.f32 %v3790, 0.083333336
    %v3963 = vmul.f32 %v3798, 0.083333336
    %v3964 = vmul.f32 %v3806, 0.083333336
    %v3965 = vmul.f32 %v3814, 0.083333336
    %v3966 = vmul.f32 %v3822, 0.083333336
    %v3967 = vmul.f32 %v3830, 0.083333336
    %v3968 = vmul.f32 %v3838, 0.083333336
    %v3969 = vmul.f32 %v3846, 0.083333336
    %v3970 = vmul.f32 %v3854, 0.083333336
    %v3971 = vmul.f32 %v3862, 0.083333336
    %v3972 = vmul.f32 %v3870, 0.083333336
    %v3973 = vmul.f32 %v3878, 0.083333336
    %v3974 = vmul.f32 %v3886, 0.083333336
    %v3975 = vmul.f32 %v3894, 0.083333336
    %v3976 = vmul.f32 %v3902, 0.083333336
    %v3977 = vmul.f32 %v3910, 0.083333336
    %v3978 = vmul.f32 %v3918, 0.083333336
    %v3979 = vmul.f32 %v3926, 0.083333336
    %v3980 = vmul.f32 %v3934, 0.083333336
    %v3981 = vmul.f32 %v3942, 0.083333336
    %v3982 = vmul.f32 %v3950, 0.083333336
    %v3983 = vmul.f32 %v3951, %v3951
    %v3984 = vmul.f32 %v3952, %v3952
    %v3985 = vmul.f32 %v3953, %v3953
    %v3986 = vmul.f32 %v3954, %v3954
    %v3987 = vmul.f32 %v3955, %v3955
    %v3988 = vmul.f32 %v3956, %v3956
    %v3989 = vmul.f32 %v3957, %v3957
    %v3990 = vmul.f32 %v3958, %v3958
    %v3991 = vmul.f32 %v3959, %v3959
    %v3992 = vmul.f32 %v3960, %v3960
    %v3993 = vmul.f32 %v3961, %v3961
    %v3994 = vmul.f32 %v3962, %v3962
    %v3995 = vmul.f32 %v3963, %v3963
    %v3996 = vmul.f32 %v3964, %v3964
    %v3997 = vmul.f32 %v3965, %v3965
    %v3998 = vmul.f32 %v3966, %v3966
    %v3999 = vmul.f32 %v3967, %v3967
    %v4000 = vmul.f32 %v3968, %v3968
    %v4001 = vmul.f32 %v3969, %v3969
    %v4002 = vmul.f32 %v3970, %v3970
    %v4003 = vmul.f32 %v3971, %v3971
    %v4004 = vmul.f32 %v3972, %v3972
    %v4005 = vmul.f32 %v3973, %v3973
    %v4006 = vmul.f32 %v3974, %v3974
    %v4007 = vmul.f32 %v3975, %v3975
    %v4008 = vmul.f32 %v3976, %v3976
    %v4009 = vmul.f32 %v3977, %v3977
    %v4010 = vmul.f32 %v3978, %v3978
    %v4011 = vmul.f32 %v3979, %v3979
    %v4012 = vmul.f32 %v3980, %v3980
    %v4013 = vmul.f32 %v3981, %v3981
    %v4014 = vmul.f32 %v3982, %v3982
    %v4047 = vsel %vm510, %v3999, %v3983
    %v4048 = vsel %vm510, %v4000, %v3984
    %v4049 = vsel %vm510, %v4001, %v3985
    %v4050 = vsel %vm510, %v4002, %v3986
    %v4051 = vsel %vm510, %v4003, %v3987
    %v4052 = vsel %vm510, %v4004, %v3988
    %v4053 = vsel %vm510, %v4005, %v3989
    %v4054 = vsel %vm510, %v4006, %v3990
    %v4055 = vsel %vm510, %v4007, %v3991
    %v4056 = vsel %vm510, %v4008, %v3992
    %v4057 = vsel %vm510, %v4009, %v3993
    %v4058 = vsel %vm510, %v4010, %v3994
    %v4059 = vsel %vm510, %v4011, %v3995
    %v4060 = vsel %vm510, %v4012, %v3996
    %v4061 = vsel %vm510, %v4013, %v3997
    %v4062 = vsel %vm510, %v4014, %v3998
    %v4079 = vsel %vm543, %v4047, 0.0
    %v4080 = vsel %vm543, %v4048, 0.0
    %v4081 = vadd.f32 %v4079, %v4080
    %v4082 = vsel %vm543, %v4049, 0.0
    %v4083 = vadd.f32 %v4081, %v4082
    %v4084 = vsel %vm543, %v4050, 0.0
    %v4085 = vadd.f32 %v4083, %v4084
    %v4086 = vsel %vm543, %v4051, 0.0
    %v4087 = vadd.f32 %v4085, %v4086
    %v4088 = vsel %vm543, %v4052, 0.0
    %v4089 = vadd.f32 %v4087, %v4088
    %v4090 = vsel %vm543, %v4053, 0.0
    %v4091 = vadd.f32 %v4089, %v4090
    %v4092 = vsel %vm543, %v4054, 0.0
    %v4093 = vadd.f32 %v4091, %v4092
    %v4094 = vsel %vm543, %v4055, 0.0
    %v4095 = vadd.f32 %v4093, %v4094
    %v4096 = vsel %vm543, %v4056, 0.0
    %v4097 = vadd.f32 %v4095, %v4096
    %v4098 = vsel %vm543, %v4057, 0.0
    %v4099 = vadd.f32 %v4097, %v4098
    %v4100 = vsel %vm543, %v4058, 0.0
    %v4101 = vadd.f32 %v4099, %v4100
    %v4102 = vsel %vm543, %v4059, 0.0
    %v4103 = vadd.f32 %v4101, %v4102
    %v4104 = vsel %vm543, %v4060, 0.0
    %v4105 = vadd.f32 %v4103, %v4104
    %v4106 = vsel %vm543, %v4061, 0.0
    %v4107 = vadd.f32 %v4105, %v4106
    %v4108 = vsel %vm543, %v4062, 0.0
    %v4109 = vadd.f32 %v4107, %v4108
    %4110 = vadd.xlane.f32.xlu0 %v4109
    %v4111 = vpop.xlane.xlu0 %4110
    %v4112 = vrsqrt.pop %v4111
    %v4113 = vmul.f32 %v4112, %v4111
    %v4114 = vmul.f32 %v4113, %v4112
    %v4115 = vmul.f32 0.5, %v4114
    %v4116 = vsub.f32 1.5, %v4115
    %v4117 = vmul.f32 %v4112, %v4116
    %vm4118 = vweird.f32 %v4111
    %vm4119 = vweird.f32 %v4112
    %vm4120 = vmor %vm4118, %vm4119
    %v4121 = vsel %vm4120, %v4112, %v4117
    %v4123 = vrot.slane %v4121, 1
    %v4126 = vmul.f32 %v3951, %v4121
    %v4127 = vmul.f32 %v3952, %v4121
    %v4128 = vmul.f32 %v3953, %v4121
    %v4129 = vmul.f32 %v3954, %v4121
    %v4130 = vmul.f32 %v3955, %v4121
    %v4131 = vmul.f32 %v3956, %v4121
    %v4132 = vmul.f32 %v3957, %v4121
    %v4133 = vmul.f32 %v3958, %v4121
    %v4134 = vmul.f32 %v3959, %v4121
    %v4135 = vmul.f32 %v3960, %v4121
    %v4136 = vmul.f32 %v3961, %v4121
    %v4137 = vmul.f32 %v3962, %v4121
    %v4138 = vmul.f32 %v3963, %v4121
    %v4139 = vmul.f32 %v3964, %v4121
    %v4140 = vmul.f32 %v3965, %v4121
    %v4141 = vmul.f32 %v3966, %v4121
    %v4142 = vmul.f32 %v3967, %v4123
    %v4143 = vmul.f32 %v3968, %v4123
    %v4144 = vmul.f32 %v3969, %v4123
    %v4145 = vmul.f32 %v3970, %v4123
    %v4146 = vmul.f32 %v3971, %v4123
    %v4147 = vmul.f32 %v3972, %v4123
    %v4148 = vmul.f32 %v3973, %v4123
    %v4149 = vmul.f32 %v3974, %v4123
    %v4150 = vmul.f32 %v3975, %v4123
    %v4151 = vmul.f32 %v3976, %v4123
    %v4152 = vmul.f32 %v3977, %v4123
    %v4153 = vmul.f32 %v3978, %v4123
    %v4154 = vmul.f32 %v3979, %v4123
    %v4155 = vmul.f32 %v3980, %v4123
    %v4156 = vmul.f32 %v3981, %v4123
    %v4157 = vmul.f32 %v3982, %v4123
    %v4190 = vrot.slane %v4127, 4
    %v4191 = vrot.slane %v4129, 4
    %v4192 = vrot.slane %v4131, 4
    %v4193 = vrot.slane %v4133, 4
    %v4194 = vrot.slane %v4135, 4
    %v4195 = vrot.slane %v4137, 4
    %v4196 = vrot.slane %v4139, 4
    %v4197 = vrot.slane %v4141, 4
    %v4198 = vrot.slane %v4143, 4
    %v4199 = vrot.slane %v4145, 4
    %v4200 = vrot.slane %v4147, 4
    %v4201 = vrot.slane %v4149, 4
    %v4202 = vrot.slane %v4151, 4
    %v4203 = vrot.slane %v4153, 4
    %v4204 = vrot.slane %v4155, 4
    %v4205 = vrot.slane %v4157, 4
    %v4206 = vsel %vm157, %v4126, %v4190
    %v4207 = vsel %vm157, %v4128, %v4191
    %v4208 = vsel %vm157, %v4130, %v4192
    %v4209 = vsel %vm157, %v4132, %v4193
    %v4210 = vsel %vm157, %v4134, %v4194
    %v4211 = vsel %vm157, %v4136, %v4195
    %v4212 = vsel %vm157, %v4138, %v4196
    %v4213 = vsel %vm157, %v4140, %v4197
    %v4214 = vsel %vm157, %v4142, %v4198
    %v4215 = vsel %vm157, %v4144, %v4199
    %v4216 = vsel %vm157, %v4146, %v4200
    %v4217 = vsel %vm157, %v4148, %v4201
    %v4218 = vsel %vm157, %v4150, %v4202
    %v4219 = vsel %vm157, %v4152, %v4203
    %v4220 = vsel %vm157, %v4154, %v4204
    %v4221 = vsel %vm157, %v4156, %v4205
    %v4222 = vrot.slane %v4214, 7
    %v4223 = vsel %vm510, %v4222, %v4206
    %v4224 = vsel %vm689, %v4222, %v4223
    %v4225 = vrot.slane %v4215, 7
    %v4226 = vsel %vm510, %v4225, %v4207
    %v4227 = vsel %vm689, %v4225, %v4226
    %v4228 = vrot.slane %v4216, 7
    %v4229 = vsel %vm510, %v4228, %v4208
    %v4230 = vsel %vm689, %v4228, %v4229
    %v4231 = vrot.slane %v4217, 7
    %v4232 = vsel %vm510, %v4231, %v4209
    %v4233 = vsel %vm689, %v4231, %v4232
    %v4234 = vrot.slane %v4218, 7
    %v4235 = vsel %vm510, %v4234, %v4210
    %v4236 = vsel %vm689, %v4234, %v4235
    %v4237 = vrot.slane %v4219, 7
    %v4238 = vsel %vm510, %v4237, %v4211
    %v4239 = vsel %vm689, %v4237, %v4238
    %v4240 = vrot.slane %v4220, 7
    %v4241 = vsel %vm510, %v4240, %v4212
    %v4242 = vsel %vm689, %v4240, %v4241
    %v4243 = vrot.slane %v4221, 7
    %v4244 = vsel %vm510, %v4243, %v4213
    %v4245 = vsel %vm689, %v4243, %v4244
    %4254 = vst [vmem:[#allocation3 + $0x80] sm:$0x33] %v4224
    %4255 = vst [vmem:[#allocation3 + $0x88] sm:$0x33] %v4227
    %4256 = vst [vmem:[#allocation3 + $0x90] sm:$0x33] %v4230
    %4257 = vst [vmem:[#allocation3 + $0x98] sm:$0x33] %v4233
    %4258 = vst [vmem:[#allocation3 + $0xa0] sm:$0x33] %v4236
    %4259 = vst [vmem:[#allocation3 + $0xa8] sm:$0x33] %v4239
    %4260 = vst [vmem:[#allocation3 + $0xb0] sm:$0x33] %v4242
    %4261 = vst [vmem:[#allocation3 + $0xb8] sm:$0x33] %v4245
    %v4262 = vpack.c.bf16 %v3952, %v3951
    %v4263 = vpack.c.bf16 %v3954, %v3953
    %v4264 = vpack.c.bf16 %v3956, %v3955
    %v4265 = vpack.c.bf16 %v3958, %v3957
    %v4266 = vpack.c.bf16 %v3960, %v3959
    %v4267 = vpack.c.bf16 %v3962, %v3961
    %v4268 = vpack.c.bf16 %v3964, %v3963
    %v4269 = vpack.c.bf16 %v3966, %v3965
    %v4270 = vpack.c.bf16 %v3968, %v3967
    %v4271 = vpack.c.bf16 %v3970, %v3969
    %v4272 = vpack.c.bf16 %v3972, %v3971
    %v4273 = vpack.c.bf16 %v3974, %v3973
    %v4274 = vpack.c.bf16 %v3976, %v3975
    %v4275 = vpack.c.bf16 %v3978, %v3977
    %v4276 = vpack.c.bf16 %v3980, %v3979
    %v4277 = vpack.c.bf16 %v3982, %v3981
    %v4294 = vunpack.c.l.b16 %v4262
    %v4295 = vunpack.c.h.b16 %v4262
    %v4296 = vunpack.c.l.b16 %v4263
    %v4297 = vunpack.c.h.b16 %v4263
    %v4298 = vunpack.c.l.b16 %v4264
    %v4299 = vunpack.c.h.b16 %v4264
    %v4300 = vunpack.c.l.b16 %v4265
    %v4301 = vunpack.c.h.b16 %v4265
    %v4302 = vunpack.c.l.b16 %v4266
    %v4303 = vunpack.c.h.b16 %v4266
    %v4304 = vunpack.c.l.b16 %v4267
    %v4305 = vunpack.c.h.b16 %v4267
    %v4306 = vunpack.c.l.b16 %v4268
    %v4307 = vunpack.c.h.b16 %v4268
    %v4308 = vunpack.c.l.b16 %v4269
    %v4309 = vunpack.c.h.b16 %v4269
    %v4310 = vunpack.c.l.b16 %v4270
    %v4311 = vunpack.c.h.b16 %v4270
    %v4312 = vunpack.c.l.b16 %v4271
    %v4313 = vunpack.c.h.b16 %v4271
    %v4314 = vunpack.c.l.b16 %v4272
    %v4315 = vunpack.c.h.b16 %v4272
    %v4316 = vunpack.c.l.b16 %v4273
    %v4317 = vunpack.c.h.b16 %v4273
    %v4318 = vunpack.c.l.b16 %v4274
    %v4319 = vunpack.c.h.b16 %v4274
    %v4320 = vunpack.c.l.b16 %v4275
    %v4321 = vunpack.c.h.b16 %v4275
    %v4322 = vunpack.c.l.b16 %v4276
    %v4323 = vunpack.c.h.b16 %v4276
    %v4324 = vunpack.c.l.b16 %v4277
    %v4325 = vunpack.c.h.b16 %v4277
    %v4326 = vsel %vm510, %v4310, %v4294
    %v4327 = vsel %vm510, %v4311, %v4295
    %v4328 = vsel %vm510, %v4312, %v4296
    %v4329 = vsel %vm510, %v4313, %v4297
    %v4330 = vsel %vm510, %v4314, %v4298
    %v4331 = vsel %vm510, %v4315, %v4299
    %v4332 = vsel %vm510, %v4316, %v4300
    %v4333 = vsel %vm510, %v4317, %v4301
    %v4334 = vsel %vm510, %v4318, %v4302
    %v4335 = vsel %vm510, %v4319, %v4303
    %v4336 = vsel %vm510, %v4320, %v4304
    %v4337 = vsel %vm510, %v4321, %v4305
    %v4338 = vsel %vm510, %v4322, %v4306
    %v4339 = vsel %vm510, %v4323, %v4307
    %v4340 = vsel %vm510, %v4324, %v4308
    %v4341 = vsel %vm510, %v4325, %v4309
    %v4342 = vpack.c.b16 %v4327, %v4326
    %v4343 = vpack.c.b16 %v4329, %v4328
    %v4344 = vpack.c.b16 %v4331, %v4330
    %v4345 = vpack.c.b16 %v4333, %v4332
    %v4346 = vpack.c.b16 %v4335, %v4334
    %v4347 = vpack.c.b16 %v4337, %v4336
    %v4348 = vpack.c.b16 %v4339, %v4338
    %v4349 = vpack.c.b16 %v4341, %v4340
    %4358 = vst [vmem:[#allocation2 + $0x80] sm:$0x11] %v4342
    %4359 = vst [vmem:[#allocation2 + $0x88] sm:$0x11] %v4343
    %4360 = vst [vmem:[#allocation2 + $0x90] sm:$0x11] %v4344
    %4361 = vst [vmem:[#allocation2 + $0x98] sm:$0x11] %v4345
    %4362 = vst [vmem:[#allocation2 + $0xa0] sm:$0x11] %v4346
    %4363 = vst [vmem:[#allocation2 + $0xa8] sm:$0x11] %v4347
    %4364 = vst [vmem:[#allocation2 + $0xb0] sm:$0x11] %v4348
    %4365 = vst [vmem:[#allocation2 + $0xb8] sm:$0x11] %v4349
    %v4366 = vld [vmem:[%s1 + $0xc0] sm:$0xff]
    %v4367 = vld [vmem:[%s1 + $0xc8] sm:$0xff]
    %v4368 = vld [vmem:[%s1 + $0xd0] sm:$0xff]
    %v4369 = vld [vmem:[%s1 + $0xd8] sm:$0xff]
    %v4370 = vld [vmem:[%s1 + $0xe0] sm:$0xff]
    %v4371 = vld [vmem:[%s1 + $0xe8] sm:$0xff]
    %v4372 = vld [vmem:[%s1 + $0xf0] sm:$0xff]
    %v4373 = vld [vmem:[%s1 + $0xf8] sm:$0xff]
    %v4374 = vld [vmem:[%s1 + $0x100] sm:$0x33]
    %v4375 = vld [vmem:[%s1 + $0x108] sm:$0x33]
    %v4376 = vld [vmem:[%s1 + $0x110] sm:$0x33]
    %v4377 = vld [vmem:[%s1 + $0x118] sm:$0x33]
    %v4378 = vld [vmem:[%s1 + $0x120] sm:$0x33]
    %v4379 = vld [vmem:[%s1 + $0x128] sm:$0x33]
    %v4380 = vld [vmem:[%s1 + $0x130] sm:$0x33]
    %v4381 = vld [vmem:[%s1 + $0x138] sm:$0x33]
    %v4382 = vld [vmem:[%s1 + $0x240] sm:$0xff]
    %v4383 = vld [vmem:[%s1 + $0x248] sm:$0xff]
    %v4384 = vld [vmem:[%s1 + $0x250] sm:$0xff]
    %v4385 = vld [vmem:[%s1 + $0x258] sm:$0xff]
    %v4386 = vld [vmem:[%s1 + $0x260] sm:$0xff]
    %v4387 = vld [vmem:[%s1 + $0x268] sm:$0xff]
    %v4388 = vld [vmem:[%s1 + $0x270] sm:$0xff]
    %v4389 = vld [vmem:[%s1 + $0x278] sm:$0xff]
    %v4390 = vld [vmem:[%s1 + $0x280] sm:$0x33]
    %v4391 = vld [vmem:[%s1 + $0x288] sm:$0x33]
    %v4392 = vld [vmem:[%s1 + $0x290] sm:$0x33]
    %v4393 = vld [vmem:[%s1 + $0x298] sm:$0x33]
    %v4394 = vld [vmem:[%s1 + $0x2a0] sm:$0x33]
    %v4395 = vld [vmem:[%s1 + $0x2a8] sm:$0x33]
    %v4396 = vld [vmem:[%s1 + $0x2b0] sm:$0x33]
    %v4397 = vld [vmem:[%s1 + $0x2b8] sm:$0x33]
    %v4398 = vunpack.c.l.bf16 %v4366
    %v4399 = vunpack.c.h.bf16 %v4366
    %v4400 = vunpack.c.l.bf16 %v4367
    %v4401 = vunpack.c.h.bf16 %v4367
    %v4402 = vunpack.c.l.bf16 %v4368
    %v4403 = vunpack.c.h.bf16 %v4368
    %v4404 = vunpack.c.l.bf16 %v4369
    %v4405 = vunpack.c.h.bf16 %v4369
    %v4406 = vunpack.c.l.bf16 %v4370
    %v4407 = vunpack.c.h.bf16 %v4370
    %v4408 = vunpack.c.l.bf16 %v4371
    %v4409 = vunpack.c.h.bf16 %v4371
    %v4410 = vunpack.c.l.bf16 %v4372
    %v4411 = vunpack.c.h.bf16 %v4372
    %v4412 = vunpack.c.l.bf16 %v4373
    %v4413 = vunpack.c.h.bf16 %v4373
    %v4414 = vunpack.c.l.bf16 %v4374
    %v4415 = vunpack.c.h.bf16 %v4374
    %v4416 = vunpack.c.l.bf16 %v4375
    %v4417 = vunpack.c.h.bf16 %v4375
    %v4418 = vunpack.c.l.bf16 %v4376
    %v4419 = vunpack.c.h.bf16 %v4376
    %v4420 = vunpack.c.l.bf16 %v4377
    %v4421 = vunpack.c.h.bf16 %v4377
    %v4422 = vunpack.c.l.bf16 %v4378
    %v4423 = vunpack.c.h.bf16 %v4378
    %v4424 = vunpack.c.l.bf16 %v4379
    %v4425 = vunpack.c.h.bf16 %v4379
    %v4426 = vunpack.c.l.bf16 %v4380
    %v4427 = vunpack.c.h.bf16 %v4380
    %v4428 = vunpack.c.l.bf16 %v4381
    %v4429 = vunpack.c.h.bf16 %v4381
    %v4430 = vunpack.c.l.bf16 %v4382
    %v4431 = vunpack.c.h.bf16 %v4382
    %v4432 = vunpack.c.l.bf16 %v4383
    %v4433 = vunpack.c.h.bf16 %v4383
    %v4434 = vunpack.c.l.bf16 %v4384
    %v4435 = vunpack.c.h.bf16 %v4384
    %v4436 = vunpack.c.l.bf16 %v4385
    %v4437 = vunpack.c.h.bf16 %v4385
    %v4438 = vunpack.c.l.bf16 %v4386
    %v4439 = vunpack.c.h.bf16 %v4386
    %v4440 = vunpack.c.l.bf16 %v4387
    %v4441 = vunpack.c.h.bf16 %v4387
    %v4442 = vunpack.c.l.bf16 %v4388
    %v4443 = vunpack.c.h.bf16 %v4388
    %v4444 = vunpack.c.l.bf16 %v4389
    %v4445 = vunpack.c.h.bf16 %v4389
    %v4446 = vunpack.c.l.bf16 %v4390
    %v4447 = vunpack.c.h.bf16 %v4390
    %v4448 = vunpack.c.l.bf16 %v4391
    %v4449 = vunpack.c.h.bf16 %v4391
    %v4450 = vunpack.c.l.bf16 %v4392
    %v4451 = vunpack.c.h.bf16 %v4392
    %v4452 = vunpack.c.l.bf16 %v4393
    %v4453 = vunpack.c.h.bf16 %v4393
    %v4454 = vunpack.c.l.bf16 %v4394
    %v4455 = vunpack.c.h.bf16 %v4394
    %v4456 = vunpack.c.l.bf16 %v4395
    %v4457 = vunpack.c.h.bf16 %v4395
    %v4458 = vunpack.c.l.bf16 %v4396
    %v4459 = vunpack.c.h.bf16 %v4396
    %v4460 = vunpack.c.l.bf16 %v4397
    %v4461 = vunpack.c.h.bf16 %v4397
    %v4462 = vsel %vm157, %v4414, 0.0
    %v4463 = vadd.f32 %v4398, %v4462
    %v4464 = vrot.slane %v4463, 4
    %v4465 = vadd.f32 %v4463, %v4464
    %v4466 = vrot.slane %v4465, 2
    %v4467 = vadd.f32 %v4465, %v4466
    %v4468 = vrot.slane %v4467, 1
    %v4469 = vadd.f32 %v4467, %v4468
    %v4470 = vsel %vm157, %v4415, 0.0
    %v4471 = vadd.f32 %v4399, %v4470
    %v4472 = vrot.slane %v4471, 4
    %v4473 = vadd.f32 %v4471, %v4472
    %v4474 = vrot.slane %v4473, 2
    %v4475 = vadd.f32 %v4473, %v4474
    %v4476 = vrot.slane %v4475, 1
    %v4477 = vadd.f32 %v4475, %v4476
    %v4478 = vsel %vm157, %v4416, 0.0
    %v4479 = vadd.f32 %v4400, %v4478
    %v4480 = vrot.slane %v4479, 4
    %v4481 = vadd.f32 %v4479, %v4480
    %v4482 = vrot.slane %v4481, 2
    %v4483 = vadd.f32 %v4481, %v4482
    %v4484 = vrot.slane %v4483, 1
    %v4485 = vadd.f32 %v4483, %v4484
    %v4486 = vsel %vm157, %v4417, 0.0
    %v4487 = vadd.f32 %v4401, %v4486
    %v4488 = vrot.slane %v4487, 4
    %v4489 = vadd.f32 %v4487, %v4488
    %v4490 = vrot.slane %v4489, 2
    %v4491 = vadd.f32 %v4489, %v4490
    %v4492 = vrot.slane %v4491, 1
    %v4493 = vadd.f32 %v4491, %v4492
    %v4494 = vsel %vm157, %v4418, 0.0
    %v4495 = vadd.f32 %v4402, %v4494
    %v4496 = vrot.slane %v4495, 4
    %v4497 = vadd.f32 %v4495, %v4496
    %v4498 = vrot.slane %v4497, 2
    %v4499 = vadd.f32 %v4497, %v4498
    %v4500 = vrot.slane %v4499, 1
    %v4501 = vadd.f32 %v4499, %v4500
    %v4502 = vsel %vm157, %v4419, 0.0
    %v4503 = vadd.f32 %v4403, %v4502
    %v4504 = vrot.slane %v4503, 4
    %v4505 = vadd.f32 %v4503, %v4504
    %v4506 = vrot.slane %v4505, 2
    %v4507 = vadd.f32 %v4505, %v4506
    %v4508 = vrot.slane %v4507, 1
    %v4509 = vadd.f32 %v4507, %v4508
    %v4510 = vsel %vm157, %v4420, 0.0
    %v4511 = vadd.f32 %v4404, %v4510
    %v4512 = vrot.slane %v4511, 4
    %v4513 = vadd.f32 %v4511, %v4512
    %v4514 = vrot.slane %v4513, 2
    %v4515 = vadd.f32 %v4513, %v4514
    %v4516 = vrot.slane %v4515, 1
    %v4517 = vadd.f32 %v4515, %v4516
    %v4518 = vsel %vm157, %v4421, 0.0
    %v4519 = vadd.f32 %v4405, %v4518
    %v4520 = vrot.slane %v4519, 4
    %v4521 = vadd.f32 %v4519, %v4520
    %v4522 = vrot.slane %v4521, 2
    %v4523 = vadd.f32 %v4521, %v4522
    %v4524 = vrot.slane %v4523, 1
    %v4525 = vadd.f32 %v4523, %v4524
    %v4526 = vsel %vm157, %v4422, 0.0
    %v4527 = vadd.f32 %v4406, %v4526
    %v4528 = vrot.slane %v4527, 4
    %v4529 = vadd.f32 %v4527, %v4528
    %v4530 = vrot.slane %v4529, 2
    %v4531 = vadd.f32 %v4529, %v4530
    %v4532 = vrot.slane %v4531, 1
    %v4533 = vadd.f32 %v4531, %v4532
    %v4534 = vsel %vm157, %v4423, 0.0
    %v4535 = vadd.f32 %v4407, %v4534
    %v4536 = vrot.slane %v4535, 4
    %v4537 = vadd.f32 %v4535, %v4536
    %v4538 = vrot.slane %v4537, 2
    %v4539 = vadd.f32 %v4537, %v4538
    %v4540 = vrot.slane %v4539, 1
    %v4541 = vadd.f32 %v4539, %v4540
    %v4542 = vsel %vm157, %v4424, 0.0
    %v4543 = vadd.f32 %v4408, %v4542
    %v4544 = vrot.slane %v4543, 4
    %v4545 = vadd.f32 %v4543, %v4544
    %v4546 = vrot.slane %v4545, 2
    %v4547 = vadd.f32 %v4545, %v4546
    %v4548 = vrot.slane %v4547, 1
    %v4549 = vadd.f32 %v4547, %v4548
    %v4550 = vsel %vm157, %v4425, 0.0
    %v4551 = vadd.f32 %v4409, %v4550
    %v4552 = vrot.slane %v4551, 4
    %v4553 = vadd.f32 %v4551, %v4552
    %v4554 = vrot.slane %v4553, 2
    %v4555 = vadd.f32 %v4553, %v4554
    %v4556 = vrot.slane %v4555, 1
    %v4557 = vadd.f32 %v4555, %v4556
    %v4558 = vsel %vm157, %v4426, 0.0
    %v4559 = vadd.f32 %v4410, %v4558
    %v4560 = vrot.slane %v4559, 4
    %v4561 = vadd.f32 %v4559, %v4560
    %v4562 = vrot.slane %v4561, 2
    %v4563 = vadd.f32 %v4561, %v4562
    %v4564 = vrot.slane %v4563, 1
    %v4565 = vadd.f32 %v4563, %v4564
    %v4566 = vsel %vm157, %v4427, 0.0
    %v4567 = vadd.f32 %v4411, %v4566
    %v4568 = vrot.slane %v4567, 4
    %v4569 = vadd.f32 %v4567, %v4568
    %v4570 = vrot.slane %v4569, 2
    %v4571 = vadd.f32 %v4569, %v4570
    %v4572 = vrot.slane %v4571, 1
    %v4573 = vadd.f32 %v4571, %v4572
    %v4574 = vsel %vm157, %v4428, 0.0
    %v4575 = vadd.f32 %v4412, %v4574
    %v4576 = vrot.slane %v4575, 4
    %v4577 = vadd.f32 %v4575, %v4576
    %v4578 = vrot.slane %v4577, 2
    %v4579 = vadd.f32 %v4577, %v4578
    %v4580 = vrot.slane %v4579, 1
    %v4581 = vadd.f32 %v4579, %v4580
    %v4582 = vsel %vm157, %v4429, 0.0
    %v4583 = vadd.f32 %v4413, %v4582
    %v4584 = vrot.slane %v4583, 4
    %v4585 = vadd.f32 %v4583, %v4584
    %v4586 = vrot.slane %v4585, 2
    %v4587 = vadd.f32 %v4585, %v4586
    %v4588 = vrot.slane %v4587, 1
    %v4589 = vadd.f32 %v4587, %v4588
    %v4590 = vsel %vm157, %v4446, 0.0
    %v4591 = vadd.f32 %v4430, %v4590
    %v4592 = vrot.slane %v4591, 4
    %v4593 = vadd.f32 %v4591, %v4592
    %v4594 = vrot.slane %v4593, 2
    %v4595 = vadd.f32 %v4593, %v4594
    %v4596 = vrot.slane %v4595, 1
    %v4597 = vadd.f32 %v4595, %v4596
    %v4598 = vsel %vm157, %v4447, 0.0
    %v4599 = vadd.f32 %v4431, %v4598
    %v4600 = vrot.slane %v4599, 4
    %v4601 = vadd.f32 %v4599, %v4600
    %v4602 = vrot.slane %v4601, 2
    %v4603 = vadd.f32 %v4601, %v4602
    %v4604 = vrot.slane %v4603, 1
    %v4605 = vadd.f32 %v4603, %v4604
    %v4606 = vsel %vm157, %v4448, 0.0
    %v4607 = vadd.f32 %v4432, %v4606
    %v4608 = vrot.slane %v4607, 4
    %v4609 = vadd.f32 %v4607, %v4608
    %v4610 = vrot.slane %v4609, 2
    %v4611 = vadd.f32 %v4609, %v4610
    %v4612 = vrot.slane %v4611, 1
    %v4613 = vadd.f32 %v4611, %v4612
    %v4614 = vsel %vm157, %v4449, 0.0
    %v4615 = vadd.f32 %v4433, %v4614
    %v4616 = vrot.slane %v4615, 4
    %v4617 = vadd.f32 %v4615, %v4616
    %v4618 = vrot.slane %v4617, 2
    %v4619 = vadd.f32 %v4617, %v4618
    %v4620 = vrot.slane %v4619, 1
    %v4621 = vadd.f32 %v4619, %v4620
    %v4622 = vsel %vm157, %v4450, 0.0
    %v4623 = vadd.f32 %v4434, %v4622
    %v4624 = vrot.slane %v4623, 4
    %v4625 = vadd.f32 %v4623, %v4624
    %v4626 = vrot.slane %v4625, 2
    %v4627 = vadd.f32 %v4625, %v4626
    %v4628 = vrot.slane %v4627, 1
    %v4629 = vadd.f32 %v4627, %v4628
    %v4630 = vsel %vm157, %v4451, 0.0
    %v4631 = vadd.f32 %v4435, %v4630
    %v4632 = vrot.slane %v4631, 4
    %v4633 = vadd.f32 %v4631, %v4632
    %v4634 = vrot.slane %v4633, 2
    %v4635 = vadd.f32 %v4633, %v4634
    %v4636 = vrot.slane %v4635, 1
    %v4637 = vadd.f32 %v4635, %v4636
    %v4638 = vsel %vm157, %v4452, 0.0
    %v4639 = vadd.f32 %v4436, %v4638
    %v4640 = vrot.slane %v4639, 4
    %v4641 = vadd.f32 %v4639, %v4640
    %v4642 = vrot.slane %v4641, 2
    %v4643 = vadd.f32 %v4641, %v4642
    %v4644 = vrot.slane %v4643, 1
    %v4645 = vadd.f32 %v4643, %v4644
    %v4646 = vsel %vm157, %v4453, 0.0
    %v4647 = vadd.f32 %v4437, %v4646
    %v4648 = vrot.slane %v4647, 4
    %v4649 = vadd.f32 %v4647, %v4648
    %v4650 = vrot.slane %v4649, 2
    %v4651 = vadd.f32 %v4649, %v4650
    %v4652 = vrot.slane %v4651, 1
    %v4653 = vadd.f32 %v4651, %v4652
    %v4654 = vsel %vm157, %v4454, 0.0
    %v4655 = vadd.f32 %v4438, %v4654
    %v4656 = vrot.slane %v4655, 4
    %v4657 = vadd.f32 %v4655, %v4656
    %v4658 = vrot.slane %v4657, 2
    %v4659 = vadd.f32 %v4657, %v4658
    %v4660 = vrot.slane %v4659, 1
    %v4661 = vadd.f32 %v4659, %v4660
    %v4662 = vsel %vm157, %v4455, 0.0
    %v4663 = vadd.f32 %v4439, %v4662
    %v4664 = vrot.slane %v4663, 4
    %v4665 = vadd.f32 %v4663, %v4664
    %v4666 = vrot.slane %v4665, 2
    %v4667 = vadd.f32 %v4665, %v4666
    %v4668 = vrot.slane %v4667, 1
    %v4669 = vadd.f32 %v4667, %v4668
    %v4670 = vsel %vm157, %v4456, 0.0
    %v4671 = vadd.f32 %v4440, %v4670
    %v4672 = vrot.slane %v4671, 4
    %v4673 = vadd.f32 %v4671, %v4672
    %v4674 = vrot.slane %v4673, 2
    %v4675 = vadd.f32 %v4673, %v4674
    %v4676 = vrot.slane %v4675, 1
    %v4677 = vadd.f32 %v4675, %v4676
    %v4678 = vsel %vm157, %v4457, 0.0
    %v4679 = vadd.f32 %v4441, %v4678
    %v4680 = vrot.slane %v4679, 4
    %v4681 = vadd.f32 %v4679, %v4680
    %v4682 = vrot.slane %v4681, 2
    %v4683 = vadd.f32 %v4681, %v4682
    %v4684 = vrot.slane %v4683, 1
    %v4685 = vadd.f32 %v4683, %v4684
    %v4686 = vsel %vm157, %v4458, 0.0
    %v4687 = vadd.f32 %v4442, %v4686
    %v4688 = vrot.slane %v4687, 4
    %v4689 = vadd.f32 %v4687, %v4688
    %v4690 = vrot.slane %v4689, 2
    %v4691 = vadd.f32 %v4689, %v4690
    %v4692 = vrot.slane %v4691, 1
    %v4693 = vadd.f32 %v4691, %v4692
    %v4694 = vsel %vm157, %v4459, 0.0
    %v4695 = vadd.f32 %v4443, %v4694
    %v4696 = vrot.slane %v4695, 4
    %v4697 = vadd.f32 %v4695, %v4696
    %v4698 = vrot.slane %v4697, 2
    %v4699 = vadd.f32 %v4697, %v4698
    %v4700 = vrot.slane %v4699, 1
    %v4701 = vadd.f32 %v4699, %v4700
    %v4702 = vsel %vm157, %v4460, 0.0
    %v4703 = vadd.f32 %v4444, %v4702
    %v4704 = vrot.slane %v4703, 4
    %v4705 = vadd.f32 %v4703, %v4704
    %v4706 = vrot.slane %v4705, 2
    %v4707 = vadd.f32 %v4705, %v4706
    %v4708 = vrot.slane %v4707, 1
    %v4709 = vadd.f32 %v4707, %v4708
    %v4710 = vsel %vm157, %v4461, 0.0
    %v4711 = vadd.f32 %v4445, %v4710
    %v4712 = vrot.slane %v4711, 4
    %v4713 = vadd.f32 %v4711, %v4712
    %v4714 = vrot.slane %v4713, 2
    %v4715 = vadd.f32 %v4713, %v4714
    %v4716 = vrot.slane %v4715, 1
    %v4717 = vadd.f32 %v4715, %v4716
    %v4718 = vmul.f32 %v4469, 0.083333336
    %v4719 = vmul.f32 %v4477, 0.083333336
    %v4720 = vmul.f32 %v4485, 0.083333336
    %v4721 = vmul.f32 %v4493, 0.083333336
    %v4722 = vmul.f32 %v4501, 0.083333336
    %v4723 = vmul.f32 %v4509, 0.083333336
    %v4724 = vmul.f32 %v4517, 0.083333336
    %v4725 = vmul.f32 %v4525, 0.083333336
    %v4726 = vmul.f32 %v4533, 0.083333336
    %v4727 = vmul.f32 %v4541, 0.083333336
    %v4728 = vmul.f32 %v4549, 0.083333336
    %v4729 = vmul.f32 %v4557, 0.083333336
    %v4730 = vmul.f32 %v4565, 0.083333336
    %v4731 = vmul.f32 %v4573, 0.083333336
    %v4732 = vmul.f32 %v4581, 0.083333336
    %v4733 = vmul.f32 %v4589, 0.083333336
    %v4734 = vmul.f32 %v4597, 0.083333336
    %v4735 = vmul.f32 %v4605, 0.083333336
    %v4736 = vmul.f32 %v4613, 0.083333336
    %v4737 = vmul.f32 %v4621, 0.083333336
    %v4738 = vmul.f32 %v4629, 0.083333336
    %v4739 = vmul.f32 %v4637, 0.083333336
    %v4740 = vmul.f32 %v4645, 0.083333336
    %v4741 = vmul.f32 %v4653, 0.083333336
    %v4742 = vmul.f32 %v4661, 0.083333336
    %v4743 = vmul.f32 %v4669, 0.083333336
    %v4744 = vmul.f32 %v4677, 0.083333336
    %v4745 = vmul.f32 %v4685, 0.083333336
    %v4746 = vmul.f32 %v4693, 0.083333336
    %v4747 = vmul.f32 %v4701, 0.083333336
    %v4748 = vmul.f32 %v4709, 0.083333336
    %v4749 = vmul.f32 %v4717, 0.083333336
    %v4750 = vmul.f32 %v4718, %v4718
    %v4751 = vmul.f32 %v4719, %v4719
    %v4752 = vmul.f32 %v4720, %v4720
    %v4753 = vmul.f32 %v4721, %v4721
    %v4754 = vmul.f32 %v4722, %v4722
    %v4755 = vmul.f32 %v4723, %v4723
    %v4756 = vmul.f32 %v4724, %v4724
    %v4757 = vmul.f32 %v4725, %v4725
    %v4758 = vmul.f32 %v4726, %v4726
    %v4759 = vmul.f32 %v4727, %v4727
    %v4760 = vmul.f32 %v4728, %v4728
    %v4761 = vmul.f32 %v4729, %v4729
    %v4762 = vmul.f32 %v4730, %v4730
    %v4763 = vmul.f32 %v4731, %v4731
    %v4764 = vmul.f32 %v4732, %v4732
    %v4765 = vmul.f32 %v4733, %v4733
    %v4766 = vmul.f32 %v4734, %v4734
    %v4767 = vmul.f32 %v4735, %v4735
    %v4768 = vmul.f32 %v4736, %v4736
    %v4769 = vmul.f32 %v4737, %v4737
    %v4770 = vmul.f32 %v4738, %v4738
    %v4771 = vmul.f32 %v4739, %v4739
    %v4772 = vmul.f32 %v4740, %v4740
    %v4773 = vmul.f32 %v4741, %v4741
    %v4774 = vmul.f32 %v4742, %v4742
    %v4775 = vmul.f32 %v4743, %v4743
    %v4776 = vmul.f32 %v4744, %v4744
    %v4777 = vmul.f32 %v4745, %v4745
    %v4778 = vmul.f32 %v4746, %v4746
    %v4779 = vmul.f32 %v4747, %v4747
    %v4780 = vmul.f32 %v4748, %v4748
    %v4781 = vmul.f32 %v4749, %v4749
    %v4814 = vsel %vm510, %v4766, %v4750
    %v4815 = vsel %vm510, %v4767, %v4751
    %v4816 = vsel %vm510, %v4768, %v4752
    %v4817 = vsel %vm510, %v4769, %v4753
    %v4818 = vsel %vm510, %v4770, %v4754
    %v4819 = vsel %vm510, %v4771, %v4755
    %v4820 = vsel %vm510, %v4772, %v4756
    %v4821 = vsel %vm510, %v4773, %v4757
    %v4822 = vsel %vm510, %v4774, %v4758
    %v4823 = vsel %vm510, %v4775, %v4759
    %v4824 = vsel %vm510, %v4776, %v4760
    %v4825 = vsel %vm510, %v4777, %v4761
    %v4826 = vsel %vm510, %v4778, %v4762
    %v4827 = vsel %vm510, %v4779, %v4763
    %v4828 = vsel %vm510, %v4780, %v4764
    %v4829 = vsel %vm510, %v4781, %v4765
    %v4846 = vsel %vm543, %v4814, 0.0
    %v4847 = vsel %vm543, %v4815, 0.0
    %v4848 = vadd.f32 %v4846, %v4847
    %v4849 = vsel %vm543, %v4816, 0.0
    %v4850 = vadd.f32 %v4848, %v4849
    %v4851 = vsel %vm543, %v4817, 0.0
    %v4852 = vadd.f32 %v4850, %v4851
    %v4853 = vsel %vm543, %v4818, 0.0
    %v4854 = vadd.f32 %v4852, %v4853
    %v4855 = vsel %vm543, %v4819, 0.0
    %v4856 = vadd.f32 %v4854, %v4855
    %v4857 = vsel %vm543, %v4820, 0.0
    %v4858 = vadd.f32 %v4856, %v4857
    %v4859 = vsel %vm543, %v4821, 0.0
    %v4860 = vadd.f32 %v4858, %v4859
    %v4861 = vsel %vm543, %v4822, 0.0
    %v4862 = vadd.f32 %v4860, %v4861
    %v4863 = vsel %vm543, %v4823, 0.0
    %v4864 = vadd.f32 %v4862, %v4863
    %v4865 = vsel %vm543, %v4824, 0.0
    %v4866 = vadd.f32 %v4864, %v4865
    %v4867 = vsel %vm543, %v4825, 0.0
    %v4868 = vadd.f32 %v4866, %v4867
    %v4869 = vsel %vm543, %v4826, 0.0
    %v4870 = vadd.f32 %v4868, %v4869
    %v4871 = vsel %vm543, %v4827, 0.0
    %v4872 = vadd.f32 %v4870, %v4871
    %v4873 = vsel %vm543, %v4828, 0.0
    %v4874 = vadd.f32 %v4872, %v4873
    %v4875 = vsel %vm543, %v4829, 0.0
    %v4876 = vadd.f32 %v4874, %v4875
    %4877 = vadd.xlane.f32.xlu0 %v4876
    %v4878 = vpop.xlane.xlu0 %4877
    %v4879 = vrsqrt.pop %v4878
    %v4880 = vmul.f32 %v4879, %v4878
    %v4881 = vmul.f32 %v4880, %v4879
    %v4882 = vmul.f32 0.5, %v4881
    %v4883 = vsub.f32 1.5, %v4882
    %v4884 = vmul.f32 %v4879, %v4883
    %vm4885 = vweird.f32 %v4878
    %vm4886 = vweird.f32 %v4879
    %vm4887 = vmor %vm4885, %vm4886
    %v4888 = vsel %vm4887, %v4879, %v4884
    %v4890 = vrot.slane %v4888, 1
    %v4893 = vmul.f32 %v4718, %v4888
    %v4894 = vmul.f32 %v4719, %v4888
    %v4895 = vmul.f32 %v4720, %v4888
    %v4896 = vmul.f32 %v4721, %v4888
    %v4897 = vmul.f32 %v4722, %v4888
    %v4898 = vmul.f32 %v4723, %v4888
    %v4899 = vmul.f32 %v4724, %v4888
    %v4900 = vmul.f32 %v4725, %v4888
    %v4901 = vmul.f32 %v4726, %v4888
    %v4902 = vmul.f32 %v4727, %v4888
    %v4903 = vmul.f32 %v4728, %v4888
    %v4904 = vmul.f32 %v4729, %v4888
    %v4905 = vmul.f32 %v4730, %v4888
    %v4906 = vmul.f32 %v4731, %v4888
    %v4907 = vmul.f32 %v4732, %v4888
    %v4908 = vmul.f32 %v4733, %v4888
    %v4909 = vmul.f32 %v4734, %v4890
    %v4910 = vmul.f32 %v4735, %v4890
    %v4911 = vmul.f32 %v4736, %v4890
    %v4912 = vmul.f32 %v4737, %v4890
    %v4913 = vmul.f32 %v4738, %v4890
    %v4914 = vmul.f32 %v4739, %v4890
    %v4915 = vmul.f32 %v4740, %v4890
    %v4916 = vmul.f32 %v4741, %v4890
    %v4917 = vmul.f32 %v4742, %v4890
    %v4918 = vmul.f32 %v4743, %v4890
    %v4919 = vmul.f32 %v4744, %v4890
    %v4920 = vmul.f32 %v4745, %v4890
    %v4921 = vmul.f32 %v4746, %v4890
    %v4922 = vmul.f32 %v4747, %v4890
    %v4923 = vmul.f32 %v4748, %v4890
    %v4924 = vmul.f32 %v4749, %v4890
    %v4957 = vrot.slane %v4894, 4
    %v4958 = vrot.slane %v4896, 4
    %v4959 = vrot.slane %v4898, 4
    %v4960 = vrot.slane %v4900, 4
    %v4961 = vrot.slane %v4902, 4
    %v4962 = vrot.slane %v4904, 4
    %v4963 = vrot.slane %v4906, 4
    %v4964 = vrot.slane %v4908, 4
    %v4965 = vrot.slane %v4910, 4
    %v4966 = vrot.slane %v4912, 4
    %v4967 = vrot.slane %v4914, 4
    %v4968 = vrot.slane %v4916, 4
    %v4969 = vrot.slane %v4918, 4
    %v4970 = vrot.slane %v4920, 4
    %v4971 = vrot.slane %v4922, 4
    %v4972 = vrot.slane %v4924, 4
    %v4973 = vsel %vm157, %v4893, %v4957
    %v4974 = vsel %vm157, %v4895, %v4958
    %v4975 = vsel %vm157, %v4897, %v4959
    %v4976 = vsel %vm157, %v4899, %v4960
    %v4977 = vsel %vm157, %v4901, %v4961
    %v4978 = vsel %vm157, %v4903, %v4962
    %v4979 = vsel %vm157, %v4905, %v4963
    %v4980 = vsel %vm157, %v4907, %v4964
    %v4981 = vsel %vm157, %v4909, %v4965
    %v4982 = vsel %vm157, %v4911, %v4966
    %v4983 = vsel %vm157, %v4913, %v4967
    %v4984 = vsel %vm157, %v4915, %v4968
    %v4985 = vsel %vm157, %v4917, %v4969
    %v4986 = vsel %vm157, %v4919, %v4970
    %v4987 = vsel %vm157, %v4921, %v4971
    %v4988 = vsel %vm157, %v4923, %v4972
    %v4989 = vrot.slane %v4973, 6
    %v4990 = vrot.slane %v4981, 5
    %v4991 = vsel %vm1457, %v4990, %v4989
    %v4992 = vsel %vm1459, %v4990, %v4991
    %v4993 = vrot.slane %v4974, 6
    %v4994 = vrot.slane %v4982, 5
    %v4995 = vsel %vm1457, %v4994, %v4993
    %v4996 = vsel %vm1459, %v4994, %v4995
    %v4997 = vrot.slane %v4975, 6
    %v4998 = vrot.slane %v4983, 5
    %v4999 = vsel %vm1457, %v4998, %v4997
    %v5000 = vsel %vm1459, %v4998, %v4999
    %v5001 = vrot.slane %v4976, 6
    %v5002 = vrot.slane %v4984, 5
    %v5003 = vsel %vm1457, %v5002, %v5001
    %v5004 = vsel %vm1459, %v5002, %v5003
    %v5005 = vrot.slane %v4977, 6
    %v5006 = vrot.slane %v4985, 5
    %v5007 = vsel %vm1457, %v5006, %v5005
    %v5008 = vsel %vm1459, %v5006, %v5007
    %v5009 = vrot.slane %v4978, 6
    %v5010 = vrot.slane %v4986, 5
    %v5011 = vsel %vm1457, %v5010, %v5009
    %v5012 = vsel %vm1459, %v5010, %v5011
    %v5013 = vrot.slane %v4979, 6
    %v5014 = vrot.slane %v4987, 5
    %v5015 = vsel %vm1457, %v5014, %v5013
    %v5016 = vsel %vm1459, %v5014, %v5015
    %v5017 = vrot.slane %v4980, 6
    %v5018 = vrot.slane %v4988, 5
    %v5019 = vsel %vm1457, %v5018, %v5017
    %v5020 = vsel %vm1459, %v5018, %v5019
    %5029 = vst [vmem:[#allocation3 + $0x80] sm:$0xcc] %v4992
    %5030 = vst [vmem:[#allocation3 + $0x88] sm:$0xcc] %v4996
    %5031 = vst [vmem:[#allocation3 + $0x90] sm:$0xcc] %v5000
    %5032 = vst [vmem:[#allocation3 + $0x98] sm:$0xcc] %v5004
    %5033 = vst [vmem:[#allocation3 + $0xa0] sm:$0xcc] %v5008
    %5034 = vst [vmem:[#allocation3 + $0xa8] sm:$0xcc] %v5012
    %5035 = vst [vmem:[#allocation3 + $0xb0] sm:$0xcc] %v5016
    %5036 = vst [vmem:[#allocation3 + $0xb8] sm:$0xcc] %v5020
    %v5037 = vpack.c.bf16 %v4719, %v4718
    %v5038 = vpack.c.bf16 %v4721, %v4720
    %v5039 = vpack.c.bf16 %v4723, %v4722
    %v5040 = vpack.c.bf16 %v4725, %v4724
    %v5041 = vpack.c.bf16 %v4727, %v4726
    %v5042 = vpack.c.bf16 %v4729, %v4728
    %v5043 = vpack.c.bf16 %v4731, %v4730
    %v5044 = vpack.c.bf16 %v4733, %v4732
    %v5045 = vpack.c.bf16 %v4735, %v4734
    %v5046 = vpack.c.bf16 %v4737, %v4736
    %v5047 = vpack.c.bf16 %v4739, %v4738
    %v5048 = vpack.c.bf16 %v4741, %v4740
    %v5049 = vpack.c.bf16 %v4743, %v4742
    %v5050 = vpack.c.bf16 %v4745, %v4744
    %v5051 = vpack.c.bf16 %v4747, %v4746
    %v5052 = vpack.c.bf16 %v4749, %v4748
    %v5069 = vunpack.c.l.b16 %v5037
    %v5070 = vunpack.c.h.b16 %v5037
    %v5071 = vunpack.c.l.b16 %v5038
    %v5072 = vunpack.c.h.b16 %v5038
    %v5073 = vunpack.c.l.b16 %v5039
    %v5074 = vunpack.c.h.b16 %v5039
    %v5075 = vunpack.c.l.b16 %v5040
    %v5076 = vunpack.c.h.b16 %v5040
    %v5077 = vunpack.c.l.b16 %v5041
    %v5078 = vunpack.c.h.b16 %v5041
    %v5079 = vunpack.c.l.b16 %v5042
    %v5080 = vunpack.c.h.b16 %v5042
    %v5081 = vunpack.c.l.b16 %v5043
    %v5082 = vunpack.c.h.b16 %v5043
    %v5083 = vunpack.c.l.b16 %v5044
    %v5084 = vunpack.c.h.b16 %v5044
    %v5085 = vunpack.c.l.b16 %v5045
    %v5086 = vunpack.c.h.b16 %v5045
    %v5087 = vunpack.c.l.b16 %v5046
    %v5088 = vunpack.c.h.b16 %v5046
    %v5089 = vunpack.c.l.b16 %v5047
    %v5090 = vunpack.c.h.b16 %v5047
    %v5091 = vunpack.c.l.b16 %v5048
    %v5092 = vunpack.c.h.b16 %v5048
    %v5093 = vunpack.c.l.b16 %v5049
    %v5094 = vunpack.c.h.b16 %v5049
    %v5095 = vunpack.c.l.b16 %v5050
    %v5096 = vunpack.c.h.b16 %v5050
    %v5097 = vunpack.c.l.b16 %v5051
    %v5098 = vunpack.c.h.b16 %v5051
    %v5099 = vunpack.c.l.b16 %v5052
    %v5100 = vunpack.c.h.b16 %v5052
    %v5101 = vsel %vm1457, %v5085, %v5069
    %v5102 = vsel %vm1457, %v5086, %v5070
    %v5103 = vsel %vm1457, %v5087, %v5071
    %v5104 = vsel %vm1457, %v5088, %v5072
    %v5105 = vsel %vm1457, %v5089, %v5073
    %v5106 = vsel %vm1457, %v5090, %v5074
    %v5107 = vsel %vm1457, %v5091, %v5075
    %v5108 = vsel %vm1457, %v5092, %v5076
    %v5109 = vsel %vm1457, %v5093, %v5077
    %v5110 = vsel %vm1457, %v5094, %v5078
    %v5111 = vsel %vm1457, %v5095, %v5079
    %v5112 = vsel %vm1457, %v5096, %v5080
    %v5113 = vsel %vm1457, %v5097, %v5081
    %v5114 = vsel %vm1457, %v5098, %v5082
    %v5115 = vsel %vm1457, %v5099, %v5083
    %v5116 = vsel %vm1457, %v5100, %v5084
    %v5117 = vpack.c.b16 %v5102, %v5101
    %v5118 = vpack.c.b16 %v5104, %v5103
    %v5119 = vpack.c.b16 %v5106, %v5105
    %v5120 = vpack.c.b16 %v5108, %v5107
    %v5121 = vpack.c.b16 %v5110, %v5109
    %v5122 = vpack.c.b16 %v5112, %v5111
    %v5123 = vpack.c.b16 %v5114, %v5113
    %v5124 = vpack.c.b16 %v5116, %v5115
    %5133 = vst [vmem:[#allocation2 + $0x80] sm:$0x22] %v5117
    %5134 = vst [vmem:[#allocation2 + $0x88] sm:$0x22] %v5118
    %5135 = vst [vmem:[#allocation2 + $0x90] sm:$0x22] %v5119
    %5136 = vst [vmem:[#allocation2 + $0x98] sm:$0x22] %v5120
    %5137 = vst [vmem:[#allocation2 + $0xa0] sm:$0x22] %v5121
    %5138 = vst [vmem:[#allocation2 + $0xa8] sm:$0x22] %v5122
    %5139 = vst [vmem:[#allocation2 + $0xb0] sm:$0x22] %v5123
    %5140 = vst [vmem:[#allocation2 + $0xb8] sm:$0x22] %v5124
    %v5141 = vld [vmem:[%s0 + $0x100] sm:$0xcc]
    %v5142 = vld [vmem:[%s0 + $0x108] sm:$0xcc]
    %v5143 = vld [vmem:[%s0 + $0x110] sm:$0xcc]
    %v5144 = vld [vmem:[%s0 + $0x118] sm:$0xcc]
    %v5145 = vld [vmem:[%s0 + $0x120] sm:$0xcc]
    %v5146 = vld [vmem:[%s0 + $0x128] sm:$0xcc]
    %v5147 = vld [vmem:[%s0 + $0x130] sm:$0xcc]
    %v5148 = vld [vmem:[%s0 + $0x138] sm:$0xcc]
    %v5149 = vld [vmem:[%s0 + $0x140] sm:$0xff]
    %v5150 = vld [vmem:[%s0 + $0x148] sm:$0xff]
    %v5151 = vld [vmem:[%s0 + $0x150] sm:$0xff]
    %v5152 = vld [vmem:[%s0 + $0x158] sm:$0xff]
    %v5153 = vld [vmem:[%s0 + $0x160] sm:$0xff]
    %v5154 = vld [vmem:[%s0 + $0x168] sm:$0xff]
    %v5155 = vld [vmem:[%s0 + $0x170] sm:$0xff]
    %v5156 = vld [vmem:[%s0 + $0x178] sm:$0xff]
    %v5157 = vld [vmem:[%s0 + $0x280] sm:$0xcc]
    %v5158 = vld [vmem:[%s0 + $0x288] sm:$0xcc]
    %v5159 = vld [vmem:[%s0 + $0x290] sm:$0xcc]
    %v5160 = vld [vmem:[%s0 + $0x298] sm:$0xcc]
    %v5161 = vld [vmem:[%s0 + $0x2a0] sm:$0xcc]
    %v5162 = vld [vmem:[%s0 + $0x2a8] sm:$0xcc]
    %v5163 = vld [vmem:[%s0 + $0x2b0] sm:$0xcc]
    %v5164 = vld [vmem:[%s0 + $0x2b8] sm:$0xcc]
    %v5165 = vld [vmem:[%s0 + $0x2c0] sm:$0xff]
    %v5166 = vld [vmem:[%s0 + $0x2c8] sm:$0xff]
    %v5167 = vld [vmem:[%s0 + $0x2d0] sm:$0xff]
    %v5168 = vld [vmem:[%s0 + $0x2d8] sm:$0xff]
    %v5169 = vld [vmem:[%s0 + $0x2e0] sm:$0xff]
    %v5170 = vld [vmem:[%s0 + $0x2e8] sm:$0xff]
    %v5171 = vld [vmem:[%s0 + $0x2f0] sm:$0xff]
    %v5172 = vld [vmem:[%s0 + $0x2f8] sm:$0xff]
    %v5173 = vunpack.c.l.bf16 %v5141
    %v5174 = vunpack.c.h.bf16 %v5141
    %v5175 = vunpack.c.l.bf16 %v5142
    %v5176 = vunpack.c.h.bf16 %v5142
    %v5177 = vunpack.c.l.bf16 %v5143
    %v5178 = vunpack.c.h.bf16 %v5143
    %v5179 = vunpack.c.l.bf16 %v5144
    %v5180 = vunpack.c.h.bf16 %v5144
    %v5181 = vunpack.c.l.bf16 %v5145
    %v5182 = vunpack.c.h.bf16 %v5145
    %v5183 = vunpack.c.l.bf16 %v5146
    %v5184 = vunpack.c.h.bf16 %v5146
    %v5185 = vunpack.c.l.bf16 %v5147
    %v5186 = vunpack.c.h.bf16 %v5147
    %v5187 = vunpack.c.l.bf16 %v5148
    %v5188 = vunpack.c.h.bf16 %v5148
    %v5189 = vunpack.c.l.bf16 %v5149
    %v5190 = vunpack.c.h.bf16 %v5149
    %v5191 = vunpack.c.l.bf16 %v5150
    %v5192 = vunpack.c.h.bf16 %v5150
    %v5193 = vunpack.c.l.bf16 %v5151
    %v5194 = vunpack.c.h.bf16 %v5151
    %v5195 = vunpack.c.l.bf16 %v5152
    %v5196 = vunpack.c.h.bf16 %v5152
    %v5197 = vunpack.c.l.bf16 %v5153
    %v5198 = vunpack.c.h.bf16 %v5153
    %v5199 = vunpack.c.l.bf16 %v5154
    %v5200 = vunpack.c.h.bf16 %v5154
    %v5201 = vunpack.c.l.bf16 %v5155
    %v5202 = vunpack.c.h.bf16 %v5155
    %v5203 = vunpack.c.l.bf16 %v5156
    %v5204 = vunpack.c.h.bf16 %v5156
    %v5205 = vunpack.c.l.bf16 %v5157
    %v5206 = vunpack.c.h.bf16 %v5157
    %v5207 = vunpack.c.l.bf16 %v5158
    %v5208 = vunpack.c.h.bf16 %v5158
    %v5209 = vunpack.c.l.bf16 %v5159
    %v5210 = vunpack.c.h.bf16 %v5159
    %v5211 = vunpack.c.l.bf16 %v5160
    %v5212 = vunpack.c.h.bf16 %v5160
    %v5213 = vunpack.c.l.bf16 %v5161
    %v5214 = vunpack.c.h.bf16 %v5161
    %v5215 = vunpack.c.l.bf16 %v5162
    %v5216 = vunpack.c.h.bf16 %v5162
    %v5217 = vunpack.c.l.bf16 %v5163
    %v5218 = vunpack.c.h.bf16 %v5163
    %v5219 = vunpack.c.l.bf16 %v5164
    %v5220 = vunpack.c.h.bf16 %v5164
    %v5221 = vunpack.c.l.bf16 %v5165
    %v5222 = vunpack.c.h.bf16 %v5165
    %v5223 = vunpack.c.l.bf16 %v5166
    %v5224 = vunpack.c.h.bf16 %v5166
    %v5225 = vunpack.c.l.bf16 %v5167
    %v5226 = vunpack.c.h.bf16 %v5167
    %v5227 = vunpack.c.l.bf16 %v5168
    %v5228 = vunpack.c.h.bf16 %v5168
    %v5229 = vunpack.c.l.bf16 %v5169
    %v5230 = vunpack.c.h.bf16 %v5169
    %v5231 = vunpack.c.l.bf16 %v5170
    %v5232 = vunpack.c.h.bf16 %v5170
    %v5233 = vunpack.c.l.bf16 %v5171
    %v5234 = vunpack.c.h.bf16 %v5171
    %v5235 = vunpack.c.l.bf16 %v5172
    %v5236 = vunpack.c.h.bf16 %v5172
    %v5301 = vrot.slane %v5173, 4
    %v5302 = vrot.slane %v5189, 4
    %v5303 = vsel %vm157, %v5301, %v5302
    %v5304 = vrot.slane %v5174, 4
    %v5305 = vrot.slane %v5190, 4
    %v5306 = vsel %vm157, %v5304, %v5305
    %v5307 = vrot.slane %v5175, 4
    %v5308 = vrot.slane %v5191, 4
    %v5309 = vsel %vm157, %v5307, %v5308
    %v5310 = vrot.slane %v5176, 4
    %v5311 = vrot.slane %v5192, 4
    %v5312 = vsel %vm157, %v5310, %v5311
    %v5313 = vrot.slane %v5177, 4
    %v5314 = vrot.slane %v5193, 4
    %v5315 = vsel %vm157, %v5313, %v5314
    %v5316 = vrot.slane %v5178, 4
    %v5317 = vrot.slane %v5194, 4
    %v5318 = vsel %vm157, %v5316, %v5317
    %v5319 = vrot.slane %v5179, 4
    %v5320 = vrot.slane %v5195, 4
    %v5321 = vsel %vm157, %v5319, %v5320
    %v5322 = vrot.slane %v5180, 4
    %v5323 = vrot.slane %v5196, 4
    %v5324 = vsel %vm157, %v5322, %v5323
    %v5325 = vrot.slane %v5181, 4
    %v5326 = vrot.slane %v5197, 4
    %v5327 = vsel %vm157, %v5325, %v5326
    %v5328 = vrot.slane %v5182, 4
    %v5329 = vrot.slane %v5198, 4
    %v5330 = vsel %vm157, %v5328, %v5329
    %v5331 = vrot.slane %v5183, 4
    %v5332 = vrot.slane %v5199, 4
    %v5333 = vsel %vm157, %v5331, %v5332
    %v5334 = vrot.slane %v5184, 4
    %v5335 = vrot.slane %v5200, 4
    %v5336 = vsel %vm157, %v5334, %v5335
    %v5337 = vrot.slane %v5185, 4
    %v5338 = vrot.slane %v5201, 4
    %v5339 = vsel %vm157, %v5337, %v5338
    %v5340 = vrot.slane %v5186, 4
    %v5341 = vrot.slane %v5202, 4
    %v5342 = vsel %vm157, %v5340, %v5341
    %v5343 = vrot.slane %v5187, 4
    %v5344 = vrot.slane %v5203, 4
    %v5345 = vsel %vm157, %v5343, %v5344
    %v5346 = vrot.slane %v5188, 4
    %v5347 = vrot.slane %v5204, 4
    %v5348 = vsel %vm157, %v5346, %v5347
    %v5349 = vrot.slane %v5205, 4
    %v5350 = vrot.slane %v5221, 4
    %v5351 = vsel %vm157, %v5349, %v5350
    %v5352 = vrot.slane %v5206, 4
    %v5353 = vrot.slane %v5222, 4
    %v5354 = vsel %vm157, %v5352, %v5353
    %v5355 = vrot.slane %v5207, 4
    %v5356 = vrot.slane %v5223, 4
    %v5357 = vsel %vm157, %v5355, %v5356
    %v5358 = vrot.slane %v5208, 4
    %v5359 = vrot.slane %v5224, 4
    %v5360 = vsel %vm157, %v5358, %v5359
    %v5361 = vrot.slane %v5209, 4
    %v5362 = vrot.slane %v5225, 4
    %v5363 = vsel %vm157, %v5361, %v5362
    %v5364 = vrot.slane %v5210, 4
    %v5365 = vrot.slane %v5226, 4
    %v5366 = vsel %vm157, %v5364, %v5365
    %v5367 = vrot.slane %v5211, 4
    %v5368 = vrot.slane %v5227, 4
    %v5369 = vsel %vm157, %v5367, %v5368
    %v5370 = vrot.slane %v5212, 4
    %v5371 = vrot.slane %v5228, 4
    %v5372 = vsel %vm157, %v5370, %v5371
    %v5373 = vrot.slane %v5213, 4
    %v5374 = vrot.slane %v5229, 4
    %v5375 = vsel %vm157, %v5373, %v5374
    %v5376 = vrot.slane %v5214, 4
    %v5377 = vrot.slane %v5230, 4
    %v5378 = vsel %vm157, %v5376, %v5377
    %v5379 = vrot.slane %v5215, 4
    %v5380 = vrot.slane %v5231, 4
    %v5381 = vsel %vm157, %v5379, %v5380
    %v5382 = vrot.slane %v5216, 4
    %v5383 = vrot.slane %v5232, 4
    %v5384 = vsel %vm157, %v5382, %v5383
    %v5385 = vrot.slane %v5217, 4
    %v5386 = vrot.slane %v5233, 4
    %v5387 = vsel %vm157, %v5385, %v5386
    %v5388 = vrot.slane %v5218, 4
    %v5389 = vrot.slane %v5234, 4
    %v5390 = vsel %vm157, %v5388, %v5389
    %v5391 = vrot.slane %v5219, 4
    %v5392 = vrot.slane %v5235, 4
    %v5393 = vsel %vm157, %v5391, %v5392
    %v5394 = vrot.slane %v5220, 4
    %v5395 = vrot.slane %v5236, 4
    %v5396 = vsel %vm157, %v5394, %v5395
    %v5461 = vsel %vm157, %v5302, 0.0
    %v5462 = vadd.f32 %v5303, %v5461
    %v5463 = vrot.slane %v5462, 4
    %v5464 = vadd.f32 %v5462, %v5463
    %v5465 = vrot.slane %v5464, 2
    %v5466 = vadd.f32 %v5464, %v5465
    %v5467 = vrot.slane %v5466, 1
    %v5468 = vadd.f32 %v5466, %v5467
    %v5469 = vsel %vm157, %v5305, 0.0
    %v5470 = vadd.f32 %v5306, %v5469
    %v5471 = vrot.slane %v5470, 4
    %v5472 = vadd.f32 %v5470, %v5471
    %v5473 = vrot.slane %v5472, 2
    %v5474 = vadd.f32 %v5472, %v5473
    %v5475 = vrot.slane %v5474, 1
    %v5476 = vadd.f32 %v5474, %v5475
    %v5477 = vsel %vm157, %v5308, 0.0
    %v5478 = vadd.f32 %v5309, %v5477
    %v5479 = vrot.slane %v5478, 4
    %v5480 = vadd.f32 %v5478, %v5479
    %v5481 = vrot.slane %v5480, 2
    %v5482 = vadd.f32 %v5480, %v5481
    %v5483 = vrot.slane %v5482, 1
    %v5484 = vadd.f32 %v5482, %v5483
    %v5485 = vsel %vm157, %v5311, 0.0
    %v5486 = vadd.f32 %v5312, %v5485
    %v5487 = vrot.slane %v5486, 4
    %v5488 = vadd.f32 %v5486, %v5487
    %v5489 = vrot.slane %v5488, 2
    %v5490 = vadd.f32 %v5488, %v5489
    %v5491 = vrot.slane %v5490, 1
    %v5492 = vadd.f32 %v5490, %v5491
    %v5493 = vsel %vm157, %v5314, 0.0
    %v5494 = vadd.f32 %v5315, %v5493
    %v5495 = vrot.slane %v5494, 4
    %v5496 = vadd.f32 %v5494, %v5495
    %v5497 = vrot.slane %v5496, 2
    %v5498 = vadd.f32 %v5496, %v5497
    %v5499 = vrot.slane %v5498, 1
    %v5500 = vadd.f32 %v5498, %v5499
    %v5501 = vsel %vm157, %v5317, 0.0
    %v5502 = vadd.f32 %v5318, %v5501
    %v5503 = vrot.slane %v5502, 4
    %v5504 = vadd.f32 %v5502, %v5503
    %v5505 = vrot.slane %v5504, 2
    %v5506 = vadd.f32 %v5504, %v5505
    %v5507 = vrot.slane %v5506, 1
    %v5508 = vadd.f32 %v5506, %v5507
    %v5509 = vsel %vm157, %v5320, 0.0
    %v5510 = vadd.f32 %v5321, %v5509
    %v5511 = vrot.slane %v5510, 4
    %v5512 = vadd.f32 %v5510, %v5511
    %v5513 = vrot.slane %v5512, 2
    %v5514 = vadd.f32 %v5512, %v5513
    %v5515 = vrot.slane %v5514, 1
    %v5516 = vadd.f32 %v5514, %v5515
    %v5517 = vsel %vm157, %v5323, 0.0
    %v5518 = vadd.f32 %v5324, %v5517
    %v5519 = vrot.slane %v5518, 4
    %v5520 = vadd.f32 %v5518, %v5519
    %v5521 = vrot.slane %v5520, 2
    %v5522 = vadd.f32 %v5520, %v5521
    %v5523 = vrot.slane %v5522, 1
    %v5524 = vadd.f32 %v5522, %v5523
    %v5525 = vsel %vm157, %v5326, 0.0
    %v5526 = vadd.f32 %v5327, %v5525
    %v5527 = vrot.slane %v5526, 4
    %v5528 = vadd.f32 %v5526, %v5527
    %v5529 = vrot.slane %v5528, 2
    %v5530 = vadd.f32 %v5528, %v5529
    %v5531 = vrot.slane %v5530, 1
    %v5532 = vadd.f32 %v5530, %v5531
    %v5533 = vsel %vm157, %v5329, 0.0
    %v5534 = vadd.f32 %v5330, %v5533
    %v5535 = vrot.slane %v5534, 4
    %v5536 = vadd.f32 %v5534, %v5535
    %v5537 = vrot.slane %v5536, 2
    %v5538 = vadd.f32 %v5536, %v5537
    %v5539 = vrot.slane %v5538, 1
    %v5540 = vadd.f32 %v5538, %v5539
    %v5541 = vsel %vm157, %v5332, 0.0
    %v5542 = vadd.f32 %v5333, %v5541
    %v5543 = vrot.slane %v5542, 4
    %v5544 = vadd.f32 %v5542, %v5543
    %v5545 = vrot.slane %v5544, 2
    %v5546 = vadd.f32 %v5544, %v5545
    %v5547 = vrot.slane %v5546, 1
    %v5548 = vadd.f32 %v5546, %v5547
    %v5549 = vsel %vm157, %v5335, 0.0
    %v5550 = vadd.f32 %v5336, %v5549
    %v5551 = vrot.slane %v5550, 4
    %v5552 = vadd.f32 %v5550, %v5551
    %v5553 = vrot.slane %v5552, 2
    %v5554 = vadd.f32 %v5552, %v5553
    %v5555 = vrot.slane %v5554, 1
    %v5556 = vadd.f32 %v5554, %v5555
    %v5557 = vsel %vm157, %v5338, 0.0
    %v5558 = vadd.f32 %v5339, %v5557
    %v5559 = vrot.slane %v5558, 4
    %v5560 = vadd.f32 %v5558, %v5559
    %v5561 = vrot.slane %v5560, 2
    %v5562 = vadd.f32 %v5560, %v5561
    %v5563 = vrot.slane %v5562, 1
    %v5564 = vadd.f32 %v5562, %v5563
    %v5565 = vsel %vm157, %v5341, 0.0
    %v5566 = vadd.f32 %v5342, %v5565
    %v5567 = vrot.slane %v5566, 4
    %v5568 = vadd.f32 %v5566, %v5567
    %v5569 = vrot.slane %v5568, 2
    %v5570 = vadd.f32 %v5568, %v5569
    %v5571 = vrot.slane %v5570, 1
    %v5572 = vadd.f32 %v5570, %v5571
    %v5573 = vsel %vm157, %v5344, 0.0
    %v5574 = vadd.f32 %v5345, %v5573
    %v5575 = vrot.slane %v5574, 4
    %v5576 = vadd.f32 %v5574, %v5575
    %v5577 = vrot.slane %v5576, 2
    %v5578 = vadd.f32 %v5576, %v5577
    %v5579 = vrot.slane %v5578, 1
    %v5580 = vadd.f32 %v5578, %v5579
    %v5581 = vsel %vm157, %v5347, 0.0
    %v5582 = vadd.f32 %v5348, %v5581
    %v5583 = vrot.slane %v5582, 4
    %v5584 = vadd.f32 %v5582, %v5583
    %v5585 = vrot.slane %v5584, 2
    %v5586 = vadd.f32 %v5584, %v5585
    %v5587 = vrot.slane %v5586, 1
    %v5588 = vadd.f32 %v5586, %v5587
    %v5589 = vsel %vm157, %v5350, 0.0
    %v5590 = vadd.f32 %v5351, %v5589
    %v5591 = vrot.slane %v5590, 4
    %v5592 = vadd.f32 %v5590, %v5591
    %v5593 = vrot.slane %v5592, 2
    %v5594 = vadd.f32 %v5592, %v5593
    %v5595 = vrot.slane %v5594, 1
    %v5596 = vadd.f32 %v5594, %v5595
    %v5597 = vsel %vm157, %v5353, 0.0
    %v5598 = vadd.f32 %v5354, %v5597
    %v5599 = vrot.slane %v5598, 4
    %v5600 = vadd.f32 %v5598, %v5599
    %v5601 = vrot.slane %v5600, 2
    %v5602 = vadd.f32 %v5600, %v5601
    %v5603 = vrot.slane %v5602, 1
    %v5604 = vadd.f32 %v5602, %v5603
    %v5605 = vsel %vm157, %v5356, 0.0
    %v5606 = vadd.f32 %v5357, %v5605
    %v5607 = vrot.slane %v5606, 4
    %v5608 = vadd.f32 %v5606, %v5607
    %v5609 = vrot.slane %v5608, 2
    %v5610 = vadd.f32 %v5608, %v5609
    %v5611 = vrot.slane %v5610, 1
    %v5612 = vadd.f32 %v5610, %v5611
    %v5613 = vsel %vm157, %v5359, 0.0
    %v5614 = vadd.f32 %v5360, %v5613
    %v5615 = vrot.slane %v5614, 4
    %v5616 = vadd.f32 %v5614, %v5615
    %v5617 = vrot.slane %v5616, 2
    %v5618 = vadd.f32 %v5616, %v5617
    %v5619 = vrot.slane %v5618, 1
    %v5620 = vadd.f32 %v5618, %v5619
    %v5621 = vsel %vm157, %v5362, 0.0
    %v5622 = vadd.f32 %v5363, %v5621
    %v5623 = vrot.slane %v5622, 4
    %v5624 = vadd.f32 %v5622, %v5623
    %v5625 = vrot.slane %v5624, 2
    %v5626 = vadd.f32 %v5624, %v5625
    %v5627 = vrot.slane %v5626, 1
    %v5628 = vadd.f32 %v5626, %v5627
    %v5629 = vsel %vm157, %v5365, 0.0
    %v5630 = vadd.f32 %v5366, %v5629
    %v5631 = vrot.slane %v5630, 4
    %v5632 = vadd.f32 %v5630, %v5631
    %v5633 = vrot.slane %v5632, 2
    %v5634 = vadd.f32 %v5632, %v5633
    %v5635 = vrot.slane %v5634, 1
    %v5636 = vadd.f32 %v5634, %v5635
    %v5637 = vsel %vm157, %v5368, 0.0
    %v5638 = vadd.f32 %v5369, %v5637
    %v5639 = vrot.slane %v5638, 4
    %v5640 = vadd.f32 %v5638, %v5639
    %v5641 = vrot.slane %v5640, 2
    %v5642 = vadd.f32 %v5640, %v5641
    %v5643 = vrot.slane %v5642, 1
    %v5644 = vadd.f32 %v5642, %v5643
    %v5645 = vsel %vm157, %v5371, 0.0
    %v5646 = vadd.f32 %v5372, %v5645
    %v5647 = vrot.slane %v5646, 4
    %v5648 = vadd.f32 %v5646, %v5647
    %v5649 = vrot.slane %v5648, 2
    %v5650 = vadd.f32 %v5648, %v5649
    %v5651 = vrot.slane %v5650, 1
    %v5652 = vadd.f32 %v5650, %v5651
    %v5653 = vsel %vm157, %v5374, 0.0
    %v5654 = vadd.f32 %v5375, %v5653
    %v5655 = vrot.slane %v5654, 4
    %v5656 = vadd.f32 %v5654, %v5655
    %v5657 = vrot.slane %v5656, 2
    %v5658 = vadd.f32 %v5656, %v5657
    %v5659 = vrot.slane %v5658, 1
    %v5660 = vadd.f32 %v5658, %v5659
    %v5661 = vsel %vm157, %v5377, 0.0
    %v5662 = vadd.f32 %v5378, %v5661
    %v5663 = vrot.slane %v5662, 4
    %v5664 = vadd.f32 %v5662, %v5663
    %v5665 = vrot.slane %v5664, 2
    %v5666 = vadd.f32 %v5664, %v5665
    %v5667 = vrot.slane %v5666, 1
    %v5668 = vadd.f32 %v5666, %v5667
    %v5669 = vsel %vm157, %v5380, 0.0
    %v5670 = vadd.f32 %v5381, %v5669
    %v5671 = vrot.slane %v5670, 4
    %v5672 = vadd.f32 %v5670, %v5671
    %v5673 = vrot.slane %v5672, 2
    %v5674 = vadd.f32 %v5672, %v5673
    %v5675 = vrot.slane %v5674, 1
    %v5676 = vadd.f32 %v5674, %v5675
    %v5677 = vsel %vm157, %v5383, 0.0
    %v5678 = vadd.f32 %v5384, %v5677
    %v5679 = vrot.slane %v5678, 4
    %v5680 = vadd.f32 %v5678, %v5679
    %v5681 = vrot.slane %v5680, 2
    %v5682 = vadd.f32 %v5680, %v5681
    %v5683 = vrot.slane %v5682, 1
    %v5684 = vadd.f32 %v5682, %v5683
    %v5685 = vsel %vm157, %v5386, 0.0
    %v5686 = vadd.f32 %v5387, %v5685
    %v5687 = vrot.slane %v5686, 4
    %v5688 = vadd.f32 %v5686, %v5687
    %v5689 = vrot.slane %v5688, 2
    %v5690 = vadd.f32 %v5688, %v5689
    %v5691 = vrot.slane %v5690, 1
    %v5692 = vadd.f32 %v5690, %v5691
    %v5693 = vsel %vm157, %v5389, 0.0
    %v5694 = vadd.f32 %v5390, %v5693
    %v5695 = vrot.slane %v5694, 4
    %v5696 = vadd.f32 %v5694, %v5695
    %v5697 = vrot.slane %v5696, 2
    %v5698 = vadd.f32 %v5696, %v5697
    %v5699 = vrot.slane %v5698, 1
    %v5700 = vadd.f32 %v5698, %v5699
    %v5701 = vsel %vm157, %v5392, 0.0
    %v5702 = vadd.f32 %v5393, %v5701
    %v5703 = vrot.slane %v5702, 4
    %v5704 = vadd.f32 %v5702, %v5703
    %v5705 = vrot.slane %v5704, 2
    %v5706 = vadd.f32 %v5704, %v5705
    %v5707 = vrot.slane %v5706, 1
    %v5708 = vadd.f32 %v5706, %v5707
    %v5709 = vsel %vm157, %v5395, 0.0
    %v5710 = vadd.f32 %v5396, %v5709
    %v5711 = vrot.slane %v5710, 4
    %v5712 = vadd.f32 %v5710, %v5711
    %v5713 = vrot.slane %v5712, 2
    %v5714 = vadd.f32 %v5712, %v5713
    %v5715 = vrot.slane %v5714, 1
    %v5716 = vadd.f32 %v5714, %v5715
    %v5717 = vmul.f32 %v5468, 0.083333336
    %v5718 = vmul.f32 %v5476, 0.083333336
    %v5719 = vmul.f32 %v5484, 0.083333336
    %v5720 = vmul.f32 %v5492, 0.083333336
    %v5721 = vmul.f32 %v5500, 0.083333336
    %v5722 = vmul.f32 %v5508, 0.083333336
    %v5723 = vmul.f32 %v5516, 0.083333336
    %v5724 = vmul.f32 %v5524, 0.083333336
    %v5725 = vmul.f32 %v5532, 0.083333336
    %v5726 = vmul.f32 %v5540, 0.083333336
    %v5727 = vmul.f32 %v5548, 0.083333336
    %v5728 = vmul.f32 %v5556, 0.083333336
    %v5729 = vmul.f32 %v5564, 0.083333336
    %v5730 = vmul.f32 %v5572, 0.083333336
    %v5731 = vmul.f32 %v5580, 0.083333336
    %v5732 = vmul.f32 %v5588, 0.083333336
    %v5733 = vmul.f32 %v5596, 0.083333336
    %v5734 = vmul.f32 %v5604, 0.083333336
    %v5735 = vmul.f32 %v5612, 0.083333336
    %v5736 = vmul.f32 %v5620, 0.083333336
    %v5737 = vmul.f32 %v5628, 0.083333336
    %v5738 = vmul.f32 %v5636, 0.083333336
    %v5739 = vmul.f32 %v5644, 0.083333336
    %v5740 = vmul.f32 %v5652, 0.083333336
    %v5741 = vmul.f32 %v5660, 0.083333336
    %v5742 = vmul.f32 %v5668, 0.083333336
    %v5743 = vmul.f32 %v5676, 0.083333336
    %v5744 = vmul.f32 %v5684, 0.083333336
    %v5745 = vmul.f32 %v5692, 0.083333336
    %v5746 = vmul.f32 %v5700, 0.083333336
    %v5747 = vmul.f32 %v5708, 0.083333336
    %v5748 = vmul.f32 %v5716, 0.083333336
    %v5749 = vmul.f32 %v5717, %v5717
    %v5750 = vmul.f32 %v5718, %v5718
    %v5751 = vmul.f32 %v5719, %v5719
    %v5752 = vmul.f32 %v5720, %v5720
    %v5753 = vmul.f32 %v5721, %v5721
    %v5754 = vmul.f32 %v5722, %v5722
    %v5755 = vmul.f32 %v5723, %v5723
    %v5756 = vmul.f32 %v5724, %v5724
    %v5757 = vmul.f32 %v5725, %v5725
    %v5758 = vmul.f32 %v5726, %v5726
    %v5759 = vmul.f32 %v5727, %v5727
    %v5760 = vmul.f32 %v5728, %v5728
    %v5761 = vmul.f32 %v5729, %v5729
    %v5762 = vmul.f32 %v5730, %v5730
    %v5763 = vmul.f32 %v5731, %v5731
    %v5764 = vmul.f32 %v5732, %v5732
    %v5765 = vmul.f32 %v5733, %v5733
    %v5766 = vmul.f32 %v5734, %v5734
    %v5767 = vmul.f32 %v5735, %v5735
    %v5768 = vmul.f32 %v5736, %v5736
    %v5769 = vmul.f32 %v5737, %v5737
    %v5770 = vmul.f32 %v5738, %v5738
    %v5771 = vmul.f32 %v5739, %v5739
    %v5772 = vmul.f32 %v5740, %v5740
    %v5773 = vmul.f32 %v5741, %v5741
    %v5774 = vmul.f32 %v5742, %v5742
    %v5775 = vmul.f32 %v5743, %v5743
    %v5776 = vmul.f32 %v5744, %v5744
    %v5777 = vmul.f32 %v5745, %v5745
    %v5778 = vmul.f32 %v5746, %v5746
    %v5779 = vmul.f32 %v5747, %v5747
    %v5780 = vmul.f32 %v5748, %v5748
    %v5813 = vsel %vm510, %v5765, %v5749
    %v5814 = vsel %vm510, %v5766, %v5750
    %v5815 = vsel %vm510, %v5767, %v5751
    %v5816 = vsel %vm510, %v5768, %v5752
    %v5817 = vsel %vm510, %v5769, %v5753
    %v5818 = vsel %vm510, %v5770, %v5754
    %v5819 = vsel %vm510, %v5771, %v5755
    %v5820 = vsel %vm510, %v5772, %v5756
    %v5821 = vsel %vm510, %v5773, %v5757
    %v5822 = vsel %vm510, %v5774, %v5758
    %v5823 = vsel %vm510, %v5775, %v5759
    %v5824 = vsel %vm510, %v5776, %v5760
    %v5825 = vsel %vm510, %v5777, %v5761
    %v5826 = vsel %vm510, %v5778, %v5762
    %v5827 = vsel %vm510, %v5779, %v5763
    %v5828 = vsel %vm510, %v5780, %v5764
    %v5845 = vsel %vm543, %v5813, 0.0
    %v5846 = vsel %vm543, %v5814, 0.0
    %v5847 = vadd.f32 %v5845, %v5846
    %v5848 = vsel %vm543, %v5815, 0.0
    %v5849 = vadd.f32 %v5847, %v5848
    %v5850 = vsel %vm543, %v5816, 0.0
    %v5851 = vadd.f32 %v5849, %v5850
    %v5852 = vsel %vm543, %v5817, 0.0
    %v5853 = vadd.f32 %v5851, %v5852
    %v5854 = vsel %vm543, %v5818, 0.0
    %v5855 = vadd.f32 %v5853, %v5854
    %v5856 = vsel %vm543, %v5819, 0.0
    %v5857 = vadd.f32 %v5855, %v5856
    %v5858 = vsel %vm543, %v5820, 0.0
    %v5859 = vadd.f32 %v5857, %v5858
    %v5860 = vsel %vm543, %v5821, 0.0
    %v5861 = vadd.f32 %v5859, %v5860
    %v5862 = vsel %vm543, %v5822, 0.0
    %v5863 = vadd.f32 %v5861, %v5862
    %v5864 = vsel %vm543, %v5823, 0.0
    %v5865 = vadd.f32 %v5863, %v5864
    %v5866 = vsel %vm543, %v5824, 0.0
    %v5867 = vadd.f32 %v5865, %v5866
    %v5868 = vsel %vm543, %v5825, 0.0
    %v5869 = vadd.f32 %v5867, %v5868
    %v5870 = vsel %vm543, %v5826, 0.0
    %v5871 = vadd.f32 %v5869, %v5870
    %v5872 = vsel %vm543, %v5827, 0.0
    %v5873 = vadd.f32 %v5871, %v5872
    %v5874 = vsel %vm543, %v5828, 0.0
    %v5875 = vadd.f32 %v5873, %v5874
    %5876 = vadd.xlane.f32.xlu0 %v5875
    %v5877 = vpop.xlane.xlu0 %5876
    %v5878 = vrsqrt.pop %v5877
    %v5879 = vmul.f32 %v5878, %v5877
    %v5880 = vmul.f32 %v5879, %v5878
    %v5881 = vmul.f32 0.5, %v5880
    %v5882 = vsub.f32 1.5, %v5881
    %v5883 = vmul.f32 %v5878, %v5882
    %vm5884 = vweird.f32 %v5877
    %vm5885 = vweird.f32 %v5878
    %vm5886 = vmor %vm5884, %vm5885
    %v5887 = vsel %vm5886, %v5878, %v5883
    %v5889 = vrot.slane %v5887, 1
    %v5892 = vmul.f32 %v5717, %v5887
    %v5893 = vmul.f32 %v5718, %v5887
    %v5894 = vmul.f32 %v5719, %v5887
    %v5895 = vmul.f32 %v5720, %v5887
    %v5896 = vmul.f32 %v5721, %v5887
    %v5897 = vmul.f32 %v5722, %v5887
    %v5898 = vmul.f32 %v5723, %v5887
    %v5899 = vmul.f32 %v5724, %v5887
    %v5900 = vmul.f32 %v5725, %v5887
    %v5901 = vmul.f32 %v5726, %v5887
    %v5902 = vmul.f32 %v5727, %v5887
    %v5903 = vmul.f32 %v5728, %v5887
    %v5904 = vmul.f32 %v5729, %v5887
    %v5905 = vmul.f32 %v5730, %v5887
    %v5906 = vmul.f32 %v5731, %v5887
    %v5907 = vmul.f32 %v5732, %v5887
    %v5908 = vmul.f32 %v5733, %v5889
    %v5909 = vmul.f32 %v5734, %v5889
    %v5910 = vmul.f32 %v5735, %v5889
    %v5911 = vmul.f32 %v5736, %v5889
    %v5912 = vmul.f32 %v5737, %v5889
    %v5913 = vmul.f32 %v5738, %v5889
    %v5914 = vmul.f32 %v5739, %v5889
    %v5915 = vmul.f32 %v5740, %v5889
    %v5916 = vmul.f32 %v5741, %v5889
    %v5917 = vmul.f32 %v5742, %v5889
    %v5918 = vmul.f32 %v5743, %v5889
    %v5919 = vmul.f32 %v5744, %v5889
    %v5920 = vmul.f32 %v5745, %v5889
    %v5921 = vmul.f32 %v5746, %v5889
    %v5922 = vmul.f32 %v5747, %v5889
    %v5923 = vmul.f32 %v5748, %v5889
    %v5956 = vrot.slane %v5893, 4
    %v5957 = vrot.slane %v5895, 4
    %v5958 = vrot.slane %v5897, 4
    %v5959 = vrot.slane %v5899, 4
    %v5960 = vrot.slane %v5901, 4
    %v5961 = vrot.slane %v5903, 4
    %v5962 = vrot.slane %v5905, 4
    %v5963 = vrot.slane %v5907, 4
    %v5964 = vrot.slane %v5909, 4
    %v5965 = vrot.slane %v5911, 4
    %v5966 = vrot.slane %v5913, 4
    %v5967 = vrot.slane %v5915, 4
    %v5968 = vrot.slane %v5917, 4
    %v5969 = vrot.slane %v5919, 4
    %v5970 = vrot.slane %v5921, 4
    %v5971 = vrot.slane %v5923, 4
    %v5972 = vsel %vm157, %v5892, %v5956
    %v5973 = vsel %vm157, %v5894, %v5957
    %v5974 = vsel %vm157, %v5896, %v5958
    %v5975 = vsel %vm157, %v5898, %v5959
    %v5976 = vsel %vm157, %v5900, %v5960
    %v5977 = vsel %vm157, %v5902, %v5961
    %v5978 = vsel %vm157, %v5904, %v5962
    %v5979 = vsel %vm157, %v5906, %v5963
    %v5980 = vsel %vm157, %v5908, %v5964
    %v5981 = vsel %vm157, %v5910, %v5965
    %v5982 = vsel %vm157, %v5912, %v5966
    %v5983 = vsel %vm157, %v5914, %v5967
    %v5984 = vsel %vm157, %v5916, %v5968
    %v5985 = vsel %vm157, %v5918, %v5969
    %v5986 = vsel %vm157, %v5920, %v5970
    %v5987 = vsel %vm157, %v5922, %v5971
    %v5988 = vrot.slane %v5980, 7
    %v5989 = vsel %vm510, %v5988, %v5972
    %v5990 = vsel %vm689, %v5988, %v5989
    %v5991 = vrot.slane %v5981, 7
    %v5992 = vsel %vm510, %v5991, %v5973
    %v5993 = vsel %vm689, %v5991, %v5992
    %v5994 = vrot.slane %v5982, 7
    %v5995 = vsel %vm510, %v5994, %v5974
    %v5996 = vsel %vm689, %v5994, %v5995
    %v5997 = vrot.slane %v5983, 7
    %v5998 = vsel %vm510, %v5997, %v5975
    %v5999 = vsel %vm689, %v5997, %v5998
    %v6000 = vrot.slane %v5984, 7
    %v6001 = vsel %vm510, %v6000, %v5976
    %v6002 = vsel %vm689, %v6000, %v6001
    %v6003 = vrot.slane %v5985, 7
    %v6004 = vsel %vm510, %v6003, %v5977
    %v6005 = vsel %vm689, %v6003, %v6004
    %v6006 = vrot.slane %v5986, 7
    %v6007 = vsel %vm510, %v6006, %v5978
    %v6008 = vsel %vm689, %v6006, %v6007
    %v6009 = vrot.slane %v5987, 7
    %v6010 = vsel %vm510, %v6009, %v5979
    %v6011 = vsel %vm689, %v6009, %v6010
    %6020 = vst [vmem:[#allocation3 + $0xc0] sm:$0x33] %v5990
    %6021 = vst [vmem:[#allocation3 + $0xc8] sm:$0x33] %v5993
    %6022 = vst [vmem:[#allocation3 + $0xd0] sm:$0x33] %v5996
    %6023 = vst [vmem:[#allocation3 + $0xd8] sm:$0x33] %v5999
    %6024 = vst [vmem:[#allocation3 + $0xe0] sm:$0x33] %v6002
    %6025 = vst [vmem:[#allocation3 + $0xe8] sm:$0x33] %v6005
    %6026 = vst [vmem:[#allocation3 + $0xf0] sm:$0x33] %v6008
    %6027 = vst [vmem:[#allocation3 + $0xf8] sm:$0x33] %v6011
    %v6028 = vpack.c.bf16 %v5718, %v5717
    %v6029 = vpack.c.bf16 %v5720, %v5719
    %v6030 = vpack.c.bf16 %v5722, %v5721
    %v6031 = vpack.c.bf16 %v5724, %v5723
    %v6032 = vpack.c.bf16 %v5726, %v5725
    %v6033 = vpack.c.bf16 %v5728, %v5727
    %v6034 = vpack.c.bf16 %v5730, %v5729
    %v6035 = vpack.c.bf16 %v5732, %v5731
    %v6036 = vpack.c.bf16 %v5734, %v5733
    %v6037 = vpack.c.bf16 %v5736, %v5735
    %v6038 = vpack.c.bf16 %v5738, %v5737
    %v6039 = vpack.c.bf16 %v5740, %v5739
    %v6040 = vpack.c.bf16 %v5742, %v5741
    %v6041 = vpack.c.bf16 %v5744, %v5743
    %v6042 = vpack.c.bf16 %v5746, %v5745
    %v6043 = vpack.c.bf16 %v5748, %v5747
    %v6060 = vunpack.c.l.b16 %v6028
    %v6061 = vunpack.c.h.b16 %v6028
    %v6062 = vunpack.c.l.b16 %v6029
    %v6063 = vunpack.c.h.b16 %v6029
    %v6064 = vunpack.c.l.b16 %v6030
    %v6065 = vunpack.c.h.b16 %v6030
    %v6066 = vunpack.c.l.b16 %v6031
    %v6067 = vunpack.c.h.b16 %v6031
    %v6068 = vunpack.c.l.b16 %v6032
    %v6069 = vunpack.c.h.b16 %v6032
    %v6070 = vunpack.c.l.b16 %v6033
    %v6071 = vunpack.c.h.b16 %v6033
    %v6072 = vunpack.c.l.b16 %v6034
    %v6073 = vunpack.c.h.b16 %v6034
    %v6074 = vunpack.c.l.b16 %v6035
    %v6075 = vunpack.c.h.b16 %v6035
    %v6076 = vunpack.c.l.b16 %v6036
    %v6077 = vunpack.c.h.b16 %v6036
    %v6078 = vunpack.c.l.b16 %v6037
    %v6079 = vunpack.c.h.b16 %v6037
    %v6080 = vunpack.c.l.b16 %v6038
    %v6081 = vunpack.c.h.b16 %v6038
    %v6082 = vunpack.c.l.b16 %v6039
    %v6083 = vunpack.c.h.b16 %v6039
    %v6084 = vunpack.c.l.b16 %v6040
    %v6085 = vunpack.c.h.b16 %v6040
    %v6086 = vunpack.c.l.b16 %v6041
    %v6087 = vunpack.c.h.b16 %v6041
    %v6088 = vunpack.c.l.b16 %v6042
    %v6089 = vunpack.c.h.b16 %v6042
    %v6090 = vunpack.c.l.b16 %v6043
    %v6091 = vunpack.c.h.b16 %v6043
    %v6092 = vsel %vm510, %v6076, %v6060
    %v6093 = vsel %vm510, %v6077, %v6061
    %v6094 = vsel %vm510, %v6078, %v6062
    %v6095 = vsel %vm510, %v6079, %v6063
    %v6096 = vsel %vm510, %v6080, %v6064
    %v6097 = vsel %vm510, %v6081, %v6065
    %v6098 = vsel %vm510, %v6082, %v6066
    %v6099 = vsel %vm510, %v6083, %v6067
    %v6100 = vsel %vm510, %v6084, %v6068
    %v6101 = vsel %vm510, %v6085, %v6069
    %v6102 = vsel %vm510, %v6086, %v6070
    %v6103 = vsel %vm510, %v6087, %v6071
    %v6104 = vsel %vm510, %v6088, %v6072
    %v6105 = vsel %vm510, %v6089, %v6073
    %v6106 = vsel %vm510, %v6090, %v6074
    %v6107 = vsel %vm510, %v6091, %v6075
    %v6108 = vpack.c.b16 %v6093, %v6092
    %v6109 = vpack.c.b16 %v6095, %v6094
    %v6110 = vpack.c.b16 %v6097, %v6096
    %v6111 = vpack.c.b16 %v6099, %v6098
    %v6112 = vpack.c.b16 %v6101, %v6100
    %v6113 = vpack.c.b16 %v6103, %v6102
    %v6114 = vpack.c.b16 %v6105, %v6104
    %v6115 = vpack.c.b16 %v6107, %v6106
    %6124 = vst [vmem:[#allocation2 + $0xc0] sm:$0x11] %v6108
    %6125 = vst [vmem:[#allocation2 + $0xc8] sm:$0x11] %v6109
    %6126 = vst [vmem:[#allocation2 + $0xd0] sm:$0x11] %v6110
    %6127 = vst [vmem:[#allocation2 + $0xd8] sm:$0x11] %v6111
    %6128 = vst [vmem:[#allocation2 + $0xe0] sm:$0x11] %v6112
    %6129 = vst [vmem:[#allocation2 + $0xe8] sm:$0x11] %v6113
    %6130 = vst [vmem:[#allocation2 + $0xf0] sm:$0x11] %v6114
    %6131 = vst [vmem:[#allocation2 + $0xf8] sm:$0x11] %v6115
    %v6132 = vld [vmem:[%s1 + $0x100] sm:$0xcc]
    %v6133 = vld [vmem:[%s1 + $0x108] sm:$0xcc]
    %v6134 = vld [vmem:[%s1 + $0x110] sm:$0xcc]
    %v6135 = vld [vmem:[%s1 + $0x118] sm:$0xcc]
    %v6136 = vld [vmem:[%s1 + $0x120] sm:$0xcc]
    %v6137 = vld [vmem:[%s1 + $0x128] sm:$0xcc]
    %v6138 = vld [vmem:[%s1 + $0x130] sm:$0xcc]
    %v6139 = vld [vmem:[%s1 + $0x138] sm:$0xcc]
    %v6140 = vld [vmem:[%s1 + $0x140] sm:$0xff]
    %v6141 = vld [vmem:[%s1 + $0x148] sm:$0xff]
    %v6142 = vld [vmem:[%s1 + $0x150] sm:$0xff]
    %v6143 = vld [vmem:[%s1 + $0x158] sm:$0xff]
    %v6144 = vld [vmem:[%s1 + $0x160] sm:$0xff]
    %v6145 = vld [vmem:[%s1 + $0x168] sm:$0xff]
    %v6146 = vld [vmem:[%s1 + $0x170] sm:$0xff]
    %v6147 = vld [vmem:[%s1 + $0x178] sm:$0xff]
    %v6148 = vld [vmem:[%s1 + $0x280] sm:$0xcc]
    %v6149 = vld [vmem:[%s1 + $0x288] sm:$0xcc]
    %v6150 = vld [vmem:[%s1 + $0x290] sm:$0xcc]
    %v6151 = vld [vmem:[%s1 + $0x298] sm:$0xcc]
    %v6152 = vld [vmem:[%s1 + $0x2a0] sm:$0xcc]
    %v6153 = vld [vmem:[%s1 + $0x2a8] sm:$0xcc]
    %v6154 = vld [vmem:[%s1 + $0x2b0] sm:$0xcc]
    %v6155 = vld [vmem:[%s1 + $0x2b8] sm:$0xcc]
    %v6156 = vld [vmem:[%s1 + $0x2c0] sm:$0xff]
    %v6157 = vld [vmem:[%s1 + $0x2c8] sm:$0xff]
    %v6158 = vld [vmem:[%s1 + $0x2d0] sm:$0xff]
    %v6159 = vld [vmem:[%s1 + $0x2d8] sm:$0xff]
    %v6160 = vld [vmem:[%s1 + $0x2e0] sm:$0xff]
    %v6161 = vld [vmem:[%s1 + $0x2e8] sm:$0xff]
    %v6162 = vld [vmem:[%s1 + $0x2f0] sm:$0xff]
    %v6163 = vld [vmem:[%s1 + $0x2f8] sm:$0xff]
    %v6164 = vunpack.c.l.bf16 %v6132
    %v6165 = vunpack.c.h.bf16 %v6132
    %v6166 = vunpack.c.l.bf16 %v6133
    %v6167 = vunpack.c.h.bf16 %v6133
    %v6168 = vunpack.c.l.bf16 %v6134
    %v6169 = vunpack.c.h.bf16 %v6134
    %v6170 = vunpack.c.l.bf16 %v6135
    %v6171 = vunpack.c.h.bf16 %v6135
    %v6172 = vunpack.c.l.bf16 %v6136
    %v6173 = vunpack.c.h.bf16 %v6136
    %v6174 = vunpack.c.l.bf16 %v6137
    %v6175 = vunpack.c.h.bf16 %v6137
    %v6176 = vunpack.c.l.bf16 %v6138
    %v6177 = vunpack.c.h.bf16 %v6138
    %v6178 = vunpack.c.l.bf16 %v6139
    %v6179 = vunpack.c.h.bf16 %v6139
    %v6180 = vunpack.c.l.bf16 %v6140
    %v6181 = vunpack.c.h.bf16 %v6140
    %v6182 = vunpack.c.l.bf16 %v6141
    %v6183 = vunpack.c.h.bf16 %v6141
    %v6184 = vunpack.c.l.bf16 %v6142
    %v6185 = vunpack.c.h.bf16 %v6142
    %v6186 = vunpack.c.l.bf16 %v6143
    %v6187 = vunpack.c.h.bf16 %v6143
    %v6188 = vunpack.c.l.bf16 %v6144
    %v6189 = vunpack.c.h.bf16 %v6144
    %v6190 = vunpack.c.l.bf16 %v6145
    %v6191 = vunpack.c.h.bf16 %v6145
    %v6192 = vunpack.c.l.bf16 %v6146
    %v6193 = vunpack.c.h.bf16 %v6146
    %v6194 = vunpack.c.l.bf16 %v6147
    %v6195 = vunpack.c.h.bf16 %v6147
    %v6196 = vunpack.c.l.bf16 %v6148
    %v6197 = vunpack.c.h.bf16 %v6148
    %v6198 = vunpack.c.l.bf16 %v6149
    %v6199 = vunpack.c.h.bf16 %v6149
    %v6200 = vunpack.c.l.bf16 %v6150
    %v6201 = vunpack.c.h.bf16 %v6150
    %v6202 = vunpack.c.l.bf16 %v6151
    %v6203 = vunpack.c.h.bf16 %v6151
    %v6204 = vunpack.c.l.bf16 %v6152
    %v6205 = vunpack.c.h.bf16 %v6152
    %v6206 = vunpack.c.l.bf16 %v6153
    %v6207 = vunpack.c.h.bf16 %v6153
    %v6208 = vunpack.c.l.bf16 %v6154
    %v6209 = vunpack.c.h.bf16 %v6154
    %v6210 = vunpack.c.l.bf16 %v6155
    %v6211 = vunpack.c.h.bf16 %v6155
    %v6212 = vunpack.c.l.bf16 %v6156
    %v6213 = vunpack.c.h.bf16 %v6156
    %v6214 = vunpack.c.l.bf16 %v6157
    %v6215 = vunpack.c.h.bf16 %v6157
    %v6216 = vunpack.c.l.bf16 %v6158
    %v6217 = vunpack.c.h.bf16 %v6158
    %v6218 = vunpack.c.l.bf16 %v6159
    %v6219 = vunpack.c.h.bf16 %v6159
    %v6220 = vunpack.c.l.bf16 %v6160
    %v6221 = vunpack.c.h.bf16 %v6160
    %v6222 = vunpack.c.l.bf16 %v6161
    %v6223 = vunpack.c.h.bf16 %v6161
    %v6224 = vunpack.c.l.bf16 %v6162
    %v6225 = vunpack.c.h.bf16 %v6162
    %v6226 = vunpack.c.l.bf16 %v6163
    %v6227 = vunpack.c.h.bf16 %v6163
    %v6292 = vrot.slane %v6164, 4
    %v6293 = vrot.slane %v6180, 4
    %v6294 = vsel %vm157, %v6292, %v6293
    %v6295 = vrot.slane %v6165, 4
    %v6296 = vrot.slane %v6181, 4
    %v6297 = vsel %vm157, %v6295, %v6296
    %v6298 = vrot.slane %v6166, 4
    %v6299 = vrot.slane %v6182, 4
    %v6300 = vsel %vm157, %v6298, %v6299
    %v6301 = vrot.slane %v6167, 4
    %v6302 = vrot.slane %v6183, 4
    %v6303 = vsel %vm157, %v6301, %v6302
    %v6304 = vrot.slane %v6168, 4
    %v6305 = vrot.slane %v6184, 4
    %v6306 = vsel %vm157, %v6304, %v6305
    %v6307 = vrot.slane %v6169, 4
    %v6308 = vrot.slane %v6185, 4
    %v6309 = vsel %vm157, %v6307, %v6308
    %v6310 = vrot.slane %v6170, 4
    %v6311 = vrot.slane %v6186, 4
    %v6312 = vsel %vm157, %v6310, %v6311
    %v6313 = vrot.slane %v6171, 4
    %v6314 = vrot.slane %v6187, 4
    %v6315 = vsel %vm157, %v6313, %v6314
    %v6316 = vrot.slane %v6172, 4
    %v6317 = vrot.slane %v6188, 4
    %v6318 = vsel %vm157, %v6316, %v6317
    %v6319 = vrot.slane %v6173, 4
    %v6320 = vrot.slane %v6189, 4
    %v6321 = vsel %vm157, %v6319, %v6320
    %v6322 = vrot.slane %v6174, 4
    %v6323 = vrot.slane %v6190, 4
    %v6324 = vsel %vm157, %v6322, %v6323
    %v6325 = vrot.slane %v6175, 4
    %v6326 = vrot.slane %v6191, 4
    %v6327 = vsel %vm157, %v6325, %v6326
    %v6328 = vrot.slane %v6176, 4
    %v6329 = vrot.slane %v6192, 4
    %v6330 = vsel %vm157, %v6328, %v6329
    %v6331 = vrot.slane %v6177, 4
    %v6332 = vrot.slane %v6193, 4
    %v6333 = vsel %vm157, %v6331, %v6332
    %v6334 = vrot.slane %v6178, 4
    %v6335 = vrot.slane %v6194, 4
    %v6336 = vsel %vm157, %v6334, %v6335
    %v6337 = vrot.slane %v6179, 4
    %v6338 = vrot.slane %v6195, 4
    %v6339 = vsel %vm157, %v6337, %v6338
    %v6340 = vrot.slane %v6196, 4
    %v6341 = vrot.slane %v6212, 4
    %v6342 = vsel %vm157, %v6340, %v6341
    %v6343 = vrot.slane %v6197, 4
    %v6344 = vrot.slane %v6213, 4
    %v6345 = vsel %vm157, %v6343, %v6344
    %v6346 = vrot.slane %v6198, 4
    %v6347 = vrot.slane %v6214, 4
    %v6348 = vsel %vm157, %v6346, %v6347
    %v6349 = vrot.slane %v6199, 4
    %v6350 = vrot.slane %v6215, 4
    %v6351 = vsel %vm157, %v6349, %v6350
    %v6352 = vrot.slane %v6200, 4
    %v6353 = vrot.slane %v6216, 4
    %v6354 = vsel %vm157, %v6352, %v6353
    %v6355 = vrot.slane %v6201, 4
    %v6356 = vrot.slane %v6217, 4
    %v6357 = vsel %vm157, %v6355, %v6356
    %v6358 = vrot.slane %v6202, 4
    %v6359 = vrot.slane %v6218, 4
    %v6360 = vsel %vm157, %v6358, %v6359
    %v6361 = vrot.slane %v6203, 4
    %v6362 = vrot.slane %v6219, 4
    %v6363 = vsel %vm157, %v6361, %v6362
    %v6364 = vrot.slane %v6204, 4
    %v6365 = vrot.slane %v6220, 4
    %v6366 = vsel %vm157, %v6364, %v6365
    %v6367 = vrot.slane %v6205, 4
    %v6368 = vrot.slane %v6221, 4
    %v6369 = vsel %vm157, %v6367, %v6368
    %v6370 = vrot.slane %v6206, 4
    %v6371 = vrot.slane %v6222, 4
    %v6372 = vsel %vm157, %v6370, %v6371
    %v6373 = vrot.slane %v6207, 4
    %v6374 = vrot.slane %v6223, 4
    %v6375 = vsel %vm157, %v6373, %v6374
    %v6376 = vrot.slane %v6208, 4
    %v6377 = vrot.slane %v6224, 4
    %v6378 = vsel %vm157, %v6376, %v6377
    %v6379 = vrot.slane %v6209, 4
    %v6380 = vrot.slane %v6225, 4
    %v6381 = vsel %vm157, %v6379, %v6380
    %v6382 = vrot.slane %v6210, 4
    %v6383 = vrot.slane %v6226, 4
    %v6384 = vsel %vm157, %v6382, %v6383
    %v6385 = vrot.slane %v6211, 4
    %v6386 = vrot.slane %v6227, 4
    %v6387 = vsel %vm157, %v6385, %v6386
    %v6452 = vsel %vm157, %v6293, 0.0
    %v6453 = vadd.f32 %v6294, %v6452
    %v6454 = vrot.slane %v6453, 4
    %v6455 = vadd.f32 %v6453, %v6454
    %v6456 = vrot.slane %v6455, 2
    %v6457 = vadd.f32 %v6455, %v6456
    %v6458 = vrot.slane %v6457, 1
    %v6459 = vadd.f32 %v6457, %v6458
    %v6460 = vsel %vm157, %v6296, 0.0
    %v6461 = vadd.f32 %v6297, %v6460
    %v6462 = vrot.slane %v6461, 4
    %v6463 = vadd.f32 %v6461, %v6462
    %v6464 = vrot.slane %v6463, 2
    %v6465 = vadd.f32 %v6463, %v6464
    %v6466 = vrot.slane %v6465, 1
    %v6467 = vadd.f32 %v6465, %v6466
    %v6468 = vsel %vm157, %v6299, 0.0
    %v6469 = vadd.f32 %v6300, %v6468
    %v6470 = vrot.slane %v6469, 4
    %v6471 = vadd.f32 %v6469, %v6470
    %v6472 = vrot.slane %v6471, 2
    %v6473 = vadd.f32 %v6471, %v6472
    %v6474 = vrot.slane %v6473, 1
    %v6475 = vadd.f32 %v6473, %v6474
    %v6476 = vsel %vm157, %v6302, 0.0
    %v6477 = vadd.f32 %v6303, %v6476
    %v6478 = vrot.slane %v6477, 4
    %v6479 = vadd.f32 %v6477, %v6478
    %v6480 = vrot.slane %v6479, 2
    %v6481 = vadd.f32 %v6479, %v6480
    %v6482 = vrot.slane %v6481, 1
    %v6483 = vadd.f32 %v6481, %v6482
    %v6484 = vsel %vm157, %v6305, 0.0
    %v6485 = vadd.f32 %v6306, %v6484
    %v6486 = vrot.slane %v6485, 4
    %v6487 = vadd.f32 %v6485, %v6486
    %v6488 = vrot.slane %v6487, 2
    %v6489 = vadd.f32 %v6487, %v6488
    %v6490 = vrot.slane %v6489, 1
    %v6491 = vadd.f32 %v6489, %v6490
    %v6492 = vsel %vm157, %v6308, 0.0
    %v6493 = vadd.f32 %v6309, %v6492
    %v6494 = vrot.slane %v6493, 4
    %v6495 = vadd.f32 %v6493, %v6494
    %v6496 = vrot.slane %v6495, 2
    %v6497 = vadd.f32 %v6495, %v6496
    %v6498 = vrot.slane %v6497, 1
    %v6499 = vadd.f32 %v6497, %v6498
    %v6500 = vsel %vm157, %v6311, 0.0
    %v6501 = vadd.f32 %v6312, %v6500
    %v6502 = vrot.slane %v6501, 4
    %v6503 = vadd.f32 %v6501, %v6502
    %v6504 = vrot.slane %v6503, 2
    %v6505 = vadd.f32 %v6503, %v6504
    %v6506 = vrot.slane %v6505, 1
    %v6507 = vadd.f32 %v6505, %v6506
    %v6508 = vsel %vm157, %v6314, 0.0
    %v6509 = vadd.f32 %v6315, %v6508
    %v6510 = vrot.slane %v6509, 4
    %v6511 = vadd.f32 %v6509, %v6510
    %v6512 = vrot.slane %v6511, 2
    %v6513 = vadd.f32 %v6511, %v6512
    %v6514 = vrot.slane %v6513, 1
    %v6515 = vadd.f32 %v6513, %v6514
    %v6516 = vsel %vm157, %v6317, 0.0
    %v6517 = vadd.f32 %v6318, %v6516
    %v6518 = vrot.slane %v6517, 4
    %v6519 = vadd.f32 %v6517, %v6518
    %v6520 = vrot.slane %v6519, 2
    %v6521 = vadd.f32 %v6519, %v6520
    %v6522 = vrot.slane %v6521, 1
    %v6523 = vadd.f32 %v6521, %v6522
    %v6524 = vsel %vm157, %v6320, 0.0
    %v6525 = vadd.f32 %v6321, %v6524
    %v6526 = vrot.slane %v6525, 4
    %v6527 = vadd.f32 %v6525, %v6526
    %v6528 = vrot.slane %v6527, 2
    %v6529 = vadd.f32 %v6527, %v6528
    %v6530 = vrot.slane %v6529, 1
    %v6531 = vadd.f32 %v6529, %v6530
    %v6532 = vsel %vm157, %v6323, 0.0
    %v6533 = vadd.f32 %v6324, %v6532
    %v6534 = vrot.slane %v6533, 4
    %v6535 = vadd.f32 %v6533, %v6534
    %v6536 = vrot.slane %v6535, 2
    %v6537 = vadd.f32 %v6535, %v6536
    %v6538 = vrot.slane %v6537, 1
    %v6539 = vadd.f32 %v6537, %v6538
    %v6540 = vsel %vm157, %v6326, 0.0
    %v6541 = vadd.f32 %v6327, %v6540
    %v6542 = vrot.slane %v6541, 4
    %v6543 = vadd.f32 %v6541, %v6542
    %v6544 = vrot.slane %v6543, 2
    %v6545 = vadd.f32 %v6543, %v6544
    %v6546 = vrot.slane %v6545, 1
    %v6547 = vadd.f32 %v6545, %v6546
    %v6548 = vsel %vm157, %v6329, 0.0
    %v6549 = vadd.f32 %v6330, %v6548
    %v6550 = vrot.slane %v6549, 4
    %v6551 = vadd.f32 %v6549, %v6550
    %v6552 = vrot.slane %v6551, 2
    %v6553 = vadd.f32 %v6551, %v6552
    %v6554 = vrot.slane %v6553, 1
    %v6555 = vadd.f32 %v6553, %v6554
    %v6556 = vsel %vm157, %v6332, 0.0
    %v6557 = vadd.f32 %v6333, %v6556
    %v6558 = vrot.slane %v6557, 4
    %v6559 = vadd.f32 %v6557, %v6558
    %v6560 = vrot.slane %v6559, 2
    %v6561 = vadd.f32 %v6559, %v6560
    %v6562 = vrot.slane %v6561, 1
    %v6563 = vadd.f32 %v6561, %v6562
    %v6564 = vsel %vm157, %v6335, 0.0
    %v6565 = vadd.f32 %v6336, %v6564
    %v6566 = vrot.slane %v6565, 4
    %v6567 = vadd.f32 %v6565, %v6566
    %v6568 = vrot.slane %v6567, 2
    %v6569 = vadd.f32 %v6567, %v6568
    %v6570 = vrot.slane %v6569, 1
    %v6571 = vadd.f32 %v6569, %v6570
    %v6572 = vsel %vm157, %v6338, 0.0
    %v6573 = vadd.f32 %v6339, %v6572
    %v6574 = vrot.slane %v6573, 4
    %v6575 = vadd.f32 %v6573, %v6574
    %v6576 = vrot.slane %v6575, 2
    %v6577 = vadd.f32 %v6575, %v6576
    %v6578 = vrot.slane %v6577, 1
    %v6579 = vadd.f32 %v6577, %v6578
    %v6580 = vsel %vm157, %v6341, 0.0
    %v6581 = vadd.f32 %v6342, %v6580
    %v6582 = vrot.slane %v6581, 4
    %v6583 = vadd.f32 %v6581, %v6582
    %v6584 = vrot.slane %v6583, 2
    %v6585 = vadd.f32 %v6583, %v6584
    %v6586 = vrot.slane %v6585, 1
    %v6587 = vadd.f32 %v6585, %v6586
    %v6588 = vsel %vm157, %v6344, 0.0
    %v6589 = vadd.f32 %v6345, %v6588
    %v6590 = vrot.slane %v6589, 4
    %v6591 = vadd.f32 %v6589, %v6590
    %v6592 = vrot.slane %v6591, 2
    %v6593 = vadd.f32 %v6591, %v6592
    %v6594 = vrot.slane %v6593, 1
    %v6595 = vadd.f32 %v6593, %v6594
    %v6596 = vsel %vm157, %v6347, 0.0
    %v6597 = vadd.f32 %v6348, %v6596
    %v6598 = vrot.slane %v6597, 4
    %v6599 = vadd.f32 %v6597, %v6598
    %v6600 = vrot.slane %v6599, 2
    %v6601 = vadd.f32 %v6599, %v6600
    %v6602 = vrot.slane %v6601, 1
    %v6603 = vadd.f32 %v6601, %v6602
    %v6604 = vsel %vm157, %v6350, 0.0
    %v6605 = vadd.f32 %v6351, %v6604
    %v6606 = vrot.slane %v6605, 4
    %v6607 = vadd.f32 %v6605, %v6606
    %v6608 = vrot.slane %v6607, 2
    %v6609 = vadd.f32 %v6607, %v6608
    %v6610 = vrot.slane %v6609, 1
    %v6611 = vadd.f32 %v6609, %v6610
    %v6612 = vsel %vm157, %v6353, 0.0
    %v6613 = vadd.f32 %v6354, %v6612
    %v6614 = vrot.slane %v6613, 4
    %v6615 = vadd.f32 %v6613, %v6614
    %v6616 = vrot.slane %v6615, 2
    %v6617 = vadd.f32 %v6615, %v6616
    %v6618 = vrot.slane %v6617, 1
    %v6619 = vadd.f32 %v6617, %v6618
    %v6620 = vsel %vm157, %v6356, 0.0
    %v6621 = vadd.f32 %v6357, %v6620
    %v6622 = vrot.slane %v6621, 4
    %v6623 = vadd.f32 %v6621, %v6622
    %v6624 = vrot.slane %v6623, 2
    %v6625 = vadd.f32 %v6623, %v6624
    %v6626 = vrot.slane %v6625, 1
    %v6627 = vadd.f32 %v6625, %v6626
    %v6628 = vsel %vm157, %v6359, 0.0
    %v6629 = vadd.f32 %v6360, %v6628
    %v6630 = vrot.slane %v6629, 4
    %v6631 = vadd.f32 %v6629, %v6630
    %v6632 = vrot.slane %v6631, 2
    %v6633 = vadd.f32 %v6631, %v6632
    %v6634 = vrot.slane %v6633, 1
    %v6635 = vadd.f32 %v6633, %v6634
    %v6636 = vsel %vm157, %v6362, 0.0
    %v6637 = vadd.f32 %v6363, %v6636
    %v6638 = vrot.slane %v6637, 4
    %v6639 = vadd.f32 %v6637, %v6638
    %v6640 = vrot.slane %v6639, 2
    %v6641 = vadd.f32 %v6639, %v6640
    %v6642 = vrot.slane %v6641, 1
    %v6643 = vadd.f32 %v6641, %v6642
    %v6644 = vsel %vm157, %v6365, 0.0
    %v6645 = vadd.f32 %v6366, %v6644
    %v6646 = vrot.slane %v6645, 4
    %v6647 = vadd.f32 %v6645, %v6646
    %v6648 = vrot.slane %v6647, 2
    %v6649 = vadd.f32 %v6647, %v6648
    %v6650 = vrot.slane %v6649, 1
    %v6651 = vadd.f32 %v6649, %v6650
    %v6652 = vsel %vm157, %v6368, 0.0
    %v6653 = vadd.f32 %v6369, %v6652
    %v6654 = vrot.slane %v6653, 4
    %v6655 = vadd.f32 %v6653, %v6654
    %v6656 = vrot.slane %v6655, 2
    %v6657 = vadd.f32 %v6655, %v6656
    %v6658 = vrot.slane %v6657, 1
    %v6659 = vadd.f32 %v6657, %v6658
    %v6660 = vsel %vm157, %v6371, 0.0
    %v6661 = vadd.f32 %v6372, %v6660
    %v6662 = vrot.slane %v6661, 4
    %v6663 = vadd.f32 %v6661, %v6662
    %v6664 = vrot.slane %v6663, 2
    %v6665 = vadd.f32 %v6663, %v6664
    %v6666 = vrot.slane %v6665, 1
    %v6667 = vadd.f32 %v6665, %v6666
    %v6668 = vsel %vm157, %v6374, 0.0
    %v6669 = vadd.f32 %v6375, %v6668
    %v6670 = vrot.slane %v6669, 4
    %v6671 = vadd.f32 %v6669, %v6670
    %v6672 = vrot.slane %v6671, 2
    %v6673 = vadd.f32 %v6671, %v6672
    %v6674 = vrot.slane %v6673, 1
    %v6675 = vadd.f32 %v6673, %v6674
    %v6676 = vsel %vm157, %v6377, 0.0
    %v6677 = vadd.f32 %v6378, %v6676
    %v6678 = vrot.slane %v6677, 4
    %v6679 = vadd.f32 %v6677, %v6678
    %v6680 = vrot.slane %v6679, 2
    %v6681 = vadd.f32 %v6679, %v6680
    %v6682 = vrot.slane %v6681, 1
    %v6683 = vadd.f32 %v6681, %v6682
    %v6684 = vsel %vm157, %v6380, 0.0
    %v6685 = vadd.f32 %v6381, %v6684
    %v6686 = vrot.slane %v6685, 4
    %v6687 = vadd.f32 %v6685, %v6686
    %v6688 = vrot.slane %v6687, 2
    %v6689 = vadd.f32 %v6687, %v6688
    %v6690 = vrot.slane %v6689, 1
    %v6691 = vadd.f32 %v6689, %v6690
    %v6692 = vsel %vm157, %v6383, 0.0
    %v6693 = vadd.f32 %v6384, %v6692
    %v6694 = vrot.slane %v6693, 4
    %v6695 = vadd.f32 %v6693, %v6694
    %v6696 = vrot.slane %v6695, 2
    %v6697 = vadd.f32 %v6695, %v6696
    %v6698 = vrot.slane %v6697, 1
    %v6699 = vadd.f32 %v6697, %v6698
    %v6700 = vsel %vm157, %v6386, 0.0
    %v6701 = vadd.f32 %v6387, %v6700
    %v6702 = vrot.slane %v6701, 4
    %v6703 = vadd.f32 %v6701, %v6702
    %v6704 = vrot.slane %v6703, 2
    %v6705 = vadd.f32 %v6703, %v6704
    %v6706 = vrot.slane %v6705, 1
    %v6707 = vadd.f32 %v6705, %v6706
    %v6708 = vmul.f32 %v6459, 0.083333336
    %v6709 = vmul.f32 %v6467, 0.083333336
    %v6710 = vmul.f32 %v6475, 0.083333336
    %v6711 = vmul.f32 %v6483, 0.083333336
    %v6712 = vmul.f32 %v6491, 0.083333336
    %v6713 = vmul.f32 %v6499, 0.083333336
    %v6714 = vmul.f32 %v6507, 0.083333336
    %v6715 = vmul.f32 %v6515, 0.083333336
    %v6716 = vmul.f32 %v6523, 0.083333336
    %v6717 = vmul.f32 %v6531, 0.083333336
    %v6718 = vmul.f32 %v6539, 0.083333336
    %v6719 = vmul.f32 %v6547, 0.083333336
    %v6720 = vmul.f32 %v6555, 0.083333336
    %v6721 = vmul.f32 %v6563, 0.083333336
    %v6722 = vmul.f32 %v6571, 0.083333336
    %v6723 = vmul.f32 %v6579, 0.083333336
    %v6724 = vmul.f32 %v6587, 0.083333336
    %v6725 = vmul.f32 %v6595, 0.083333336
    %v6726 = vmul.f32 %v6603, 0.083333336
    %v6727 = vmul.f32 %v6611, 0.083333336
    %v6728 = vmul.f32 %v6619, 0.083333336
    %v6729 = vmul.f32 %v6627, 0.083333336
    %v6730 = vmul.f32 %v6635, 0.083333336
    %v6731 = vmul.f32 %v6643, 0.083333336
    %v6732 = vmul.f32 %v6651, 0.083333336
    %v6733 = vmul.f32 %v6659, 0.083333336
    %v6734 = vmul.f32 %v6667, 0.083333336
    %v6735 = vmul.f32 %v6675, 0.083333336
    %v6736 = vmul.f32 %v6683, 0.083333336
    %v6737 = vmul.f32 %v6691, 0.083333336
    %v6738 = vmul.f32 %v6699, 0.083333336
    %v6739 = vmul.f32 %v6707, 0.083333336
    %v6740 = vmul.f32 %v6708, %v6708
    %v6741 = vmul.f32 %v6709, %v6709
    %v6742 = vmul.f32 %v6710, %v6710
    %v6743 = vmul.f32 %v6711, %v6711
    %v6744 = vmul.f32 %v6712, %v6712
    %v6745 = vmul.f32 %v6713, %v6713
    %v6746 = vmul.f32 %v6714, %v6714
    %v6747 = vmul.f32 %v6715, %v6715
    %v6748 = vmul.f32 %v6716, %v6716
    %v6749 = vmul.f32 %v6717, %v6717
    %v6750 = vmul.f32 %v6718, %v6718
    %v6751 = vmul.f32 %v6719, %v6719
    %v6752 = vmul.f32 %v6720, %v6720
    %v6753 = vmul.f32 %v6721, %v6721
    %v6754 = vmul.f32 %v6722, %v6722
    %v6755 = vmul.f32 %v6723, %v6723
    %v6756 = vmul.f32 %v6724, %v6724
    %v6757 = vmul.f32 %v6725, %v6725
    %v6758 = vmul.f32 %v6726, %v6726
    %v6759 = vmul.f32 %v6727, %v6727
    %v6760 = vmul.f32 %v6728, %v6728
    %v6761 = vmul.f32 %v6729, %v6729
    %v6762 = vmul.f32 %v6730, %v6730
    %v6763 = vmul.f32 %v6731, %v6731
    %v6764 = vmul.f32 %v6732, %v6732
    %v6765 = vmul.f32 %v6733, %v6733
    %v6766 = vmul.f32 %v6734, %v6734
    %v6767 = vmul.f32 %v6735, %v6735
    %v6768 = vmul.f32 %v6736, %v6736
    %v6769 = vmul.f32 %v6737, %v6737
    %v6770 = vmul.f32 %v6738, %v6738
    %v6771 = vmul.f32 %v6739, %v6739
    %v6804 = vsel %vm510, %v6756, %v6740
    %v6805 = vsel %vm510, %v6757, %v6741
    %v6806 = vsel %vm510, %v6758, %v6742
    %v6807 = vsel %vm510, %v6759, %v6743
    %v6808 = vsel %vm510, %v6760, %v6744
    %v6809 = vsel %vm510, %v6761, %v6745
    %v6810 = vsel %vm510, %v6762, %v6746
    %v6811 = vsel %vm510, %v6763, %v6747
    %v6812 = vsel %vm510, %v6764, %v6748
    %v6813 = vsel %vm510, %v6765, %v6749
    %v6814 = vsel %vm510, %v6766, %v6750
    %v6815 = vsel %vm510, %v6767, %v6751
    %v6816 = vsel %vm510, %v6768, %v6752
    %v6817 = vsel %vm510, %v6769, %v6753
    %v6818 = vsel %vm510, %v6770, %v6754
    %v6819 = vsel %vm510, %v6771, %v6755
    %v6836 = vsel %vm543, %v6804, 0.0
    %v6837 = vsel %vm543, %v6805, 0.0
    %v6838 = vadd.f32 %v6836, %v6837
    %v6839 = vsel %vm543, %v6806, 0.0
    %v6840 = vadd.f32 %v6838, %v6839
    %v6841 = vsel %vm543, %v6807, 0.0
    %v6842 = vadd.f32 %v6840, %v6841
    %v6843 = vsel %vm543, %v6808, 0.0
    %v6844 = vadd.f32 %v6842, %v6843
    %v6845 = vsel %vm543, %v6809, 0.0
    %v6846 = vadd.f32 %v6844, %v6845
    %v6847 = vsel %vm543, %v6810, 0.0
    %v6848 = vadd.f32 %v6846, %v6847
    %v6849 = vsel %vm543, %v6811, 0.0
    %v6850 = vadd.f32 %v6848, %v6849
    %v6851 = vsel %vm543, %v6812, 0.0
    %v6852 = vadd.f32 %v6850, %v6851
    %v6853 = vsel %vm543, %v6813, 0.0
    %v6854 = vadd.f32 %v6852, %v6853
    %v6855 = vsel %vm543, %v6814, 0.0
    %v6856 = vadd.f32 %v6854, %v6855
    %v6857 = vsel %vm543, %v6815, 0.0
    %v6858 = vadd.f32 %v6856, %v6857
    %v6859 = vsel %vm543, %v6816, 0.0
    %v6860 = vadd.f32 %v6858, %v6859
    %v6861 = vsel %vm543, %v6817, 0.0
    %v6862 = vadd.f32 %v6860, %v6861
    %v6863 = vsel %vm543, %v6818, 0.0
    %v6864 = vadd.f32 %v6862, %v6863
    %v6865 = vsel %vm543, %v6819, 0.0
    %v6866 = vadd.f32 %v6864, %v6865
    %6867 = vadd.xlane.f32.xlu0 %v6866
    %v6868 = vpop.xlane.xlu0 %6867
    %v6869 = vrsqrt.pop %v6868
    %v6870 = vmul.f32 %v6869, %v6868
    %v6871 = vmul.f32 %v6870, %v6869
    %v6872 = vmul.f32 0.5, %v6871
    %v6873 = vsub.f32 1.5, %v6872
    %v6874 = vmul.f32 %v6869, %v6873
    %vm6875 = vweird.f32 %v6868
    %vm6876 = vweird.f32 %v6869
    %vm6877 = vmor %vm6875, %vm6876
    %v6878 = vsel %vm6877, %v6869, %v6874
    %v6880 = vrot.slane %v6878, 1
    %v6883 = vmul.f32 %v6708, %v6878
    %v6884 = vmul.f32 %v6709, %v6878
    %v6885 = vmul.f32 %v6710, %v6878
    %v6886 = vmul.f32 %v6711, %v6878
    %v6887 = vmul.f32 %v6712, %v6878
    %v6888 = vmul.f32 %v6713, %v6878
    %v6889 = vmul.f32 %v6714, %v6878
    %v6890 = vmul.f32 %v6715, %v6878
    %v6891 = vmul.f32 %v6716, %v6878
    %v6892 = vmul.f32 %v6717, %v6878
    %v6893 = vmul.f32 %v6718, %v6878
    %v6894 = vmul.f32 %v6719, %v6878
    %v6895 = vmul.f32 %v6720, %v6878
    %v6896 = vmul.f32 %v6721, %v6878
    %v6897 = vmul.f32 %v6722, %v6878
    %v6898 = vmul.f32 %v6723, %v6878
    %v6899 = vmul.f32 %v6724, %v6880
    %v6900 = vmul.f32 %v6725, %v6880
    %v6901 = vmul.f32 %v6726, %v6880
    %v6902 = vmul.f32 %v6727, %v6880
    %v6903 = vmul.f32 %v6728, %v6880
    %v6904 = vmul.f32 %v6729, %v6880
    %v6905 = vmul.f32 %v6730, %v6880
    %v6906 = vmul.f32 %v6731, %v6880
    %v6907 = vmul.f32 %v6732, %v6880
    %v6908 = vmul.f32 %v6733, %v6880
    %v6909 = vmul.f32 %v6734, %v6880
    %v6910 = vmul.f32 %v6735, %v6880
    %v6911 = vmul.f32 %v6736, %v6880
    %v6912 = vmul.f32 %v6737, %v6880
    %v6913 = vmul.f32 %v6738, %v6880
    %v6914 = vmul.f32 %v6739, %v6880
    %v6947 = vrot.slane %v6884, 4
    %v6948 = vrot.slane %v6886, 4
    %v6949 = vrot.slane %v6888, 4
    %v6950 = vrot.slane %v6890, 4
    %v6951 = vrot.slane %v6892, 4
    %v6952 = vrot.slane %v6894, 4
    %v6953 = vrot.slane %v6896, 4
    %v6954 = vrot.slane %v6898, 4
    %v6955 = vrot.slane %v6900, 4
    %v6956 = vrot.slane %v6902, 4
    %v6957 = vrot.slane %v6904, 4
    %v6958 = vrot.slane %v6906, 4
    %v6959 = vrot.slane %v6908, 4
    %v6960 = vrot.slane %v6910, 4
    %v6961 = vrot.slane %v6912, 4
    %v6962 = vrot.slane %v6914, 4
    %v6963 = vsel %vm157, %v6883, %v6947
    %v6964 = vsel %vm157, %v6885, %v6948
    %v6965 = vsel %vm157, %v6887, %v6949
    %v6966 = vsel %vm157, %v6889, %v6950
    %v6967 = vsel %vm157, %v6891, %v6951
    %v6968 = vsel %vm157, %v6893, %v6952
    %v6969 = vsel %vm157, %v6895, %v6953
    %v6970 = vsel %vm157, %v6897, %v6954
    %v6971 = vsel %vm157, %v6899, %v6955
    %v6972 = vsel %vm157, %v6901, %v6956
    %v6973 = vsel %vm157, %v6903, %v6957
    %v6974 = vsel %vm157, %v6905, %v6958
    %v6975 = vsel %vm157, %v6907, %v6959
    %v6976 = vsel %vm157, %v6909, %v6960
    %v6977 = vsel %vm157, %v6911, %v6961
    %v6978 = vsel %vm157, %v6913, %v6962
    %v6979 = vrot.slane %v6963, 6
    %v6980 = vrot.slane %v6971, 5
    %v6981 = vsel %vm1457, %v6980, %v6979
    %v6982 = vsel %vm1459, %v6980, %v6981
    %v6983 = vrot.slane %v6964, 6
    %v6984 = vrot.slane %v6972, 5
    %v6985 = vsel %vm1457, %v6984, %v6983
    %v6986 = vsel %vm1459, %v6984, %v6985
    %v6987 = vrot.slane %v6965, 6
    %v6988 = vrot.slane %v6973, 5
    %v6989 = vsel %vm1457, %v6988, %v6987
    %v6990 = vsel %vm1459, %v6988, %v6989
    %v6991 = vrot.slane %v6966, 6
    %v6992 = vrot.slane %v6974, 5
    %v6993 = vsel %vm1457, %v6992, %v6991
    %v6994 = vsel %vm1459, %v6992, %v6993
    %v6995 = vrot.slane %v6967, 6
    %v6996 = vrot.slane %v6975, 5
    %v6997 = vsel %vm1457, %v6996, %v6995
    %v6998 = vsel %vm1459, %v6996, %v6997
    %v6999 = vrot.slane %v6968, 6
    %v7000 = vrot.slane %v6976, 5
    %v7001 = vsel %vm1457, %v7000, %v6999
    %v7002 = vsel %vm1459, %v7000, %v7001
    %v7003 = vrot.slane %v6969, 6
    %v7004 = vrot.slane %v6977, 5
    %v7005 = vsel %vm1457, %v7004, %v7003
    %v7006 = vsel %vm1459, %v7004, %v7005
    %v7007 = vrot.slane %v6970, 6
    %v7008 = vrot.slane %v6978, 5
    %v7009 = vsel %vm1457, %v7008, %v7007
    %v7010 = vsel %vm1459, %v7008, %v7009
    %7019 = vst [vmem:[#allocation3 + $0xc0] sm:$0xcc] %v6982
    %7020 = vst [vmem:[#allocation3 + $0xc8] sm:$0xcc] %v6986
    %7021 = vst [vmem:[#allocation3 + $0xd0] sm:$0xcc] %v6990
    %7022 = vst [vmem:[#allocation3 + $0xd8] sm:$0xcc] %v6994
    %7023 = vst [vmem:[#allocation3 + $0xe0] sm:$0xcc] %v6998
    %7024 = vst [vmem:[#allocation3 + $0xe8] sm:$0xcc] %v7002
    %7025 = vst [vmem:[#allocation3 + $0xf0] sm:$0xcc] %v7006
    %7026 = vst [vmem:[#allocation3 + $0xf8] sm:$0xcc] %v7010
    %v7027 = vpack.c.bf16 %v6709, %v6708
    %v7028 = vpack.c.bf16 %v6711, %v6710
    %v7029 = vpack.c.bf16 %v6713, %v6712
    %v7030 = vpack.c.bf16 %v6715, %v6714
    %v7031 = vpack.c.bf16 %v6717, %v6716
    %v7032 = vpack.c.bf16 %v6719, %v6718
    %v7033 = vpack.c.bf16 %v6721, %v6720
    %v7034 = vpack.c.bf16 %v6723, %v6722
    %v7035 = vpack.c.bf16 %v6725, %v6724
    %v7036 = vpack.c.bf16 %v6727, %v6726
    %v7037 = vpack.c.bf16 %v6729, %v6728
    %v7038 = vpack.c.bf16 %v6731, %v6730
    %v7039 = vpack.c.bf16 %v6733, %v6732
    %v7040 = vpack.c.bf16 %v6735, %v6734
    %v7041 = vpack.c.bf16 %v6737, %v6736
    %v7042 = vpack.c.bf16 %v6739, %v6738
    %v7059 = vunpack.c.l.b16 %v7027
    %v7060 = vunpack.c.h.b16 %v7027
    %v7061 = vunpack.c.l.b16 %v7028
    %v7062 = vunpack.c.h.b16 %v7028
    %v7063 = vunpack.c.l.b16 %v7029
    %v7064 = vunpack.c.h.b16 %v7029
    %v7065 = vunpack.c.l.b16 %v7030
    %v7066 = vunpack.c.h.b16 %v7030
    %v7067 = vunpack.c.l.b16 %v7031
    %v7068 = vunpack.c.h.b16 %v7031
    %v7069 = vunpack.c.l.b16 %v7032
    %v7070 = vunpack.c.h.b16 %v7032
    %v7071 = vunpack.c.l.b16 %v7033
    %v7072 = vunpack.c.h.b16 %v7033
    %v7073 = vunpack.c.l.b16 %v7034
    %v7074 = vunpack.c.h.b16 %v7034
    %v7075 = vunpack.c.l.b16 %v7035
    %v7076 = vunpack.c.h.b16 %v7035
    %v7077 = vunpack.c.l.b16 %v7036
    %v7078 = vunpack.c.h.b16 %v7036
    %v7079 = vunpack.c.l.b16 %v7037
    %v7080 = vunpack.c.h.b16 %v7037
    %v7081 = vunpack.c.l.b16 %v7038
    %v7082 = vunpack.c.h.b16 %v7038
    %v7083 = vunpack.c.l.b16 %v7039
    %v7084 = vunpack.c.h.b16 %v7039
    %v7085 = vunpack.c.l.b16 %v7040
    %v7086 = vunpack.c.h.b16 %v7040
    %v7087 = vunpack.c.l.b16 %v7041
    %v7088 = vunpack.c.h.b16 %v7041
    %v7089 = vunpack.c.l.b16 %v7042
    %v7090 = vunpack.c.h.b16 %v7042
    %v7091 = vsel %vm1457, %v7075, %v7059
    %v7092 = vsel %vm1457, %v7076, %v7060
    %v7093 = vsel %vm1457, %v7077, %v7061
    %v7094 = vsel %vm1457, %v7078, %v7062
    %v7095 = vsel %vm1457, %v7079, %v7063
    %v7096 = vsel %vm1457, %v7080, %v7064
    %v7097 = vsel %vm1457, %v7081, %v7065
    %v7098 = vsel %vm1457, %v7082, %v7066
    %v7099 = vsel %vm1457, %v7083, %v7067
    %v7100 = vsel %vm1457, %v7084, %v7068
    %v7101 = vsel %vm1457, %v7085, %v7069
    %v7102 = vsel %vm1457, %v7086, %v7070
    %v7103 = vsel %vm1457, %v7087, %v7071
    %v7104 = vsel %vm1457, %v7088, %v7072
    %v7105 = vsel %vm1457, %v7089, %v7073
    %v7106 = vsel %vm1457, %v7090, %v7074
    %v7107 = vpack.c.b16 %v7092, %v7091
    %v7108 = vpack.c.b16 %v7094, %v7093
    %v7109 = vpack.c.b16 %v7096, %v7095
    %v7110 = vpack.c.b16 %v7098, %v7097
    %v7111 = vpack.c.b16 %v7100, %v7099
    %v7112 = vpack.c.b16 %v7102, %v7101
    %v7113 = vpack.c.b16 %v7104, %v7103
    %v7114 = vpack.c.b16 %v7106, %v7105
    %7123 = vst [vmem:[#allocation2 + $0xc0] sm:$0x22] %v7107
    %7124 = vst [vmem:[#allocation2 + $0xc8] sm:$0x22] %v7108
    %7125 = vst [vmem:[#allocation2 + $0xd0] sm:$0x22] %v7109
    %7126 = vst [vmem:[#allocation2 + $0xd8] sm:$0x22] %v7110
    %7127 = vst [vmem:[#allocation2 + $0xe0] sm:$0x22] %v7111
    %7128 = vst [vmem:[#allocation2 + $0xe8] sm:$0x22] %v7112
    %7129 = vst [vmem:[#allocation2 + $0xf0] sm:$0x22] %v7113
    %7130 = vst [vmem:[#allocation2 + $0xf8] sm:$0x22] %v7114
    %v7131 = vld [vmem:[#allocation2] sm:$0xff]
    %v7132 = vld [vmem:[#allocation2 + $0x8] sm:$0xff]
    %v7133 = vld [vmem:[#allocation2 + $0x10] sm:$0xff]
    %v7134 = vld [vmem:[#allocation2 + $0x18] sm:$0xff]
    %v7135 = vld [vmem:[#allocation2 + $0x20] sm:$0xff]
    %v7136 = vld [vmem:[#allocation2 + $0x28] sm:$0xff]
    %v7137 = vld [vmem:[#allocation2 + $0x30] sm:$0xff]
    %v7138 = vld [vmem:[#allocation2 + $0x38] sm:$0xff]
    %v7139 = vld [vmem:[#allocation2 + $0x40] sm:$0xff]
    %v7140 = vld [vmem:[#allocation2 + $0x48] sm:$0xff]
    %v7141 = vld [vmem:[#allocation2 + $0x50] sm:$0xff]
    %v7142 = vld [vmem:[#allocation2 + $0x58] sm:$0xff]
    %v7143 = vld [vmem:[#allocation2 + $0x60] sm:$0xff]
    %v7144 = vld [vmem:[#allocation2 + $0x68] sm:$0xff]
    %v7145 = vld [vmem:[#allocation2 + $0x70] sm:$0xff]
    %v7146 = vld [vmem:[#allocation2 + $0x78] sm:$0xff]
    %v7147 = vld [vmem:[#allocation2 + $0x80] sm:$0xff]
    %v7148 = vld [vmem:[#allocation2 + $0x88] sm:$0xff]
    %v7149 = vld [vmem:[#allocation2 + $0x90] sm:$0xff]
    %v7150 = vld [vmem:[#allocation2 + $0x98] sm:$0xff]
    %v7151 = vld [vmem:[#allocation2 + $0xa0] sm:$0xff]
    %v7152 = vld [vmem:[#allocation2 + $0xa8] sm:$0xff]
    %v7153 = vld [vmem:[#allocation2 + $0xb0] sm:$0xff]
    %v7154 = vld [vmem:[#allocation2 + $0xb8] sm:$0xff]
    %v7155 = vld [vmem:[#allocation2 + $0xc0] sm:$0xff]
    %v7156 = vld [vmem:[#allocation2 + $0xc8] sm:$0xff]
    %v7157 = vld [vmem:[#allocation2 + $0xd0] sm:$0xff]
    %v7158 = vld [vmem:[#allocation2 + $0xd8] sm:$0xff]
    %v7159 = vld [vmem:[#allocation2 + $0xe0] sm:$0xff]
    %v7160 = vld [vmem:[#allocation2 + $0xe8] sm:$0xff]
    %v7161 = vld [vmem:[#allocation2 + $0xf0] sm:$0xff]
    %v7162 = vld [vmem:[#allocation2 + $0xf8] sm:$0xff]
    %v7163 = vld [vmem:[%s2] sm:$0xff]
    %v7164 = vld [vmem:[%s2 + $0x8] sm:$0xff]
    %v7165 = vld [vmem:[%s2 + $0x10] sm:$0xff]
    %v7166 = vld [vmem:[%s2 + $0x18] sm:$0xff]
    %v7167 = vld [vmem:[%s2 + $0x20] sm:$0xff]
    %v7168 = vld [vmem:[%s2 + $0x28] sm:$0xff]
    %v7169 = vld [vmem:[%s2 + $0x30] sm:$0xff]
    %v7170 = vld [vmem:[%s2 + $0x38] sm:$0xff]
    %v7171 = vld [vmem:[%s2 + $0x40] sm:$0xff]
    %v7172 = vld [vmem:[%s2 + $0x48] sm:$0xff]
    %v7173 = vld [vmem:[%s2 + $0x50] sm:$0xff]
    %v7174 = vld [vmem:[%s2 + $0x58] sm:$0xff]
    %v7175 = vld [vmem:[%s2 + $0x60] sm:$0xff]
    %v7176 = vld [vmem:[%s2 + $0x68] sm:$0xff]
    %v7177 = vld [vmem:[%s2 + $0x70] sm:$0xff]
    %v7178 = vld [vmem:[%s2 + $0x78] sm:$0xff]
    %v7179 = vld [vmem:[%s2 + $0x80] sm:$0xff]
    %v7180 = vld [vmem:[%s2 + $0x88] sm:$0xff]
    %v7181 = vld [vmem:[%s2 + $0x90] sm:$0xff]
    %v7182 = vld [vmem:[%s2 + $0x98] sm:$0xff]
    %v7183 = vld [vmem:[%s2 + $0xa0] sm:$0xff]
    %v7184 = vld [vmem:[%s2 + $0xa8] sm:$0xff]
    %v7185 = vld [vmem:[%s2 + $0xb0] sm:$0xff]
    %v7186 = vld [vmem:[%s2 + $0xb8] sm:$0xff]
    %v7187 = vld [vmem:[%s2 + $0xc0] sm:$0xff]
    %v7188 = vld [vmem:[%s2 + $0xc8] sm:$0xff]
    %v7189 = vld [vmem:[%s2 + $0xd0] sm:$0xff]
    %v7190 = vld [vmem:[%s2 + $0xd8] sm:$0xff]
    %v7191 = vld [vmem:[%s2 + $0xe0] sm:$0xff]
    %v7192 = vld [vmem:[%s2 + $0xe8] sm:$0xff]
    %v7193 = vld [vmem:[%s2 + $0xf0] sm:$0xff]
    %v7194 = vld [vmem:[%s2 + $0xf8] sm:$0xff]
    %v7195 = vld [vmem:[%s2 + $0x100] sm:$0xff]
    %v7196 = vld [vmem:[%s2 + $0x108] sm:$0xff]
    %v7197 = vld [vmem:[%s2 + $0x110] sm:$0xff]
    %v7198 = vld [vmem:[%s2 + $0x118] sm:$0xff]
    %v7199 = vld [vmem:[%s2 + $0x120] sm:$0xff]
    %v7200 = vld [vmem:[%s2 + $0x128] sm:$0xff]
    %v7201 = vld [vmem:[%s2 + $0x130] sm:$0xff]
    %v7202 = vld [vmem:[%s2 + $0x138] sm:$0xff]
    %v7203 = vld [vmem:[%s2 + $0x140] sm:$0xff]
    %v7204 = vld [vmem:[%s2 + $0x148] sm:$0xff]
    %v7205 = vld [vmem:[%s2 + $0x150] sm:$0xff]
    %v7206 = vld [vmem:[%s2 + $0x158] sm:$0xff]
    %v7207 = vld [vmem:[%s2 + $0x160] sm:$0xff]
    %v7208 = vld [vmem:[%s2 + $0x168] sm:$0xff]
    %v7209 = vld [vmem:[%s2 + $0x170] sm:$0xff]
    %v7210 = vld [vmem:[%s2 + $0x178] sm:$0xff]
    %v7211 = vld [vmem:[%s2 + $0x180] sm:$0xff]
    %v7212 = vld [vmem:[%s2 + $0x188] sm:$0xff]
    %v7213 = vld [vmem:[%s2 + $0x190] sm:$0xff]
    %v7214 = vld [vmem:[%s2 + $0x198] sm:$0xff]
    %v7215 = vld [vmem:[%s2 + $0x1a0] sm:$0xff]
    %v7216 = vld [vmem:[%s2 + $0x1a8] sm:$0xff]
    %v7217 = vld [vmem:[%s2 + $0x1b0] sm:$0xff]
    %v7218 = vld [vmem:[%s2 + $0x1b8] sm:$0xff]
    %v7219 = vld [vmem:[%s2 + $0x1c0] sm:$0xff]
    %v7220 = vld [vmem:[%s2 + $0x1c8] sm:$0xff]
    %v7221 = vld [vmem:[%s2 + $0x1d0] sm:$0xff]
    %v7222 = vld [vmem:[%s2 + $0x1d8] sm:$0xff]
    %v7223 = vld [vmem:[%s2 + $0x1e0] sm:$0xff]
    %v7224 = vld [vmem:[%s2 + $0x1e8] sm:$0xff]
    %v7225 = vld [vmem:[%s2 + $0x1f0] sm:$0xff]
    %v7226 = vld [vmem:[%s2 + $0x1f8] sm:$0xff]
    %v7227 = vld [vmem:[%s2 + $0x200] sm:$0xff]
    %v7228 = vld [vmem:[%s2 + $0x208] sm:$0xff]
    %v7229 = vld [vmem:[%s2 + $0x210] sm:$0xff]
    %v7230 = vld [vmem:[%s2 + $0x218] sm:$0xff]
    %v7231 = vld [vmem:[%s2 + $0x220] sm:$0xff]
    %v7232 = vld [vmem:[%s2 + $0x228] sm:$0xff]
    %v7233 = vld [vmem:[%s2 + $0x230] sm:$0xff]
    %v7234 = vld [vmem:[%s2 + $0x238] sm:$0xff]
    %v7235 = vld [vmem:[%s2 + $0x240] sm:$0xff]
    %v7236 = vld [vmem:[%s2 + $0x248] sm:$0xff]
    %v7237 = vld [vmem:[%s2 + $0x250] sm:$0xff]
    %v7238 = vld [vmem:[%s2 + $0x258] sm:$0xff]
    %v7239 = vld [vmem:[%s2 + $0x260] sm:$0xff]
    %v7240 = vld [vmem:[%s2 + $0x268] sm:$0xff]
    %v7241 = vld [vmem:[%s2 + $0x270] sm:$0xff]
    %v7242 = vld [vmem:[%s2 + $0x278] sm:$0xff]
    %v7243 = vld [vmem:[%s2 + $0x280] sm:$0xff]
    %v7244 = vld [vmem:[%s2 + $0x288] sm:$0xff]
    %v7245 = vld [vmem:[%s2 + $0x290] sm:$0xff]
    %v7246 = vld [vmem:[%s2 + $0x298] sm:$0xff]
    %v7247 = vld [vmem:[%s2 + $0x2a0] sm:$0xff]
    %v7248 = vld [vmem:[%s2 + $0x2a8] sm:$0xff]
    %v7249 = vld [vmem:[%s2 + $0x2b0] sm:$0xff]
    %v7250 = vld [vmem:[%s2 + $0x2b8] sm:$0xff]
    %v7251 = vld [vmem:[%s2 + $0x2c0] sm:$0xff]
    %v7252 = vld [vmem:[%s2 + $0x2c8] sm:$0xff]
    %v7253 = vld [vmem:[%s2 + $0x2d0] sm:$0xff]
    %v7254 = vld [vmem:[%s2 + $0x2d8] sm:$0xff]
    %v7255 = vld [vmem:[%s2 + $0x2e0] sm:$0xff]
    %v7256 = vld [vmem:[%s2 + $0x2e8] sm:$0xff]
    %v7257 = vld [vmem:[%s2 + $0x2f0] sm:$0xff]
    %v7258 = vld [vmem:[%s2 + $0x2f8] sm:$0xff]
    %v7259 = vld [vmem:[%s2 + $0x300] sm:$0xff]
    %v7260 = vld [vmem:[%s2 + $0x308] sm:$0xff]
    %v7261 = vld [vmem:[%s2 + $0x310] sm:$0xff]
    %v7262 = vld [vmem:[%s2 + $0x318] sm:$0xff]
    %v7263 = vld [vmem:[%s2 + $0x320] sm:$0xff]
    %v7264 = vld [vmem:[%s2 + $0x328] sm:$0xff]
    %v7265 = vld [vmem:[%s2 + $0x330] sm:$0xff]
    %v7266 = vld [vmem:[%s2 + $0x338] sm:$0xff]
    %v7267 = vld [vmem:[%s2 + $0x340] sm:$0xff]
    %v7268 = vld [vmem:[%s2 + $0x348] sm:$0xff]
    %v7269 = vld [vmem:[%s2 + $0x350] sm:$0xff]
    %v7270 = vld [vmem:[%s2 + $0x358] sm:$0xff]
    %v7271 = vld [vmem:[%s2 + $0x360] sm:$0xff]
    %v7272 = vld [vmem:[%s2 + $0x368] sm:$0xff]
    %v7273 = vld [vmem:[%s2 + $0x370] sm:$0xff]
    %v7274 = vld [vmem:[%s2 + $0x378] sm:$0xff]
    %v7275 = vld [vmem:[%s2 + $0x380] sm:$0xff]
    %v7276 = vld [vmem:[%s2 + $0x388] sm:$0xff]
    %v7277 = vld [vmem:[%s2 + $0x390] sm:$0xff]
    %v7278 = vld [vmem:[%s2 + $0x398] sm:$0xff]
    %v7279 = vld [vmem:[%s2 + $0x3a0] sm:$0xff]
    %v7280 = vld [vmem:[%s2 + $0x3a8] sm:$0xff]
    %v7281 = vld [vmem:[%s2 + $0x3b0] sm:$0xff]
    %v7282 = vld [vmem:[%s2 + $0x3b8] sm:$0xff]
    %v7283 = vld [vmem:[%s2 + $0x3c0] sm:$0xff]
    %v7284 = vld [vmem:[%s2 + $0x3c8] sm:$0xff]
    %v7285 = vld [vmem:[%s2 + $0x3d0] sm:$0xff]
    %v7286 = vld [vmem:[%s2 + $0x3d8] sm:$0xff]
    %v7287 = vld [vmem:[%s2 + $0x3e0] sm:$0xff]
    %v7288 = vld [vmem:[%s2 + $0x3e8] sm:$0xff]
    %v7289 = vld [vmem:[%s2 + $0x3f0] sm:$0xff]
    %v7290 = vld [vmem:[%s2 + $0x3f8] sm:$0xff]
    %v7291 = vld [vmem:[%s2 + $0x400] sm:$0xff]
    %v7292 = vld [vmem:[%s2 + $0x408] sm:$0xff]
    %v7293 = vld [vmem:[%s2 + $0x410] sm:$0xff]
    %v7294 = vld [vmem:[%s2 + $0x418] sm:$0xff]
    %v7295 = vld [vmem:[%s2 + $0x420] sm:$0xff]
    %v7296 = vld [vmem:[%s2 + $0x428] sm:$0xff]
    %v7297 = vld [vmem:[%s2 + $0x430] sm:$0xff]
    %v7298 = vld [vmem:[%s2 + $0x438] sm:$0xff]
    %v7299 = vld [vmem:[%s2 + $0x440] sm:$0xff]
    %v7300 = vld [vmem:[%s2 + $0x448] sm:$0xff]
    %v7301 = vld [vmem:[%s2 + $0x450] sm:$0xff]
    %v7302 = vld [vmem:[%s2 + $0x458] sm:$0xff]
    %v7303 = vld [vmem:[%s2 + $0x460] sm:$0xff]
    %v7304 = vld [vmem:[%s2 + $0x468] sm:$0xff]
    %v7305 = vld [vmem:[%s2 + $0x470] sm:$0xff]
    %v7306 = vld [vmem:[%s2 + $0x478] sm:$0xff]
    %v7307 = vld [vmem:[%s2 + $0x480] sm:$0xff]
    %v7308 = vld [vmem:[%s2 + $0x488] sm:$0xff]
    %v7309 = vld [vmem:[%s2 + $0x490] sm:$0xff]
    %v7310 = vld [vmem:[%s2 + $0x498] sm:$0xff]
    %v7311 = vld [vmem:[%s2 + $0x4a0] sm:$0xff]
    %v7312 = vld [vmem:[%s2 + $0x4a8] sm:$0xff]
    %v7313 = vld [vmem:[%s2 + $0x4b0] sm:$0xff]
    %v7314 = vld [vmem:[%s2 + $0x4b8] sm:$0xff]
    %v7315 = vld [vmem:[%s2 + $0x4c0] sm:$0xff]
    %v7316 = vld [vmem:[%s2 + $0x4c8] sm:$0xff]
    %v7317 = vld [vmem:[%s2 + $0x4d0] sm:$0xff]
    %v7318 = vld [vmem:[%s2 + $0x4d8] sm:$0xff]
    %v7319 = vld [vmem:[%s2 + $0x4e0] sm:$0xff]
    %v7320 = vld [vmem:[%s2 + $0x4e8] sm:$0xff]
    %v7321 = vld [vmem:[%s2 + $0x4f0] sm:$0xff]
    %v7322 = vld [vmem:[%s2 + $0x4f8] sm:$0xff]
    %v7323 = vld [vmem:[%s2 + $0x500] sm:$0xff]
    %v7324 = vld [vmem:[%s2 + $0x508] sm:$0xff]
    %v7325 = vld [vmem:[%s2 + $0x510] sm:$0xff]
    %v7326 = vld [vmem:[%s2 + $0x518] sm:$0xff]
    %v7327 = vld [vmem:[%s2 + $0x520] sm:$0xff]
    %v7328 = vld [vmem:[%s2 + $0x528] sm:$0xff]
    %v7329 = vld [vmem:[%s2 + $0x530] sm:$0xff]
    %v7330 = vld [vmem:[%s2 + $0x538] sm:$0xff]
    %v7331 = vld [vmem:[%s2 + $0x540] sm:$0xff]
    %v7332 = vld [vmem:[%s2 + $0x548] sm:$0xff]
    %v7333 = vld [vmem:[%s2 + $0x550] sm:$0xff]
    %v7334 = vld [vmem:[%s2 + $0x558] sm:$0xff]
    %v7335 = vld [vmem:[%s2 + $0x560] sm:$0xff]
    %v7336 = vld [vmem:[%s2 + $0x568] sm:$0xff]
    %v7337 = vld [vmem:[%s2 + $0x570] sm:$0xff]
    %v7338 = vld [vmem:[%s2 + $0x578] sm:$0xff]
    %v7339 = vld [vmem:[%s2 + $0x580] sm:$0xff]
    %v7340 = vld [vmem:[%s2 + $0x588] sm:$0xff]
    %v7341 = vld [vmem:[%s2 + $0x590] sm:$0xff]
    %v7342 = vld [vmem:[%s2 + $0x598] sm:$0xff]
    %v7343 = vld [vmem:[%s2 + $0x5a0] sm:$0xff]
    %v7344 = vld [vmem:[%s2 + $0x5a8] sm:$0xff]
    %v7345 = vld [vmem:[%s2 + $0x5b0] sm:$0xff]
    %v7346 = vld [vmem:[%s2 + $0x5b8] sm:$0xff]
    %v7347 = vld [vmem:[%s2 + $0x5c0] sm:$0xff]
    %v7348 = vld [vmem:[%s2 + $0x5c8] sm:$0xff]
    %v7349 = vld [vmem:[%s2 + $0x5d0] sm:$0xff]
    %v7350 = vld [vmem:[%s2 + $0x5d8] sm:$0xff]
    %v7351 = vld [vmem:[%s2 + $0x5e0] sm:$0xff]
    %v7352 = vld [vmem:[%s2 + $0x5e8] sm:$0xff]
    %v7353 = vld [vmem:[%s2 + $0x5f0] sm:$0xff]
    %v7354 = vld [vmem:[%s2 + $0x5f8] sm:$0xff]
    %v7355 = vld [vmem:[%s2 + $0x600] sm:$0xff]
    %v7356 = vld [vmem:[%s2 + $0x608] sm:$0xff]
    %v7357 = vld [vmem:[%s2 + $0x610] sm:$0xff]
    %v7358 = vld [vmem:[%s2 + $0x618] sm:$0xff]
    %v7359 = vld [vmem:[%s2 + $0x620] sm:$0xff]
    %v7360 = vld [vmem:[%s2 + $0x628] sm:$0xff]
    %v7361 = vld [vmem:[%s2 + $0x630] sm:$0xff]
    %v7362 = vld [vmem:[%s2 + $0x638] sm:$0xff]
    %v7363 = vld [vmem:[%s2 + $0x640] sm:$0xff]
    %v7364 = vld [vmem:[%s2 + $0x648] sm:$0xff]
    %v7365 = vld [vmem:[%s2 + $0x650] sm:$0xff]
    %v7366 = vld [vmem:[%s2 + $0x658] sm:$0xff]
    %v7367 = vld [vmem:[%s2 + $0x660] sm:$0xff]
    %v7368 = vld [vmem:[%s2 + $0x668] sm:$0xff]
    %v7369 = vld [vmem:[%s2 + $0x670] sm:$0xff]
    %v7370 = vld [vmem:[%s2 + $0x678] sm:$0xff]
    %v7371 = vld [vmem:[%s2 + $0x680] sm:$0xff]
    %v7372 = vld [vmem:[%s2 + $0x688] sm:$0xff]
    %v7373 = vld [vmem:[%s2 + $0x690] sm:$0xff]
    %v7374 = vld [vmem:[%s2 + $0x698] sm:$0xff]
    %v7375 = vld [vmem:[%s2 + $0x6a0] sm:$0xff]
    %v7376 = vld [vmem:[%s2 + $0x6a8] sm:$0xff]
    %v7377 = vld [vmem:[%s2 + $0x6b0] sm:$0xff]
    %v7378 = vld [vmem:[%s2 + $0x6b8] sm:$0xff]
    %v7379 = vld [vmem:[%s2 + $0x6c0] sm:$0xff]
    %v7380 = vld [vmem:[%s2 + $0x6c8] sm:$0xff]
    %v7381 = vld [vmem:[%s2 + $0x6d0] sm:$0xff]
    %v7382 = vld [vmem:[%s2 + $0x6d8] sm:$0xff]
    %v7383 = vld [vmem:[%s2 + $0x6e0] sm:$0xff]
    %v7384 = vld [vmem:[%s2 + $0x6e8] sm:$0xff]
    %v7385 = vld [vmem:[%s2 + $0x6f0] sm:$0xff]
    %v7386 = vld [vmem:[%s2 + $0x6f8] sm:$0xff]
    %v7387 = vld [vmem:[%s2 + $0x700] sm:$0xff]
    %v7388 = vld [vmem:[%s2 + $0x708] sm:$0xff]
    %v7389 = vld [vmem:[%s2 + $0x710] sm:$0xff]
    %v7390 = vld [vmem:[%s2 + $0x718] sm:$0xff]
    %v7391 = vld [vmem:[%s2 + $0x720] sm:$0xff]
    %v7392 = vld [vmem:[%s2 + $0x728] sm:$0xff]
    %v7393 = vld [vmem:[%s2 + $0x730] sm:$0xff]
    %v7394 = vld [vmem:[%s2 + $0x738] sm:$0xff]
    %v7395 = vld [vmem:[%s2 + $0x740] sm:$0xff]
    %v7396 = vld [vmem:[%s2 + $0x748] sm:$0xff]
    %v7397 = vld [vmem:[%s2 + $0x750] sm:$0xff]
    %v7398 = vld [vmem:[%s2 + $0x758] sm:$0xff]
    %v7399 = vld [vmem:[%s2 + $0x760] sm:$0xff]
    %v7400 = vld [vmem:[%s2 + $0x768] sm:$0xff]
    %v7401 = vld [vmem:[%s2 + $0x770] sm:$0xff]
    %v7402 = vld [vmem:[%s2 + $0x778] sm:$0xff]
    %v7403 = vld [vmem:[%s2 + $0x780] sm:$0xff]
    %v7404 = vld [vmem:[%s2 + $0x788] sm:$0xff]
    %v7405 = vld [vmem:[%s2 + $0x790] sm:$0xff]
    %v7406 = vld [vmem:[%s2 + $0x798] sm:$0xff]
    %v7407 = vld [vmem:[%s2 + $0x7a0] sm:$0xff]
    %v7408 = vld [vmem:[%s2 + $0x7a8] sm:$0xff]
    %v7409 = vld [vmem:[%s2 + $0x7b0] sm:$0xff]
    %v7410 = vld [vmem:[%s2 + $0x7b8] sm:$0xff]
    %v7411 = vld [vmem:[%s2 + $0x7c0] sm:$0xff]
    %v7412 = vld [vmem:[%s2 + $0x7c8] sm:$0xff]
    %v7413 = vld [vmem:[%s2 + $0x7d0] sm:$0xff]
    %v7414 = vld [vmem:[%s2 + $0x7d8] sm:$0xff]
    %v7415 = vld [vmem:[%s2 + $0x7e0] sm:$0xff]
    %v7416 = vld [vmem:[%s2 + $0x7e8] sm:$0xff]
    %v7417 = vld [vmem:[%s2 + $0x7f0] sm:$0xff]
    %v7418 = vld [vmem:[%s2 + $0x7f8] sm:$0xff]
    %v7419 = vld [vmem:[%s2 + $0x800] sm:$0xff]
    %v7420 = vld [vmem:[%s2 + $0x808] sm:$0xff]
    %v7421 = vld [vmem:[%s2 + $0x810] sm:$0xff]
    %v7422 = vld [vmem:[%s2 + $0x818] sm:$0xff]
    %v7423 = vld [vmem:[%s2 + $0x820] sm:$0xff]
    %v7424 = vld [vmem:[%s2 + $0x828] sm:$0xff]
    %v7425 = vld [vmem:[%s2 + $0x830] sm:$0xff]
    %v7426 = vld [vmem:[%s2 + $0x838] sm:$0xff]
    %v7427 = vld [vmem:[%s2 + $0x840] sm:$0xff]
    %v7428 = vld [vmem:[%s2 + $0x848] sm:$0xff]
    %v7429 = vld [vmem:[%s2 + $0x850] sm:$0xff]
    %v7430 = vld [vmem:[%s2 + $0x858] sm:$0xff]
    %v7431 = vld [vmem:[%s2 + $0x860] sm:$0xff]
    %v7432 = vld [vmem:[%s2 + $0x868] sm:$0xff]
    %v7433 = vld [vmem:[%s2 + $0x870] sm:$0xff]
    %v7434 = vld [vmem:[%s2 + $0x878] sm:$0xff]
    %v7435 = vld [vmem:[%s2 + $0x880] sm:$0xff]
    %v7436 = vld [vmem:[%s2 + $0x888] sm:$0xff]
    %v7437 = vld [vmem:[%s2 + $0x890] sm:$0xff]
    %v7438 = vld [vmem:[%s2 + $0x898] sm:$0xff]
    %v7439 = vld [vmem:[%s2 + $0x8a0] sm:$0xff]
    %v7440 = vld [vmem:[%s2 + $0x8a8] sm:$0xff]
    %v7441 = vld [vmem:[%s2 + $0x8b0] sm:$0xff]
    %v7442 = vld [vmem:[%s2 + $0x8b8] sm:$0xff]
    %v7443 = vld [vmem:[%s2 + $0x8c0] sm:$0xff]
    %v7444 = vld [vmem:[%s2 + $0x8c8] sm:$0xff]
    %v7445 = vld [vmem:[%s2 + $0x8d0] sm:$0xff]
    %v7446 = vld [vmem:[%s2 + $0x8d8] sm:$0xff]
    %v7447 = vld [vmem:[%s2 + $0x8e0] sm:$0xff]
    %v7448 = vld [vmem:[%s2 + $0x8e8] sm:$0xff]
    %v7449 = vld [vmem:[%s2 + $0x8f0] sm:$0xff]
    %v7450 = vld [vmem:[%s2 + $0x8f8] sm:$0xff]
    %v7451 = vld [vmem:[%s2 + $0x900] sm:$0xff]
    %v7452 = vld [vmem:[%s2 + $0x908] sm:$0xff]
    %v7453 = vld [vmem:[%s2 + $0x910] sm:$0xff]
    %v7454 = vld [vmem:[%s2 + $0x918] sm:$0xff]
    %v7455 = vld [vmem:[%s2 + $0x920] sm:$0xff]
    %v7456 = vld [vmem:[%s2 + $0x928] sm:$0xff]
    %v7457 = vld [vmem:[%s2 + $0x930] sm:$0xff]
    %v7458 = vld [vmem:[%s2 + $0x938] sm:$0xff]
    %v7459 = vld [vmem:[%s2 + $0x940] sm:$0xff]
    %v7460 = vld [vmem:[%s2 + $0x948] sm:$0xff]
    %v7461 = vld [vmem:[%s2 + $0x950] sm:$0xff]
    %v7462 = vld [vmem:[%s2 + $0x958] sm:$0xff]
    %v7463 = vld [vmem:[%s2 + $0x960] sm:$0xff]
    %v7464 = vld [vmem:[%s2 + $0x968] sm:$0xff]
    %v7465 = vld [vmem:[%s2 + $0x970] sm:$0xff]
    %v7466 = vld [vmem:[%s2 + $0x978] sm:$0xff]
    %v7467 = vld [vmem:[%s2 + $0x980] sm:$0xff]
    %v7468 = vld [vmem:[%s2 + $0x988] sm:$0xff]
    %v7469 = vld [vmem:[%s2 + $0x990] sm:$0xff]
    %v7470 = vld [vmem:[%s2 + $0x998] sm:$0xff]
    %v7471 = vld [vmem:[%s2 + $0x9a0] sm:$0xff]
    %v7472 = vld [vmem:[%s2 + $0x9a8] sm:$0xff]
    %v7473 = vld [vmem:[%s2 + $0x9b0] sm:$0xff]
    %v7474 = vld [vmem:[%s2 + $0x9b8] sm:$0xff]
    %v7475 = vld [vmem:[%s2 + $0x9c0] sm:$0xff]
    %v7476 = vld [vmem:[%s2 + $0x9c8] sm:$0xff]
    %v7477 = vld [vmem:[%s2 + $0x9d0] sm:$0xff]
    %v7478 = vld [vmem:[%s2 + $0x9d8] sm:$0xff]
    %v7479 = vld [vmem:[%s2 + $0x9e0] sm:$0xff]
    %v7480 = vld [vmem:[%s2 + $0x9e8] sm:$0xff]
    %v7481 = vld [vmem:[%s2 + $0x9f0] sm:$0xff]
    %v7482 = vld [vmem:[%s2 + $0x9f8] sm:$0xff]
    %v7483 = vld [vmem:[%s2 + $0xa00] sm:$0xff]
    %v7484 = vld [vmem:[%s2 + $0xa08] sm:$0xff]
    %v7485 = vld [vmem:[%s2 + $0xa10] sm:$0xff]
    %v7486 = vld [vmem:[%s2 + $0xa18] sm:$0xff]
    %v7487 = vld [vmem:[%s2 + $0xa20] sm:$0xff]
    %v7488 = vld [vmem:[%s2 + $0xa28] sm:$0xff]
    %v7489 = vld [vmem:[%s2 + $0xa30] sm:$0xff]
    %v7490 = vld [vmem:[%s2 + $0xa38] sm:$0xff]
    %v7491 = vld [vmem:[%s2 + $0xa40] sm:$0xff]
    %v7492 = vld [vmem:[%s2 + $0xa48] sm:$0xff]
    %v7493 = vld [vmem:[%s2 + $0xa50] sm:$0xff]
    %v7494 = vld [vmem:[%s2 + $0xa58] sm:$0xff]
    %v7495 = vld [vmem:[%s2 + $0xa60] sm:$0xff]
    %v7496 = vld [vmem:[%s2 + $0xa68] sm:$0xff]
    %v7497 = vld [vmem:[%s2 + $0xa70] sm:$0xff]
    %v7498 = vld [vmem:[%s2 + $0xa78] sm:$0xff]
    %v7499 = vld [vmem:[%s2 + $0xa80] sm:$0xff]
    %v7500 = vld [vmem:[%s2 + $0xa88] sm:$0xff]
    %v7501 = vld [vmem:[%s2 + $0xa90] sm:$0xff]
    %v7502 = vld [vmem:[%s2 + $0xa98] sm:$0xff]
    %v7503 = vld [vmem:[%s2 + $0xaa0] sm:$0xff]
    %v7504 = vld [vmem:[%s2 + $0xaa8] sm:$0xff]
    %v7505 = vld [vmem:[%s2 + $0xab0] sm:$0xff]
    %v7506 = vld [vmem:[%s2 + $0xab8] sm:$0xff]
    %v7507 = vld [vmem:[%s2 + $0xac0] sm:$0xff]
    %v7508 = vld [vmem:[%s2 + $0xac8] sm:$0xff]
    %v7509 = vld [vmem:[%s2 + $0xad0] sm:$0xff]
    %v7510 = vld [vmem:[%s2 + $0xad8] sm:$0xff]
    %v7511 = vld [vmem:[%s2 + $0xae0] sm:$0xff]
    %v7512 = vld [vmem:[%s2 + $0xae8] sm:$0xff]
    %v7513 = vld [vmem:[%s2 + $0xaf0] sm:$0xff]
    %v7514 = vld [vmem:[%s2 + $0xaf8] sm:$0xff]
    %v7515 = vld [vmem:[%s2 + $0xb00] sm:$0xff]
    %v7516 = vld [vmem:[%s2 + $0xb08] sm:$0xff]
    %v7517 = vld [vmem:[%s2 + $0xb10] sm:$0xff]
    %v7518 = vld [vmem:[%s2 + $0xb18] sm:$0xff]
    %v7519 = vld [vmem:[%s2 + $0xb20] sm:$0xff]
    %v7520 = vld [vmem:[%s2 + $0xb28] sm:$0xff]
    %v7521 = vld [vmem:[%s2 + $0xb30] sm:$0xff]
    %v7522 = vld [vmem:[%s2 + $0xb38] sm:$0xff]
    %v7523 = vld [vmem:[%s2 + $0xb40] sm:$0xff]
    %v7524 = vld [vmem:[%s2 + $0xb48] sm:$0xff]
    %v7525 = vld [vmem:[%s2 + $0xb50] sm:$0xff]
    %v7526 = vld [vmem:[%s2 + $0xb58] sm:$0xff]
    %v7527 = vld [vmem:[%s2 + $0xb60] sm:$0xff]
    %v7528 = vld [vmem:[%s2 + $0xb68] sm:$0xff]
    %v7529 = vld [vmem:[%s2 + $0xb70] sm:$0xff]
    %v7530 = vld [vmem:[%s2 + $0xb78] sm:$0xff]
    %v7531 = vld [vmem:[%s2 + $0xb80] sm:$0xff]
    %v7532 = vld [vmem:[%s2 + $0xb88] sm:$0xff]
    %v7533 = vld [vmem:[%s2 + $0xb90] sm:$0xff]
    %v7534 = vld [vmem:[%s2 + $0xb98] sm:$0xff]
    %v7535 = vld [vmem:[%s2 + $0xba0] sm:$0xff]
    %v7536 = vld [vmem:[%s2 + $0xba8] sm:$0xff]
    %v7537 = vld [vmem:[%s2 + $0xbb0] sm:$0xff]
    %v7538 = vld [vmem:[%s2 + $0xbb8] sm:$0xff]
    %v7539 = vld [vmem:[%s2 + $0xbc0] sm:$0xff]
    %v7540 = vld [vmem:[%s2 + $0xbc8] sm:$0xff]
    %v7541 = vld [vmem:[%s2 + $0xbd0] sm:$0xff]
    %v7542 = vld [vmem:[%s2 + $0xbd8] sm:$0xff]
    %v7543 = vld [vmem:[%s2 + $0xbe0] sm:$0xff]
    %v7544 = vld [vmem:[%s2 + $0xbe8] sm:$0xff]
    %v7545 = vld [vmem:[%s2 + $0xbf0] sm:$0xff]
    %v7546 = vld [vmem:[%s2 + $0xbf8] sm:$0xff]
    %v7547 = vld [vmem:[%s2 + $0xc00] sm:$0xff]
    %v7548 = vld [vmem:[%s2 + $0xc08] sm:$0xff]
    %v7549 = vld [vmem:[%s2 + $0xc10] sm:$0xff]
    %v7550 = vld [vmem:[%s2 + $0xc18] sm:$0xff]
    %v7551 = vld [vmem:[%s2 + $0xc20] sm:$0xff]
    %v7552 = vld [vmem:[%s2 + $0xc28] sm:$0xff]
    %v7553 = vld [vmem:[%s2 + $0xc30] sm:$0xff]
    %v7554 = vld [vmem:[%s2 + $0xc38] sm:$0xff]
    %v7555 = vld [vmem:[%s2 + $0xc40] sm:$0xff]
    %v7556 = vld [vmem:[%s2 + $0xc48] sm:$0xff]
    %v7557 = vld [vmem:[%s2 + $0xc50] sm:$0xff]
    %v7558 = vld [vmem:[%s2 + $0xc58] sm:$0xff]
    %v7559 = vld [vmem:[%s2 + $0xc60] sm:$0xff]
    %v7560 = vld [vmem:[%s2 + $0xc68] sm:$0xff]
    %v7561 = vld [vmem:[%s2 + $0xc70] sm:$0xff]
    %v7562 = vld [vmem:[%s2 + $0xc78] sm:$0xff]
    %v7563 = vld [vmem:[%s2 + $0xc80] sm:$0xff]
    %v7564 = vld [vmem:[%s2 + $0xc88] sm:$0xff]
    %v7565 = vld [vmem:[%s2 + $0xc90] sm:$0xff]
    %v7566 = vld [vmem:[%s2 + $0xc98] sm:$0xff]
    %v7567 = vld [vmem:[%s2 + $0xca0] sm:$0xff]
    %v7568 = vld [vmem:[%s2 + $0xca8] sm:$0xff]
    %v7569 = vld [vmem:[%s2 + $0xcb0] sm:$0xff]
    %v7570 = vld [vmem:[%s2 + $0xcb8] sm:$0xff]
    %v7571 = vld [vmem:[%s2 + $0xcc0] sm:$0xff]
    %v7572 = vld [vmem:[%s2 + $0xcc8] sm:$0xff]
    %v7573 = vld [vmem:[%s2 + $0xcd0] sm:$0xff]
    %v7574 = vld [vmem:[%s2 + $0xcd8] sm:$0xff]
    %v7575 = vld [vmem:[%s2 + $0xce0] sm:$0xff]
    %v7576 = vld [vmem:[%s2 + $0xce8] sm:$0xff]
    %v7577 = vld [vmem:[%s2 + $0xcf0] sm:$0xff]
    %v7578 = vld [vmem:[%s2 + $0xcf8] sm:$0xff]
    %v7579 = vld [vmem:[%s2 + $0xd00] sm:$0xff]
    %v7580 = vld [vmem:[%s2 + $0xd08] sm:$0xff]
    %v7581 = vld [vmem:[%s2 + $0xd10] sm:$0xff]
    %v7582 = vld [vmem:[%s2 + $0xd18] sm:$0xff]
    %v7583 = vld [vmem:[%s2 + $0xd20] sm:$0xff]
    %v7584 = vld [vmem:[%s2 + $0xd28] sm:$0xff]
    %v7585 = vld [vmem:[%s2 + $0xd30] sm:$0xff]
    %v7586 = vld [vmem:[%s2 + $0xd38] sm:$0xff]
    %v7587 = vld [vmem:[%s2 + $0xd40] sm:$0xff]
    %v7588 = vld [vmem:[%s2 + $0xd48] sm:$0xff]
    %v7589 = vld [vmem:[%s2 + $0xd50] sm:$0xff]
    %v7590 = vld [vmem:[%s2 + $0xd58] sm:$0xff]
    %v7591 = vld [vmem:[%s2 + $0xd60] sm:$0xff]
    %v7592 = vld [vmem:[%s2 + $0xd68] sm:$0xff]
    %v7593 = vld [vmem:[%s2 + $0xd70] sm:$0xff]
    %v7594 = vld [vmem:[%s2 + $0xd78] sm:$0xff]
    %v7595 = vld [vmem:[%s2 + $0xd80] sm:$0xff]
    %v7596 = vld [vmem:[%s2 + $0xd88] sm:$0xff]
    %v7597 = vld [vmem:[%s2 + $0xd90] sm:$0xff]
    %v7598 = vld [vmem:[%s2 + $0xd98] sm:$0xff]
    %v7599 = vld [vmem:[%s2 + $0xda0] sm:$0xff]
    %v7600 = vld [vmem:[%s2 + $0xda8] sm:$0xff]
    %v7601 = vld [vmem:[%s2 + $0xdb0] sm:$0xff]
    %v7602 = vld [vmem:[%s2 + $0xdb8] sm:$0xff]
    %v7603 = vld [vmem:[%s2 + $0xdc0] sm:$0xff]
    %v7604 = vld [vmem:[%s2 + $0xdc8] sm:$0xff]
    %v7605 = vld [vmem:[%s2 + $0xdd0] sm:$0xff]
    %v7606 = vld [vmem:[%s2 + $0xdd8] sm:$0xff]
    %v7607 = vld [vmem:[%s2 + $0xde0] sm:$0xff]
    %v7608 = vld [vmem:[%s2 + $0xde8] sm:$0xff]
    %v7609 = vld [vmem:[%s2 + $0xdf0] sm:$0xff]
    %v7610 = vld [vmem:[%s2 + $0xdf8] sm:$0xff]
    %v7611 = vld [vmem:[%s2 + $0xe00] sm:$0xff]
    %v7612 = vld [vmem:[%s2 + $0xe08] sm:$0xff]
    %v7613 = vld [vmem:[%s2 + $0xe10] sm:$0xff]
    %v7614 = vld [vmem:[%s2 + $0xe18] sm:$0xff]
    %v7615 = vld [vmem:[%s2 + $0xe20] sm:$0xff]
    %v7616 = vld [vmem:[%s2 + $0xe28] sm:$0xff]
    %v7617 = vld [vmem:[%s2 + $0xe30] sm:$0xff]
    %v7618 = vld [vmem:[%s2 + $0xe38] sm:$0xff]
    %v7619 = vld [vmem:[%s2 + $0xe40] sm:$0xff]
    %v7620 = vld [vmem:[%s2 + $0xe48] sm:$0xff]
    %v7621 = vld [vmem:[%s2 + $0xe50] sm:$0xff]
    %v7622 = vld [vmem:[%s2 + $0xe58] sm:$0xff]
    %v7623 = vld [vmem:[%s2 + $0xe60] sm:$0xff]
    %v7624 = vld [vmem:[%s2 + $0xe68] sm:$0xff]
    %v7625 = vld [vmem:[%s2 + $0xe70] sm:$0xff]
    %v7626 = vld [vmem:[%s2 + $0xe78] sm:$0xff]
    %v7627 = vld [vmem:[%s2 + $0xe80] sm:$0xff]
    %v7628 = vld [vmem:[%s2 + $0xe88] sm:$0xff]
    %v7629 = vld [vmem:[%s2 + $0xe90] sm:$0xff]
    %v7630 = vld [vmem:[%s2 + $0xe98] sm:$0xff]
    %v7631 = vld [vmem:[%s2 + $0xea0] sm:$0xff]
    %v7632 = vld [vmem:[%s2 + $0xea8] sm:$0xff]
    %v7633 = vld [vmem:[%s2 + $0xeb0] sm:$0xff]
    %v7634 = vld [vmem:[%s2 + $0xeb8] sm:$0xff]
    %v7635 = vld [vmem:[%s2 + $0xec0] sm:$0xff]
    %v7636 = vld [vmem:[%s2 + $0xec8] sm:$0xff]
    %v7637 = vld [vmem:[%s2 + $0xed0] sm:$0xff]
    %v7638 = vld [vmem:[%s2 + $0xed8] sm:$0xff]
    %v7639 = vld [vmem:[%s2 + $0xee0] sm:$0xff]
    %v7640 = vld [vmem:[%s2 + $0xee8] sm:$0xff]
    %v7641 = vld [vmem:[%s2 + $0xef0] sm:$0xff]
    %v7642 = vld [vmem:[%s2 + $0xef8] sm:$0xff]
    %v7643 = vld [vmem:[%s2 + $0xf00] sm:$0xff]
    %v7644 = vld [vmem:[%s2 + $0xf08] sm:$0xff]
    %v7645 = vld [vmem:[%s2 + $0xf10] sm:$0xff]
    %v7646 = vld [vmem:[%s2 + $0xf18] sm:$0xff]
    %v7647 = vld [vmem:[%s2 + $0xf20] sm:$0xff]
    %v7648 = vld [vmem:[%s2 + $0xf28] sm:$0xff]
    %v7649 = vld [vmem:[%s2 + $0xf30] sm:$0xff]
    %v7650 = vld [vmem:[%s2 + $0xf38] sm:$0xff]
    %v7651 = vld [vmem:[%s2 + $0xf40] sm:$0xff]
    %v7652 = vld [vmem:[%s2 + $0xf48] sm:$0xff]
    %v7653 = vld [vmem:[%s2 + $0xf50] sm:$0xff]
    %v7654 = vld [vmem:[%s2 + $0xf58] sm:$0xff]
    %v7655 = vld [vmem:[%s2 + $0xf60] sm:$0xff]
    %v7656 = vld [vmem:[%s2 + $0xf68] sm:$0xff]
    %v7657 = vld [vmem:[%s2 + $0xf70] sm:$0xff]
    %v7658 = vld [vmem:[%s2 + $0xf78] sm:$0xff]
    %v7659 = vld [vmem:[%s2 + $0xf80] sm:$0xff]
    %v7660 = vld [vmem:[%s2 + $0xf88] sm:$0xff]
    %v7661 = vld [vmem:[%s2 + $0xf90] sm:$0xff]
    %v7662 = vld [vmem:[%s2 + $0xf98] sm:$0xff]
    %v7663 = vld [vmem:[%s2 + $0xfa0] sm:$0xff]
    %v7664 = vld [vmem:[%s2 + $0xfa8] sm:$0xff]
    %v7665 = vld [vmem:[%s2 + $0xfb0] sm:$0xff]
    %v7666 = vld [vmem:[%s2 + $0xfb8] sm:$0xff]
    %v7667 = vld [vmem:[%s2 + $0xfc0] sm:$0xff]
    %v7668 = vld [vmem:[%s2 + $0xfc8] sm:$0xff]
    %v7669 = vld [vmem:[%s2 + $0xfd0] sm:$0xff]
    %v7670 = vld [vmem:[%s2 + $0xfd8] sm:$0xff]
    %v7671 = vld [vmem:[%s2 + $0xfe0] sm:$0xff]
    %v7672 = vld [vmem:[%s2 + $0xfe8] sm:$0xff]
    %v7673 = vld [vmem:[%s2 + $0xff0] sm:$0xff]
    %v7674 = vld [vmem:[%s2 + $0xff8] sm:$0xff]
    %v7707 = vunpack.c.l.b16 %v7131
    %v7708 = vunpack.c.h.b16 %v7131
    %v7709 = vunpack.c.l.b16 %v7132
    %v7710 = vunpack.c.h.b16 %v7132
    %v7711 = vunpack.c.l.b16 %v7133
    %v7712 = vunpack.c.h.b16 %v7133
    %v7713 = vunpack.c.l.b16 %v7134
    %v7714 = vunpack.c.h.b16 %v7134
    %v7715 = vunpack.c.l.b16 %v7135
    %v7716 = vunpack.c.h.b16 %v7135
    %v7717 = vunpack.c.l.b16 %v7136
    %v7718 = vunpack.c.h.b16 %v7136
    %v7719 = vunpack.c.l.b16 %v7137
    %v7720 = vunpack.c.h.b16 %v7137
    %v7721 = vunpack.c.l.b16 %v7138
    %v7722 = vunpack.c.h.b16 %v7138
    %v7723 = vunpack.c.l.b16 %v7139
    %v7724 = vunpack.c.h.b16 %v7139
    %v7725 = vunpack.c.l.b16 %v7140
    %v7726 = vunpack.c.h.b16 %v7140
    %v7727 = vunpack.c.l.b16 %v7141
    %v7728 = vunpack.c.h.b16 %v7141
    %v7729 = vunpack.c.l.b16 %v7142
    %v7730 = vunpack.c.h.b16 %v7142
    %v7731 = vunpack.c.l.b16 %v7143
    %v7732 = vunpack.c.h.b16 %v7143
    %v7733 = vunpack.c.l.b16 %v7144
    %v7734 = vunpack.c.h.b16 %v7144
    %v7735 = vunpack.c.l.b16 %v7145
    %v7736 = vunpack.c.h.b16 %v7145
    %v7737 = vunpack.c.l.b16 %v7146
    %v7738 = vunpack.c.h.b16 %v7146
    %v7739 = vunpack.c.l.b16 %v7147
    %v7740 = vunpack.c.h.b16 %v7147
    %v7741 = vunpack.c.l.b16 %v7148
    %v7742 = vunpack.c.h.b16 %v7148
    %v7743 = vunpack.c.l.b16 %v7149
    %v7744 = vunpack.c.h.b16 %v7149
    %v7745 = vunpack.c.l.b16 %v7150
    %v7746 = vunpack.c.h.b16 %v7150
    %v7747 = vunpack.c.l.b16 %v7151
    %v7748 = vunpack.c.h.b16 %v7151
    %v7749 = vunpack.c.l.b16 %v7152
    %v7750 = vunpack.c.h.b16 %v7152
    %v7751 = vunpack.c.l.b16 %v7153
    %v7752 = vunpack.c.h.b16 %v7153
    %v7753 = vunpack.c.l.b16 %v7154
    %v7754 = vunpack.c.h.b16 %v7154
    %v7755 = vunpack.c.l.b16 %v7155
    %v7756 = vunpack.c.h.b16 %v7155
    %v7757 = vunpack.c.l.b16 %v7156
    %v7758 = vunpack.c.h.b16 %v7156
    %v7759 = vunpack.c.l.b16 %v7157
    %v7760 = vunpack.c.h.b16 %v7157
    %v7761 = vunpack.c.l.b16 %v7158
    %v7762 = vunpack.c.h.b16 %v7158
    %v7763 = vunpack.c.l.b16 %v7159
    %v7764 = vunpack.c.h.b16 %v7159
    %v7765 = vunpack.c.l.b16 %v7160
    %v7766 = vunpack.c.h.b16 %v7160
    %v7767 = vunpack.c.l.b16 %v7161
    %v7768 = vunpack.c.h.b16 %v7161
    %v7769 = vunpack.c.l.b16 %v7162
    %v7770 = vunpack.c.h.b16 %v7162
    %v7771 = vpack.c.b16 %v7723, %v7707
    %v7772 = vpack.c.b16 %v7724, %v7708
    %v7773 = vpack.c.b16 %v7725, %v7709
    %v7774 = vpack.c.b16 %v7726, %v7710
    %v7775 = vpack.c.b16 %v7727, %v7711
    %v7776 = vpack.c.b16 %v7728, %v7712
    %v7777 = vpack.c.b16 %v7729, %v7713
    %v7778 = vpack.c.b16 %v7730, %v7714
    %v7779 = vpack.c.b16 %v7731, %v7715
    %v7780 = vpack.c.b16 %v7732, %v7716
    %v7781 = vpack.c.b16 %v7733, %v7717
    %v7782 = vpack.c.b16 %v7734, %v7718
    %v7783 = vpack.c.b16 %v7735, %v7719
    %v7784 = vpack.c.b16 %v7736, %v7720
    %v7785 = vpack.c.b16 %v7737, %v7721
    %v7786 = vpack.c.b16 %v7738, %v7722
    %v7787 = vpack.c.b16 %v7755, %v7739
    %v7788 = vpack.c.b16 %v7756, %v7740
    %v7789 = vpack.c.b16 %v7757, %v7741
    %v7790 = vpack.c.b16 %v7758, %v7742
    %v7791 = vpack.c.b16 %v7759, %v7743
    %v7792 = vpack.c.b16 %v7760, %v7744
    %v7793 = vpack.c.b16 %v7761, %v7745
    %v7794 = vpack.c.b16 %v7762, %v7746
    %v7795 = vpack.c.b16 %v7763, %v7747
    %v7796 = vpack.c.b16 %v7764, %v7748
    %v7797 = vpack.c.b16 %v7765, %v7749
    %v7798 = vpack.c.b16 %v7766, %v7750
    %v7799 = vpack.c.b16 %v7767, %v7751
    %v7800 = vpack.c.b16 %v7768, %v7752
    %v7801 = vpack.c.b16 %v7769, %v7753
    %v7802 = vpack.c.b16 %v7770, %v7754
    %v8347 = vunpack.c.l.b16 %v7163
    %v8348 = vunpack.c.h.b16 %v7163
    %v8349 = vunpack.c.l.b16 %v7164
    %v8350 = vunpack.c.h.b16 %v7164
    %v8351 = vunpack.c.l.b16 %v7165
    %v8352 = vunpack.c.h.b16 %v7165
    %v8353 = vunpack.c.l.b16 %v7166
    %v8354 = vunpack.c.h.b16 %v7166
    %v8355 = vunpack.c.l.b16 %v7167
    %v8356 = vunpack.c.h.b16 %v7167
    %v8357 = vunpack.c.l.b16 %v7168
    %v8358 = vunpack.c.h.b16 %v7168
    %v8359 = vunpack.c.l.b16 %v7169
    %v8360 = vunpack.c.h.b16 %v7169
    %v8361 = vunpack.c.l.b16 %v7170
    %v8362 = vunpack.c.h.b16 %v7170
    %v8363 = vunpack.c.l.b16 %v7171
    %v8364 = vunpack.c.h.b16 %v7171
    %v8365 = vunpack.c.l.b16 %v7172
    %v8366 = vunpack.c.h.b16 %v7172
    %v8367 = vunpack.c.l.b16 %v7173
    %v8368 = vunpack.c.h.b16 %v7173
    %v8369 = vunpack.c.l.b16 %v7174
    %v8370 = vunpack.c.h.b16 %v7174
    %v8371 = vunpack.c.l.b16 %v7175
    %v8372 = vunpack.c.h.b16 %v7175
    %v8373 = vunpack.c.l.b16 %v7176
    %v8374 = vunpack.c.h.b16 %v7176
    %v8375 = vunpack.c.l.b16 %v7177
    %v8376 = vunpack.c.h.b16 %v7177
    %v8377 = vunpack.c.l.b16 %v7178
    %v8378 = vunpack.c.h.b16 %v7178
    %v8379 = vunpack.c.l.b16 %v7179
    %v8380 = vunpack.c.h.b16 %v7179
    %v8381 = vunpack.c.l.b16 %v7180
    %v8382 = vunpack.c.h.b16 %v7180
    %v8383 = vunpack.c.l.b16 %v7181
    %v8384 = vunpack.c.h.b16 %v7181
    %v8385 = vunpack.c.l.b16 %v7182
    %v8386 = vunpack.c.h.b16 %v7182
    %v8387 = vunpack.c.l.b16 %v7183
    %v8388 = vunpack.c.h.b16 %v7183
    %v8389 = vunpack.c.l.b16 %v7184
    %v8390 = vunpack.c.h.b16 %v7184
    %v8391 = vunpack.c.l.b16 %v7185
    %v8392 = vunpack.c.h.b16 %v7185
    %v8393 = vunpack.c.l.b16 %v7186
    %v8394 = vunpack.c.h.b16 %v7186
    %v8395 = vunpack.c.l.b16 %v7187
    %v8396 = vunpack.c.h.b16 %v7187
    %v8397 = vunpack.c.l.b16 %v7188
    %v8398 = vunpack.c.h.b16 %v7188
    %v8399 = vunpack.c.l.b16 %v7189
    %v8400 = vunpack.c.h.b16 %v7189
    %v8401 = vunpack.c.l.b16 %v7190
    %v8402 = vunpack.c.h.b16 %v7190
    %v8403 = vunpack.c.l.b16 %v7191
    %v8404 = vunpack.c.h.b16 %v7191
    %v8405 = vunpack.c.l.b16 %v7192
    %v8406 = vunpack.c.h.b16 %v7192
    %v8407 = vunpack.c.l.b16 %v7193
    %v8408 = vunpack.c.h.b16 %v7193
    %v8409 = vunpack.c.l.b16 %v7194
    %v8410 = vunpack.c.h.b16 %v7194
    %v8411 = vunpack.c.l.b16 %v7195
    %v8412 = vunpack.c.h.b16 %v7195
    %v8413 = vunpack.c.l.b16 %v7196
    %v8414 = vunpack.c.h.b16 %v7196
    %v8415 = vunpack.c.l.b16 %v7197
    %v8416 = vunpack.c.h.b16 %v7197
    %v8417 = vunpack.c.l.b16 %v7198
    %v8418 = vunpack.c.h.b16 %v7198
    %v8419 = vunpack.c.l.b16 %v7199
    %v8420 = vunpack.c.h.b16 %v7199
    %v8421 = vunpack.c.l.b16 %v7200
    %v8422 = vunpack.c.h.b16 %v7200
    %v8423 = vunpack.c.l.b16 %v7201
    %v8424 = vunpack.c.h.b16 %v7201
    %v8425 = vunpack.c.l.b16 %v7202
    %v8426 = vunpack.c.h.b16 %v7202
    %v8427 = vunpack.c.l.b16 %v7203
    %v8428 = vunpack.c.h.b16 %v7203
    %v8429 = vunpack.c.l.b16 %v7204
    %v8430 = vunpack.c.h.b16 %v7204
    %v8431 = vunpack.c.l.b16 %v7205
    %v8432 = vunpack.c.h.b16 %v7205
    %v8433 = vunpack.c.l.b16 %v7206
    %v8434 = vunpack.c.h.b16 %v7206
    %v8435 = vunpack.c.l.b16 %v7207
    %v8436 = vunpack.c.h.b16 %v7207
    %v8437 = vunpack.c.l.b16 %v7208
    %v8438 = vunpack.c.h.b16 %v7208
    %v8439 = vunpack.c.l.b16 %v7209
    %v8440 = vunpack.c.h.b16 %v7209
    %v8441 = vunpack.c.l.b16 %v7210
    %v8442 = vunpack.c.h.b16 %v7210
    %v8443 = vunpack.c.l.b16 %v7211
    %v8444 = vunpack.c.h.b16 %v7211
    %v8445 = vunpack.c.l.b16 %v7212
    %v8446 = vunpack.c.h.b16 %v7212
    %v8447 = vunpack.c.l.b16 %v7213
    %v8448 = vunpack.c.h.b16 %v7213
    %v8449 = vunpack.c.l.b16 %v7214
    %v8450 = vunpack.c.h.b16 %v7214
    %v8451 = vunpack.c.l.b16 %v7215
    %v8452 = vunpack.c.h.b16 %v7215
    %v8453 = vunpack.c.l.b16 %v7216
    %v8454 = vunpack.c.h.b16 %v7216
    %v8455 = vunpack.c.l.b16 %v7217
    %v8456 = vunpack.c.h.b16 %v7217
    %v8457 = vunpack.c.l.b16 %v7218
    %v8458 = vunpack.c.h.b16 %v7218
    %v8459 = vunpack.c.l.b16 %v7219
    %v8460 = vunpack.c.h.b16 %v7219
    %v8461 = vunpack.c.l.b16 %v7220
    %v8462 = vunpack.c.h.b16 %v7220
    %v8463 = vunpack.c.l.b16 %v7221
    %v8464 = vunpack.c.h.b16 %v7221
    %v8465 = vunpack.c.l.b16 %v7222
    %v8466 = vunpack.c.h.b16 %v7222
    %v8467 = vunpack.c.l.b16 %v7223
    %v8468 = vunpack.c.h.b16 %v7223
    %v8469 = vunpack.c.l.b16 %v7224
    %v8470 = vunpack.c.h.b16 %v7224
    %v8471 = vunpack.c.l.b16 %v7225
    %v8472 = vunpack.c.h.b16 %v7225
    %v8473 = vunpack.c.l.b16 %v7226
    %v8474 = vunpack.c.h.b16 %v7226
    %v8475 = vunpack.c.l.b16 %v7227
    %v8476 = vunpack.c.h.b16 %v7227
    %v8477 = vunpack.c.l.b16 %v7228
    %v8478 = vunpack.c.h.b16 %v7228
    %v8479 = vunpack.c.l.b16 %v7229
    %v8480 = vunpack.c.h.b16 %v7229
    %v8481 = vunpack.c.l.b16 %v7230
    %v8482 = vunpack.c.h.b16 %v7230
    %v8483 = vunpack.c.l.b16 %v7231
    %v8484 = vunpack.c.h.b16 %v7231
    %v8485 = vunpack.c.l.b16 %v7232
    %v8486 = vunpack.c.h.b16 %v7232
    %v8487 = vunpack.c.l.b16 %v7233
    %v8488 = vunpack.c.h.b16 %v7233
    %v8489 = vunpack.c.l.b16 %v7234
    %v8490 = vunpack.c.h.b16 %v7234
    %v8491 = vunpack.c.l.b16 %v7235
    %v8492 = vunpack.c.h.b16 %v7235
    %v8493 = vunpack.c.l.b16 %v7236
    %v8494 = vunpack.c.h.b16 %v7236
    %v8495 = vunpack.c.l.b16 %v7237
    %v8496 = vunpack.c.h.b16 %v7237
    %v8497 = vunpack.c.l.b16 %v7238
    %v8498 = vunpack.c.h.b16 %v7238
    %v8499 = vunpack.c.l.b16 %v7239
    %v8500 = vunpack.c.h.b16 %v7239
    %v8501 = vunpack.c.l.b16 %v7240
    %v8502 = vunpack.c.h.b16 %v7240
    %v8503 = vunpack.c.l.b16 %v7241
    %v8504 = vunpack.c.h.b16 %v7241
    %v8505 = vunpack.c.l.b16 %v7242
    %v8506 = vunpack.c.h.b16 %v7242
    %v8507 = vunpack.c.l.b16 %v7243
    %v8508 = vunpack.c.h.b16 %v7243
    %v8509 = vunpack.c.l.b16 %v7244
    %v8510 = vunpack.c.h.b16 %v7244
    %v8511 = vunpack.c.l.b16 %v7245
    %v8512 = vunpack.c.h.b16 %v7245
    %v8513 = vunpack.c.l.b16 %v7246
    %v8514 = vunpack.c.h.b16 %v7246
    %v8515 = vunpack.c.l.b16 %v7247
    %v8516 = vunpack.c.h.b16 %v7247
    %v8517 = vunpack.c.l.b16 %v7248
    %v8518 = vunpack.c.h.b16 %v7248
    %v8519 = vunpack.c.l.b16 %v7249
    %v8520 = vunpack.c.h.b16 %v7249
    %v8521 = vunpack.c.l.b16 %v7250
    %v8522 = vunpack.c.h.b16 %v7250
    %v8523 = vunpack.c.l.b16 %v7251
    %v8524 = vunpack.c.h.b16 %v7251
    %v8525 = vunpack.c.l.b16 %v7252
    %v8526 = vunpack.c.h.b16 %v7252
    %v8527 = vunpack.c.l.b16 %v7253
    %v8528 = vunpack.c.h.b16 %v7253
    %v8529 = vunpack.c.l.b16 %v7254
    %v8530 = vunpack.c.h.b16 %v7254
    %v8531 = vunpack.c.l.b16 %v7255
    %v8532 = vunpack.c.h.b16 %v7255
    %v8533 = vunpack.c.l.b16 %v7256
    %v8534 = vunpack.c.h.b16 %v7256
    %v8535 = vunpack.c.l.b16 %v7257
    %v8536 = vunpack.c.h.b16 %v7257
    %v8537 = vunpack.c.l.b16 %v7258
    %v8538 = vunpack.c.h.b16 %v7258
    %v8539 = vunpack.c.l.b16 %v7259
    %v8540 = vunpack.c.h.b16 %v7259
    %v8541 = vunpack.c.l.b16 %v7260
    %v8542 = vunpack.c.h.b16 %v7260
    %v8543 = vunpack.c.l.b16 %v7261
    %v8544 = vunpack.c.h.b16 %v7261
    %v8545 = vunpack.c.l.b16 %v7262
    %v8546 = vunpack.c.h.b16 %v7262
    %v8547 = vunpack.c.l.b16 %v7263
    %v8548 = vunpack.c.h.b16 %v7263
    %v8549 = vunpack.c.l.b16 %v7264
    %v8550 = vunpack.c.h.b16 %v7264
    %v8551 = vunpack.c.l.b16 %v7265
    %v8552 = vunpack.c.h.b16 %v7265
    %v8553 = vunpack.c.l.b16 %v7266
    %v8554 = vunpack.c.h.b16 %v7266
    %v8555 = vunpack.c.l.b16 %v7267
    %v8556 = vunpack.c.h.b16 %v7267
    %v8557 = vunpack.c.l.b16 %v7268
    %v8558 = vunpack.c.h.b16 %v7268
    %v8559 = vunpack.c.l.b16 %v7269
    %v8560 = vunpack.c.h.b16 %v7269
    %v8561 = vunpack.c.l.b16 %v7270
    %v8562 = vunpack.c.h.b16 %v7270
    %v8563 = vunpack.c.l.b16 %v7271
    %v8564 = vunpack.c.h.b16 %v7271
    %v8565 = vunpack.c.l.b16 %v7272
    %v8566 = vunpack.c.h.b16 %v7272
    %v8567 = vunpack.c.l.b16 %v7273
    %v8568 = vunpack.c.h.b16 %v7273
    %v8569 = vunpack.c.l.b16 %v7274
    %v8570 = vunpack.c.h.b16 %v7274
    %v8571 = vunpack.c.l.b16 %v7275
    %v8572 = vunpack.c.h.b16 %v7275
    %v8573 = vunpack.c.l.b16 %v7276
    %v8574 = vunpack.c.h.b16 %v7276
    %v8575 = vunpack.c.l.b16 %v7277
    %v8576 = vunpack.c.h.b16 %v7277
    %v8577 = vunpack.c.l.b16 %v7278
    %v8578 = vunpack.c.h.b16 %v7278
    %v8579 = vunpack.c.l.b16 %v7279
    %v8580 = vunpack.c.h.b16 %v7279
    %v8581 = vunpack.c.l.b16 %v7280
    %v8582 = vunpack.c.h.b16 %v7280
    %v8583 = vunpack.c.l.b16 %v7281
    %v8584 = vunpack.c.h.b16 %v7281
    %v8585 = vunpack.c.l.b16 %v7282
    %v8586 = vunpack.c.h.b16 %v7282
    %v8587 = vunpack.c.l.b16 %v7283
    %v8588 = vunpack.c.h.b16 %v7283
    %v8589 = vunpack.c.l.b16 %v7284
    %v8590 = vunpack.c.h.b16 %v7284
    %v8591 = vunpack.c.l.b16 %v7285
    %v8592 = vunpack.c.h.b16 %v7285
    %v8593 = vunpack.c.l.b16 %v7286
    %v8594 = vunpack.c.h.b16 %v7286
    %v8595 = vunpack.c.l.b16 %v7287
    %v8596 = vunpack.c.h.b16 %v7287
    %v8597 = vunpack.c.l.b16 %v7288
    %v8598 = vunpack.c.h.b16 %v7288
    %v8599 = vunpack.c.l.b16 %v7289
    %v8600 = vunpack.c.h.b16 %v7289
    %v8601 = vunpack.c.l.b16 %v7290
    %v8602 = vunpack.c.h.b16 %v7290
    %v8603 = vunpack.c.l.b16 %v7291
    %v8604 = vunpack.c.h.b16 %v7291
    %v8605 = vunpack.c.l.b16 %v7292
    %v8606 = vunpack.c.h.b16 %v7292
    %v8607 = vunpack.c.l.b16 %v7293
    %v8608 = vunpack.c.h.b16 %v7293
    %v8609 = vunpack.c.l.b16 %v7294
    %v8610 = vunpack.c.h.b16 %v7294
    %v8611 = vunpack.c.l.b16 %v7295
    %v8612 = vunpack.c.h.b16 %v7295
    %v8613 = vunpack.c.l.b16 %v7296
    %v8614 = vunpack.c.h.b16 %v7296
    %v8615 = vunpack.c.l.b16 %v7297
    %v8616 = vunpack.c.h.b16 %v7297
    %v8617 = vunpack.c.l.b16 %v7298
    %v8618 = vunpack.c.h.b16 %v7298
    %v8619 = vunpack.c.l.b16 %v7299
    %v8620 = vunpack.c.h.b16 %v7299
    %v8621 = vunpack.c.l.b16 %v7300
    %v8622 = vunpack.c.h.b16 %v7300
    %v8623 = vunpack.c.l.b16 %v7301
    %v8624 = vunpack.c.h.b16 %v7301
    %v8625 = vunpack.c.l.b16 %v7302
    %v8626 = vunpack.c.h.b16 %v7302
    %v8627 = vunpack.c.l.b16 %v7303
    %v8628 = vunpack.c.h.b16 %v7303
    %v8629 = vunpack.c.l.b16 %v7304
    %v8630 = vunpack.c.h.b16 %v7304
    %v8631 = vunpack.c.l.b16 %v7305
    %v8632 = vunpack.c.h.b16 %v7305
    %v8633 = vunpack.c.l.b16 %v7306
    %v8634 = vunpack.c.h.b16 %v7306
    %v8635 = vunpack.c.l.b16 %v7307
    %v8636 = vunpack.c.h.b16 %v7307
    %v8637 = vunpack.c.l.b16 %v7308
    %v8638 = vunpack.c.h.b16 %v7308
    %v8639 = vunpack.c.l.b16 %v7309
    %v8640 = vunpack.c.h.b16 %v7309
    %v8641 = vunpack.c.l.b16 %v7310
    %v8642 = vunpack.c.h.b16 %v7310
    %v8643 = vunpack.c.l.b16 %v7311
    %v8644 = vunpack.c.h.b16 %v7311
    %v8645 = vunpack.c.l.b16 %v7312
    %v8646 = vunpack.c.h.b16 %v7312
    %v8647 = vunpack.c.l.b16 %v7313
    %v8648 = vunpack.c.h.b16 %v7313
    %v8649 = vunpack.c.l.b16 %v7314
    %v8650 = vunpack.c.h.b16 %v7314
    %v8651 = vunpack.c.l.b16 %v7315
    %v8652 = vunpack.c.h.b16 %v7315
    %v8653 = vunpack.c.l.b16 %v7316
    %v8654 = vunpack.c.h.b16 %v7316
    %v8655 = vunpack.c.l.b16 %v7317
    %v8656 = vunpack.c.h.b16 %v7317
    %v8657 = vunpack.c.l.b16 %v7318
    %v8658 = vunpack.c.h.b16 %v7318
    %v8659 = vunpack.c.l.b16 %v7319
    %v8660 = vunpack.c.h.b16 %v7319
    %v8661 = vunpack.c.l.b16 %v7320
    %v8662 = vunpack.c.h.b16 %v7320
    %v8663 = vunpack.c.l.b16 %v7321
    %v8664 = vunpack.c.h.b16 %v7321
    %v8665 = vunpack.c.l.b16 %v7322
    %v8666 = vunpack.c.h.b16 %v7322
    %v8667 = vunpack.c.l.b16 %v7323
    %v8668 = vunpack.c.h.b16 %v7323
    %v8669 = vunpack.c.l.b16 %v7324
    %v8670 = vunpack.c.h.b16 %v7324
    %v8671 = vunpack.c.l.b16 %v7325
    %v8672 = vunpack.c.h.b16 %v7325
    %v8673 = vunpack.c.l.b16 %v7326
    %v8674 = vunpack.c.h.b16 %v7326
    %v8675 = vunpack.c.l.b16 %v7327
    %v8676 = vunpack.c.h.b16 %v7327
    %v8677 = vunpack.c.l.b16 %v7328
    %v8678 = vunpack.c.h.b16 %v7328
    %v8679 = vunpack.c.l.b16 %v7329
    %v8680 = vunpack.c.h.b16 %v7329
    %v8681 = vunpack.c.l.b16 %v7330
    %v8682 = vunpack.c.h.b16 %v7330
    %v8683 = vunpack.c.l.b16 %v7331
    %v8684 = vunpack.c.h.b16 %v7331
    %v8685 = vunpack.c.l.b16 %v7332
    %v8686 = vunpack.c.h.b16 %v7332
    %v8687 = vunpack.c.l.b16 %v7333
    %v8688 = vunpack.c.h.b16 %v7333
    %v8689 = vunpack.c.l.b16 %v7334
    %v8690 = vunpack.c.h.b16 %v7334
    %v8691 = vunpack.c.l.b16 %v7335
    %v8692 = vunpack.c.h.b16 %v7335
    %v8693 = vunpack.c.l.b16 %v7336
    %v8694 = vunpack.c.h.b16 %v7336
    %v8695 = vunpack.c.l.b16 %v7337
    %v8696 = vunpack.c.h.b16 %v7337
    %v8697 = vunpack.c.l.b16 %v7338
    %v8698 = vunpack.c.h.b16 %v7338
    %v8699 = vunpack.c.l.b16 %v7339
    %v8700 = vunpack.c.h.b16 %v7339
    %v8701 = vunpack.c.l.b16 %v7340
    %v8702 = vunpack.c.h.b16 %v7340
    %v8703 = vunpack.c.l.b16 %v7341
    %v8704 = vunpack.c.h.b16 %v7341
    %v8705 = vunpack.c.l.b16 %v7342
    %v8706 = vunpack.c.h.b16 %v7342
    %v8707 = vunpack.c.l.b16 %v7343
    %v8708 = vunpack.c.h.b16 %v7343
    %v8709 = vunpack.c.l.b16 %v7344
    %v8710 = vunpack.c.h.b16 %v7344
    %v8711 = vunpack.c.l.b16 %v7345
    %v8712 = vunpack.c.h.b16 %v7345
    %v8713 = vunpack.c.l.b16 %v7346
    %v8714 = vunpack.c.h.b16 %v7346
    %v8715 = vunpack.c.l.b16 %v7347
    %v8716 = vunpack.c.h.b16 %v7347
    %v8717 = vunpack.c.l.b16 %v7348
    %v8718 = vunpack.c.h.b16 %v7348
    %v8719 = vunpack.c.l.b16 %v7349
    %v8720 = vunpack.c.h.b16 %v7349
    %v8721 = vunpack.c.l.b16 %v7350
    %v8722 = vunpack.c.h.b16 %v7350
    %v8723 = vunpack.c.l.b16 %v7351
    %v8724 = vunpack.c.h.b16 %v7351
    %v8725 = vunpack.c.l.b16 %v7352
    %v8726 = vunpack.c.h.b16 %v7352
    %v8727 = vunpack.c.l.b16 %v7353
    %v8728 = vunpack.c.h.b16 %v7353
    %v8729 = vunpack.c.l.b16 %v7354
    %v8730 = vunpack.c.h.b16 %v7354
    %v8731 = vunpack.c.l.b16 %v7355
    %v8732 = vunpack.c.h.b16 %v7355
    %v8733 = vunpack.c.l.b16 %v7356
    %v8734 = vunpack.c.h.b16 %v7356
    %v8735 = vunpack.c.l.b16 %v7357
    %v8736 = vunpack.c.h.b16 %v7357
    %v8737 = vunpack.c.l.b16 %v7358
    %v8738 = vunpack.c.h.b16 %v7358
    %v8739 = vunpack.c.l.b16 %v7359
    %v8740 = vunpack.c.h.b16 %v7359
    %v8741 = vunpack.c.l.b16 %v7360
    %v8742 = vunpack.c.h.b16 %v7360
    %v8743 = vunpack.c.l.b16 %v7361
    %v8744 = vunpack.c.h.b16 %v7361
    %v8745 = vunpack.c.l.b16 %v7362
    %v8746 = vunpack.c.h.b16 %v7362
    %v8747 = vunpack.c.l.b16 %v7363
    %v8748 = vunpack.c.h.b16 %v7363
    %v8749 = vunpack.c.l.b16 %v7364
    %v8750 = vunpack.c.h.b16 %v7364
    %v8751 = vunpack.c.l.b16 %v7365
    %v8752 = vunpack.c.h.b16 %v7365
    %v8753 = vunpack.c.l.b16 %v7366
    %v8754 = vunpack.c.h.b16 %v7366
    %v8755 = vunpack.c.l.b16 %v7367
    %v8756 = vunpack.c.h.b16 %v7367
    %v8757 = vunpack.c.l.b16 %v7368
    %v8758 = vunpack.c.h.b16 %v7368
    %v8759 = vunpack.c.l.b16 %v7369
    %v8760 = vunpack.c.h.b16 %v7369
    %v8761 = vunpack.c.l.b16 %v7370
    %v8762 = vunpack.c.h.b16 %v7370
    %v8763 = vunpack.c.l.b16 %v7371
    %v8764 = vunpack.c.h.b16 %v7371
    %v8765 = vunpack.c.l.b16 %v7372
    %v8766 = vunpack.c.h.b16 %v7372
    %v8767 = vunpack.c.l.b16 %v7373
    %v8768 = vunpack.c.h.b16 %v7373
    %v8769 = vunpack.c.l.b16 %v7374
    %v8770 = vunpack.c.h.b16 %v7374
    %v8771 = vunpack.c.l.b16 %v7375
    %v8772 = vunpack.c.h.b16 %v7375
    %v8773 = vunpack.c.l.b16 %v7376
    %v8774 = vunpack.c.h.b16 %v7376
    %v8775 = vunpack.c.l.b16 %v7377
    %v8776 = vunpack.c.h.b16 %v7377
    %v8777 = vunpack.c.l.b16 %v7378
    %v8778 = vunpack.c.h.b16 %v7378
    %v8779 = vunpack.c.l.b16 %v7379
    %v8780 = vunpack.c.h.b16 %v7379
    %v8781 = vunpack.c.l.b16 %v7380
    %v8782 = vunpack.c.h.b16 %v7380
    %v8783 = vunpack.c.l.b16 %v7381
    %v8784 = vunpack.c.h.b16 %v7381
    %v8785 = vunpack.c.l.b16 %v7382
    %v8786 = vunpack.c.h.b16 %v7382
    %v8787 = vunpack.c.l.b16 %v7383
    %v8788 = vunpack.c.h.b16 %v7383
    %v8789 = vunpack.c.l.b16 %v7384
    %v8790 = vunpack.c.h.b16 %v7384
    %v8791 = vunpack.c.l.b16 %v7385
    %v8792 = vunpack.c.h.b16 %v7385
    %v8793 = vunpack.c.l.b16 %v7386
    %v8794 = vunpack.c.h.b16 %v7386
    %v8795 = vunpack.c.l.b16 %v7387
    %v8796 = vunpack.c.h.b16 %v7387
    %v8797 = vunpack.c.l.b16 %v7388
    %v8798 = vunpack.c.h.b16 %v7388
    %v8799 = vunpack.c.l.b16 %v7389
    %v8800 = vunpack.c.h.b16 %v7389
    %v8801 = vunpack.c.l.b16 %v7390
    %v8802 = vunpack.c.h.b16 %v7390
    %v8803 = vunpack.c.l.b16 %v7391
    %v8804 = vunpack.c.h.b16 %v7391
    %v8805 = vunpack.c.l.b16 %v7392
    %v8806 = vunpack.c.h.b16 %v7392
    %v8807 = vunpack.c.l.b16 %v7393
    %v8808 = vunpack.c.h.b16 %v7393
    %v8809 = vunpack.c.l.b16 %v7394
    %v8810 = vunpack.c.h.b16 %v7394
    %v8811 = vunpack.c.l.b16 %v7395
    %v8812 = vunpack.c.h.b16 %v7395
    %v8813 = vunpack.c.l.b16 %v7396
    %v8814 = vunpack.c.h.b16 %v7396
    %v8815 = vunpack.c.l.b16 %v7397
    %v8816 = vunpack.c.h.b16 %v7397
    %v8817 = vunpack.c.l.b16 %v7398
    %v8818 = vunpack.c.h.b16 %v7398
    %v8819 = vunpack.c.l.b16 %v7399
    %v8820 = vunpack.c.h.b16 %v7399
    %v8821 = vunpack.c.l.b16 %v7400
    %v8822 = vunpack.c.h.b16 %v7400
    %v8823 = vunpack.c.l.b16 %v7401
    %v8824 = vunpack.c.h.b16 %v7401
    %v8825 = vunpack.c.l.b16 %v7402
    %v8826 = vunpack.c.h.b16 %v7402
    %v8827 = vunpack.c.l.b16 %v7403
    %v8828 = vunpack.c.h.b16 %v7403
    %v8829 = vunpack.c.l.b16 %v7404
    %v8830 = vunpack.c.h.b16 %v7404
    %v8831 = vunpack.c.l.b16 %v7405
    %v8832 = vunpack.c.h.b16 %v7405
    %v8833 = vunpack.c.l.b16 %v7406
    %v8834 = vunpack.c.h.b16 %v7406
    %v8835 = vunpack.c.l.b16 %v7407
    %v8836 = vunpack.c.h.b16 %v7407
    %v8837 = vunpack.c.l.b16 %v7408
    %v8838 = vunpack.c.h.b16 %v7408
    %v8839 = vunpack.c.l.b16 %v7409
    %v8840 = vunpack.c.h.b16 %v7409
    %v8841 = vunpack.c.l.b16 %v7410
    %v8842 = vunpack.c.h.b16 %v7410
    %v8843 = vunpack.c.l.b16 %v7411
    %v8844 = vunpack.c.h.b16 %v7411
    %v8845 = vunpack.c.l.b16 %v7412
    %v8846 = vunpack.c.h.b16 %v7412
    %v8847 = vunpack.c.l.b16 %v7413
    %v8848 = vunpack.c.h.b16 %v7413
    %v8849 = vunpack.c.l.b16 %v7414
    %v8850 = vunpack.c.h.b16 %v7414
    %v8851 = vunpack.c.l.b16 %v7415
    %v8852 = vunpack.c.h.b16 %v7415
    %v8853 = vunpack.c.l.b16 %v7416
    %v8854 = vunpack.c.h.b16 %v7416
    %v8855 = vunpack.c.l.b16 %v7417
    %v8856 = vunpack.c.h.b16 %v7417
    %v8857 = vunpack.c.l.b16 %v7418
    %v8858 = vunpack.c.h.b16 %v7418
    %v8859 = vunpack.c.l.b16 %v7419
    %v8860 = vunpack.c.h.b16 %v7419
    %v8861 = vunpack.c.l.b16 %v7420
    %v8862 = vunpack.c.h.b16 %v7420
    %v8863 = vunpack.c.l.b16 %v7421
    %v8864 = vunpack.c.h.b16 %v7421
    %v8865 = vunpack.c.l.b16 %v7422
    %v8866 = vunpack.c.h.b16 %v7422
    %v8867 = vunpack.c.l.b16 %v7423
    %v8868 = vunpack.c.h.b16 %v7423
    %v8869 = vunpack.c.l.b16 %v7424
    %v8870 = vunpack.c.h.b16 %v7424
    %v8871 = vunpack.c.l.b16 %v7425
    %v8872 = vunpack.c.h.b16 %v7425
    %v8873 = vunpack.c.l.b16 %v7426
    %v8874 = vunpack.c.h.b16 %v7426
    %v8875 = vunpack.c.l.b16 %v7427
    %v8876 = vunpack.c.h.b16 %v7427
    %v8877 = vunpack.c.l.b16 %v7428
    %v8878 = vunpack.c.h.b16 %v7428
    %v8879 = vunpack.c.l.b16 %v7429
    %v8880 = vunpack.c.h.b16 %v7429
    %v8881 = vunpack.c.l.b16 %v7430
    %v8882 = vunpack.c.h.b16 %v7430
    %v8883 = vunpack.c.l.b16 %v7431
    %v8884 = vunpack.c.h.b16 %v7431
    %v8885 = vunpack.c.l.b16 %v7432
    %v8886 = vunpack.c.h.b16 %v7432
    %v8887 = vunpack.c.l.b16 %v7433
    %v8888 = vunpack.c.h.b16 %v7433
    %v8889 = vunpack.c.l.b16 %v7434
    %v8890 = vunpack.c.h.b16 %v7434
    %v8891 = vunpack.c.l.b16 %v7435
    %v8892 = vunpack.c.h.b16 %v7435
    %v8893 = vunpack.c.l.b16 %v7436
    %v8894 = vunpack.c.h.b16 %v7436
    %v8895 = vunpack.c.l.b16 %v7437
    %v8896 = vunpack.c.h.b16 %v7437
    %v8897 = vunpack.c.l.b16 %v7438
    %v8898 = vunpack.c.h.b16 %v7438
    %v8899 = vunpack.c.l.b16 %v7439
    %v8900 = vunpack.c.h.b16 %v7439
    %v8901 = vunpack.c.l.b16 %v7440
    %v8902 = vunpack.c.h.b16 %v7440
    %v8903 = vunpack.c.l.b16 %v7441
    %v8904 = vunpack.c.h.b16 %v7441
    %v8905 = vunpack.c.l.b16 %v7442
    %v8906 = vunpack.c.h.b16 %v7442
    %v8907 = vunpack.c.l.b16 %v7443
    %v8908 = vunpack.c.h.b16 %v7443
    %v8909 = vunpack.c.l.b16 %v7444
    %v8910 = vunpack.c.h.b16 %v7444
    %v8911 = vunpack.c.l.b16 %v7445
    %v8912 = vunpack.c.h.b16 %v7445
    %v8913 = vunpack.c.l.b16 %v7446
    %v8914 = vunpack.c.h.b16 %v7446
    %v8915 = vunpack.c.l.b16 %v7447
    %v8916 = vunpack.c.h.b16 %v7447
    %v8917 = vunpack.c.l.b16 %v7448
    %v8918 = vunpack.c.h.b16 %v7448
    %v8919 = vunpack.c.l.b16 %v7449
    %v8920 = vunpack.c.h.b16 %v7449
    %v8921 = vunpack.c.l.b16 %v7450
    %v8922 = vunpack.c.h.b16 %v7450
    %v8923 = vunpack.c.l.b16 %v7451
    %v8924 = vunpack.c.h.b16 %v7451
    %v8925 = vunpack.c.l.b16 %v7452
    %v8926 = vunpack.c.h.b16 %v7452
    %v8927 = vunpack.c.l.b16 %v7453
    %v8928 = vunpack.c.h.b16 %v7453
    %v8929 = vunpack.c.l.b16 %v7454
    %v8930 = vunpack.c.h.b16 %v7454
    %v8931 = vunpack.c.l.b16 %v7455
    %v8932 = vunpack.c.h.b16 %v7455
    %v8933 = vunpack.c.l.b16 %v7456
    %v8934 = vunpack.c.h.b16 %v7456
    %v8935 = vunpack.c.l.b16 %v7457
    %v8936 = vunpack.c.h.b16 %v7457
    %v8937 = vunpack.c.l.b16 %v7458
    %v8938 = vunpack.c.h.b16 %v7458
    %v8939 = vunpack.c.l.b16 %v7459
    %v8940 = vunpack.c.h.b16 %v7459
    %v8941 = vunpack.c.l.b16 %v7460
    %v8942 = vunpack.c.h.b16 %v7460
    %v8943 = vunpack.c.l.b16 %v7461
    %v8944 = vunpack.c.h.b16 %v7461
    %v8945 = vunpack.c.l.b16 %v7462
    %v8946 = vunpack.c.h.b16 %v7462
    %v8947 = vunpack.c.l.b16 %v7463
    %v8948 = vunpack.c.h.b16 %v7463
    %v8949 = vunpack.c.l.b16 %v7464
    %v8950 = vunpack.c.h.b16 %v7464
    %v8951 = vunpack.c.l.b16 %v7465
    %v8952 = vunpack.c.h.b16 %v7465
    %v8953 = vunpack.c.l.b16 %v7466
    %v8954 = vunpack.c.h.b16 %v7466
    %v8955 = vunpack.c.l.b16 %v7467
    %v8956 = vunpack.c.h.b16 %v7467
    %v8957 = vunpack.c.l.b16 %v7468
    %v8958 = vunpack.c.h.b16 %v7468
    %v8959 = vunpack.c.l.b16 %v7469
    %v8960 = vunpack.c.h.b16 %v7469
    %v8961 = vunpack.c.l.b16 %v7470
    %v8962 = vunpack.c.h.b16 %v7470
    %v8963 = vunpack.c.l.b16 %v7471
    %v8964 = vunpack.c.h.b16 %v7471
    %v8965 = vunpack.c.l.b16 %v7472
    %v8966 = vunpack.c.h.b16 %v7472
    %v8967 = vunpack.c.l.b16 %v7473
    %v8968 = vunpack.c.h.b16 %v7473
    %v8969 = vunpack.c.l.b16 %v7474
    %v8970 = vunpack.c.h.b16 %v7474
    %v8971 = vunpack.c.l.b16 %v7475
    %v8972 = vunpack.c.h.b16 %v7475
    %v8973 = vunpack.c.l.b16 %v7476
    %v8974 = vunpack.c.h.b16 %v7476
    %v8975 = vunpack.c.l.b16 %v7477
    %v8976 = vunpack.c.h.b16 %v7477
    %v8977 = vunpack.c.l.b16 %v7478
    %v8978 = vunpack.c.h.b16 %v7478
    %v8979 = vunpack.c.l.b16 %v7479
    %v8980 = vunpack.c.h.b16 %v7479
    %v8981 = vunpack.c.l.b16 %v7480
    %v8982 = vunpack.c.h.b16 %v7480
    %v8983 = vunpack.c.l.b16 %v7481
    %v8984 = vunpack.c.h.b16 %v7481
    %v8985 = vunpack.c.l.b16 %v7482
    %v8986 = vunpack.c.h.b16 %v7482
    %v8987 = vunpack.c.l.b16 %v7483
    %v8988 = vunpack.c.h.b16 %v7483
    %v8989 = vunpack.c.l.b16 %v7484
    %v8990 = vunpack.c.h.b16 %v7484
    %v8991 = vunpack.c.l.b16 %v7485
    %v8992 = vunpack.c.h.b16 %v7485
    %v8993 = vunpack.c.l.b16 %v7486
    %v8994 = vunpack.c.h.b16 %v7486
    %v8995 = vunpack.c.l.b16 %v7487
    %v8996 = vunpack.c.h.b16 %v7487
    %v8997 = vunpack.c.l.b16 %v7488
    %v8998 = vunpack.c.h.b16 %v7488
    %v8999 = vunpack.c.l.b16 %v7489
    %v9000 = vunpack.c.h.b16 %v7489
    %v9001 = vunpack.c.l.b16 %v7490
    %v9002 = vunpack.c.h.b16 %v7490
    %v9003 = vunpack.c.l.b16 %v7491
    %v9004 = vunpack.c.h.b16 %v7491
    %v9005 = vunpack.c.l.b16 %v7492
    %v9006 = vunpack.c.h.b16 %v7492
    %v9007 = vunpack.c.l.b16 %v7493
    %v9008 = vunpack.c.h.b16 %v7493
    %v9009 = vunpack.c.l.b16 %v7494
    %v9010 = vunpack.c.h.b16 %v7494
    %v9011 = vunpack.c.l.b16 %v7495
    %v9012 = vunpack.c.h.b16 %v7495
    %v9013 = vunpack.c.l.b16 %v7496
    %v9014 = vunpack.c.h.b16 %v7496
    %v9015 = vunpack.c.l.b16 %v7497
    %v9016 = vunpack.c.h.b16 %v7497
    %v9017 = vunpack.c.l.b16 %v7498
    %v9018 = vunpack.c.h.b16 %v7498
    %v9019 = vunpack.c.l.b16 %v7499
    %v9020 = vunpack.c.h.b16 %v7499
    %v9021 = vunpack.c.l.b16 %v7500
    %v9022 = vunpack.c.h.b16 %v7500
    %v9023 = vunpack.c.l.b16 %v7501
    %v9024 = vunpack.c.h.b16 %v7501
    %v9025 = vunpack.c.l.b16 %v7502
    %v9026 = vunpack.c.h.b16 %v7502
    %v9027 = vunpack.c.l.b16 %v7503
    %v9028 = vunpack.c.h.b16 %v7503
    %v9029 = vunpack.c.l.b16 %v7504
    %v9030 = vunpack.c.h.b16 %v7504
    %v9031 = vunpack.c.l.b16 %v7505
    %v9032 = vunpack.c.h.b16 %v7505
    %v9033 = vunpack.c.l.b16 %v7506
    %v9034 = vunpack.c.h.b16 %v7506
    %v9035 = vunpack.c.l.b16 %v7507
    %v9036 = vunpack.c.h.b16 %v7507
    %v9037 = vunpack.c.l.b16 %v7508
    %v9038 = vunpack.c.h.b16 %v7508
    %v9039 = vunpack.c.l.b16 %v7509
    %v9040 = vunpack.c.h.b16 %v7509
    %v9041 = vunpack.c.l.b16 %v7510
    %v9042 = vunpack.c.h.b16 %v7510
    %v9043 = vunpack.c.l.b16 %v7511
    %v9044 = vunpack.c.h.b16 %v7511
    %v9045 = vunpack.c.l.b16 %v7512
    %v9046 = vunpack.c.h.b16 %v7512
    %v9047 = vunpack.c.l.b16 %v7513
    %v9048 = vunpack.c.h.b16 %v7513
    %v9049 = vunpack.c.l.b16 %v7514
    %v9050 = vunpack.c.h.b16 %v7514
    %v9051 = vunpack.c.l.b16 %v7515
    %v9052 = vunpack.c.h.b16 %v7515
    %v9053 = vunpack.c.l.b16 %v7516
    %v9054 = vunpack.c.h.b16 %v7516
    %v9055 = vunpack.c.l.b16 %v7517
    %v9056 = vunpack.c.h.b16 %v7517
    %v9057 = vunpack.c.l.b16 %v7518
    %v9058 = vunpack.c.h.b16 %v7518
    %v9059 = vunpack.c.l.b16 %v7519
    %v9060 = vunpack.c.h.b16 %v7519
    %v9061 = vunpack.c.l.b16 %v7520
    %v9062 = vunpack.c.h.b16 %v7520
    %v9063 = vunpack.c.l.b16 %v7521
    %v9064 = vunpack.c.h.b16 %v7521
    %v9065 = vunpack.c.l.b16 %v7522
    %v9066 = vunpack.c.h.b16 %v7522
    %v9067 = vunpack.c.l.b16 %v7523
    %v9068 = vunpack.c.h.b16 %v7523
    %v9069 = vunpack.c.l.b16 %v7524
    %v9070 = vunpack.c.h.b16 %v7524
    %v9071 = vunpack.c.l.b16 %v7525
    %v9072 = vunpack.c.h.b16 %v7525
    %v9073 = vunpack.c.l.b16 %v7526
    %v9074 = vunpack.c.h.b16 %v7526
    %v9075 = vunpack.c.l.b16 %v7527
    %v9076 = vunpack.c.h.b16 %v7527
    %v9077 = vunpack.c.l.b16 %v7528
    %v9078 = vunpack.c.h.b16 %v7528
    %v9079 = vunpack.c.l.b16 %v7529
    %v9080 = vunpack.c.h.b16 %v7529
    %v9081 = vunpack.c.l.b16 %v7530
    %v9082 = vunpack.c.h.b16 %v7530
    %v9083 = vunpack.c.l.b16 %v7531
    %v9084 = vunpack.c.h.b16 %v7531
    %v9085 = vunpack.c.l.b16 %v7532
    %v9086 = vunpack.c.h.b16 %v7532
    %v9087 = vunpack.c.l.b16 %v7533
    %v9088 = vunpack.c.h.b16 %v7533
    %v9089 = vunpack.c.l.b16 %v7534
    %v9090 = vunpack.c.h.b16 %v7534
    %v9091 = vunpack.c.l.b16 %v7535
    %v9092 = vunpack.c.h.b16 %v7535
    %v9093 = vunpack.c.l.b16 %v7536
    %v9094 = vunpack.c.h.b16 %v7536
    %v9095 = vunpack.c.l.b16 %v7537
    %v9096 = vunpack.c.h.b16 %v7537
    %v9097 = vunpack.c.l.b16 %v7538
    %v9098 = vunpack.c.h.b16 %v7538
    %v9099 = vunpack.c.l.b16 %v7539
    %v9100 = vunpack.c.h.b16 %v7539
    %v9101 = vunpack.c.l.b16 %v7540
    %v9102 = vunpack.c.h.b16 %v7540
    %v9103 = vunpack.c.l.b16 %v7541
    %v9104 = vunpack.c.h.b16 %v7541
    %v9105 = vunpack.c.l.b16 %v7542
    %v9106 = vunpack.c.h.b16 %v7542
    %v9107 = vunpack.c.l.b16 %v7543
    %v9108 = vunpack.c.h.b16 %v7543
    %v9109 = vunpack.c.l.b16 %v7544
    %v9110 = vunpack.c.h.b16 %v7544
    %v9111 = vunpack.c.l.b16 %v7545
    %v9112 = vunpack.c.h.b16 %v7545
    %v9113 = vunpack.c.l.b16 %v7546
    %v9114 = vunpack.c.h.b16 %v7546
    %v9115 = vunpack.c.l.b16 %v7547
    %v9116 = vunpack.c.h.b16 %v7547
    %v9117 = vunpack.c.l.b16 %v7548
    %v9118 = vunpack.c.h.b16 %v7548
    %v9119 = vunpack.c.l.b16 %v7549
    %v9120 = vunpack.c.h.b16 %v7549
    %v9121 = vunpack.c.l.b16 %v7550
    %v9122 = vunpack.c.h.b16 %v7550
    %v9123 = vunpack.c.l.b16 %v7551
    %v9124 = vunpack.c.h.b16 %v7551
    %v9125 = vunpack.c.l.b16 %v7552
    %v9126 = vunpack.c.h.b16 %v7552
    %v9127 = vunpack.c.l.b16 %v7553
    %v9128 = vunpack.c.h.b16 %v7553
    %v9129 = vunpack.c.l.b16 %v7554
    %v9130 = vunpack.c.h.b16 %v7554
    %v9131 = vunpack.c.l.b16 %v7555
    %v9132 = vunpack.c.h.b16 %v7555
    %v9133 = vunpack.c.l.b16 %v7556
    %v9134 = vunpack.c.h.b16 %v7556
    %v9135 = vunpack.c.l.b16 %v7557
    %v9136 = vunpack.c.h.b16 %v7557
    %v9137 = vunpack.c.l.b16 %v7558
    %v9138 = vunpack.c.h.b16 %v7558
    %v9139 = vunpack.c.l.b16 %v7559
    %v9140 = vunpack.c.h.b16 %v7559
    %v9141 = vunpack.c.l.b16 %v7560
    %v9142 = vunpack.c.h.b16 %v7560
    %v9143 = vunpack.c.l.b16 %v7561
    %v9144 = vunpack.c.h.b16 %v7561
    %v9145 = vunpack.c.l.b16 %v7562
    %v9146 = vunpack.c.h.b16 %v7562
    %v9147 = vunpack.c.l.b16 %v7563
    %v9148 = vunpack.c.h.b16 %v7563
    %v9149 = vunpack.c.l.b16 %v7564
    %v9150 = vunpack.c.h.b16 %v7564
    %v9151 = vunpack.c.l.b16 %v7565
    %v9152 = vunpack.c.h.b16 %v7565
    %v9153 = vunpack.c.l.b16 %v7566
    %v9154 = vunpack.c.h.b16 %v7566
    %v9155 = vunpack.c.l.b16 %v7567
    %v9156 = vunpack.c.h.b16 %v7567
    %v9157 = vunpack.c.l.b16 %v7568
    %v9158 = vunpack.c.h.b16 %v7568
    %v9159 = vunpack.c.l.b16 %v7569
    %v9160 = vunpack.c.h.b16 %v7569
    %v9161 = vunpack.c.l.b16 %v7570
    %v9162 = vunpack.c.h.b16 %v7570
    %v9163 = vunpack.c.l.b16 %v7571
    %v9164 = vunpack.c.h.b16 %v7571
    %v9165 = vunpack.c.l.b16 %v7572
    %v9166 = vunpack.c.h.b16 %v7572
    %v9167 = vunpack.c.l.b16 %v7573
    %v9168 = vunpack.c.h.b16 %v7573
    %v9169 = vunpack.c.l.b16 %v7574
    %v9170 = vunpack.c.h.b16 %v7574
    %v9171 = vunpack.c.l.b16 %v7575
    %v9172 = vunpack.c.h.b16 %v7575
    %v9173 = vunpack.c.l.b16 %v7576
    %v9174 = vunpack.c.h.b16 %v7576
    %v9175 = vunpack.c.l.b16 %v7577
    %v9176 = vunpack.c.h.b16 %v7577
    %v9177 = vunpack.c.l.b16 %v7578
    %v9178 = vunpack.c.h.b16 %v7578
    %v9179 = vunpack.c.l.b16 %v7579
    %v9180 = vunpack.c.h.b16 %v7579
    %v9181 = vunpack.c.l.b16 %v7580
    %v9182 = vunpack.c.h.b16 %v7580
    %v9183 = vunpack.c.l.b16 %v7581
    %v9184 = vunpack.c.h.b16 %v7581
    %v9185 = vunpack.c.l.b16 %v7582
    %v9186 = vunpack.c.h.b16 %v7582
    %v9187 = vunpack.c.l.b16 %v7583
    %v9188 = vunpack.c.h.b16 %v7583
    %v9189 = vunpack.c.l.b16 %v7584
    %v9190 = vunpack.c.h.b16 %v7584
    %v9191 = vunpack.c.l.b16 %v7585
    %v9192 = vunpack.c.h.b16 %v7585
    %v9193 = vunpack.c.l.b16 %v7586
    %v9194 = vunpack.c.h.b16 %v7586
    %v9195 = vunpack.c.l.b16 %v7587
    %v9196 = vunpack.c.h.b16 %v7587
    %v9197 = vunpack.c.l.b16 %v7588
    %v9198 = vunpack.c.h.b16 %v7588
    %v9199 = vunpack.c.l.b16 %v7589
    %v9200 = vunpack.c.h.b16 %v7589
    %v9201 = vunpack.c.l.b16 %v7590
    %v9202 = vunpack.c.h.b16 %v7590
    %v9203 = vunpack.c.l.b16 %v7591
    %v9204 = vunpack.c.h.b16 %v7591
    %v9205 = vunpack.c.l.b16 %v7592
    %v9206 = vunpack.c.h.b16 %v7592
    %v9207 = vunpack.c.l.b16 %v7593
    %v9208 = vunpack.c.h.b16 %v7593
    %v9209 = vunpack.c.l.b16 %v7594
    %v9210 = vunpack.c.h.b16 %v7594
    %v9211 = vunpack.c.l.b16 %v7595
    %v9212 = vunpack.c.h.b16 %v7595
    %v9213 = vunpack.c.l.b16 %v7596
    %v9214 = vunpack.c.h.b16 %v7596
    %v9215 = vunpack.c.l.b16 %v7597
    %v9216 = vunpack.c.h.b16 %v7597
    %v9217 = vunpack.c.l.b16 %v7598
    %v9218 = vunpack.c.h.b16 %v7598
    %v9219 = vunpack.c.l.b16 %v7599
    %v9220 = vunpack.c.h.b16 %v7599
    %v9221 = vunpack.c.l.b16 %v7600
    %v9222 = vunpack.c.h.b16 %v7600
    %v9223 = vunpack.c.l.b16 %v7601
    %v9224 = vunpack.c.h.b16 %v7601
    %v9225 = vunpack.c.l.b16 %v7602
    %v9226 = vunpack.c.h.b16 %v7602
    %v9227 = vunpack.c.l.b16 %v7603
    %v9228 = vunpack.c.h.b16 %v7603
    %v9229 = vunpack.c.l.b16 %v7604
    %v9230 = vunpack.c.h.b16 %v7604
    %v9231 = vunpack.c.l.b16 %v7605
    %v9232 = vunpack.c.h.b16 %v7605
    %v9233 = vunpack.c.l.b16 %v7606
    %v9234 = vunpack.c.h.b16 %v7606
    %v9235 = vunpack.c.l.b16 %v7607
    %v9236 = vunpack.c.h.b16 %v7607
    %v9237 = vunpack.c.l.b16 %v7608
    %v9238 = vunpack.c.h.b16 %v7608
    %v9239 = vunpack.c.l.b16 %v7609
    %v9240 = vunpack.c.h.b16 %v7609
    %v9241 = vunpack.c.l.b16 %v7610
    %v9242 = vunpack.c.h.b16 %v7610
    %v9243 = vunpack.c.l.b16 %v7611
    %v9244 = vunpack.c.h.b16 %v7611
    %v9245 = vunpack.c.l.b16 %v7612
    %v9246 = vunpack.c.h.b16 %v7612
    %v9247 = vunpack.c.l.b16 %v7613
    %v9248 = vunpack.c.h.b16 %v7613
    %v9249 = vunpack.c.l.b16 %v7614
    %v9250 = vunpack.c.h.b16 %v7614
    %v9251 = vunpack.c.l.b16 %v7615
    %v9252 = vunpack.c.h.b16 %v7615
    %v9253 = vunpack.c.l.b16 %v7616
    %v9254 = vunpack.c.h.b16 %v7616
    %v9255 = vunpack.c.l.b16 %v7617
    %v9256 = vunpack.c.h.b16 %v7617
    %v9257 = vunpack.c.l.b16 %v7618
    %v9258 = vunpack.c.h.b16 %v7618
    %v9259 = vunpack.c.l.b16 %v7619
    %v9260 = vunpack.c.h.b16 %v7619
    %v9261 = vunpack.c.l.b16 %v7620
    %v9262 = vunpack.c.h.b16 %v7620
    %v9263 = vunpack.c.l.b16 %v7621
    %v9264 = vunpack.c.h.b16 %v7621
    %v9265 = vunpack.c.l.b16 %v7622
    %v9266 = vunpack.c.h.b16 %v7622
    %v9267 = vunpack.c.l.b16 %v7623
    %v9268 = vunpack.c.h.b16 %v7623
    %v9269 = vunpack.c.l.b16 %v7624
    %v9270 = vunpack.c.h.b16 %v7624
    %v9271 = vunpack.c.l.b16 %v7625
    %v9272 = vunpack.c.h.b16 %v7625
    %v9273 = vunpack.c.l.b16 %v7626
    %v9274 = vunpack.c.h.b16 %v7626
    %v9275 = vunpack.c.l.b16 %v7627
    %v9276 = vunpack.c.h.b16 %v7627
    %v9277 = vunpack.c.l.b16 %v7628
    %v9278 = vunpack.c.h.b16 %v7628
    %v9279 = vunpack.c.l.b16 %v7629
    %v9280 = vunpack.c.h.b16 %v7629
    %v9281 = vunpack.c.l.b16 %v7630
    %v9282 = vunpack.c.h.b16 %v7630
    %v9283 = vunpack.c.l.b16 %v7631
    %v9284 = vunpack.c.h.b16 %v7631
    %v9285 = vunpack.c.l.b16 %v7632
    %v9286 = vunpack.c.h.b16 %v7632
    %v9287 = vunpack.c.l.b16 %v7633
    %v9288 = vunpack.c.h.b16 %v7633
    %v9289 = vunpack.c.l.b16 %v7634
    %v9290 = vunpack.c.h.b16 %v7634
    %v9291 = vunpack.c.l.b16 %v7635
    %v9292 = vunpack.c.h.b16 %v7635
    %v9293 = vunpack.c.l.b16 %v7636
    %v9294 = vunpack.c.h.b16 %v7636
    %v9295 = vunpack.c.l.b16 %v7637
    %v9296 = vunpack.c.h.b16 %v7637
    %v9297 = vunpack.c.l.b16 %v7638
    %v9298 = vunpack.c.h.b16 %v7638
    %v9299 = vunpack.c.l.b16 %v7639
    %v9300 = vunpack.c.h.b16 %v7639
    %v9301 = vunpack.c.l.b16 %v7640
    %v9302 = vunpack.c.h.b16 %v7640
    %v9303 = vunpack.c.l.b16 %v7641
    %v9304 = vunpack.c.h.b16 %v7641
    %v9305 = vunpack.c.l.b16 %v7642
    %v9306 = vunpack.c.h.b16 %v7642
    %v9307 = vunpack.c.l.b16 %v7643
    %v9308 = vunpack.c.h.b16 %v7643
    %v9309 = vunpack.c.l.b16 %v7644
    %v9310 = vunpack.c.h.b16 %v7644
    %v9311 = vunpack.c.l.b16 %v7645
    %v9312 = vunpack.c.h.b16 %v7645
    %v9313 = vunpack.c.l.b16 %v7646
    %v9314 = vunpack.c.h.b16 %v7646
    %v9315 = vunpack.c.l.b16 %v7647
    %v9316 = vunpack.c.h.b16 %v7647
    %v9317 = vunpack.c.l.b16 %v7648
    %v9318 = vunpack.c.h.b16 %v7648
    %v9319 = vunpack.c.l.b16 %v7649
    %v9320 = vunpack.c.h.b16 %v7649
    %v9321 = vunpack.c.l.b16 %v7650
    %v9322 = vunpack.c.h.b16 %v7650
    %v9323 = vunpack.c.l.b16 %v7651
    %v9324 = vunpack.c.h.b16 %v7651
    %v9325 = vunpack.c.l.b16 %v7652
    %v9326 = vunpack.c.h.b16 %v7652
    %v9327 = vunpack.c.l.b16 %v7653
    %v9328 = vunpack.c.h.b16 %v7653
    %v9329 = vunpack.c.l.b16 %v7654
    %v9330 = vunpack.c.h.b16 %v7654
    %v9331 = vunpack.c.l.b16 %v7655
    %v9332 = vunpack.c.h.b16 %v7655
    %v9333 = vunpack.c.l.b16 %v7656
    %v9334 = vunpack.c.h.b16 %v7656
    %v9335 = vunpack.c.l.b16 %v7657
    %v9336 = vunpack.c.h.b16 %v7657
    %v9337 = vunpack.c.l.b16 %v7658
    %v9338 = vunpack.c.h.b16 %v7658
    %v9339 = vunpack.c.l.b16 %v7659
    %v9340 = vunpack.c.h.b16 %v7659
    %v9341 = vunpack.c.l.b16 %v7660
    %v9342 = vunpack.c.h.b16 %v7660
    %v9343 = vunpack.c.l.b16 %v7661
    %v9344 = vunpack.c.h.b16 %v7661
    %v9345 = vunpack.c.l.b16 %v7662
    %v9346 = vunpack.c.h.b16 %v7662
    %v9347 = vunpack.c.l.b16 %v7663
    %v9348 = vunpack.c.h.b16 %v7663
    %v9349 = vunpack.c.l.b16 %v7664
    %v9350 = vunpack.c.h.b16 %v7664
    %v9351 = vunpack.c.l.b16 %v7665
    %v9352 = vunpack.c.h.b16 %v7665
    %v9353 = vunpack.c.l.b16 %v7666
    %v9354 = vunpack.c.h.b16 %v7666
    %v9355 = vunpack.c.l.b16 %v7667
    %v9356 = vunpack.c.h.b16 %v7667
    %v9357 = vunpack.c.l.b16 %v7668
    %v9358 = vunpack.c.h.b16 %v7668
    %v9359 = vunpack.c.l.b16 %v7669
    %v9360 = vunpack.c.h.b16 %v7669
    %v9361 = vunpack.c.l.b16 %v7670
    %v9362 = vunpack.c.h.b16 %v7670
    %v9363 = vunpack.c.l.b16 %v7671
    %v9364 = vunpack.c.h.b16 %v7671
    %v9365 = vunpack.c.l.b16 %v7672
    %v9366 = vunpack.c.h.b16 %v7672
    %v9367 = vunpack.c.l.b16 %v7673
    %v9368 = vunpack.c.h.b16 %v7673
    %v9369 = vunpack.c.l.b16 %v7674
    %v9370 = vunpack.c.h.b16 %v7674
    %v9371 = vpack.c.b16 %v8351, %v8347
    %v9372 = vpack.c.b16 %v8352, %v8348
    %v9373 = vpack.c.b16 %v8353, %v8349
    %v9374 = vpack.c.b16 %v8354, %v8350
    %v9375 = vpack.c.b16 %v8359, %v8355
    %v9376 = vpack.c.b16 %v8360, %v8356
    %v9377 = vpack.c.b16 %v8361, %v8357
    %v9378 = vpack.c.b16 %v8362, %v8358
    %v9379 = vpack.c.b16 %v8367, %v8363
    %v9380 = vpack.c.b16 %v8368, %v8364
    %v9381 = vpack.c.b16 %v8369, %v8365
    %v9382 = vpack.c.b16 %v8370, %v8366
    %v9383 = vpack.c.b16 %v8375, %v8371
    %v9384 = vpack.c.b16 %v8376, %v8372
    %v9385 = vpack.c.b16 %v8377, %v8373
    %v9386 = vpack.c.b16 %v8378, %v8374
    %v9387 = vpack.c.b16 %v8383, %v8379
    %v9388 = vpack.c.b16 %v8384, %v8380
    %v9389 = vpack.c.b16 %v8385, %v8381
    %v9390 = vpack.c.b16 %v8386, %v8382
    %v9391 = vpack.c.b16 %v8391, %v8387
    %v9392 = vpack.c.b16 %v8392, %v8388
    %v9393 = vpack.c.b16 %v8393, %v8389
    %v9394 = vpack.c.b16 %v8394, %v8390
    %v9395 = vpack.c.b16 %v8399, %v8395
    %v9396 = vpack.c.b16 %v8400, %v8396
    %v9397 = vpack.c.b16 %v8401, %v8397
    %v9398 = vpack.c.b16 %v8402, %v8398
    %v9399 = vpack.c.b16 %v8407, %v8403
    %v9400 = vpack.c.b16 %v8408, %v8404
    %v9401 = vpack.c.b16 %v8409, %v8405
    %v9402 = vpack.c.b16 %v8410, %v8406
    %v9403 = vpack.c.b16 %v8415, %v8411
    %v9404 = vpack.c.b16 %v8416, %v8412
    %v9405 = vpack.c.b16 %v8417, %v8413
    %v9406 = vpack.c.b16 %v8418, %v8414
    %v9407 = vpack.c.b16 %v8423, %v8419
    %v9408 = vpack.c.b16 %v8424, %v8420
    %v9409 = vpack.c.b16 %v8425, %v8421
    %v9410 = vpack.c.b16 %v8426, %v8422
    %v9411 = vpack.c.b16 %v8431, %v8427
    %v9412 = vpack.c.b16 %v8432, %v8428
    %v9413 = vpack.c.b16 %v8433, %v8429
    %v9414 = vpack.c.b16 %v8434, %v8430
    %v9415 = vpack.c.b16 %v8439, %v8435
    %v9416 = vpack.c.b16 %v8440, %v8436
    %v9417 = vpack.c.b16 %v8441, %v8437
    %v9418 = vpack.c.b16 %v8442, %v8438
    %v9419 = vpack.c.b16 %v8447, %v8443
    %v9420 = vpack.c.b16 %v8448, %v8444
    %v9421 = vpack.c.b16 %v8449, %v8445
    %v9422 = vpack.c.b16 %v8450, %v8446
    %v9423 = vpack.c.b16 %v8455, %v8451
    %v9424 = vpack.c.b16 %v8456, %v8452
    %v9425 = vpack.c.b16 %v8457, %v8453
    %v9426 = vpack.c.b16 %v8458, %v8454
    %v9427 = vpack.c.b16 %v8463, %v8459
    %v9428 = vpack.c.b16 %v8464, %v8460
    %v9429 = vpack.c.b16 %v8465, %v8461
    %v9430 = vpack.c.b16 %v8466, %v8462
    %v9431 = vpack.c.b16 %v8471, %v8467
    %v9432 = vpack.c.b16 %v8472, %v8468
    %v9433 = vpack.c.b16 %v8473, %v8469
    %v9434 = vpack.c.b16 %v8474, %v8470
    %v9435 = vpack.c.b16 %v8479, %v8475
    %v9436 = vpack.c.b16 %v8480, %v8476
    %v9437 = vpack.c.b16 %v8481, %v8477
    %v9438 = vpack.c.b16 %v8482, %v8478
    %v9439 = vpack.c.b16 %v8487, %v8483
    %v9440 = vpack.c.b16 %v8488, %v8484
    %v9441 = vpack.c.b16 %v8489, %v8485
    %v9442 = vpack.c.b16 %v8490, %v8486
    %v9443 = vpack.c.b16 %v8495, %v8491
    %v9444 = vpack.c.b16 %v8496, %v8492
    %v9445 = vpack.c.b16 %v8497, %v8493
    %v9446 = vpack.c.b16 %v8498, %v8494
    %v9447 = vpack.c.b16 %v8503, %v8499
    %v9448 = vpack.c.b16 %v8504, %v8500
    %v9449 = vpack.c.b16 %v8505, %v8501
    %v9450 = vpack.c.b16 %v8506, %v8502
    %v9451 = vpack.c.b16 %v8511, %v8507
    %v9452 = vpack.c.b16 %v8512, %v8508
    %v9453 = vpack.c.b16 %v8513, %v8509
    %v9454 = vpack.c.b16 %v8514, %v8510
    %v9455 = vpack.c.b16 %v8519, %v8515
    %v9456 = vpack.c.b16 %v8520, %v8516
    %v9457 = vpack.c.b16 %v8521, %v8517
    %v9458 = vpack.c.b16 %v8522, %v8518
    %v9459 = vpack.c.b16 %v8527, %v8523
    %v9460 = vpack.c.b16 %v8528, %v8524
    %v9461 = vpack.c.b16 %v8529, %v8525
    %v9462 = vpack.c.b16 %v8530, %v8526
    %v9463 = vpack.c.b16 %v8535, %v8531
    %v9464 = vpack.c.b16 %v8536, %v8532
    %v9465 = vpack.c.b16 %v8537, %v8533
    %v9466 = vpack.c.b16 %v8538, %v8534
    %v9467 = vpack.c.b16 %v8543, %v8539
    %v9468 = vpack.c.b16 %v8544, %v8540
    %v9469 = vpack.c.b16 %v8545, %v8541
    %v9470 = vpack.c.b16 %v8546, %v8542
    %v9471 = vpack.c.b16 %v8551, %v8547
    %v9472 = vpack.c.b16 %v8552, %v8548
    %v9473 = vpack.c.b16 %v8553, %v8549
    %v9474 = vpack.c.b16 %v8554, %v8550
    %v9475 = vpack.c.b16 %v8559, %v8555
    %v9476 = vpack.c.b16 %v8560, %v8556
    %v9477 = vpack.c.b16 %v8561, %v8557
    %v9478 = vpack.c.b16 %v8562, %v8558
    %v9479 = vpack.c.b16 %v8567, %v8563
    %v9480 = vpack.c.b16 %v8568, %v8564
    %v9481 = vpack.c.b16 %v8569, %v8565
    %v9482 = vpack.c.b16 %v8570, %v8566
    %v9483 = vpack.c.b16 %v8575, %v8571
    %v9484 = vpack.c.b16 %v8576, %v8572
    %v9485 = vpack.c.b16 %v8577, %v8573
    %v9486 = vpack.c.b16 %v8578, %v8574
    %v9487 = vpack.c.b16 %v8583, %v8579
    %v9488 = vpack.c.b16 %v8584, %v8580
    %v9489 = vpack.c.b16 %v8585, %v8581
    %v9490 = vpack.c.b16 %v8586, %v8582
    %v9491 = vpack.c.b16 %v8591, %v8587
    %v9492 = vpack.c.b16 %v8592, %v8588
    %v9493 = vpack.c.b16 %v8593, %v8589
    %v9494 = vpack.c.b16 %v8594, %v8590
    %v9495 = vpack.c.b16 %v8599, %v8595
    %v9496 = vpack.c.b16 %v8600, %v8596
    %v9497 = vpack.c.b16 %v8601, %v8597
    %v9498 = vpack.c.b16 %v8602, %v8598
    %v9499 = vpack.c.b16 %v8607, %v8603
    %v9500 = vpack.c.b16 %v8608, %v8604
    %v9501 = vpack.c.b16 %v8609, %v8605
    %v9502 = vpack.c.b16 %v8610, %v8606
    %v9503 = vpack.c.b16 %v8615, %v8611
    %v9504 = vpack.c.b16 %v8616, %v8612
    %v9505 = vpack.c.b16 %v8617, %v8613
    %v9506 = vpack.c.b16 %v8618, %v8614
    %v9507 = vpack.c.b16 %v8623, %v8619
    %v9508 = vpack.c.b16 %v8624, %v8620
    %v9509 = vpack.c.b16 %v8625, %v8621
    %v9510 = vpack.c.b16 %v8626, %v8622
    %v9511 = vpack.c.b16 %v8631, %v8627
    %v9512 = vpack.c.b16 %v8632, %v8628
    %v9513 = vpack.c.b16 %v8633, %v8629
    %v9514 = vpack.c.b16 %v8634, %v8630
    %v9515 = vpack.c.b16 %v8639, %v8635
    %v9516 = vpack.c.b16 %v8640, %v8636
    %v9517 = vpack.c.b16 %v8641, %v8637
    %v9518 = vpack.c.b16 %v8642, %v8638
    %v9519 = vpack.c.b16 %v8647, %v8643
    %v9520 = vpack.c.b16 %v8648, %v8644
    %v9521 = vpack.c.b16 %v8649, %v8645
    %v9522 = vpack.c.b16 %v8650, %v8646
    %v9523 = vpack.c.b16 %v8655, %v8651
    %v9524 = vpack.c.b16 %v8656, %v8652
    %v9525 = vpack.c.b16 %v8657, %v8653
    %v9526 = vpack.c.b16 %v8658, %v8654
    %v9527 = vpack.c.b16 %v8663, %v8659
    %v9528 = vpack.c.b16 %v8664, %v8660
    %v9529 = vpack.c.b16 %v8665, %v8661
    %v9530 = vpack.c.b16 %v8666, %v8662
    %v9531 = vpack.c.b16 %v8671, %v8667
    %v9532 = vpack.c.b16 %v8672, %v8668
    %v9533 = vpack.c.b16 %v8673, %v8669
    %v9534 = vpack.c.b16 %v8674, %v8670
    %v9535 = vpack.c.b16 %v8679, %v8675
    %v9536 = vpack.c.b16 %v8680, %v8676
    %v9537 = vpack.c.b16 %v8681, %v8677
    %v9538 = vpack.c.b16 %v8682, %v8678
    %v9539 = vpack.c.b16 %v8687, %v8683
    %v9540 = vpack.c.b16 %v8688, %v8684
    %v9541 = vpack.c.b16 %v8689, %v8685
    %v9542 = vpack.c.b16 %v8690, %v8686
    %v9543 = vpack.c.b16 %v8695, %v8691
    %v9544 = vpack.c.b16 %v8696, %v8692
    %v9545 = vpack.c.b16 %v8697, %v8693
    %v9546 = vpack.c.b16 %v8698, %v8694
    %v9547 = vpack.c.b16 %v8703, %v8699
    %v9548 = vpack.c.b16 %v8704, %v8700
    %v9549 = vpack.c.b16 %v8705, %v8701
    %v9550 = vpack.c.b16 %v8706, %v8702
    %v9551 = vpack.c.b16 %v8711, %v8707
    %v9552 = vpack.c.b16 %v8712, %v8708
    %v9553 = vpack.c.b16 %v8713, %v8709
    %v9554 = vpack.c.b16 %v8714, %v8710
    %v9555 = vpack.c.b16 %v8719, %v8715
    %v9556 = vpack.c.b16 %v8720, %v8716
    %v9557 = vpack.c.b16 %v8721, %v8717
    %v9558 = vpack.c.b16 %v8722, %v8718
    %v9559 = vpack.c.b16 %v8727, %v8723
    %v9560 = vpack.c.b16 %v8728, %v8724
    %v9561 = vpack.c.b16 %v8729, %v8725
    %v9562 = vpack.c.b16 %v8730, %v8726
    %v9563 = vpack.c.b16 %v8735, %v8731
    %v9564 = vpack.c.b16 %v8736, %v8732
    %v9565 = vpack.c.b16 %v8737, %v8733
    %v9566 = vpack.c.b16 %v8738, %v8734
    %v9567 = vpack.c.b16 %v8743, %v8739
    %v9568 = vpack.c.b16 %v8744, %v8740
    %v9569 = vpack.c.b16 %v8745, %v8741
    %v9570 = vpack.c.b16 %v8746, %v8742
    %v9571 = vpack.c.b16 %v8751, %v8747
    %v9572 = vpack.c.b16 %v8752, %v8748
    %v9573 = vpack.c.b16 %v8753, %v8749
    %v9574 = vpack.c.b16 %v8754, %v8750
    %v9575 = vpack.c.b16 %v8759, %v8755
    %v9576 = vpack.c.b16 %v8760, %v8756
    %v9577 = vpack.c.b16 %v8761, %v8757
    %v9578 = vpack.c.b16 %v8762, %v8758
    %v9579 = vpack.c.b16 %v8767, %v8763
    %v9580 = vpack.c.b16 %v8768, %v8764
    %v9581 = vpack.c.b16 %v8769, %v8765
    %v9582 = vpack.c.b16 %v8770, %v8766
    %v9583 = vpack.c.b16 %v8775, %v8771
    %v9584 = vpack.c.b16 %v8776, %v8772
    %v9585 = vpack.c.b16 %v8777, %v8773
    %v9586 = vpack.c.b16 %v8778, %v8774
    %v9587 = vpack.c.b16 %v8783, %v8779
    %v9588 = vpack.c.b16 %v8784, %v8780
    %v9589 = vpack.c.b16 %v8785, %v8781
    %v9590 = vpack.c.b16 %v8786, %v8782
    %v9591 = vpack.c.b16 %v8791, %v8787
    %v9592 = vpack.c.b16 %v8792, %v8788
    %v9593 = vpack.c.b16 %v8793, %v8789
    %v9594 = vpack.c.b16 %v8794, %v8790
    %v9595 = vpack.c.b16 %v8799, %v8795
    %v9596 = vpack.c.b16 %v8800, %v8796
    %v9597 = vpack.c.b16 %v8801, %v8797
    %v9598 = vpack.c.b16 %v8802, %v8798
    %v9599 = vpack.c.b16 %v8807, %v8803
    %v9600 = vpack.c.b16 %v8808, %v8804
    %v9601 = vpack.c.b16 %v8809, %v8805
    %v9602 = vpack.c.b16 %v8810, %v8806
    %v9603 = vpack.c.b16 %v8815, %v8811
    %v9604 = vpack.c.b16 %v8816, %v8812
    %v9605 = vpack.c.b16 %v8817, %v8813
    %v9606 = vpack.c.b16 %v8818, %v8814
    %v9607 = vpack.c.b16 %v8823, %v8819
    %v9608 = vpack.c.b16 %v8824, %v8820
    %v9609 = vpack.c.b16 %v8825, %v8821
    %v9610 = vpack.c.b16 %v8826, %v8822
    %v9611 = vpack.c.b16 %v8831, %v8827
    %v9612 = vpack.c.b16 %v8832, %v8828
    %v9613 = vpack.c.b16 %v8833, %v8829
    %v9614 = vpack.c.b16 %v8834, %v8830
    %v9615 = vpack.c.b16 %v8839, %v8835
    %v9616 = vpack.c.b16 %v8840, %v8836
    %v9617 = vpack.c.b16 %v8841, %v8837
    %v9618 = vpack.c.b16 %v8842, %v8838
    %v9619 = vpack.c.b16 %v8847, %v8843
    %v9620 = vpack.c.b16 %v8848, %v8844
    %v9621 = vpack.c.b16 %v8849, %v8845
    %v9622 = vpack.c.b16 %v8850, %v8846
    %v9623 = vpack.c.b16 %v8855, %v8851
    %v9624 = vpack.c.b16 %v8856, %v8852
    %v9625 = vpack.c.b16 %v8857, %v8853
    %v9626 = vpack.c.b16 %v8858, %v8854
    %v9627 = vpack.c.b16 %v8863, %v8859
    %v9628 = vpack.c.b16 %v8864, %v8860
    %v9629 = vpack.c.b16 %v8865, %v8861
    %v9630 = vpack.c.b16 %v8866, %v8862
    %v9631 = vpack.c.b16 %v8871, %v8867
    %v9632 = vpack.c.b16 %v8872, %v8868
    %v9633 = vpack.c.b16 %v8873, %v8869
    %v9634 = vpack.c.b16 %v8874, %v8870
    %v9635 = vpack.c.b16 %v8879, %v8875
    %v9636 = vpack.c.b16 %v8880, %v8876
    %v9637 = vpack.c.b16 %v8881, %v8877
    %v9638 = vpack.c.b16 %v8882, %v8878
    %v9639 = vpack.c.b16 %v8887, %v8883
    %v9640 = vpack.c.b16 %v8888, %v8884
    %v9641 = vpack.c.b16 %v8889, %v8885
    %v9642 = vpack.c.b16 %v8890, %v8886
    %v9643 = vpack.c.b16 %v8895, %v8891
    %v9644 = vpack.c.b16 %v8896, %v8892
    %v9645 = vpack.c.b16 %v8897, %v8893
    %v9646 = vpack.c.b16 %v8898, %v8894
    %v9647 = vpack.c.b16 %v8903, %v8899
    %v9648 = vpack.c.b16 %v8904, %v8900
    %v9649 = vpack.c.b16 %v8905, %v8901
    %v9650 = vpack.c.b16 %v8906, %v8902
    %v9651 = vpack.c.b16 %v8911, %v8907
    %v9652 = vpack.c.b16 %v8912, %v8908
    %v9653 = vpack.c.b16 %v8913, %v8909
    %v9654 = vpack.c.b16 %v8914, %v8910
    %v9655 = vpack.c.b16 %v8919, %v8915
    %v9656 = vpack.c.b16 %v8920, %v8916
    %v9657 = vpack.c.b16 %v8921, %v8917
    %v9658 = vpack.c.b16 %v8922, %v8918
    %v9659 = vpack.c.b16 %v8927, %v8923
    %v9660 = vpack.c.b16 %v8928, %v8924
    %v9661 = vpack.c.b16 %v8929, %v8925
    %v9662 = vpack.c.b16 %v8930, %v8926
    %v9663 = vpack.c.b16 %v8935, %v8931
    %v9664 = vpack.c.b16 %v8936, %v8932
    %v9665 = vpack.c.b16 %v8937, %v8933
    %v9666 = vpack.c.b16 %v8938, %v8934
    %v9667 = vpack.c.b16 %v8943, %v8939
    %v9668 = vpack.c.b16 %v8944, %v8940
    %v9669 = vpack.c.b16 %v8945, %v8941
    %v9670 = vpack.c.b16 %v8946, %v8942
    %v9671 = vpack.c.b16 %v8951, %v8947
    %v9672 = vpack.c.b16 %v8952, %v8948
    %v9673 = vpack.c.b16 %v8953, %v8949
    %v9674 = vpack.c.b16 %v8954, %v8950
    %v9675 = vpack.c.b16 %v8959, %v8955
    %v9676 = vpack.c.b16 %v8960, %v8956
    %v9677 = vpack.c.b16 %v8961, %v8957
    %v9678 = vpack.c.b16 %v8962, %v8958
    %v9679 = vpack.c.b16 %v8967, %v8963
    %v9680 = vpack.c.b16 %v8968, %v8964
    %v9681 = vpack.c.b16 %v8969, %v8965
    %v9682 = vpack.c.b16 %v8970, %v8966
    %v9683 = vpack.c.b16 %v8975, %v8971
    %v9684 = vpack.c.b16 %v8976, %v8972
    %v9685 = vpack.c.b16 %v8977, %v8973
    %v9686 = vpack.c.b16 %v8978, %v8974
    %v9687 = vpack.c.b16 %v8983, %v8979
    %v9688 = vpack.c.b16 %v8984, %v8980
    %v9689 = vpack.c.b16 %v8985, %v8981
    %v9690 = vpack.c.b16 %v8986, %v8982
    %v9691 = vpack.c.b16 %v8991, %v8987
    %v9692 = vpack.c.b16 %v8992, %v8988
    %v9693 = vpack.c.b16 %v8993, %v8989
    %v9694 = vpack.c.b16 %v8994, %v8990
    %v9695 = vpack.c.b16 %v8999, %v8995
    %v9696 = vpack.c.b16 %v9000, %v8996
    %v9697 = vpack.c.b16 %v9001, %v8997
    %v9698 = vpack.c.b16 %v9002, %v8998
    %v9699 = vpack.c.b16 %v9007, %v9003
    %v9700 = vpack.c.b16 %v9008, %v9004
    %v9701 = vpack.c.b16 %v9009, %v9005
    %v9702 = vpack.c.b16 %v9010, %v9006
    %v9703 = vpack.c.b16 %v9015, %v9011
    %v9704 = vpack.c.b16 %v9016, %v9012
    %v9705 = vpack.c.b16 %v9017, %v9013
    %v9706 = vpack.c.b16 %v9018, %v9014
    %v9707 = vpack.c.b16 %v9023, %v9019
    %v9708 = vpack.c.b16 %v9024, %v9020
    %v9709 = vpack.c.b16 %v9025, %v9021
    %v9710 = vpack.c.b16 %v9026, %v9022
    %v9711 = vpack.c.b16 %v9031, %v9027
    %v9712 = vpack.c.b16 %v9032, %v9028
    %v9713 = vpack.c.b16 %v9033, %v9029
    %v9714 = vpack.c.b16 %v9034, %v9030
    %v9715 = vpack.c.b16 %v9039, %v9035
    %v9716 = vpack.c.b16 %v9040, %v9036
    %v9717 = vpack.c.b16 %v9041, %v9037
    %v9718 = vpack.c.b16 %v9042, %v9038
    %v9719 = vpack.c.b16 %v9047, %v9043
    %v9720 = vpack.c.b16 %v9048, %v9044
    %v9721 = vpack.c.b16 %v9049, %v9045
    %v9722 = vpack.c.b16 %v9050, %v9046
    %v9723 = vpack.c.b16 %v9055, %v9051
    %v9724 = vpack.c.b16 %v9056, %v9052
    %v9725 = vpack.c.b16 %v9057, %v9053
    %v9726 = vpack.c.b16 %v9058, %v9054
    %v9727 = vpack.c.b16 %v9063, %v9059
    %v9728 = vpack.c.b16 %v9064, %v9060
    %v9729 = vpack.c.b16 %v9065, %v9061
    %v9730 = vpack.c.b16 %v9066, %v9062
    %v9731 = vpack.c.b16 %v9071, %v9067
    %v9732 = vpack.c.b16 %v9072, %v9068
    %v9733 = vpack.c.b16 %v9073, %v9069
    %v9734 = vpack.c.b16 %v9074, %v9070
    %v9735 = vpack.c.b16 %v9079, %v9075
    %v9736 = vpack.c.b16 %v9080, %v9076
    %v9737 = vpack.c.b16 %v9081, %v9077
    %v9738 = vpack.c.b16 %v9082, %v9078
    %v9739 = vpack.c.b16 %v9087, %v9083
    %v9740 = vpack.c.b16 %v9088, %v9084
    %v9741 = vpack.c.b16 %v9089, %v9085
    %v9742 = vpack.c.b16 %v9090, %v9086
    %v9743 = vpack.c.b16 %v9095, %v9091
    %v9744 = vpack.c.b16 %v9096, %v9092
    %v9745 = vpack.c.b16 %v9097, %v9093
    %v9746 = vpack.c.b16 %v9098, %v9094
    %v9747 = vpack.c.b16 %v9103, %v9099
    %v9748 = vpack.c.b16 %v9104, %v9100
    %v9749 = vpack.c.b16 %v9105, %v9101
    %v9750 = vpack.c.b16 %v9106, %v9102
    %v9751 = vpack.c.b16 %v9111, %v9107
    %v9752 = vpack.c.b16 %v9112, %v9108
    %v9753 = vpack.c.b16 %v9113, %v9109
    %v9754 = vpack.c.b16 %v9114, %v9110
    %v9755 = vpack.c.b16 %v9119, %v9115
    %v9756 = vpack.c.b16 %v9120, %v9116
    %v9757 = vpack.c.b16 %v9121, %v9117
    %v9758 = vpack.c.b16 %v9122, %v9118
    %v9759 = vpack.c.b16 %v9127, %v9123
    %v9760 = vpack.c.b16 %v9128, %v9124
    %v9761 = vpack.c.b16 %v9129, %v9125
    %v9762 = vpack.c.b16 %v9130, %v9126
    %v9763 = vpack.c.b16 %v9135, %v9131
    %v9764 = vpack.c.b16 %v9136, %v9132
    %v9765 = vpack.c.b16 %v9137, %v9133
    %v9766 = vpack.c.b16 %v9138, %v9134
    %v9767 = vpack.c.b16 %v9143, %v9139
    %v9768 = vpack.c.b16 %v9144, %v9140
    %v9769 = vpack.c.b16 %v9145, %v9141
    %v9770 = vpack.c.b16 %v9146, %v9142
    %v9771 = vpack.c.b16 %v9151, %v9147
    %v9772 = vpack.c.b16 %v9152, %v9148
    %v9773 = vpack.c.b16 %v9153, %v9149
    %v9774 = vpack.c.b16 %v9154, %v9150
    %v9775 = vpack.c.b16 %v9159, %v9155
    %v9776 = vpack.c.b16 %v9160, %v9156
    %v9777 = vpack.c.b16 %v9161, %v9157
    %v9778 = vpack.c.b16 %v9162, %v9158
    %v9779 = vpack.c.b16 %v9167, %v9163
    %v9780 = vpack.c.b16 %v9168, %v9164
    %v9781 = vpack.c.b16 %v9169, %v9165
    %v9782 = vpack.c.b16 %v9170, %v9166
    %v9783 = vpack.c.b16 %v9175, %v9171
    %v9784 = vpack.c.b16 %v9176, %v9172
    %v9785 = vpack.c.b16 %v9177, %v9173
    %v9786 = vpack.c.b16 %v9178, %v9174
    %v9787 = vpack.c.b16 %v9183, %v9179
    %v9788 = vpack.c.b16 %v9184, %v9180
    %v9789 = vpack.c.b16 %v9185, %v9181
    %v9790 = vpack.c.b16 %v9186, %v9182
    %v9791 = vpack.c.b16 %v9191, %v9187
    %v9792 = vpack.c.b16 %v9192, %v9188
    %v9793 = vpack.c.b16 %v9193, %v9189
    %v9794 = vpack.c.b16 %v9194, %v9190
    %v9795 = vpack.c.b16 %v9199, %v9195
    %v9796 = vpack.c.b16 %v9200, %v9196
    %v9797 = vpack.c.b16 %v9201, %v9197
    %v9798 = vpack.c.b16 %v9202, %v9198
    %v9799 = vpack.c.b16 %v9207, %v9203
    %v9800 = vpack.c.b16 %v9208, %v9204
    %v9801 = vpack.c.b16 %v9209, %v9205
    %v9802 = vpack.c.b16 %v9210, %v9206
    %v9803 = vpack.c.b16 %v9215, %v9211
    %v9804 = vpack.c.b16 %v9216, %v9212
    %v9805 = vpack.c.b16 %v9217, %v9213
    %v9806 = vpack.c.b16 %v9218, %v9214
    %v9807 = vpack.c.b16 %v9223, %v9219
    %v9808 = vpack.c.b16 %v9224, %v9220
    %v9809 = vpack.c.b16 %v9225, %v9221
    %v9810 = vpack.c.b16 %v9226, %v9222
    %v9811 = vpack.c.b16 %v9231, %v9227
    %v9812 = vpack.c.b16 %v9232, %v9228
    %v9813 = vpack.c.b16 %v9233, %v9229
    %v9814 = vpack.c.b16 %v9234, %v9230
    %v9815 = vpack.c.b16 %v9239, %v9235
    %v9816 = vpack.c.b16 %v9240, %v9236
    %v9817 = vpack.c.b16 %v9241, %v9237
    %v9818 = vpack.c.b16 %v9242, %v9238
    %v9819 = vpack.c.b16 %v9247, %v9243
    %v9820 = vpack.c.b16 %v9248, %v9244
    %v9821 = vpack.c.b16 %v9249, %v9245
    %v9822 = vpack.c.b16 %v9250, %v9246
    %v9823 = vpack.c.b16 %v9255, %v9251
    %v9824 = vpack.c.b16 %v9256, %v9252
    %v9825 = vpack.c.b16 %v9257, %v9253
    %v9826 = vpack.c.b16 %v9258, %v9254
    %v9827 = vpack.c.b16 %v9263, %v9259
    %v9828 = vpack.c.b16 %v9264, %v9260
    %v9829 = vpack.c.b16 %v9265, %v9261
    %v9830 = vpack.c.b16 %v9266, %v9262
    %v9831 = vpack.c.b16 %v9271, %v9267
    %v9832 = vpack.c.b16 %v9272, %v9268
    %v9833 = vpack.c.b16 %v9273, %v9269
    %v9834 = vpack.c.b16 %v9274, %v9270
    %v9835 = vpack.c.b16 %v9279, %v9275
    %v9836 = vpack.c.b16 %v9280, %v9276
    %v9837 = vpack.c.b16 %v9281, %v9277
    %v9838 = vpack.c.b16 %v9282, %v9278
    %v9839 = vpack.c.b16 %v9287, %v9283
    %v9840 = vpack.c.b16 %v9288, %v9284
    %v9841 = vpack.c.b16 %v9289, %v9285
    %v9842 = vpack.c.b16 %v9290, %v9286
    %v9843 = vpack.c.b16 %v9295, %v9291
    %v9844 = vpack.c.b16 %v9296, %v9292
    %v9845 = vpack.c.b16 %v9297, %v9293
    %v9846 = vpack.c.b16 %v9298, %v9294
    %v9847 = vpack.c.b16 %v9303, %v9299
    %v9848 = vpack.c.b16 %v9304, %v9300
    %v9849 = vpack.c.b16 %v9305, %v9301
    %v9850 = vpack.c.b16 %v9306, %v9302
    %v9851 = vpack.c.b16 %v9311, %v9307
    %v9852 = vpack.c.b16 %v9312, %v9308
    %v9853 = vpack.c.b16 %v9313, %v9309
    %v9854 = vpack.c.b16 %v9314, %v9310
    %v9855 = vpack.c.b16 %v9319, %v9315
    %v9856 = vpack.c.b16 %v9320, %v9316
    %v9857 = vpack.c.b16 %v9321, %v9317
    %v9858 = vpack.c.b16 %v9322, %v9318
    %v9859 = vpack.c.b16 %v9327, %v9323
    %v9860 = vpack.c.b16 %v9328, %v9324
    %v9861 = vpack.c.b16 %v9329, %v9325
    %v9862 = vpack.c.b16 %v9330, %v9326
    %v9863 = vpack.c.b16 %v9335, %v9331
    %v9864 = vpack.c.b16 %v9336, %v9332
    %v9865 = vpack.c.b16 %v9337, %v9333
    %v9866 = vpack.c.b16 %v9338, %v9334
    %v9867 = vpack.c.b16 %v9343, %v9339
    %v9868 = vpack.c.b16 %v9344, %v9340
    %v9869 = vpack.c.b16 %v9345, %v9341
    %v9870 = vpack.c.b16 %v9346, %v9342
    %v9871 = vpack.c.b16 %v9351, %v9347
    %v9872 = vpack.c.b16 %v9352, %v9348
    %v9873 = vpack.c.b16 %v9353, %v9349
    %v9874 = vpack.c.b16 %v9354, %v9350
    %v9875 = vpack.c.b16 %v9359, %v9355
    %v9876 = vpack.c.b16 %v9360, %v9356
    %v9877 = vpack.c.b16 %v9361, %v9357
    %v9878 = vpack.c.b16 %v9362, %v9358
    %v9879 = vpack.c.b16 %v9367, %v9363
    %v9880 = vpack.c.b16 %v9368, %v9364
    %v9881 = vpack.c.b16 %v9369, %v9365
    %v9882 = vpack.c.b16 %v9370, %v9366
    %10395 = vmatpush.bf16.msra.mxu0 %v9399
    %10396 = vmatpush.bf16.msra.mxu0 %v9395
    %10397 = vmatpush.bf16.msra.mxu0 %v9391
    %10398 = vmatpush.bf16.msra.mxu0 %v9387
    %10399 = vmatpush.bf16.msra.mxu0 %v9383
    %10400 = vmatpush.bf16.msra.mxu0 %v9379
    %10401 = vmatpush.bf16.msra.mxu0 %v9375
    %10402 = vmatpush.bf16.msra.mxu0 %v9371
    %10403 = vmatmul.bf16.gmra.mxu0 %v7771
    %v10404 = vpop.f32.mrf.mxu0
    %v10405 = vadd.f32 0.0, %v10404
    %v10406 = vpop.f32.mrf.mxu0
    %10407 = vmatmul.bf16.gmra.mxu0 %v7787
    %v10408 = vpop.f32.mrf.mxu0
    %v10409 = vpop.f32.mrf.mxu0
    %10410 = vdwg.mxu0
    %10411 = vmatpush.bf16.msra.mxu0 %v9431
    %10412 = vmatpush.bf16.msra.mxu0 %v9427
    %10413 = vmatpush.bf16.msra.mxu0 %v9423
    %10414 = vmatpush.bf16.msra.mxu0 %v9419
    %10415 = vmatpush.bf16.msra.mxu0 %v9415
    %10416 = vmatpush.bf16.msra.mxu0 %v9411
    %10417 = vmatpush.bf16.msra.mxu0 %v9407
    %10418 = vmatpush.bf16.msra.mxu0 %v9403
    %10419 = vmatmul.bf16.gmra.mxu0 %v7772
    %v10420 = vpop.f32.mrf.mxu0
    %v10421 = vadd.f32 %v10405, %v10420
    %v10422 = vpop.f32.mrf.mxu0
    %10423 = vmatmul.bf16.gmra.mxu0 %v7788
    %v10424 = vpop.f32.mrf.mxu0
    %v10425 = vpop.f32.mrf.mxu0
    %10426 = vdwg.mxu0
    %10427 = vmatpush.bf16.msra.mxu0 %v9463
    %10428 = vmatpush.bf16.msra.mxu0 %v9459
    %10429 = vmatpush.bf16.msra.mxu0 %v9455
    %10430 = vmatpush.bf16.msra.mxu0 %v9451
    %10431 = vmatpush.bf16.msra.mxu0 %v9447
    %10432 = vmatpush.bf16.msra.mxu0 %v9443
    %10433 = vmatpush.bf16.msra.mxu0 %v9439
    %10434 = vmatpush.bf16.msra.mxu0 %v9435
    %10435 = vmatmul.bf16.gmra.mxu0 %v7773
    %v10436 = vpop.f32.mrf.mxu0
    %v10437 = vadd.f32 %v10421, %v10436
    %v10438 = vpop.f32.mrf.mxu0
    %10439 = vmatmul.bf16.gmra.mxu0 %v7789
    %v10440 = vpop.f32.mrf.mxu0
    %v10441 = vpop.f32.mrf.mxu0
    %10442 = vdwg.mxu0
    %10443 = vmatpush.bf16.msra.mxu0 %v9495
    %10444 = vmatpush.bf16.msra.mxu0 %v9491
    %10445 = vmatpush.bf16.msra.mxu0 %v9487
    %10446 = vmatpush.bf16.msra.mxu0 %v9483
    %10447 = vmatpush.bf16.msra.mxu0 %v9479
    %10448 = vmatpush.bf16.msra.mxu0 %v9475
    %10449 = vmatpush.bf16.msra.mxu0 %v9471
    %10450 = vmatpush.bf16.msra.mxu0 %v9467
    %10451 = vmatmul.bf16.gmra.mxu0 %v7774
    %v10452 = vpop.f32.mrf.mxu0
    %v10453 = vadd.f32 %v10437, %v10452
    %v10454 = vpop.f32.mrf.mxu0
    %10455 = vmatmul.bf16.gmra.mxu0 %v7790
    %v10456 = vpop.f32.mrf.mxu0
    %v10457 = vpop.f32.mrf.mxu0
    %10458 = vdwg.mxu0
    %10459 = vmatpush.bf16.msra.mxu0 %v9527
    %10460 = vmatpush.bf16.msra.mxu0 %v9523
    %10461 = vmatpush.bf16.msra.mxu0 %v9519
    %10462 = vmatpush.bf16.msra.mxu0 %v9515
    %10463 = vmatpush.bf16.msra.mxu0 %v9511
    %10464 = vmatpush.bf16.msra.mxu0 %v9507
    %10465 = vmatpush.bf16.msra.mxu0 %v9503
    %10466 = vmatpush.bf16.msra.mxu0 %v9499
    %10467 = vmatmul.bf16.gmra.mxu0 %v7775
    %v10468 = vpop.f32.mrf.mxu0
    %v10469 = vadd.f32 %v10453, %v10468
    %v10470 = vpop.f32.mrf.mxu0
    %10471 = vmatmul.bf16.gmra.mxu0 %v7791
    %v10472 = vpop.f32.mrf.mxu0
    %v10473 = vpop.f32.mrf.mxu0
    %10474 = vdwg.mxu0
    %10475 = vmatpush.bf16.msra.mxu0 %v9559
    %10476 = vmatpush.bf16.msra.mxu0 %v9555
    %10477 = vmatpush.bf16.msra.mxu0 %v9551
    %10478 = vmatpush.bf16.msra.mxu0 %v9547
    %10479 = vmatpush.bf16.msra.mxu0 %v9543
    %10480 = vmatpush.bf16.msra.mxu0 %v9539
    %10481 = vmatpush.bf16.msra.mxu0 %v9535
    %10482 = vmatpush.bf16.msra.mxu0 %v9531
    %10483 = vmatmul.bf16.gmra.mxu0 %v7776
    %v10484 = vpop.f32.mrf.mxu0
    %v10485 = vadd.f32 %v10469, %v10484
    %v10486 = vpop.f32.mrf.mxu0
    %10487 = vmatmul.bf16.gmra.mxu0 %v7792
    %v10488 = vpop.f32.mrf.mxu0
    %v10489 = vpop.f32.mrf.mxu0
    %10490 = vdwg.mxu0
    %10491 = vmatpush.bf16.msra.mxu0 %v9591
    %10492 = vmatpush.bf16.msra.mxu0 %v9587
    %10493 = vmatpush.bf16.msra.mxu0 %v9583
    %10494 = vmatpush.bf16.msra.mxu0 %v9579
    %10495 = vmatpush.bf16.msra.mxu0 %v9575
    %10496 = vmatpush.bf16.msra.mxu0 %v9571
    %10497 = vmatpush.bf16.msra.mxu0 %v9567
    %10498 = vmatpush.bf16.msra.mxu0 %v9563
    %10499 = vmatmul.bf16.gmra.mxu0 %v7777
    %v10500 = vpop.f32.mrf.mxu0
    %v10501 = vadd.f32 %v10485, %v10500
    %v10502 = vpop.f32.mrf.mxu0
    %10503 = vmatmul.bf16.gmra.mxu0 %v7793
    %v10504 = vpop.f32.mrf.mxu0
    %v10505 = vpop.f32.mrf.mxu0
    %10506 = vdwg.mxu0
    %10507 = vmatpush.bf16.msra.mxu0 %v9623
    %10508 = vmatpush.bf16.msra.mxu0 %v9619
    %10509 = vmatpush.bf16.msra.mxu0 %v9615
    %10510 = vmatpush.bf16.msra.mxu0 %v9611
    %10511 = vmatpush.bf16.msra.mxu0 %v9607
    %10512 = vmatpush.bf16.msra.mxu0 %v9603
    %10513 = vmatpush.bf16.msra.mxu0 %v9599
    %10514 = vmatpush.bf16.msra.mxu0 %v9595
    %10515 = vmatmul.bf16.gmra.mxu0 %v7778
    %v10516 = vpop.f32.mrf.mxu0
    %v10517 = vadd.f32 %v10501, %v10516
    %v10518 = vpop.f32.mrf.mxu0
    %10519 = vmatmul.bf16.gmra.mxu0 %v7794
    %v10520 = vpop.f32.mrf.mxu0
    %v10521 = vpop.f32.mrf.mxu0
    %10522 = vdwg.mxu0
    %10523 = vmatpush.bf16.msra.mxu0 %v9655
    %10524 = vmatpush.bf16.msra.mxu0 %v9651
    %10525 = vmatpush.bf16.msra.mxu0 %v9647
    %10526 = vmatpush.bf16.msra.mxu0 %v9643
    %10527 = vmatpush.bf16.msra.mxu0 %v9639
    %10528 = vmatpush.bf16.msra.mxu0 %v9635
    %10529 = vmatpush.bf16.msra.mxu0 %v9631
    %10530 = vmatpush.bf16.msra.mxu0 %v9627
    %10531 = vmatmul.bf16.gmra.mxu0 %v7779
    %v10532 = vpop.f32.mrf.mxu0
    %v10533 = vadd.f32 %v10517, %v10532
    %v10534 = vpop.f32.mrf.mxu0
    %10535 = vmatmul.bf16.gmra.mxu0 %v7795
    %v10536 = vpop.f32.mrf.mxu0
    %v10537 = vpop.f32.mrf.mxu0
    %10538 = vdwg.mxu0
    %10539 = vmatpush.bf16.msra.mxu0 %v9687
    %10540 = vmatpush.bf16.msra.mxu0 %v9683
    %10541 = vmatpush.bf16.msra.mxu0 %v9679
    %10542 = vmatpush.bf16.msra.mxu0 %v9675
    %10543 = vmatpush.bf16.msra.mxu0 %v9671
    %10544 = vmatpush.bf16.msra.mxu0 %v9667
    %10545 = vmatpush.bf16.msra.mxu0 %v9663
    %10546 = vmatpush.bf16.msra.mxu0 %v9659
    %10547 = vmatmul.bf16.gmra.mxu0 %v7780
    %v10548 = vpop.f32.mrf.mxu0
    %v10549 = vadd.f32 %v10533, %v10548
    %v10550 = vpop.f32.mrf.mxu0
    %10551 = vmatmul.bf16.gmra.mxu0 %v7796
    %v10552 = vpop.f32.mrf.mxu0
    %v10553 = vpop.f32.mrf.mxu0
    %10554 = vdwg.mxu0
    %10555 = vmatpush.bf16.msra.mxu0 %v9719
    %10556 = vmatpush.bf16.msra.mxu0 %v9715
    %10557 = vmatpush.bf16.msra.mxu0 %v9711
    %10558 = vmatpush.bf16.msra.mxu0 %v9707
    %10559 = vmatpush.bf16.msra.mxu0 %v9703
    %10560 = vmatpush.bf16.msra.mxu0 %v9699
    %10561 = vmatpush.bf16.msra.mxu0 %v9695
    %10562 = vmatpush.bf16.msra.mxu0 %v9691
    %10563 = vmatmul.bf16.gmra.mxu0 %v7781
    %v10564 = vpop.f32.mrf.mxu0
    %v10565 = vadd.f32 %v10549, %v10564
    %v10566 = vpop.f32.mrf.mxu0
    %10567 = vmatmul.bf16.gmra.mxu0 %v7797
    %v10568 = vpop.f32.mrf.mxu0
    %v10569 = vpop.f32.mrf.mxu0
    %10570 = vdwg.mxu0
    %10571 = vmatpush.bf16.msra.mxu0 %v9751
    %10572 = vmatpush.bf16.msra.mxu0 %v9747
    %10573 = vmatpush.bf16.msra.mxu0 %v9743
    %10574 = vmatpush.bf16.msra.mxu0 %v9739
    %10575 = vmatpush.bf16.msra.mxu0 %v9735
    %10576 = vmatpush.bf16.msra.mxu0 %v9731
    %10577 = vmatpush.bf16.msra.mxu0 %v9727
    %10578 = vmatpush.bf16.msra.mxu0 %v9723
    %10579 = vmatmul.bf16.gmra.mxu0 %v7782
    %v10580 = vpop.f32.mrf.mxu0
    %v10581 = vadd.f32 %v10565, %v10580
    %v10582 = vpop.f32.mrf.mxu0
    %10583 = vmatmul.bf16.gmra.mxu0 %v7798
    %v10584 = vpop.f32.mrf.mxu0
    %v10585 = vpop.f32.mrf.mxu0
    %10586 = vdwg.mxu0
    %10587 = vmatpush.bf16.msra.mxu0 %v9783
    %10588 = vmatpush.bf16.msra.mxu0 %v9779
    %10589 = vmatpush.bf16.msra.mxu0 %v9775
    %10590 = vmatpush.bf16.msra.mxu0 %v9771
    %10591 = vmatpush.bf16.msra.mxu0 %v9767
    %10592 = vmatpush.bf16.msra.mxu0 %v9763
    %10593 = vmatpush.bf16.msra.mxu0 %v9759
    %10594 = vmatpush.bf16.msra.mxu0 %v9755
    %10595 = vmatmul.bf16.gmra.mxu0 %v7783
    %v10596 = vpop.f32.mrf.mxu0
    %v10597 = vadd.f32 %v10581, %v10596
    %v10598 = vpop.f32.mrf.mxu0
    %10599 = vmatmul.bf16.gmra.mxu0 %v7799
    %v10600 = vpop.f32.mrf.mxu0
    %v10601 = vpop.f32.mrf.mxu0
    %10602 = vdwg.mxu0
    %10603 = vmatpush.bf16.msra.mxu0 %v9815
    %10604 = vmatpush.bf16.msra.mxu0 %v9811
    %10605 = vmatpush.bf16.msra.mxu0 %v9807
    %10606 = vmatpush.bf16.msra.mxu0 %v9803
    %10607 = vmatpush.bf16.msra.mxu0 %v9799
    %10608 = vmatpush.bf16.msra.mxu0 %v9795
    %10609 = vmatpush.bf16.msra.mxu0 %v9791
    %10610 = vmatpush.bf16.msra.mxu0 %v9787
    %10611 = vmatmul.bf16.gmra.mxu0 %v7784
    %v10612 = vpop.f32.mrf.mxu0
    %v10613 = vadd.f32 %v10597, %v10612
    %v10614 = vpop.f32.mrf.mxu0
    %10615 = vmatmul.bf16.gmra.mxu0 %v7800
    %v10616 = vpop.f32.mrf.mxu0
    %v10617 = vpop.f32.mrf.mxu0
    %10618 = vdwg.mxu0
    %10619 = vmatpush.bf16.msra.mxu0 %v9847
    %10620 = vmatpush.bf16.msra.mxu0 %v9843
    %10621 = vmatpush.bf16.msra.mxu0 %v9839
    %10622 = vmatpush.bf16.msra.mxu0 %v9835
    %10623 = vmatpush.bf16.msra.mxu0 %v9831
    %10624 = vmatpush.bf16.msra.mxu0 %v9827
    %10625 = vmatpush.bf16.msra.mxu0 %v9823
    %10626 = vmatpush.bf16.msra.mxu0 %v9819
    %10627 = vmatmul.bf16.gmra.mxu0 %v7785
    %v10628 = vpop.f32.mrf.mxu0
    %v10629 = vadd.f32 %v10613, %v10628
    %v10630 = vpop.f32.mrf.mxu0
    %10631 = vmatmul.bf16.gmra.mxu0 %v7801
    %v10632 = vpop.f32.mrf.mxu0
    %v10633 = vpop.f32.mrf.mxu0
    %10634 = vdwg.mxu0
    %10635 = vmatpush.bf16.msra.mxu0 %v9879
    %10636 = vmatpush.bf16.msra.mxu0 %v9875
    %10637 = vmatpush.bf16.msra.mxu0 %v9871
    %10638 = vmatpush.bf16.msra.mxu0 %v9867
    %10639 = vmatpush.bf16.msra.mxu0 %v9863
    %10640 = vmatpush.bf16.msra.mxu0 %v9859
    %10641 = vmatpush.bf16.msra.mxu0 %v9855
    %10642 = vmatpush.bf16.msra.mxu0 %v9851
    %10643 = vmatmul.bf16.gmra.mxu0 %v7786
    %v10644 = vpop.f32.mrf.mxu0
    %v10645 = vadd.f32 %v10629, %v10644
    %v10646 = vpop.f32.mrf.mxu0
    %10647 = vmatmul.bf16.gmra.mxu0 %v7802
    %v10648 = vpop.f32.mrf.mxu0
    %v10649 = vpop.f32.mrf.mxu0
    %10650 = vdwg.mxu0
    %10651 = vmatpush.bf16.msra.mxu0 %v9400
    %10652 = vmatpush.bf16.msra.mxu0 %v9396
    %10653 = vmatpush.bf16.msra.mxu0 %v9392
    %10654 = vmatpush.bf16.msra.mxu0 %v9388
    %10655 = vmatpush.bf16.msra.mxu0 %v9384
    %10656 = vmatpush.bf16.msra.mxu0 %v9380
    %10657 = vmatpush.bf16.msra.mxu0 %v9376
    %10658 = vmatpush.bf16.msra.mxu0 %v9372
    %10659 = vmatmul.bf16.gmra.mxu0 %v7771
    %v10660 = vpop.f32.mrf.mxu0
    %v10661 = vpop.f32.mrf.mxu0
    %v10662 = vadd.f32 0.0, %v10661
    %10663 = vmatmul.bf16.gmra.mxu0 %v7787
    %v10664 = vpop.f32.mrf.mxu0
    %v10665 = vpop.f32.mrf.mxu0
    %10666 = vdwg.mxu0
    %10667 = vmatpush.bf16.msra.mxu0 %v9432
    %10668 = vmatpush.bf16.msra.mxu0 %v9428
    %10669 = vmatpush.bf16.msra.mxu0 %v9424
    %10670 = vmatpush.bf16.msra.mxu0 %v9420
    %10671 = vmatpush.bf16.msra.mxu0 %v9416
    %10672 = vmatpush.bf16.msra.mxu0 %v9412
    %10673 = vmatpush.bf16.msra.mxu0 %v9408
    %10674 = vmatpush.bf16.msra.mxu0 %v9404
    %10675 = vmatmul.bf16.gmra.mxu0 %v7772
    %v10676 = vpop.f32.mrf.mxu0
    %v10677 = vpop.f32.mrf.mxu0
    %v10678 = vadd.f32 %v10662, %v10677
    %10679 = vmatmul.bf16.gmra.mxu0 %v7788
    %v10680 = vpop.f32.mrf.mxu0
    %v10681 = vpop.f32.mrf.mxu0
    %10682 = vdwg.mxu0
    %10683 = vmatpush.bf16.msra.mxu0 %v9464
    %10684 = vmatpush.bf16.msra.mxu0 %v9460
    %10685 = vmatpush.bf16.msra.mxu0 %v9456
    %10686 = vmatpush.bf16.msra.mxu0 %v9452
    %10687 = vmatpush.bf16.msra.mxu0 %v9448
    %10688 = vmatpush.bf16.msra.mxu0 %v9444
    %10689 = vmatpush.bf16.msra.mxu0 %v9440
    %10690 = vmatpush.bf16.msra.mxu0 %v9436
    %10691 = vmatmul.bf16.gmra.mxu0 %v7773
    %v10692 = vpop.f32.mrf.mxu0
    %v10693 = vpop.f32.mrf.mxu0
    %v10694 = vadd.f32 %v10678, %v10693
    %10695 = vmatmul.bf16.gmra.mxu0 %v7789
    %v10696 = vpop.f32.mrf.mxu0
    %v10697 = vpop.f32.mrf.mxu0
    %10698 = vdwg.mxu0
    %10699 = vmatpush.bf16.msra.mxu0 %v9496
    %10700 = vmatpush.bf16.msra.mxu0 %v9492
    %10701 = vmatpush.bf16.msra.mxu0 %v9488
    %10702 = vmatpush.bf16.msra.mxu0 %v9484
    %10703 = vmatpush.bf16.msra.mxu0 %v9480
    %10704 = vmatpush.bf16.msra.mxu0 %v9476
    %10705 = vmatpush.bf16.msra.mxu0 %v9472
    %10706 = vmatpush.bf16.msra.mxu0 %v9468
    %10707 = vmatmul.bf16.gmra.mxu0 %v7774
    %v10708 = vpop.f32.mrf.mxu0
    %v10709 = vpop.f32.mrf.mxu0
    %v10710 = vadd.f32 %v10694, %v10709
    %10711 = vmatmul.bf16.gmra.mxu0 %v7790
    %v10712 = vpop.f32.mrf.mxu0
    %v10713 = vpop.f32.mrf.mxu0
    %10714 = vdwg.mxu0
    %10715 = vmatpush.bf16.msra.mxu0 %v9528
    %10716 = vmatpush.bf16.msra.mxu0 %v9524
    %10717 = vmatpush.bf16.msra.mxu0 %v9520
    %10718 = vmatpush.bf16.msra.mxu0 %v9516
    %10719 = vmatpush.bf16.msra.mxu0 %v9512
    %10720 = vmatpush.bf16.msra.mxu0 %v9508
    %10721 = vmatpush.bf16.msra.mxu0 %v9504
    %10722 = vmatpush.bf16.msra.mxu0 %v9500
    %10723 = vmatmul.bf16.gmra.mxu0 %v7775
    %v10724 = vpop.f32.mrf.mxu0
    %v10725 = vpop.f32.mrf.mxu0
    %v10726 = vadd.f32 %v10710, %v10725
    %10727 = vmatmul.bf16.gmra.mxu0 %v7791
    %v10728 = vpop.f32.mrf.mxu0
    %v10729 = vpop.f32.mrf.mxu0
    %10730 = vdwg.mxu0
    %10731 = vmatpush.bf16.msra.mxu0 %v9560
    %10732 = vmatpush.bf16.msra.mxu0 %v9556
    %10733 = vmatpush.bf16.msra.mxu0 %v9552
    %10734 = vmatpush.bf16.msra.mxu0 %v9548
    %10735 = vmatpush.bf16.msra.mxu0 %v9544
    %10736 = vmatpush.bf16.msra.mxu0 %v9540
    %10737 = vmatpush.bf16.msra.mxu0 %v9536
    %10738 = vmatpush.bf16.msra.mxu0 %v9532
    %10739 = vmatmul.bf16.gmra.mxu0 %v7776
    %v10740 = vpop.f32.mrf.mxu0
    %v10741 = vpop.f32.mrf.mxu0
    %v10742 = vadd.f32 %v10726, %v10741
    %10743 = vmatmul.bf16.gmra.mxu0 %v7792
    %v10744 = vpop.f32.mrf.mxu0
    %v10745 = vpop.f32.mrf.mxu0
    %10746 = vdwg.mxu0
    %10747 = vmatpush.bf16.msra.mxu0 %v9592
    %10748 = vmatpush.bf16.msra.mxu0 %v9588
    %10749 = vmatpush.bf16.msra.mxu0 %v9584
    %10750 = vmatpush.bf16.msra.mxu0 %v9580
    %10751 = vmatpush.bf16.msra.mxu0 %v9576
    %10752 = vmatpush.bf16.msra.mxu0 %v9572
    %10753 = vmatpush.bf16.msra.mxu0 %v9568
    %10754 = vmatpush.bf16.msra.mxu0 %v9564
    %10755 = vmatmul.bf16.gmra.mxu0 %v7777
    %v10756 = vpop.f32.mrf.mxu0
    %v10757 = vpop.f32.mrf.mxu0
    %v10758 = vadd.f32 %v10742, %v10757
    %10759 = vmatmul.bf16.gmra.mxu0 %v7793
    %v10760 = vpop.f32.mrf.mxu0
    %v10761 = vpop.f32.mrf.mxu0
    %10762 = vdwg.mxu0
    %10763 = vmatpush.bf16.msra.mxu0 %v9624
    %10764 = vmatpush.bf16.msra.mxu0 %v9620
    %10765 = vmatpush.bf16.msra.mxu0 %v9616
    %10766 = vmatpush.bf16.msra.mxu0 %v9612
    %10767 = vmatpush.bf16.msra.mxu0 %v9608
    %10768 = vmatpush.bf16.msra.mxu0 %v9604
    %10769 = vmatpush.bf16.msra.mxu0 %v9600
    %10770 = vmatpush.bf16.msra.mxu0 %v9596
    %10771 = vmatmul.bf16.gmra.mxu0 %v7778
    %v10772 = vpop.f32.mrf.mxu0
    %v10773 = vpop.f32.mrf.mxu0
    %v10774 = vadd.f32 %v10758, %v10773
    %10775 = vmatmul.bf16.gmra.mxu0 %v7794
    %v10776 = vpop.f32.mrf.mxu0
    %v10777 = vpop.f32.mrf.mxu0
    %10778 = vdwg.mxu0
    %10779 = vmatpush.bf16.msra.mxu0 %v9656
    %10780 = vmatpush.bf16.msra.mxu0 %v9652
    %10781 = vmatpush.bf16.msra.mxu0 %v9648
    %10782 = vmatpush.bf16.msra.mxu0 %v9644
    %10783 = vmatpush.bf16.msra.mxu0 %v9640
    %10784 = vmatpush.bf16.msra.mxu0 %v9636
    %10785 = vmatpush.bf16.msra.mxu0 %v9632
    %10786 = vmatpush.bf16.msra.mxu0 %v9628
    %10787 = vmatmul.bf16.gmra.mxu0 %v7779
    %v10788 = vpop.f32.mrf.mxu0
    %v10789 = vpop.f32.mrf.mxu0
    %v10790 = vadd.f32 %v10774, %v10789
    %10791 = vmatmul.bf16.gmra.mxu0 %v7795
    %v10792 = vpop.f32.mrf.mxu0
    %v10793 = vpop.f32.mrf.mxu0
    %10794 = vdwg.mxu0
    %10795 = vmatpush.bf16.msra.mxu0 %v9688
    %10796 = vmatpush.bf16.msra.mxu0 %v9684
    %10797 = vmatpush.bf16.msra.mxu0 %v9680
    %10798 = vmatpush.bf16.msra.mxu0 %v9676
    %10799 = vmatpush.bf16.msra.mxu0 %v9672
    %10800 = vmatpush.bf16.msra.mxu0 %v9668
    %10801 = vmatpush.bf16.msra.mxu0 %v9664
    %10802 = vmatpush.bf16.msra.mxu0 %v9660
    %10803 = vmatmul.bf16.gmra.mxu0 %v7780
    %v10804 = vpop.f32.mrf.mxu0
    %v10805 = vpop.f32.mrf.mxu0
    %v10806 = vadd.f32 %v10790, %v10805
    %10807 = vmatmul.bf16.gmra.mxu0 %v7796
    %v10808 = vpop.f32.mrf.mxu0
    %v10809 = vpop.f32.mrf.mxu0
    %10810 = vdwg.mxu0
    %10811 = vmatpush.bf16.msra.mxu0 %v9720
    %10812 = vmatpush.bf16.msra.mxu0 %v9716
    %10813 = vmatpush.bf16.msra.mxu0 %v9712
    %10814 = vmatpush.bf16.msra.mxu0 %v9708
    %10815 = vmatpush.bf16.msra.mxu0 %v9704
    %10816 = vmatpush.bf16.msra.mxu0 %v9700
    %10817 = vmatpush.bf16.msra.mxu0 %v9696
    %10818 = vmatpush.bf16.msra.mxu0 %v9692
    %10819 = vmatmul.bf16.gmra.mxu0 %v7781
    %v10820 = vpop.f32.mrf.mxu0
    %v10821 = vpop.f32.mrf.mxu0
    %v10822 = vadd.f32 %v10806, %v10821
    %10823 = vmatmul.bf16.gmra.mxu0 %v7797
    %v10824 = vpop.f32.mrf.mxu0
    %v10825 = vpop.f32.mrf.mxu0
    %10826 = vdwg.mxu0
    %10827 = vmatpush.bf16.msra.mxu0 %v9752
    %10828 = vmatpush.bf16.msra.mxu0 %v9748
    %10829 = vmatpush.bf16.msra.mxu0 %v9744
    %10830 = vmatpush.bf16.msra.mxu0 %v9740
    %10831 = vmatpush.bf16.msra.mxu0 %v9736
    %10832 = vmatpush.bf16.msra.mxu0 %v9732
    %10833 = vmatpush.bf16.msra.mxu0 %v9728
    %10834 = vmatpush.bf16.msra.mxu0 %v9724
    %10835 = vmatmul.bf16.gmra.mxu0 %v7782
    %v10836 = vpop.f32.mrf.mxu0
    %v10837 = vpop.f32.mrf.mxu0
    %v10838 = vadd.f32 %v10822, %v10837
    %10839 = vmatmul.bf16.gmra.mxu0 %v7798
    %v10840 = vpop.f32.mrf.mxu0
    %v10841 = vpop.f32.mrf.mxu0
    %10842 = vdwg.mxu0
    %10843 = vmatpush.bf16.msra.mxu0 %v9784
    %10844 = vmatpush.bf16.msra.mxu0 %v9780
    %10845 = vmatpush.bf16.msra.mxu0 %v9776
    %10846 = vmatpush.bf16.msra.mxu0 %v9772
    %10847 = vmatpush.bf16.msra.mxu0 %v9768
    %10848 = vmatpush.bf16.msra.mxu0 %v9764
    %10849 = vmatpush.bf16.msra.mxu0 %v9760
    %10850 = vmatpush.bf16.msra.mxu0 %v9756
    %10851 = vmatmul.bf16.gmra.mxu0 %v7783
    %v10852 = vpop.f32.mrf.mxu0
    %v10853 = vpop.f32.mrf.mxu0
    %v10854 = vadd.f32 %v10838, %v10853
    %10855 = vmatmul.bf16.gmra.mxu0 %v7799
    %v10856 = vpop.f32.mrf.mxu0
    %v10857 = vpop.f32.mrf.mxu0
    %10858 = vdwg.mxu0
    %10859 = vmatpush.bf16.msra.mxu0 %v9816
    %10860 = vmatpush.bf16.msra.mxu0 %v9812
    %10861 = vmatpush.bf16.msra.mxu0 %v9808
    %10862 = vmatpush.bf16.msra.mxu0 %v9804
    %10863 = vmatpush.bf16.msra.mxu0 %v9800
    %10864 = vmatpush.bf16.msra.mxu0 %v9796
    %10865 = vmatpush.bf16.msra.mxu0 %v9792
    %10866 = vmatpush.bf16.msra.mxu0 %v9788
    %10867 = vmatmul.bf16.gmra.mxu0 %v7784
    %v10868 = vpop.f32.mrf.mxu0
    %v10869 = vpop.f32.mrf.mxu0
    %v10870 = vadd.f32 %v10854, %v10869
    %10871 = vmatmul.bf16.gmra.mxu0 %v7800
    %v10872 = vpop.f32.mrf.mxu0
    %v10873 = vpop.f32.mrf.mxu0
    %10874 = vdwg.mxu0
    %10875 = vmatpush.bf16.msra.mxu0 %v9848
    %10876 = vmatpush.bf16.msra.mxu0 %v9844
    %10877 = vmatpush.bf16.msra.mxu0 %v9840
    %10878 = vmatpush.bf16.msra.mxu0 %v9836
    %10879 = vmatpush.bf16.msra.mxu0 %v9832
    %10880 = vmatpush.bf16.msra.mxu0 %v9828
    %10881 = vmatpush.bf16.msra.mxu0 %v9824
    %10882 = vmatpush.bf16.msra.mxu0 %v9820
    %10883 = vmatmul.bf16.gmra.mxu0 %v7785
    %v10884 = vpop.f32.mrf.mxu0
    %v10885 = vpop.f32.mrf.mxu0
    %v10886 = vadd.f32 %v10870, %v10885
    %10887 = vmatmul.bf16.gmra.mxu0 %v7801
    %v10888 = vpop.f32.mrf.mxu0
    %v10889 = vpop.f32.mrf.mxu0
    %10890 = vdwg.mxu0
    %10891 = vmatpush.bf16.msra.mxu0 %v9880
    %10892 = vmatpush.bf16.msra.mxu0 %v9876
    %10893 = vmatpush.bf16.msra.mxu0 %v9872
    %10894 = vmatpush.bf16.msra.mxu0 %v9868
    %10895 = vmatpush.bf16.msra.mxu0 %v9864
    %10896 = vmatpush.bf16.msra.mxu0 %v9860
    %10897 = vmatpush.bf16.msra.mxu0 %v9856
    %10898 = vmatpush.bf16.msra.mxu0 %v9852
    %10899 = vmatmul.bf16.gmra.mxu0 %v7786
    %v10900 = vpop.f32.mrf.mxu0
    %v10901 = vpop.f32.mrf.mxu0
    %v10902 = vadd.f32 %v10886, %v10901
    %10903 = vmatmul.bf16.gmra.mxu0 %v7802
    %v10904 = vpop.f32.mrf.mxu0
    %v10905 = vpop.f32.mrf.mxu0
    %10906 = vdwg.mxu0
    %10907 = vmatpush.bf16.msra.mxu0 %v9401
    %10908 = vmatpush.bf16.msra.mxu0 %v9397
    %10909 = vmatpush.bf16.msra.mxu0 %v9393
    %10910 = vmatpush.bf16.msra.mxu0 %v9389
    %10911 = vmatpush.bf16.msra.mxu0 %v9385
    %10912 = vmatpush.bf16.msra.mxu0 %v9381
    %10913 = vmatpush.bf16.msra.mxu0 %v9377
    %10914 = vmatpush.bf16.msra.mxu0 %v9373
    %10915 = vmatmul.bf16.gmra.mxu0 %v7771
    %v10916 = vpop.f32.mrf.mxu0
    %v10917 = vpop.f32.mrf.mxu0
    %10918 = vmatmul.bf16.gmra.mxu0 %v7787
    %v10919 = vpop.f32.mrf.mxu0
    %v10920 = vadd.f32 0.0, %v10919
    %v10921 = vpop.f32.mrf.mxu0
    %10922 = vdwg.mxu0
    %10923 = vmatpush.bf16.msra.mxu0 %v9433
    %10924 = vmatpush.bf16.msra.mxu0 %v9429
    %10925 = vmatpush.bf16.msra.mxu0 %v9425
    %10926 = vmatpush.bf16.msra.mxu0 %v9421
    %10927 = vmatpush.bf16.msra.mxu0 %v9417
    %10928 = vmatpush.bf16.msra.mxu0 %v9413
    %10929 = vmatpush.bf16.msra.mxu0 %v9409
    %10930 = vmatpush.bf16.msra.mxu0 %v9405
    %10931 = vmatmul.bf16.gmra.mxu0 %v7772
    %v10932 = vpop.f32.mrf.mxu0
    %v10933 = vpop.f32.mrf.mxu0
    %10934 = vmatmul.bf16.gmra.mxu0 %v7788
    %v10935 = vpop.f32.mrf.mxu0
    %v10936 = vadd.f32 %v10920, %v10935
    %v10937 = vpop.f32.mrf.mxu0
    %10938 = vdwg.mxu0
    %10939 = vmatpush.bf16.msra.mxu0 %v9465
    %10940 = vmatpush.bf16.msra.mxu0 %v9461
    %10941 = vmatpush.bf16.msra.mxu0 %v9457
    %10942 = vmatpush.bf16.msra.mxu0 %v9453
    %10943 = vmatpush.bf16.msra.mxu0 %v9449
    %10944 = vmatpush.bf16.msra.mxu0 %v9445
    %10945 = vmatpush.bf16.msra.mxu0 %v9441
    %10946 = vmatpush.bf16.msra.mxu0 %v9437
    %10947 = vmatmul.bf16.gmra.mxu0 %v7773
    %v10948 = vpop.f32.mrf.mxu0
    %v10949 = vpop.f32.mrf.mxu0
    %10950 = vmatmul.bf16.gmra.mxu0 %v7789
    %v10951 = vpop.f32.mrf.mxu0
    %v10952 = vadd.f32 %v10936, %v10951
    %v10953 = vpop.f32.mrf.mxu0
    %10954 = vdwg.mxu0
    %10955 = vmatpush.bf16.msra.mxu0 %v9497
    %10956 = vmatpush.bf16.msra.mxu0 %v9493
    %10957 = vmatpush.bf16.msra.mxu0 %v9489
    %10958 = vmatpush.bf16.msra.mxu0 %v9485
    %10959 = vmatpush.bf16.msra.mxu0 %v9481
    %10960 = vmatpush.bf16.msra.mxu0 %v9477
    %10961 = vmatpush.bf16.msra.mxu0 %v9473
    %10962 = vmatpush.bf16.msra.mxu0 %v9469
    %10963 = vmatmul.bf16.gmra.mxu0 %v7774
    %v10964 = vpop.f32.mrf.mxu0
    %v10965 = vpop.f32.mrf.mxu0
    %10966 = vmatmul.bf16.gmra.mxu0 %v7790
    %v10967 = vpop.f32.mrf.mxu0
    %v10968 = vadd.f32 %v10952, %v10967
    %v10969 = vpop.f32.mrf.mxu0
    %10970 = vdwg.mxu0
    %10971 = vmatpush.bf16.msra.mxu0 %v9529
    %10972 = vmatpush.bf16.msra.mxu0 %v9525
    %10973 = vmatpush.bf16.msra.mxu0 %v9521
    %10974 = vmatpush.bf16.msra.mxu0 %v9517
    %10975 = vmatpush.bf16.msra.mxu0 %v9513
    %10976 = vmatpush.bf16.msra.mxu0 %v9509
    %10977 = vmatpush.bf16.msra.mxu0 %v9505
    %10978 = vmatpush.bf16.msra.mxu0 %v9501
    %10979 = vmatmul.bf16.gmra.mxu0 %v7775
    %v10980 = vpop.f32.mrf.mxu0
    %v10981 = vpop.f32.mrf.mxu0
    %10982 = vmatmul.bf16.gmra.mxu0 %v7791
    %v10983 = vpop.f32.mrf.mxu0
    %v10984 = vadd.f32 %v10968, %v10983
    %v10985 = vpop.f32.mrf.mxu0
    %10986 = vdwg.mxu0
    %10987 = vmatpush.bf16.msra.mxu0 %v9561
    %10988 = vmatpush.bf16.msra.mxu0 %v9557
    %10989 = vmatpush.bf16.msra.mxu0 %v9553
    %10990 = vmatpush.bf16.msra.mxu0 %v9549
    %10991 = vmatpush.bf16.msra.mxu0 %v9545
    %10992 = vmatpush.bf16.msra.mxu0 %v9541
    %10993 = vmatpush.bf16.msra.mxu0 %v9537
    %10994 = vmatpush.bf16.msra.mxu0 %v9533
    %10995 = vmatmul.bf16.gmra.mxu0 %v7776
    %v10996 = vpop.f32.mrf.mxu0
    %v10997 = vpop.f32.mrf.mxu0
    %10998 = vmatmul.bf16.gmra.mxu0 %v7792
    %v10999 = vpop.f32.mrf.mxu0
    %v11000 = vadd.f32 %v10984, %v10999
    %v11001 = vpop.f32.mrf.mxu0
    %11002 = vdwg.mxu0
    %11003 = vmatpush.bf16.msra.mxu0 %v9593
    %11004 = vmatpush.bf16.msra.mxu0 %v9589
    %11005 = vmatpush.bf16.msra.mxu0 %v9585
    %11006 = vmatpush.bf16.msra.mxu0 %v9581
    %11007 = vmatpush.bf16.msra.mxu0 %v9577
    %11008 = vmatpush.bf16.msra.mxu0 %v9573
    %11009 = vmatpush.bf16.msra.mxu0 %v9569
    %11010 = vmatpush.bf16.msra.mxu0 %v9565
    %11011 = vmatmul.bf16.gmra.mxu0 %v7777
    %v11012 = vpop.f32.mrf.mxu0
    %v11013 = vpop.f32.mrf.mxu0
    %11014 = vmatmul.bf16.gmra.mxu0 %v7793
    %v11015 = vpop.f32.mrf.mxu0
    %v11016 = vadd.f32 %v11000, %v11015
    %v11017 = vpop.f32.mrf.mxu0
    %11018 = vdwg.mxu0
    %11019 = vmatpush.bf16.msra.mxu0 %v9625
    %11020 = vmatpush.bf16.msra.mxu0 %v9621
    %11021 = vmatpush.bf16.msra.mxu0 %v9617
    %11022 = vmatpush.bf16.msra.mxu0 %v9613
    %11023 = vmatpush.bf16.msra.mxu0 %v9609
    %11024 = vmatpush.bf16.msra.mxu0 %v9605
    %11025 = vmatpush.bf16.msra.mxu0 %v9601
    %11026 = vmatpush.bf16.msra.mxu0 %v9597
    %11027 = vmatmul.bf16.gmra.mxu0 %v7778
    %v11028 = vpop.f32.mrf.mxu0
    %v11029 = vpop.f32.mrf.mxu0
    %11030 = vmatmul.bf16.gmra.mxu0 %v7794
    %v11031 = vpop.f32.mrf.mxu0
    %v11032 = vadd.f32 %v11016, %v11031
    %v11033 = vpop.f32.mrf.mxu0
    %11034 = vdwg.mxu0
    %11035 = vmatpush.bf16.msra.mxu0 %v9657
    %11036 = vmatpush.bf16.msra.mxu0 %v9653
    %11037 = vmatpush.bf16.msra.mxu0 %v9649
    %11038 = vmatpush.bf16.msra.mxu0 %v9645
    %11039 = vmatpush.bf16.msra.mxu0 %v9641
    %11040 = vmatpush.bf16.msra.mxu0 %v9637
    %11041 = vmatpush.bf16.msra.mxu0 %v9633
    %11042 = vmatpush.bf16.msra.mxu0 %v9629
    %11043 = vmatmul.bf16.gmra.mxu0 %v7779
    %v11044 = vpop.f32.mrf.mxu0
    %v11045 = vpop.f32.mrf.mxu0
    %11046 = vmatmul.bf16.gmra.mxu0 %v7795
    %v11047 = vpop.f32.mrf.mxu0
    %v11048 = vadd.f32 %v11032, %v11047
    %v11049 = vpop.f32.mrf.mxu0
    %11050 = vdwg.mxu0
    %11051 = vmatpush.bf16.msra.mxu0 %v9689
    %11052 = vmatpush.bf16.msra.mxu0 %v9685
    %11053 = vmatpush.bf16.msra.mxu0 %v9681
    %11054 = vmatpush.bf16.msra.mxu0 %v9677
    %11055 = vmatpush.bf16.msra.mxu0 %v9673
    %11056 = vmatpush.bf16.msra.mxu0 %v9669
    %11057 = vmatpush.bf16.msra.mxu0 %v9665
    %11058 = vmatpush.bf16.msra.mxu0 %v9661
    %11059 = vmatmul.bf16.gmra.mxu0 %v7780
    %v11060 = vpop.f32.mrf.mxu0
    %v11061 = vpop.f32.mrf.mxu0
    %11062 = vmatmul.bf16.gmra.mxu0 %v7796
    %v11063 = vpop.f32.mrf.mxu0
    %v11064 = vadd.f32 %v11048, %v11063
    %v11065 = vpop.f32.mrf.mxu0
    %11066 = vdwg.mxu0
    %11067 = vmatpush.bf16.msra.mxu0 %v9721
    %11068 = vmatpush.bf16.msra.mxu0 %v9717
    %11069 = vmatpush.bf16.msra.mxu0 %v9713
    %11070 = vmatpush.bf16.msra.mxu0 %v9709
    %11071 = vmatpush.bf16.msra.mxu0 %v9705
    %11072 = vmatpush.bf16.msra.mxu0 %v9701
    %11073 = vmatpush.bf16.msra.mxu0 %v9697
    %11074 = vmatpush.bf16.msra.mxu0 %v9693
    %11075 = vmatmul.bf16.gmra.mxu0 %v7781
    %v11076 = vpop.f32.mrf.mxu0
    %v11077 = vpop.f32.mrf.mxu0
    %11078 = vmatmul.bf16.gmra.mxu0 %v7797
    %v11079 = vpop.f32.mrf.mxu0
    %v11080 = vadd.f32 %v11064, %v11079
    %v11081 = vpop.f32.mrf.mxu0
    %11082 = vdwg.mxu0
    %11083 = vmatpush.bf16.msra.mxu0 %v9753
    %11084 = vmatpush.bf16.msra.mxu0 %v9749
    %11085 = vmatpush.bf16.msra.mxu0 %v9745
    %11086 = vmatpush.bf16.msra.mxu0 %v9741
    %11087 = vmatpush.bf16.msra.mxu0 %v9737
    %11088 = vmatpush.bf16.msra.mxu0 %v9733
    %11089 = vmatpush.bf16.msra.mxu0 %v9729
    %11090 = vmatpush.bf16.msra.mxu0 %v9725
    %11091 = vmatmul.bf16.gmra.mxu0 %v7782
    %v11092 = vpop.f32.mrf.mxu0
    %v11093 = vpop.f32.mrf.mxu0
    %11094 = vmatmul.bf16.gmra.mxu0 %v7798
    %v11095 = vpop.f32.mrf.mxu0
    %v11096 = vadd.f32 %v11080, %v11095
    %v11097 = vpop.f32.mrf.mxu0
    %11098 = vdwg.mxu0
    %11099 = vmatpush.bf16.msra.mxu0 %v9785
    %11100 = vmatpush.bf16.msra.mxu0 %v9781
    %11101 = vmatpush.bf16.msra.mxu0 %v9777
    %11102 = vmatpush.bf16.msra.mxu0 %v9773
    %11103 = vmatpush.bf16.msra.mxu0 %v9769
    %11104 = vmatpush.bf16.msra.mxu0 %v9765
    %11105 = vmatpush.bf16.msra.mxu0 %v9761
    %11106 = vmatpush.bf16.msra.mxu0 %v9757
    %11107 = vmatmul.bf16.gmra.mxu0 %v7783
    %v11108 = vpop.f32.mrf.mxu0
    %v11109 = vpop.f32.mrf.mxu0
    %11110 = vmatmul.bf16.gmra.mxu0 %v7799
    %v11111 = vpop.f32.mrf.mxu0
    %v11112 = vadd.f32 %v11096, %v11111
    %v11113 = vpop.f32.mrf.mxu0
    %11114 = vdwg.mxu0
    %11115 = vmatpush.bf16.msra.mxu0 %v9817
    %11116 = vmatpush.bf16.msra.mxu0 %v9813
    %11117 = vmatpush.bf16.msra.mxu0 %v9809
    %11118 = vmatpush.bf16.msra.mxu0 %v9805
    %11119 = vmatpush.bf16.msra.mxu0 %v9801
    %11120 = vmatpush.bf16.msra.mxu0 %v9797
    %11121 = vmatpush.bf16.msra.mxu0 %v9793
    %11122 = vmatpush.bf16.msra.mxu0 %v9789
    %11123 = vmatmul.bf16.gmra.mxu0 %v7784
    %v11124 = vpop.f32.mrf.mxu0
    %v11125 = vpop.f32.mrf.mxu0
    %11126 = vmatmul.bf16.gmra.mxu0 %v7800
    %v11127 = vpop.f32.mrf.mxu0
    %v11128 = vadd.f32 %v11112, %v11127
    %v11129 = vpop.f32.mrf.mxu0
    %11130 = vdwg.mxu0
    %11131 = vmatpush.bf16.msra.mxu0 %v9849
    %11132 = vmatpush.bf16.msra.mxu0 %v9845
    %11133 = vmatpush.bf16.msra.mxu0 %v9841
    %11134 = vmatpush.bf16.msra.mxu0 %v9837
    %11135 = vmatpush.bf16.msra.mxu0 %v9833
    %11136 = vmatpush.bf16.msra.mxu0 %v9829
    %11137 = vmatpush.bf16.msra.mxu0 %v9825
    %11138 = vmatpush.bf16.msra.mxu0 %v9821
    %11139 = vmatmul.bf16.gmra.mxu0 %v7785
    %v11140 = vpop.f32.mrf.mxu0
    %v11141 = vpop.f32.mrf.mxu0
    %11142 = vmatmul.bf16.gmra.mxu0 %v7801
    %v11143 = vpop.f32.mrf.mxu0
    %v11144 = vadd.f32 %v11128, %v11143
    %v11145 = vpop.f32.mrf.mxu0
    %11146 = vdwg.mxu0
    %11147 = vmatpush.bf16.msra.mxu0 %v9881
    %11148 = vmatpush.bf16.msra.mxu0 %v9877
    %11149 = vmatpush.bf16.msra.mxu0 %v9873
    %11150 = vmatpush.bf16.msra.mxu0 %v9869
    %11151 = vmatpush.bf16.msra.mxu0 %v9865
    %11152 = vmatpush.bf16.msra.mxu0 %v9861
    %11153 = vmatpush.bf16.msra.mxu0 %v9857
    %11154 = vmatpush.bf16.msra.mxu0 %v9853
    %11155 = vmatmul.bf16.gmra.mxu0 %v7786
    %v11156 = vpop.f32.mrf.mxu0
    %v11157 = vpop.f32.mrf.mxu0
    %11158 = vmatmul.bf16.gmra.mxu0 %v7802
    %v11159 = vpop.f32.mrf.mxu0
    %v11160 = vadd.f32 %v11144, %v11159
    %v11161 = vpop.f32.mrf.mxu0
    %11162 = vdwg.mxu0
    %11163 = vmatpush.bf16.msra.mxu0 %v9402
    %11164 = vmatpush.bf16.msra.mxu0 %v9398
    %11165 = vmatpush.bf16.msra.mxu0 %v9394
    %11166 = vmatpush.bf16.msra.mxu0 %v9390
    %11167 = vmatpush.bf16.msra.mxu0 %v9386
    %11168 = vmatpush.bf16.msra.mxu0 %v9382
    %11169 = vmatpush.bf16.msra.mxu0 %v9378
    %11170 = vmatpush.bf16.msra.mxu0 %v9374
    %11171 = vmatmul.bf16.gmra.mxu0 %v7771
    %v11172 = vpop.f32.mrf.mxu0
    %v11173 = vpop.f32.mrf.mxu0
    %11174 = vmatmul.bf16.gmra.mxu0 %v7787
    %v11175 = vpop.f32.mrf.mxu0
    %v11176 = vpop.f32.mrf.mxu0
    %v11177 = vadd.f32 0.0, %v11176
    %11178 = vdwg.mxu0
    %11179 = vmatpush.bf16.msra.mxu0 %v9434
    %11180 = vmatpush.bf16.msra.mxu0 %v9430
    %11181 = vmatpush.bf16.msra.mxu0 %v9426
    %11182 = vmatpush.bf16.msra.mxu0 %v9422
    %11183 = vmatpush.bf16.msra.mxu0 %v9418
    %11184 = vmatpush.bf16.msra.mxu0 %v9414
    %11185 = vmatpush.bf16.msra.mxu0 %v9410
    %11186 = vmatpush.bf16.msra.mxu0 %v9406
    %11187 = vmatmul.bf16.gmra.mxu0 %v7772
    %v11188 = vpop.f32.mrf.mxu0
    %v11189 = vpop.f32.mrf.mxu0
    %11190 = vmatmul.bf16.gmra.mxu0 %v7788
    %v11191 = vpop.f32.mrf.mxu0
    %v11192 = vpop.f32.mrf.mxu0
    %v11193 = vadd.f32 %v11177, %v11192
    %11194 = vdwg.mxu0
    %11195 = vmatpush.bf16.msra.mxu0 %v9466
    %11196 = vmatpush.bf16.msra.mxu0 %v9462
    %11197 = vmatpush.bf16.msra.mxu0 %v9458
    %11198 = vmatpush.bf16.msra.mxu0 %v9454
    %11199 = vmatpush.bf16.msra.mxu0 %v9450
    %11200 = vmatpush.bf16.msra.mxu0 %v9446
    %11201 = vmatpush.bf16.msra.mxu0 %v9442
    %11202 = vmatpush.bf16.msra.mxu0 %v9438
    %11203 = vmatmul.bf16.gmra.mxu0 %v7773
    %v11204 = vpop.f32.mrf.mxu0
    %v11205 = vpop.f32.mrf.mxu0
    %11206 = vmatmul.bf16.gmra.mxu0 %v7789
    %v11207 = vpop.f32.mrf.mxu0
    %v11208 = vpop.f32.mrf.mxu0
    %v11209 = vadd.f32 %v11193, %v11208
    %11210 = vdwg.mxu0
    %11211 = vmatpush.bf16.msra.mxu0 %v9498
    %11212 = vmatpush.bf16.msra.mxu0 %v9494
    %11213 = vmatpush.bf16.msra.mxu0 %v9490
    %11214 = vmatpush.bf16.msra.mxu0 %v9486
    %11215 = vmatpush.bf16.msra.mxu0 %v9482
    %11216 = vmatpush.bf16.msra.mxu0 %v9478
    %11217 = vmatpush.bf16.msra.mxu0 %v9474
    %11218 = vmatpush.bf16.msra.mxu0 %v9470
    %11219 = vmatmul.bf16.gmra.mxu0 %v7774
    %v11220 = vpop.f32.mrf.mxu0
    %v11221 = vpop.f32.mrf.mxu0
    %11222 = vmatmul.bf16.gmra.mxu0 %v7790
    %v11223 = vpop.f32.mrf.mxu0
    %v11224 = vpop.f32.mrf.mxu0
    %v11225 = vadd.f32 %v11209, %v11224
    %11226 = vdwg.mxu0
    %11227 = vmatpush.bf16.msra.mxu0 %v9530
    %11228 = vmatpush.bf16.msra.mxu0 %v9526
    %11229 = vmatpush.bf16.msra.mxu0 %v9522
    %11230 = vmatpush.bf16.msra.mxu0 %v9518
    %11231 = vmatpush.bf16.msra.mxu0 %v9514
    %11232 = vmatpush.bf16.msra.mxu0 %v9510
    %11233 = vmatpush.bf16.msra.mxu0 %v9506
    %11234 = vmatpush.bf16.msra.mxu0 %v9502
    %11235 = vmatmul.bf16.gmra.mxu0 %v7775
    %v11236 = vpop.f32.mrf.mxu0
    %v11237 = vpop.f32.mrf.mxu0
    %11238 = vmatmul.bf16.gmra.mxu0 %v7791
    %v11239 = vpop.f32.mrf.mxu0
    %v11240 = vpop.f32.mrf.mxu0
    %v11241 = vadd.f32 %v11225, %v11240
    %11242 = vdwg.mxu0
    %11243 = vmatpush.bf16.msra.mxu0 %v9562
    %11244 = vmatpush.bf16.msra.mxu0 %v9558
    %11245 = vmatpush.bf16.msra.mxu0 %v9554
    %11246 = vmatpush.bf16.msra.mxu0 %v9550
    %11247 = vmatpush.bf16.msra.mxu0 %v9546
    %11248 = vmatpush.bf16.msra.mxu0 %v9542
    %11249 = vmatpush.bf16.msra.mxu0 %v9538
    %11250 = vmatpush.bf16.msra.mxu0 %v9534
    %11251 = vmatmul.bf16.gmra.mxu0 %v7776
    %v11252 = vpop.f32.mrf.mxu0
    %v11253 = vpop.f32.mrf.mxu0
    %11254 = vmatmul.bf16.gmra.mxu0 %v7792
    %v11255 = vpop.f32.mrf.mxu0
    %v11256 = vpop.f32.mrf.mxu0
    %v11257 = vadd.f32 %v11241, %v11256
    %11258 = vdwg.mxu0
    %11259 = vmatpush.bf16.msra.mxu0 %v9594
    %11260 = vmatpush.bf16.msra.mxu0 %v9590
    %11261 = vmatpush.bf16.msra.mxu0 %v9586
    %11262 = vmatpush.bf16.msra.mxu0 %v9582
    %11263 = vmatpush.bf16.msra.mxu0 %v9578
    %11264 = vmatpush.bf16.msra.mxu0 %v9574
    %11265 = vmatpush.bf16.msra.mxu0 %v9570
    %11266 = vmatpush.bf16.msra.mxu0 %v9566
    %11267 = vmatmul.bf16.gmra.mxu0 %v7777
    %v11268 = vpop.f32.mrf.mxu0
    %v11269 = vpop.f32.mrf.mxu0
    %11270 = vmatmul.bf16.gmra.mxu0 %v7793
    %v11271 = vpop.f32.mrf.mxu0
    %v11272 = vpop.f32.mrf.mxu0
    %v11273 = vadd.f32 %v11257, %v11272
    %11274 = vdwg.mxu0
    %11275 = vmatpush.bf16.msra.mxu0 %v9626
    %11276 = vmatpush.bf16.msra.mxu0 %v9622
    %11277 = vmatpush.bf16.msra.mxu0 %v9618
    %11278 = vmatpush.bf16.msra.mxu0 %v9614
    %11279 = vmatpush.bf16.msra.mxu0 %v9610
    %11280 = vmatpush.bf16.msra.mxu0 %v9606
    %11281 = vmatpush.bf16.msra.mxu0 %v9602
    %11282 = vmatpush.bf16.msra.mxu0 %v9598
    %11283 = vmatmul.bf16.gmra.mxu0 %v7778
    %v11284 = vpop.f32.mrf.mxu0
    %v11285 = vpop.f32.mrf.mxu0
    %11286 = vmatmul.bf16.gmra.mxu0 %v7794
    %v11287 = vpop.f32.mrf.mxu0
    %v11288 = vpop.f32.mrf.mxu0
    %v11289 = vadd.f32 %v11273, %v11288
    %11290 = vdwg.mxu0
    %11291 = vmatpush.bf16.msra.mxu0 %v9658
    %11292 = vmatpush.bf16.msra.mxu0 %v9654
    %11293 = vmatpush.bf16.msra.mxu0 %v9650
    %11294 = vmatpush.bf16.msra.mxu0 %v9646
    %11295 = vmatpush.bf16.msra.mxu0 %v9642
    %11296 = vmatpush.bf16.msra.mxu0 %v9638
    %11297 = vmatpush.bf16.msra.mxu0 %v9634
    %11298 = vmatpush.bf16.msra.mxu0 %v9630
    %11299 = vmatmul.bf16.gmra.mxu0 %v7779
    %v11300 = vpop.f32.mrf.mxu0
    %v11301 = vpop.f32.mrf.mxu0
    %11302 = vmatmul.bf16.gmra.mxu0 %v7795
    %v11303 = vpop.f32.mrf.mxu0
    %v11304 = vpop.f32.mrf.mxu0
    %v11305 = vadd.f32 %v11289, %v11304
    %11306 = vdwg.mxu0
    %11307 = vmatpush.bf16.msra.mxu0 %v9690
    %11308 = vmatpush.bf16.msra.mxu0 %v9686
    %11309 = vmatpush.bf16.msra.mxu0 %v9682
    %11310 = vmatpush.bf16.msra.mxu0 %v9678
    %11311 = vmatpush.bf16.msra.mxu0 %v9674
    %11312 = vmatpush.bf16.msra.mxu0 %v9670
    %11313 = vmatpush.bf16.msra.mxu0 %v9666
    %11314 = vmatpush.bf16.msra.mxu0 %v9662
    %11315 = vmatmul.bf16.gmra.mxu0 %v7780
    %v11316 = vpop.f32.mrf.mxu0
    %v11317 = vpop.f32.mrf.mxu0
    %11318 = vmatmul.bf16.gmra.mxu0 %v7796
    %v11319 = vpop.f32.mrf.mxu0
    %v11320 = vpop.f32.mrf.mxu0
    %v11321 = vadd.f32 %v11305, %v11320
    %11322 = vdwg.mxu0
    %11323 = vmatpush.bf16.msra.mxu0 %v9722
    %11324 = vmatpush.bf16.msra.mxu0 %v9718
    %11325 = vmatpush.bf16.msra.mxu0 %v9714
    %11326 = vmatpush.bf16.msra.mxu0 %v9710
    %11327 = vmatpush.bf16.msra.mxu0 %v9706
    %11328 = vmatpush.bf16.msra.mxu0 %v9702
    %11329 = vmatpush.bf16.msra.mxu0 %v9698
    %11330 = vmatpush.bf16.msra.mxu0 %v9694
    %11331 = vmatmul.bf16.gmra.mxu0 %v7781
    %v11332 = vpop.f32.mrf.mxu0
    %v11333 = vpop.f32.mrf.mxu0
    %11334 = vmatmul.bf16.gmra.mxu0 %v7797
    %v11335 = vpop.f32.mrf.mxu0
    %v11336 = vpop.f32.mrf.mxu0
    %v11337 = vadd.f32 %v11321, %v11336
    %11338 = vdwg.mxu0
    %11339 = vmatpush.bf16.msra.mxu0 %v9754
    %11340 = vmatpush.bf16.msra.mxu0 %v9750
    %11341 = vmatpush.bf16.msra.mxu0 %v9746
    %11342 = vmatpush.bf16.msra.mxu0 %v9742
    %11343 = vmatpush.bf16.msra.mxu0 %v9738
    %11344 = vmatpush.bf16.msra.mxu0 %v9734
    %11345 = vmatpush.bf16.msra.mxu0 %v9730
    %11346 = vmatpush.bf16.msra.mxu0 %v9726
    %11347 = vmatmul.bf16.gmra.mxu0 %v7782
    %v11348 = vpop.f32.mrf.mxu0
    %v11349 = vpop.f32.mrf.mxu0
    %11350 = vmatmul.bf16.gmra.mxu0 %v7798
    %v11351 = vpop.f32.mrf.mxu0
    %v11352 = vpop.f32.mrf.mxu0
    %v11353 = vadd.f32 %v11337, %v11352
    %11354 = vdwg.mxu0
    %11355 = vmatpush.bf16.msra.mxu0 %v9786
    %11356 = vmatpush.bf16.msra.mxu0 %v9782
    %11357 = vmatpush.bf16.msra.mxu0 %v9778
    %11358 = vmatpush.bf16.msra.mxu0 %v9774
    %11359 = vmatpush.bf16.msra.mxu0 %v9770
    %11360 = vmatpush.bf16.msra.mxu0 %v9766
    %11361 = vmatpush.bf16.msra.mxu0 %v9762
    %11362 = vmatpush.bf16.msra.mxu0 %v9758
    %11363 = vmatmul.bf16.gmra.mxu0 %v7783
    %v11364 = vpop.f32.mrf.mxu0
    %v11365 = vpop.f32.mrf.mxu0
    %11366 = vmatmul.bf16.gmra.mxu0 %v7799
    %v11367 = vpop.f32.mrf.mxu0
    %v11368 = vpop.f32.mrf.mxu0
    %v11369 = vadd.f32 %v11353, %v11368
    %11370 = vdwg.mxu0
    %11371 = vmatpush.bf16.msra.mxu0 %v9818
    %11372 = vmatpush.bf16.msra.mxu0 %v9814
    %11373 = vmatpush.bf16.msra.mxu0 %v9810
    %11374 = vmatpush.bf16.msra.mxu0 %v9806
    %11375 = vmatpush.bf16.msra.mxu0 %v9802
    %11376 = vmatpush.bf16.msra.mxu0 %v9798
    %11377 = vmatpush.bf16.msra.mxu0 %v9794
    %11378 = vmatpush.bf16.msra.mxu0 %v9790
    %11379 = vmatmul.bf16.gmra.mxu0 %v7784
    %v11380 = vpop.f32.mrf.mxu0
    %v11381 = vpop.f32.mrf.mxu0
    %11382 = vmatmul.bf16.gmra.mxu0 %v7800
    %v11383 = vpop.f32.mrf.mxu0
    %v11384 = vpop.f32.mrf.mxu0
    %v11385 = vadd.f32 %v11369, %v11384
    %11386 = vdwg.mxu0
    %11387 = vmatpush.bf16.msra.mxu0 %v9850
    %11388 = vmatpush.bf16.msra.mxu0 %v9846
    %11389 = vmatpush.bf16.msra.mxu0 %v9842
    %11390 = vmatpush.bf16.msra.mxu0 %v9838
    %11391 = vmatpush.bf16.msra.mxu0 %v9834
    %11392 = vmatpush.bf16.msra.mxu0 %v9830
    %11393 = vmatpush.bf16.msra.mxu0 %v9826
    %11394 = vmatpush.bf16.msra.mxu0 %v9822
    %11395 = vmatmul.bf16.gmra.mxu0 %v7785
    %v11396 = vpop.f32.mrf.mxu0
    %v11397 = vpop.f32.mrf.mxu0
    %11398 = vmatmul.bf16.gmra.mxu0 %v7801
    %v11399 = vpop.f32.mrf.mxu0
    %v11400 = vpop.f32.mrf.mxu0
    %v11401 = vadd.f32 %v11385, %v11400
    %11402 = vdwg.mxu0
    %11403 = vmatpush.bf16.msra.mxu0 %v9882
    %11404 = vmatpush.bf16.msra.mxu0 %v9878
    %11405 = vmatpush.bf16.msra.mxu0 %v9874
    %11406 = vmatpush.bf16.msra.mxu0 %v9870
    %11407 = vmatpush.bf16.msra.mxu0 %v9866
    %11408 = vmatpush.bf16.msra.mxu0 %v9862
    %11409 = vmatpush.bf16.msra.mxu0 %v9858
    %11410 = vmatpush.bf16.msra.mxu0 %v9854
    %11411 = vmatmul.bf16.gmra.mxu0 %v7786
    %v11412 = vpop.f32.mrf.mxu0
    %v11413 = vpop.f32.mrf.mxu0
    %11414 = vmatmul.bf16.gmra.mxu0 %v7802
    %v11415 = vpop.f32.mrf.mxu0
    %v11416 = vpop.f32.mrf.mxu0
    %v11417 = vadd.f32 %v11401, %v11416
    %11418 = vdwg.mxu0
    %v11419 = vld [vmem:[%s4] sm:$0xf]
    %v11420 = vld [vmem:[%s4 + $0x4] sm:$0xf]
    %v11421 = vld [vmem:[%s4 + $0x8] sm:$0xf]
    %v11422 = vld [vmem:[%s4 + $0xc] sm:$0xf]
    %v11423 = vld [vmem:[%s4 + $0x10] sm:$0xf]
    %v11424 = vld [vmem:[%s4 + $0x14] sm:$0xf]
    %v11425 = vld [vmem:[%s4 + $0x18] sm:$0xf]
    %v11426 = vld [vmem:[%s4 + $0x1c] sm:$0xf]
    %v11427 = vld [vmem:[%s4 + $0x20] sm:$0xf]
    %v11428 = vld [vmem:[%s4 + $0x24] sm:$0xf]
    %v11429 = vld [vmem:[%s4 + $0x28] sm:$0xf]
    %v11430 = vld [vmem:[%s4 + $0x2c] sm:$0xf]
    %v11431 = vld [vmem:[%s4 + $0x30] sm:$0xf]
    %v11432 = vld [vmem:[%s4 + $0x34] sm:$0xf]
    %v11433 = vld [vmem:[%s4 + $0x38] sm:$0xf]
    %v11434 = vld [vmem:[%s4 + $0x3c] sm:$0xf]
    %v11435 = vld [vmem:[%s4 + $0x40] sm:$0xf]
    %v11436 = vld [vmem:[%s4 + $0x44] sm:$0xf]
    %v11437 = vld [vmem:[%s4 + $0x48] sm:$0xf]
    %v11438 = vld [vmem:[%s4 + $0x4c] sm:$0xf]
    %v11439 = vld [vmem:[%s4 + $0x50] sm:$0xf]
    %v11440 = vld [vmem:[%s4 + $0x54] sm:$0xf]
    %v11441 = vld [vmem:[%s4 + $0x58] sm:$0xf]
    %v11442 = vld [vmem:[%s4 + $0x5c] sm:$0xf]
    %v11443 = vld [vmem:[%s4 + $0x60] sm:$0xf]
    %v11444 = vld [vmem:[%s4 + $0x64] sm:$0xf]
    %v11445 = vld [vmem:[%s4 + $0x68] sm:$0xf]
    %v11446 = vld [vmem:[%s4 + $0x6c] sm:$0xf]
    %v11447 = vld [vmem:[%s4 + $0x70] sm:$0xf]
    %v11448 = vld [vmem:[%s4 + $0x74] sm:$0xf]
    %v11449 = vld [vmem:[%s4 + $0x78] sm:$0xf]
    %v11450 = vld [vmem:[%s4 + $0x7c] sm:$0xf]
    %v11451 = vld [vmem:[%s4 + $0x80] sm:$0xf]
    %v11452 = vld [vmem:[%s4 + $0x84] sm:$0xf]
    %v11453 = vld [vmem:[%s4 + $0x88] sm:$0xf]
    %v11454 = vld [vmem:[%s4 + $0x8c] sm:$0xf]
    %v11455 = vld [vmem:[%s4 + $0x90] sm:$0xf]
    %v11456 = vld [vmem:[%s4 + $0x94] sm:$0xf]
    %v11457 = vld [vmem:[%s4 + $0x98] sm:$0xf]
    %v11458 = vld [vmem:[%s4 + $0x9c] sm:$0xf]
    %v11459 = vld [vmem:[%s4 + $0xa0] sm:$0xf]
    %v11460 = vld [vmem:[%s4 + $0xa4] sm:$0xf]
    %v11461 = vld [vmem:[%s4 + $0xa8] sm:$0xf]
    %v11462 = vld [vmem:[%s4 + $0xac] sm:$0xf]
    %v11463 = vld [vmem:[%s4 + $0xb0] sm:$0xf]
    %v11464 = vld [vmem:[%s4 + $0xb4] sm:$0xf]
    %v11465 = vld [vmem:[%s4 + $0xb8] sm:$0xf]
    %v11466 = vld [vmem:[%s4 + $0xbc] sm:$0xf]
    %v11467 = vld [vmem:[%s4 + $0xc0] sm:$0xf]
    %v11468 = vld [vmem:[%s4 + $0xc4] sm:$0xf]
    %v11469 = vld [vmem:[%s4 + $0xc8] sm:$0xf]
    %v11470 = vld [vmem:[%s4 + $0xcc] sm:$0xf]
    %v11471 = vld [vmem:[%s4 + $0xd0] sm:$0xf]
    %v11472 = vld [vmem:[%s4 + $0xd4] sm:$0xf]
    %v11473 = vld [vmem:[%s4 + $0xd8] sm:$0xf]
    %v11474 = vld [vmem:[%s4 + $0xdc] sm:$0xf]
    %v11475 = vld [vmem:[%s4 + $0xe0] sm:$0xf]
    %v11476 = vld [vmem:[%s4 + $0xe4] sm:$0xf]
    %v11477 = vld [vmem:[%s4 + $0xe8] sm:$0xf]
    %v11478 = vld [vmem:[%s4 + $0xec] sm:$0xf]
    %v11479 = vld [vmem:[%s4 + $0xf0] sm:$0xf]
    %v11480 = vld [vmem:[%s4 + $0xf4] sm:$0xf]
    %v11481 = vld [vmem:[%s4 + $0xf8] sm:$0xf]
    %v11482 = vld [vmem:[%s4 + $0xfc] sm:$0xf]
    %v11483 = vld [vmem:[%s4 + $0x100] sm:$0xf]
    %v11484 = vld [vmem:[%s4 + $0x104] sm:$0xf]
    %v11485 = vld [vmem:[%s4 + $0x108] sm:$0xf]
    %v11486 = vld [vmem:[%s4 + $0x10c] sm:$0xf]
    %v11487 = vld [vmem:[%s4 + $0x110] sm:$0xf]
    %v11488 = vld [vmem:[%s4 + $0x114] sm:$0xf]
    %v11489 = vld [vmem:[%s4 + $0x118] sm:$0xf]
    %v11490 = vld [vmem:[%s4 + $0x11c] sm:$0xf]
    %v11491 = vld [vmem:[%s4 + $0x120] sm:$0xf]
    %v11492 = vld [vmem:[%s4 + $0x124] sm:$0xf]
    %v11493 = vld [vmem:[%s4 + $0x128] sm:$0xf]
    %v11494 = vld [vmem:[%s4 + $0x12c] sm:$0xf]
    %v11495 = vld [vmem:[%s4 + $0x130] sm:$0xf]
    %v11496 = vld [vmem:[%s4 + $0x134] sm:$0xf]
    %v11497 = vld [vmem:[%s4 + $0x138] sm:$0xf]
    %v11498 = vld [vmem:[%s4 + $0x13c] sm:$0xf]
    %v11499 = vld [vmem:[%s4 + $0x140] sm:$0xf]
    %v11500 = vld [vmem:[%s4 + $0x144] sm:$0xf]
    %v11501 = vld [vmem:[%s4 + $0x148] sm:$0xf]
    %v11502 = vld [vmem:[%s4 + $0x14c] sm:$0xf]
    %v11503 = vld [vmem:[%s4 + $0x150] sm:$0xf]
    %v11504 = vld [vmem:[%s4 + $0x154] sm:$0xf]
    %v11505 = vld [vmem:[%s4 + $0x158] sm:$0xf]
    %v11506 = vld [vmem:[%s4 + $0x15c] sm:$0xf]
    %v11507 = vld [vmem:[%s4 + $0x160] sm:$0xf]
    %v11508 = vld [vmem:[%s4 + $0x164] sm:$0xf]
    %v11509 = vld [vmem:[%s4 + $0x168] sm:$0xf]
    %v11510 = vld [vmem:[%s4 + $0x16c] sm:$0xf]
    %v11511 = vld [vmem:[%s4 + $0x170] sm:$0xf]
    %v11512 = vld [vmem:[%s4 + $0x174] sm:$0xf]
    %v11513 = vld [vmem:[%s4 + $0x178] sm:$0xf]
    %v11514 = vld [vmem:[%s4 + $0x17c] sm:$0xf]
    %v11515 = vld [vmem:[%s4 + $0x180] sm:$0xf]
    %v11516 = vld [vmem:[%s4 + $0x184] sm:$0xf]
    %v11517 = vld [vmem:[%s4 + $0x188] sm:$0xf]
    %v11518 = vld [vmem:[%s4 + $0x18c] sm:$0xf]
    %v11519 = vld [vmem:[%s4 + $0x190] sm:$0xf]
    %v11520 = vld [vmem:[%s4 + $0x194] sm:$0xf]
    %v11521 = vld [vmem:[%s4 + $0x198] sm:$0xf]
    %v11522 = vld [vmem:[%s4 + $0x19c] sm:$0xf]
    %v11523 = vld [vmem:[%s4 + $0x1a0] sm:$0xf]
    %v11524 = vld [vmem:[%s4 + $0x1a4] sm:$0xf]
    %v11525 = vld [vmem:[%s4 + $0x1a8] sm:$0xf]
    %v11526 = vld [vmem:[%s4 + $0x1ac] sm:$0xf]
    %v11527 = vld [vmem:[%s4 + $0x1b0] sm:$0xf]
    %v11528 = vld [vmem:[%s4 + $0x1b4] sm:$0xf]
    %v11529 = vld [vmem:[%s4 + $0x1b8] sm:$0xf]
    %v11530 = vld [vmem:[%s4 + $0x1bc] sm:$0xf]
    %v11531 = vld [vmem:[%s4 + $0x1c0] sm:$0xf]
    %v11532 = vld [vmem:[%s4 + $0x1c4] sm:$0xf]
    %v11533 = vld [vmem:[%s4 + $0x1c8] sm:$0xf]
    %v11534 = vld [vmem:[%s4 + $0x1cc] sm:$0xf]
    %v11535 = vld [vmem:[%s4 + $0x1d0] sm:$0xf]
    %v11536 = vld [vmem:[%s4 + $0x1d4] sm:$0xf]
    %v11537 = vld [vmem:[%s4 + $0x1d8] sm:$0xf]
    %v11538 = vld [vmem:[%s4 + $0x1dc] sm:$0xf]
    %v11539 = vld [vmem:[%s4 + $0x1e0] sm:$0xf]
    %v11540 = vld [vmem:[%s4 + $0x1e4] sm:$0xf]
    %v11541 = vld [vmem:[%s4 + $0x1e8] sm:$0xf]
    %v11542 = vld [vmem:[%s4 + $0x1ec] sm:$0xf]
    %v11543 = vld [vmem:[%s4 + $0x1f0] sm:$0xf]
    %v11544 = vld [vmem:[%s4 + $0x1f4] sm:$0xf]
    %v11545 = vld [vmem:[%s4 + $0x1f8] sm:$0xf]
    %v11546 = vld [vmem:[%s4 + $0x1fc] sm:$0xf]
    %v11547 = vld [vmem:[%s4 + $0x200] sm:$0xf]
    %v11548 = vld [vmem:[%s4 + $0x204] sm:$0xf]
    %v11549 = vld [vmem:[%s4 + $0x208] sm:$0xf]
    %v11550 = vld [vmem:[%s4 + $0x20c] sm:$0xf]
    %v11551 = vld [vmem:[%s4 + $0x210] sm:$0xf]
    %v11552 = vld [vmem:[%s4 + $0x214] sm:$0xf]
    %v11553 = vld [vmem:[%s4 + $0x218] sm:$0xf]
    %v11554 = vld [vmem:[%s4 + $0x21c] sm:$0xf]
    %v11555 = vld [vmem:[%s4 + $0x220] sm:$0xf]
    %v11556 = vld [vmem:[%s4 + $0x224] sm:$0xf]
    %v11557 = vld [vmem:[%s4 + $0x228] sm:$0xf]
    %v11558 = vld [vmem:[%s4 + $0x22c] sm:$0xf]
    %v11559 = vld [vmem:[%s4 + $0x230] sm:$0xf]
    %v11560 = vld [vmem:[%s4 + $0x234] sm:$0xf]
    %v11561 = vld [vmem:[%s4 + $0x238] sm:$0xf]
    %v11562 = vld [vmem:[%s4 + $0x23c] sm:$0xf]
    %v11563 = vld [vmem:[%s4 + $0x240] sm:$0xf]
    %v11564 = vld [vmem:[%s4 + $0x244] sm:$0xf]
    %v11565 = vld [vmem:[%s4 + $0x248] sm:$0xf]
    %v11566 = vld [vmem:[%s4 + $0x24c] sm:$0xf]
    %v11567 = vld [vmem:[%s4 + $0x250] sm:$0xf]
    %v11568 = vld [vmem:[%s4 + $0x254] sm:$0xf]
    %v11569 = vld [vmem:[%s4 + $0x258] sm:$0xf]
    %v11570 = vld [vmem:[%s4 + $0x25c] sm:$0xf]
    %v11571 = vld [vmem:[%s4 + $0x260] sm:$0xf]
    %v11572 = vld [vmem:[%s4 + $0x264] sm:$0xf]
    %v11573 = vld [vmem:[%s4 + $0x268] sm:$0xf]
    %v11574 = vld [vmem:[%s4 + $0x26c] sm:$0xf]
    %v11575 = vld [vmem:[%s4 + $0x270] sm:$0xf]
    %v11576 = vld [vmem:[%s4 + $0x274] sm:$0xf]
    %v11577 = vld [vmem:[%s4 + $0x278] sm:$0xf]
    %v11578 = vld [vmem:[%s4 + $0x27c] sm:$0xf]
    %v11579 = vld [vmem:[%s4 + $0x280] sm:$0xf]
    %v11580 = vld [vmem:[%s4 + $0x284] sm:$0xf]
    %v11581 = vld [vmem:[%s4 + $0x288] sm:$0xf]
    %v11582 = vld [vmem:[%s4 + $0x28c] sm:$0xf]
    %v11583 = vld [vmem:[%s4 + $0x290] sm:$0xf]
    %v11584 = vld [vmem:[%s4 + $0x294] sm:$0xf]
    %v11585 = vld [vmem:[%s4 + $0x298] sm:$0xf]
    %v11586 = vld [vmem:[%s4 + $0x29c] sm:$0xf]
    %v11587 = vld [vmem:[%s4 + $0x2a0] sm:$0xf]
    %v11588 = vld [vmem:[%s4 + $0x2a4] sm:$0xf]
    %v11589 = vld [vmem:[%s4 + $0x2a8] sm:$0xf]
    %v11590 = vld [vmem:[%s4 + $0x2ac] sm:$0xf]
    %v11591 = vld [vmem:[%s4 + $0x2b0] sm:$0xf]
    %v11592 = vld [vmem:[%s4 + $0x2b4] sm:$0xf]
    %v11593 = vld [vmem:[%s4 + $0x2b8] sm:$0xf]
    %v11594 = vld [vmem:[%s4 + $0x2bc] sm:$0xf]
    %v11595 = vld [vmem:[%s4 + $0x2c0] sm:$0xf]
    %v11596 = vld [vmem:[%s4 + $0x2c4] sm:$0xf]
    %v11597 = vld [vmem:[%s4 + $0x2c8] sm:$0xf]
    %v11598 = vld [vmem:[%s4 + $0x2cc] sm:$0xf]
    %v11599 = vld [vmem:[%s4 + $0x2d0] sm:$0xf]
    %v11600 = vld [vmem:[%s4 + $0x2d4] sm:$0xf]
    %v11601 = vld [vmem:[%s4 + $0x2d8] sm:$0xf]
    %v11602 = vld [vmem:[%s4 + $0x2dc] sm:$0xf]
    %v11603 = vld [vmem:[%s4 + $0x2e0] sm:$0xf]
    %v11604 = vld [vmem:[%s4 + $0x2e4] sm:$0xf]
    %v11605 = vld [vmem:[%s4 + $0x2e8] sm:$0xf]
    %v11606 = vld [vmem:[%s4 + $0x2ec] sm:$0xf]
    %v11607 = vld [vmem:[%s4 + $0x2f0] sm:$0xf]
    %v11608 = vld [vmem:[%s4 + $0x2f4] sm:$0xf]
    %v11609 = vld [vmem:[%s4 + $0x2f8] sm:$0xf]
    %v11610 = vld [vmem:[%s4 + $0x2fc] sm:$0xf]
    %v11611 = vld [vmem:[%s4 + $0x300] sm:$0xf]
    %v11612 = vld [vmem:[%s4 + $0x304] sm:$0xf]
    %v11613 = vld [vmem:[%s4 + $0x308] sm:$0xf]
    %v11614 = vld [vmem:[%s4 + $0x30c] sm:$0xf]
    %v11615 = vld [vmem:[%s4 + $0x310] sm:$0xf]
    %v11616 = vld [vmem:[%s4 + $0x314] sm:$0xf]
    %v11617 = vld [vmem:[%s4 + $0x318] sm:$0xf]
    %v11618 = vld [vmem:[%s4 + $0x31c] sm:$0xf]
    %v11619 = vld [vmem:[%s4 + $0x320] sm:$0xf]
    %v11620 = vld [vmem:[%s4 + $0x324] sm:$0xf]
    %v11621 = vld [vmem:[%s4 + $0x328] sm:$0xf]
    %v11622 = vld [vmem:[%s4 + $0x32c] sm:$0xf]
    %v11623 = vld [vmem:[%s4 + $0x330] sm:$0xf]
    %v11624 = vld [vmem:[%s4 + $0x334] sm:$0xf]
    %v11625 = vld [vmem:[%s4 + $0x338] sm:$0xf]
    %v11626 = vld [vmem:[%s4 + $0x33c] sm:$0xf]
    %v11627 = vld [vmem:[%s4 + $0x340] sm:$0xf]
    %v11628 = vld [vmem:[%s4 + $0x344] sm:$0xf]
    %v11629 = vld [vmem:[%s4 + $0x348] sm:$0xf]
    %v11630 = vld [vmem:[%s4 + $0x34c] sm:$0xf]
    %v11631 = vld [vmem:[%s4 + $0x350] sm:$0xf]
    %v11632 = vld [vmem:[%s4 + $0x354] sm:$0xf]
    %v11633 = vld [vmem:[%s4 + $0x358] sm:$0xf]
    %v11634 = vld [vmem:[%s4 + $0x35c] sm:$0xf]
    %v11635 = vld [vmem:[%s4 + $0x360] sm:$0xf]
    %v11636 = vld [vmem:[%s4 + $0x364] sm:$0xf]
    %v11637 = vld [vmem:[%s4 + $0x368] sm:$0xf]
    %v11638 = vld [vmem:[%s4 + $0x36c] sm:$0xf]
    %v11639 = vld [vmem:[%s4 + $0x370] sm:$0xf]
    %v11640 = vld [vmem:[%s4 + $0x374] sm:$0xf]
    %v11641 = vld [vmem:[%s4 + $0x378] sm:$0xf]
    %v11642 = vld [vmem:[%s4 + $0x37c] sm:$0xf]
    %v11643 = vld [vmem:[%s4 + $0x380] sm:$0xf]
    %v11644 = vld [vmem:[%s4 + $0x384] sm:$0xf]
    %v11645 = vld [vmem:[%s4 + $0x388] sm:$0xf]
    %v11646 = vld [vmem:[%s4 + $0x38c] sm:$0xf]
    %v11647 = vld [vmem:[%s4 + $0x390] sm:$0xf]
    %v11648 = vld [vmem:[%s4 + $0x394] sm:$0xf]
    %v11649 = vld [vmem:[%s4 + $0x398] sm:$0xf]
    %v11650 = vld [vmem:[%s4 + $0x39c] sm:$0xf]
    %v11651 = vld [vmem:[%s4 + $0x3a0] sm:$0xf]
    %v11652 = vld [vmem:[%s4 + $0x3a4] sm:$0xf]
    %v11653 = vld [vmem:[%s4 + $0x3a8] sm:$0xf]
    %v11654 = vld [vmem:[%s4 + $0x3ac] sm:$0xf]
    %v11655 = vld [vmem:[%s4 + $0x3b0] sm:$0xf]
    %v11656 = vld [vmem:[%s4 + $0x3b4] sm:$0xf]
    %v11657 = vld [vmem:[%s4 + $0x3b8] sm:$0xf]
    %v11658 = vld [vmem:[%s4 + $0x3bc] sm:$0xf]
    %v11659 = vld [vmem:[%s4 + $0x3c0] sm:$0xf]
    %v11660 = vld [vmem:[%s4 + $0x3c4] sm:$0xf]
    %v11661 = vld [vmem:[%s4 + $0x3c8] sm:$0xf]
    %v11662 = vld [vmem:[%s4 + $0x3cc] sm:$0xf]
    %v11663 = vld [vmem:[%s4 + $0x3d0] sm:$0xf]
    %v11664 = vld [vmem:[%s4 + $0x3d4] sm:$0xf]
    %v11665 = vld [vmem:[%s4 + $0x3d8] sm:$0xf]
    %v11666 = vld [vmem:[%s4 + $0x3dc] sm:$0xf]
    %v11667 = vld [vmem:[%s4 + $0x3e0] sm:$0xf]
    %v11668 = vld [vmem:[%s4 + $0x3e4] sm:$0xf]
    %v11669 = vld [vmem:[%s4 + $0x3e8] sm:$0xf]
    %v11670 = vld [vmem:[%s4 + $0x3ec] sm:$0xf]
    %v11671 = vld [vmem:[%s4 + $0x3f0] sm:$0xf]
    %v11672 = vld [vmem:[%s4 + $0x3f4] sm:$0xf]
    %v11673 = vld [vmem:[%s4 + $0x3f8] sm:$0xf]
    %v11674 = vld [vmem:[%s4 + $0x3fc] sm:$0xf]
    %v11931 = vunpack.c.l.b16 %v11419
    %v11932 = vunpack.c.l.b16 %v11420
    %v11933 = vunpack.c.l.b16 %v11421
    %v11934 = vunpack.c.l.b16 %v11422
    %v11935 = vunpack.c.l.b16 %v11423
    %v11936 = vunpack.c.l.b16 %v11424
    %v11937 = vunpack.c.l.b16 %v11425
    %v11938 = vunpack.c.l.b16 %v11426
    %v11939 = vunpack.c.l.b16 %v11427
    %v11940 = vunpack.c.l.b16 %v11428
    %v11941 = vunpack.c.l.b16 %v11429
    %v11942 = vunpack.c.l.b16 %v11430
    %v11943 = vunpack.c.l.b16 %v11431
    %v11944 = vunpack.c.l.b16 %v11432
    %v11945 = vunpack.c.l.b16 %v11433
    %v11946 = vunpack.c.l.b16 %v11434
    %v11947 = vunpack.c.l.b16 %v11435
    %v11948 = vunpack.c.l.b16 %v11436
    %v11949 = vunpack.c.l.b16 %v11437
    %v11950 = vunpack.c.l.b16 %v11438
    %v11951 = vunpack.c.l.b16 %v11439
    %v11952 = vunpack.c.l.b16 %v11440
    %v11953 = vunpack.c.l.b16 %v11441
    %v11954 = vunpack.c.l.b16 %v11442
    %v11955 = vunpack.c.l.b16 %v11443
    %v11956 = vunpack.c.l.b16 %v11444
    %v11957 = vunpack.c.l.b16 %v11445
    %v11958 = vunpack.c.l.b16 %v11446
    %v11959 = vunpack.c.l.b16 %v11447
    %v11960 = vunpack.c.l.b16 %v11448
    %v11961 = vunpack.c.l.b16 %v11449
    %v11962 = vunpack.c.l.b16 %v11450
    %v11963 = vunpack.c.l.b16 %v11451
    %v11964 = vunpack.c.l.b16 %v11452
    %v11965 = vunpack.c.l.b16 %v11453
    %v11966 = vunpack.c.l.b16 %v11454
    %v11967 = vunpack.c.l.b16 %v11455
    %v11968 = vunpack.c.l.b16 %v11456
    %v11969 = vunpack.c.l.b16 %v11457
    %v11970 = vunpack.c.l.b16 %v11458
    %v11971 = vunpack.c.l.b16 %v11459
    %v11972 = vunpack.c.l.b16 %v11460
    %v11973 = vunpack.c.l.b16 %v11461
    %v11974 = vunpack.c.l.b16 %v11462
    %v11975 = vunpack.c.l.b16 %v11463
    %v11976 = vunpack.c.l.b16 %v11464
    %v11977 = vunpack.c.l.b16 %v11465
    %v11978 = vunpack.c.l.b16 %v11466
    %v11979 = vunpack.c.l.b16 %v11467
    %v11980 = vunpack.c.l.b16 %v11468
    %v11981 = vunpack.c.l.b16 %v11469
    %v11982 = vunpack.c.l.b16 %v11470
    %v11983 = vunpack.c.l.b16 %v11471
    %v11984 = vunpack.c.l.b16 %v11472
    %v11985 = vunpack.c.l.b16 %v11473
    %v11986 = vunpack.c.l.b16 %v11474
    %v11987 = vunpack.c.l.b16 %v11475
    %v11988 = vunpack.c.l.b16 %v11476
    %v11989 = vunpack.c.l.b16 %v11477
    %v11990 = vunpack.c.l.b16 %v11478
    %v11991 = vunpack.c.l.b16 %v11479
    %v11992 = vunpack.c.l.b16 %v11480
    %v11993 = vunpack.c.l.b16 %v11481
    %v11994 = vunpack.c.l.b16 %v11482
    %v11995 = vunpack.c.l.b16 %v11483
    %v11996 = vunpack.c.l.b16 %v11484
    %v11997 = vunpack.c.l.b16 %v11485
    %v11998 = vunpack.c.l.b16 %v11486
    %v11999 = vunpack.c.l.b16 %v11487
    %v12000 = vunpack.c.l.b16 %v11488
    %v12001 = vunpack.c.l.b16 %v11489
    %v12002 = vunpack.c.l.b16 %v11490
    %v12003 = vunpack.c.l.b16 %v11491
    %v12004 = vunpack.c.l.b16 %v11492
    %v12005 = vunpack.c.l.b16 %v11493
    %v12006 = vunpack.c.l.b16 %v11494
    %v12007 = vunpack.c.l.b16 %v11495
    %v12008 = vunpack.c.l.b16 %v11496
    %v12009 = vunpack.c.l.b16 %v11497
    %v12010 = vunpack.c.l.b16 %v11498
    %v12011 = vunpack.c.l.b16 %v11499
    %v12012 = vunpack.c.l.b16 %v11500
    %v12013 = vunpack.c.l.b16 %v11501
    %v12014 = vunpack.c.l.b16 %v11502
    %v12015 = vunpack.c.l.b16 %v11503
    %v12016 = vunpack.c.l.b16 %v11504
    %v12017 = vunpack.c.l.b16 %v11505
    %v12018 = vunpack.c.l.b16 %v11506
    %v12019 = vunpack.c.l.b16 %v11507
    %v12020 = vunpack.c.l.b16 %v11508
    %v12021 = vunpack.c.l.b16 %v11509
    %v12022 = vunpack.c.l.b16 %v11510
    %v12023 = vunpack.c.l.b16 %v11511
    %v12024 = vunpack.c.l.b16 %v11512
    %v12025 = vunpack.c.l.b16 %v11513
    %v12026 = vunpack.c.l.b16 %v11514
    %v12027 = vunpack.c.l.b16 %v11515
    %v12028 = vunpack.c.l.b16 %v11516
    %v12029 = vunpack.c.l.b16 %v11517
    %v12030 = vunpack.c.l.b16 %v11518
    %v12031 = vunpack.c.l.b16 %v11519
    %v12032 = vunpack.c.l.b16 %v11520
    %v12033 = vunpack.c.l.b16 %v11521
    %v12034 = vunpack.c.l.b16 %v11522
    %v12035 = vunpack.c.l.b16 %v11523
    %v12036 = vunpack.c.l.b16 %v11524
    %v12037 = vunpack.c.l.b16 %v11525
    %v12038 = vunpack.c.l.b16 %v11526
    %v12039 = vunpack.c.l.b16 %v11527
    %v12040 = vunpack.c.l.b16 %v11528
    %v12041 = vunpack.c.l.b16 %v11529
    %v12042 = vunpack.c.l.b16 %v11530
    %v12043 = vunpack.c.l.b16 %v11531
    %v12044 = vunpack.c.l.b16 %v11532
    %v12045 = vunpack.c.l.b16 %v11533
    %v12046 = vunpack.c.l.b16 %v11534
    %v12047 = vunpack.c.l.b16 %v11535
    %v12048 = vunpack.c.l.b16 %v11536
    %v12049 = vunpack.c.l.b16 %v11537
    %v12050 = vunpack.c.l.b16 %v11538
    %v12051 = vunpack.c.l.b16 %v11539
    %v12052 = vunpack.c.l.b16 %v11540
    %v12053 = vunpack.c.l.b16 %v11541
    %v12054 = vunpack.c.l.b16 %v11542
    %v12055 = vunpack.c.l.b16 %v11543
    %v12056 = vunpack.c.l.b16 %v11544
    %v12057 = vunpack.c.l.b16 %v11545
    %v12058 = vunpack.c.l.b16 %v11546
    %v12059 = vunpack.c.l.b16 %v11547
    %v12060 = vunpack.c.l.b16 %v11548
    %v12061 = vunpack.c.l.b16 %v11549
    %v12062 = vunpack.c.l.b16 %v11550
    %v12063 = vunpack.c.l.b16 %v11551
    %v12064 = vunpack.c.l.b16 %v11552
    %v12065 = vunpack.c.l.b16 %v11553
    %v12066 = vunpack.c.l.b16 %v11554
    %v12067 = vunpack.c.l.b16 %v11555
    %v12068 = vunpack.c.l.b16 %v11556
    %v12069 = vunpack.c.l.b16 %v11557
    %v12070 = vunpack.c.l.b16 %v11558
    %v12071 = vunpack.c.l.b16 %v11559
    %v12072 = vunpack.c.l.b16 %v11560
    %v12073 = vunpack.c.l.b16 %v11561
    %v12074 = vunpack.c.l.b16 %v11562
    %v12075 = vunpack.c.l.b16 %v11563
    %v12076 = vunpack.c.l.b16 %v11564
    %v12077 = vunpack.c.l.b16 %v11565
    %v12078 = vunpack.c.l.b16 %v11566
    %v12079 = vunpack.c.l.b16 %v11567
    %v12080 = vunpack.c.l.b16 %v11568
    %v12081 = vunpack.c.l.b16 %v11569
    %v12082 = vunpack.c.l.b16 %v11570
    %v12083 = vunpack.c.l.b16 %v11571
    %v12084 = vunpack.c.l.b16 %v11572
    %v12085 = vunpack.c.l.b16 %v11573
    %v12086 = vunpack.c.l.b16 %v11574
    %v12087 = vunpack.c.l.b16 %v11575
    %v12088 = vunpack.c.l.b16 %v11576
    %v12089 = vunpack.c.l.b16 %v11577
    %v12090 = vunpack.c.l.b16 %v11578
    %v12091 = vunpack.c.l.b16 %v11579
    %v12092 = vunpack.c.l.b16 %v11580
    %v12093 = vunpack.c.l.b16 %v11581
    %v12094 = vunpack.c.l.b16 %v11582
    %v12095 = vunpack.c.l.b16 %v11583
    %v12096 = vunpack.c.l.b16 %v11584
    %v12097 = vunpack.c.l.b16 %v11585
    %v12098 = vunpack.c.l.b16 %v11586
    %v12099 = vunpack.c.l.b16 %v11587
    %v12100 = vunpack.c.l.b16 %v11588
    %v12101 = vunpack.c.l.b16 %v11589
    %v12102 = vunpack.c.l.b16 %v11590
    %v12103 = vunpack.c.l.b16 %v11591
    %v12104 = vunpack.c.l.b16 %v11592
    %v12105 = vunpack.c.l.b16 %v11593
    %v12106 = vunpack.c.l.b16 %v11594
    %v12107 = vunpack.c.l.b16 %v11595
    %v12108 = vunpack.c.l.b16 %v11596
    %v12109 = vunpack.c.l.b16 %v11597
    %v12110 = vunpack.c.l.b16 %v11598
    %v12111 = vunpack.c.l.b16 %v11599
    %v12112 = vunpack.c.l.b16 %v11600
    %v12113 = vunpack.c.l.b16 %v11601
    %v12114 = vunpack.c.l.b16 %v11602
    %v12115 = vunpack.c.l.b16 %v11603
    %v12116 = vunpack.c.l.b16 %v11604
    %v12117 = vunpack.c.l.b16 %v11605
    %v12118 = vunpack.c.l.b16 %v11606
    %v12119 = vunpack.c.l.b16 %v11607
    %v12120 = vunpack.c.l.b16 %v11608
    %v12121 = vunpack.c.l.b16 %v11609
    %v12122 = vunpack.c.l.b16 %v11610
    %v12123 = vunpack.c.l.b16 %v11611
    %v12124 = vunpack.c.l.b16 %v11612
    %v12125 = vunpack.c.l.b16 %v11613
    %v12126 = vunpack.c.l.b16 %v11614
    %v12127 = vunpack.c.l.b16 %v11615
    %v12128 = vunpack.c.l.b16 %v11616
    %v12129 = vunpack.c.l.b16 %v11617
    %v12130 = vunpack.c.l.b16 %v11618
    %v12131 = vunpack.c.l.b16 %v11619
    %v12132 = vunpack.c.l.b16 %v11620
    %v12133 = vunpack.c.l.b16 %v11621
    %v12134 = vunpack.c.l.b16 %v11622
    %v12135 = vunpack.c.l.b16 %v11623
    %v12136 = vunpack.c.l.b16 %v11624
    %v12137 = vunpack.c.l.b16 %v11625
    %v12138 = vunpack.c.l.b16 %v11626
    %v12139 = vunpack.c.l.b16 %v11627
    %v12140 = vunpack.c.l.b16 %v11628
    %v12141 = vunpack.c.l.b16 %v11629
    %v12142 = vunpack.c.l.b16 %v11630
    %v12143 = vunpack.c.l.b16 %v11631
    %v12144 = vunpack.c.l.b16 %v11632
    %v12145 = vunpack.c.l.b16 %v11633
    %v12146 = vunpack.c.l.b16 %v11634
    %v12147 = vunpack.c.l.b16 %v11635
    %v12148 = vunpack.c.l.b16 %v11636
    %v12149 = vunpack.c.l.b16 %v11637
    %v12150 = vunpack.c.l.b16 %v11638
    %v12151 = vunpack.c.l.b16 %v11639
    %v12152 = vunpack.c.l.b16 %v11640
    %v12153 = vunpack.c.l.b16 %v11641
    %v12154 = vunpack.c.l.b16 %v11642
    %v12155 = vunpack.c.l.b16 %v11643
    %v12156 = vunpack.c.l.b16 %v11644
    %v12157 = vunpack.c.l.b16 %v11645
    %v12158 = vunpack.c.l.b16 %v11646
    %v12159 = vunpack.c.l.b16 %v11647
    %v12160 = vunpack.c.l.b16 %v11648
    %v12161 = vunpack.c.l.b16 %v11649
    %v12162 = vunpack.c.l.b16 %v11650
    %v12163 = vunpack.c.l.b16 %v11651
    %v12164 = vunpack.c.l.b16 %v11652
    %v12165 = vunpack.c.l.b16 %v11653
    %v12166 = vunpack.c.l.b16 %v11654
    %v12167 = vunpack.c.l.b16 %v11655
    %v12168 = vunpack.c.l.b16 %v11656
    %v12169 = vunpack.c.l.b16 %v11657
    %v12170 = vunpack.c.l.b16 %v11658
    %v12171 = vunpack.c.l.b16 %v11659
    %v12172 = vunpack.c.l.b16 %v11660
    %v12173 = vunpack.c.l.b16 %v11661
    %v12174 = vunpack.c.l.b16 %v11662
    %v12175 = vunpack.c.l.b16 %v11663
    %v12176 = vunpack.c.l.b16 %v11664
    %v12177 = vunpack.c.l.b16 %v11665
    %v12178 = vunpack.c.l.b16 %v11666
    %v12179 = vunpack.c.l.b16 %v11667
    %v12180 = vunpack.c.l.b16 %v11668
    %v12181 = vunpack.c.l.b16 %v11669
    %v12182 = vunpack.c.l.b16 %v11670
    %v12183 = vunpack.c.l.b16 %v11671
    %v12184 = vunpack.c.l.b16 %v11672
    %v12185 = vunpack.c.l.b16 %v11673
    %v12186 = vunpack.c.l.b16 %v11674
    %v12187 = vpack.c.b16 %v11932, %v11931
    %v12188 = vpack.c.b16 %v11934, %v11933
    %v12189 = vpack.c.b16 %v11936, %v11935
    %v12190 = vpack.c.b16 %v11938, %v11937
    %v12191 = vpack.c.b16 %v11940, %v11939
    %v12192 = vpack.c.b16 %v11942, %v11941
    %v12193 = vpack.c.b16 %v11944, %v11943
    %v12194 = vpack.c.b16 %v11946, %v11945
    %v12195 = vpack.c.b16 %v11948, %v11947
    %v12196 = vpack.c.b16 %v11950, %v11949
    %v12197 = vpack.c.b16 %v11952, %v11951
    %v12198 = vpack.c.b16 %v11954, %v11953
    %v12199 = vpack.c.b16 %v11956, %v11955
    %v12200 = vpack.c.b16 %v11958, %v11957
    %v12201 = vpack.c.b16 %v11960, %v11959
    %v12202 = vpack.c.b16 %v11962, %v11961
    %v12203 = vpack.c.b16 %v11964, %v11963
    %v12204 = vpack.c.b16 %v11966, %v11965
    %v12205 = vpack.c.b16 %v11968, %v11967
    %v12206 = vpack.c.b16 %v11970, %v11969
    %v12207 = vpack.c.b16 %v11972, %v11971
    %v12208 = vpack.c.b16 %v11974, %v11973
    %v12209 = vpack.c.b16 %v11976, %v11975
    %v12210 = vpack.c.b16 %v11978, %v11977
    %v12211 = vpack.c.b16 %v11980, %v11979
    %v12212 = vpack.c.b16 %v11982, %v11981
    %v12213 = vpack.c.b16 %v11984, %v11983
    %v12214 = vpack.c.b16 %v11986, %v11985
    %v12215 = vpack.c.b16 %v11988, %v11987
    %v12216 = vpack.c.b16 %v11990, %v11989
    %v12217 = vpack.c.b16 %v11992, %v11991
    %v12218 = vpack.c.b16 %v11994, %v11993
    %v12219 = vpack.c.b16 %v11996, %v11995
    %v12220 = vpack.c.b16 %v11998, %v11997
    %v12221 = vpack.c.b16 %v12000, %v11999
    %v12222 = vpack.c.b16 %v12002, %v12001
    %v12223 = vpack.c.b16 %v12004, %v12003
    %v12224 = vpack.c.b16 %v12006, %v12005
    %v12225 = vpack.c.b16 %v12008, %v12007
    %v12226 = vpack.c.b16 %v12010, %v12009
    %v12227 = vpack.c.b16 %v12012, %v12011
    %v12228 = vpack.c.b16 %v12014, %v12013
    %v12229 = vpack.c.b16 %v12016, %v12015
    %v12230 = vpack.c.b16 %v12018, %v12017
    %v12231 = vpack.c.b16 %v12020, %v12019
    %v12232 = vpack.c.b16 %v12022, %v12021
    %v12233 = vpack.c.b16 %v12024, %v12023
    %v12234 = vpack.c.b16 %v12026, %v12025
    %v12235 = vpack.c.b16 %v12028, %v12027
    %v12236 = vpack.c.b16 %v12030, %v12029
    %v12237 = vpack.c.b16 %v12032, %v12031
    %v12238 = vpack.c.b16 %v12034, %v12033
    %v12239 = vpack.c.b16 %v12036, %v12035
    %v12240 = vpack.c.b16 %v12038, %v12037
    %v12241 = vpack.c.b16 %v12040, %v12039
    %v12242 = vpack.c.b16 %v12042, %v12041
    %v12243 = vpack.c.b16 %v12044, %v12043
    %v12244 = vpack.c.b16 %v12046, %v12045
    %v12245 = vpack.c.b16 %v12048, %v12047
    %v12246 = vpack.c.b16 %v12050, %v12049
    %v12247 = vpack.c.b16 %v12052, %v12051
    %v12248 = vpack.c.b16 %v12054, %v12053
    %v12249 = vpack.c.b16 %v12056, %v12055
    %v12250 = vpack.c.b16 %v12058, %v12057
    %v12251 = vpack.c.b16 %v12060, %v12059
    %v12252 = vpack.c.b16 %v12062, %v12061
    %v12253 = vpack.c.b16 %v12064, %v12063
    %v12254 = vpack.c.b16 %v12066, %v12065
    %v12255 = vpack.c.b16 %v12068, %v12067
    %v12256 = vpack.c.b16 %v12070, %v12069
    %v12257 = vpack.c.b16 %v12072, %v12071
    %v12258 = vpack.c.b16 %v12074, %v12073
    %v12259 = vpack.c.b16 %v12076, %v12075
    %v12260 = vpack.c.b16 %v12078, %v12077
    %v12261 = vpack.c.b16 %v12080, %v12079
    %v12262 = vpack.c.b16 %v12082, %v12081
    %v12263 = vpack.c.b16 %v12084, %v12083
    %v12264 = vpack.c.b16 %v12086, %v12085
    %v12265 = vpack.c.b16 %v12088, %v12087
    %v12266 = vpack.c.b16 %v12090, %v12089
    %v12267 = vpack.c.b16 %v12092, %v12091
    %v12268 = vpack.c.b16 %v12094, %v12093
    %v12269 = vpack.c.b16 %v12096, %v12095
    %v12270 = vpack.c.b16 %v12098, %v12097
    %v12271 = vpack.c.b16 %v12100, %v12099
    %v12272 = vpack.c.b16 %v12102, %v12101
    %v12273 = vpack.c.b16 %v12104, %v12103
    %v12274 = vpack.c.b16 %v12106, %v12105
    %v12275 = vpack.c.b16 %v12108, %v12107
    %v12276 = vpack.c.b16 %v12110, %v12109
    %v12277 = vpack.c.b16 %v12112, %v12111
    %v12278 = vpack.c.b16 %v12114, %v12113
    %v12279 = vpack.c.b16 %v12116, %v12115
    %v12280 = vpack.c.b16 %v12118, %v12117
    %v12281 = vpack.c.b16 %v12120, %v12119
    %v12282 = vpack.c.b16 %v12122, %v12121
    %v12283 = vpack.c.b16 %v12124, %v12123
    %v12284 = vpack.c.b16 %v12126, %v12125
    %v12285 = vpack.c.b16 %v12128, %v12127
    %v12286 = vpack.c.b16 %v12130, %v12129
    %v12287 = vpack.c.b16 %v12132, %v12131
    %v12288 = vpack.c.b16 %v12134, %v12133
    %v12289 = vpack.c.b16 %v12136, %v12135
    %v12290 = vpack.c.b16 %v12138, %v12137
    %v12291 = vpack.c.b16 %v12140, %v12139
    %v12292 = vpack.c.b16 %v12142, %v12141
    %v12293 = vpack.c.b16 %v12144, %v12143
    %v12294 = vpack.c.b16 %v12146, %v12145
    %v12295 = vpack.c.b16 %v12148, %v12147
    %v12296 = vpack.c.b16 %v12150, %v12149
    %v12297 = vpack.c.b16 %v12152, %v12151
    %v12298 = vpack.c.b16 %v12154, %v12153
    %v12299 = vpack.c.b16 %v12156, %v12155
    %v12300 = vpack.c.b16 %v12158, %v12157
    %v12301 = vpack.c.b16 %v12160, %v12159
    %v12302 = vpack.c.b16 %v12162, %v12161
    %v12303 = vpack.c.b16 %v12164, %v12163
    %v12304 = vpack.c.b16 %v12166, %v12165
    %v12305 = vpack.c.b16 %v12168, %v12167
    %v12306 = vpack.c.b16 %v12170, %v12169
    %v12307 = vpack.c.b16 %v12172, %v12171
    %v12308 = vpack.c.b16 %v12174, %v12173
    %v12309 = vpack.c.b16 %v12176, %v12175
    %v12310 = vpack.c.b16 %v12178, %v12177
    %v12311 = vpack.c.b16 %v12180, %v12179
    %v12312 = vpack.c.b16 %v12182, %v12181
    %v12313 = vpack.c.b16 %v12184, %v12183
    %v12314 = vpack.c.b16 %v12186, %v12185
    %12443 = vmatpush.bf16.msra.mxu0 %v12194
    %12444 = vmatpush.bf16.msra.mxu0 %v12193
    %12445 = vmatpush.bf16.msra.mxu0 %v12192
    %12446 = vmatpush.bf16.msra.mxu0 %v12191
    %12447 = vmatpush.bf16.msra.mxu0 %v12190
    %12448 = vmatpush.bf16.msra.mxu0 %v12189
    %12449 = vmatpush.bf16.msra.mxu0 %v12188
    %12450 = vmatpush.bf16.msra.mxu0 %v12187
    %12451 = vmatmul.bf16.gmra.mxu0 %v7771
    %v12452 = vpop.f32.mrf.mxu0
    %v12453 = vadd.f32 0.0, %v12452
    %v12454 = vpop.f32.mrf.mxu0
    %v12455 = vadd.f32 0.0, %v12454
    %12456 = vmatmul.bf16.gmra.mxu0 %v7787
    %v12457 = vpop.f32.mrf.mxu0
    %v12458 = vadd.f32 0.0, %v12457
    %v12459 = vpop.f32.mrf.mxu0
    %v12460 = vadd.f32 0.0, %v12459
    %12461 = vdwg.mxu0
    %12462 = vmatpush.bf16.msra.mxu0 %v12202
    %12463 = vmatpush.bf16.msra.mxu0 %v12201
    %12464 = vmatpush.bf16.msra.mxu0 %v12200
    %12465 = vmatpush.bf16.msra.mxu0 %v12199
    %12466 = vmatpush.bf16.msra.mxu0 %v12198
    %12467 = vmatpush.bf16.msra.mxu0 %v12197
    %12468 = vmatpush.bf16.msra.mxu0 %v12196
    %12469 = vmatpush.bf16.msra.mxu0 %v12195
    %12470 = vmatmul.bf16.gmra.mxu0 %v7772
    %v12471 = vpop.f32.mrf.mxu0
    %v12472 = vadd.f32 %v12453, %v12471
    %v12473 = vpop.f32.mrf.mxu0
    %v12474 = vadd.f32 %v12455, %v12473
    %12475 = vmatmul.bf16.gmra.mxu0 %v7788
    %v12476 = vpop.f32.mrf.mxu0
    %v12477 = vadd.f32 %v12458, %v12476
    %v12478 = vpop.f32.mrf.mxu0
    %v12479 = vadd.f32 %v12460, %v12478
    %12480 = vdwg.mxu0
    %12481 = vmatpush.bf16.msra.mxu0 %v12210
    %12482 = vmatpush.bf16.msra.mxu0 %v12209
    %12483 = vmatpush.bf16.msra.mxu0 %v12208
    %12484 = vmatpush.bf16.msra.mxu0 %v12207
    %12485 = vmatpush.bf16.msra.mxu0 %v12206
    %12486 = vmatpush.bf16.msra.mxu0 %v12205
    %12487 = vmatpush.bf16.msra.mxu0 %v12204
    %12488 = vmatpush.bf16.msra.mxu0 %v12203
    %12489 = vmatmul.bf16.gmra.mxu0 %v7773
    %v12490 = vpop.f32.mrf.mxu0
    %v12491 = vadd.f32 %v12472, %v12490
    %v12492 = vpop.f32.mrf.mxu0
    %v12493 = vadd.f32 %v12474, %v12492
    %12494 = vmatmul.bf16.gmra.mxu0 %v7789
    %v12495 = vpop.f32.mrf.mxu0
    %v12496 = vadd.f32 %v12477, %v12495
    %v12497 = vpop.f32.mrf.mxu0
    %v12498 = vadd.f32 %v12479, %v12497
    %12499 = vdwg.mxu0
    %12500 = vmatpush.bf16.msra.mxu0 %v12218
    %12501 = vmatpush.bf16.msra.mxu0 %v12217
    %12502 = vmatpush.bf16.msra.mxu0 %v12216
    %12503 = vmatpush.bf16.msra.mxu0 %v12215
    %12504 = vmatpush.bf16.msra.mxu0 %v12214
    %12505 = vmatpush.bf16.msra.mxu0 %v12213
    %12506 = vmatpush.bf16.msra.mxu0 %v12212
    %12507 = vmatpush.bf16.msra.mxu0 %v12211
    %12508 = vmatmul.bf16.gmra.mxu0 %v7774
    %v12509 = vpop.f32.mrf.mxu0
    %v12510 = vadd.f32 %v12491, %v12509
    %v12511 = vpop.f32.mrf.mxu0
    %v12512 = vadd.f32 %v12493, %v12511
    %12513 = vmatmul.bf16.gmra.mxu0 %v7790
    %v12514 = vpop.f32.mrf.mxu0
    %v12515 = vadd.f32 %v12496, %v12514
    %v12516 = vpop.f32.mrf.mxu0
    %v12517 = vadd.f32 %v12498, %v12516
    %12518 = vdwg.mxu0
    %12519 = vmatpush.bf16.msra.mxu0 %v12226
    %12520 = vmatpush.bf16.msra.mxu0 %v12225
    %12521 = vmatpush.bf16.msra.mxu0 %v12224
    %12522 = vmatpush.bf16.msra.mxu0 %v12223
    %12523 = vmatpush.bf16.msra.mxu0 %v12222
    %12524 = vmatpush.bf16.msra.mxu0 %v12221
    %12525 = vmatpush.bf16.msra.mxu0 %v12220
    %12526 = vmatpush.bf16.msra.mxu0 %v12219
    %12527 = vmatmul.bf16.gmra.mxu0 %v7775
    %v12528 = vpop.f32.mrf.mxu0
    %v12529 = vadd.f32 %v12510, %v12528
    %v12530 = vpop.f32.mrf.mxu0
    %v12531 = vadd.f32 %v12512, %v12530
    %12532 = vmatmul.bf16.gmra.mxu0 %v7791
    %v12533 = vpop.f32.mrf.mxu0
    %v12534 = vadd.f32 %v12515, %v12533
    %v12535 = vpop.f32.mrf.mxu0
    %v12536 = vadd.f32 %v12517, %v12535
    %12537 = vdwg.mxu0
    %12538 = vmatpush.bf16.msra.mxu0 %v12234
    %12539 = vmatpush.bf16.msra.mxu0 %v12233
    %12540 = vmatpush.bf16.msra.mxu0 %v12232
    %12541 = vmatpush.bf16.msra.mxu0 %v12231
    %12542 = vmatpush.bf16.msra.mxu0 %v12230
    %12543 = vmatpush.bf16.msra.mxu0 %v12229
    %12544 = vmatpush.bf16.msra.mxu0 %v12228
    %12545 = vmatpush.bf16.msra.mxu0 %v12227
    %12546 = vmatmul.bf16.gmra.mxu0 %v7776
    %v12547 = vpop.f32.mrf.mxu0
    %v12548 = vadd.f32 %v12529, %v12547
    %v12549 = vpop.f32.mrf.mxu0
    %v12550 = vadd.f32 %v12531, %v12549
    %12551 = vmatmul.bf16.gmra.mxu0 %v7792
    %v12552 = vpop.f32.mrf.mxu0
    %v12553 = vadd.f32 %v12534, %v12552
    %v12554 = vpop.f32.mrf.mxu0
    %v12555 = vadd.f32 %v12536, %v12554
    %12556 = vdwg.mxu0
    %12557 = vmatpush.bf16.msra.mxu0 %v12242
    %12558 = vmatpush.bf16.msra.mxu0 %v12241
    %12559 = vmatpush.bf16.msra.mxu0 %v12240
    %12560 = vmatpush.bf16.msra.mxu0 %v12239
    %12561 = vmatpush.bf16.msra.mxu0 %v12238
    %12562 = vmatpush.bf16.msra.mxu0 %v12237
    %12563 = vmatpush.bf16.msra.mxu0 %v12236
    %12564 = vmatpush.bf16.msra.mxu0 %v12235
    %12565 = vmatmul.bf16.gmra.mxu0 %v7777
    %v12566 = vpop.f32.mrf.mxu0
    %v12567 = vadd.f32 %v12548, %v12566
    %v12568 = vpop.f32.mrf.mxu0
    %v12569 = vadd.f32 %v12550, %v12568
    %12570 = vmatmul.bf16.gmra.mxu0 %v7793
    %v12571 = vpop.f32.mrf.mxu0
    %v12572 = vadd.f32 %v12553, %v12571
    %v12573 = vpop.f32.mrf.mxu0
    %v12574 = vadd.f32 %v12555, %v12573
    %12575 = vdwg.mxu0
    %12576 = vmatpush.bf16.msra.mxu0 %v12250
    %12577 = vmatpush.bf16.msra.mxu0 %v12249
    %12578 = vmatpush.bf16.msra.mxu0 %v12248
    %12579 = vmatpush.bf16.msra.mxu0 %v12247
    %12580 = vmatpush.bf16.msra.mxu0 %v12246
    %12581 = vmatpush.bf16.msra.mxu0 %v12245
    %12582 = vmatpush.bf16.msra.mxu0 %v12244
    %12583 = vmatpush.bf16.msra.mxu0 %v12243
    %12584 = vmatmul.bf16.gmra.mxu0 %v7778
    %v12585 = vpop.f32.mrf.mxu0
    %v12586 = vadd.f32 %v12567, %v12585
    %v12587 = vpop.f32.mrf.mxu0
    %v12588 = vadd.f32 %v12569, %v12587
    %12589 = vmatmul.bf16.gmra.mxu0 %v7794
    %v12590 = vpop.f32.mrf.mxu0
    %v12591 = vadd.f32 %v12572, %v12590
    %v12592 = vpop.f32.mrf.mxu0
    %v12593 = vadd.f32 %v12574, %v12592
    %12594 = vdwg.mxu0
    %12595 = vmatpush.bf16.msra.mxu0 %v12258
    %12596 = vmatpush.bf16.msra.mxu0 %v12257
    %12597 = vmatpush.bf16.msra.mxu0 %v12256
    %12598 = vmatpush.bf16.msra.mxu0 %v12255
    %12599 = vmatpush.bf16.msra.mxu0 %v12254
    %12600 = vmatpush.bf16.msra.mxu0 %v12253
    %12601 = vmatpush.bf16.msra.mxu0 %v12252
    %12602 = vmatpush.bf16.msra.mxu0 %v12251
    %12603 = vmatmul.bf16.gmra.mxu0 %v7779
    %v12604 = vpop.f32.mrf.mxu0
    %v12605 = vadd.f32 %v12586, %v12604
    %v12606 = vpop.f32.mrf.mxu0
    %v12607 = vadd.f32 %v12588, %v12606
    %12608 = vmatmul.bf16.gmra.mxu0 %v7795
    %v12609 = vpop.f32.mrf.mxu0
    %v12610 = vadd.f32 %v12591, %v12609
    %v12611 = vpop.f32.mrf.mxu0
    %v12612 = vadd.f32 %v12593, %v12611
    %12613 = vdwg.mxu0
    %12614 = vmatpush.bf16.msra.mxu0 %v12266
    %12615 = vmatpush.bf16.msra.mxu0 %v12265
    %12616 = vmatpush.bf16.msra.mxu0 %v12264
    %12617 = vmatpush.bf16.msra.mxu0 %v12263
    %12618 = vmatpush.bf16.msra.mxu0 %v12262
    %12619 = vmatpush.bf16.msra.mxu0 %v12261
    %12620 = vmatpush.bf16.msra.mxu0 %v12260
    %12621 = vmatpush.bf16.msra.mxu0 %v12259
    %12622 = vmatmul.bf16.gmra.mxu0 %v7780
    %v12623 = vpop.f32.mrf.mxu0
    %v12624 = vadd.f32 %v12605, %v12623
    %v12625 = vpop.f32.mrf.mxu0
    %v12626 = vadd.f32 %v12607, %v12625
    %12627 = vmatmul.bf16.gmra.mxu0 %v7796
    %v12628 = vpop.f32.mrf.mxu0
    %v12629 = vadd.f32 %v12610, %v12628
    %v12630 = vpop.f32.mrf.mxu0
    %v12631 = vadd.f32 %v12612, %v12630
    %12632 = vdwg.mxu0
    %12633 = vmatpush.bf16.msra.mxu0 %v12274
    %12634 = vmatpush.bf16.msra.mxu0 %v12273
    %12635 = vmatpush.bf16.msra.mxu0 %v12272
    %12636 = vmatpush.bf16.msra.mxu0 %v12271
    %12637 = vmatpush.bf16.msra.mxu0 %v12270
    %12638 = vmatpush.bf16.msra.mxu0 %v12269
    %12639 = vmatpush.bf16.msra.mxu0 %v12268
    %12640 = vmatpush.bf16.msra.mxu0 %v12267
    %12641 = vmatmul.bf16.gmra.mxu0 %v7781
    %v12642 = vpop.f32.mrf.mxu0
    %v12643 = vadd.f32 %v12624, %v12642
    %v12644 = vpop.f32.mrf.mxu0
    %v12645 = vadd.f32 %v12626, %v12644
    %12646 = vmatmul.bf16.gmra.mxu0 %v7797
    %v12647 = vpop.f32.mrf.mxu0
    %v12648 = vadd.f32 %v12629, %v12647
    %v12649 = vpop.f32.mrf.mxu0
    %v12650 = vadd.f32 %v12631, %v12649
    %12651 = vdwg.mxu0
    %12652 = vmatpush.bf16.msra.mxu0 %v12282
    %12653 = vmatpush.bf16.msra.mxu0 %v12281
    %12654 = vmatpush.bf16.msra.mxu0 %v12280
    %12655 = vmatpush.bf16.msra.mxu0 %v12279
    %12656 = vmatpush.bf16.msra.mxu0 %v12278
    %12657 = vmatpush.bf16.msra.mxu0 %v12277
    %12658 = vmatpush.bf16.msra.mxu0 %v12276
    %12659 = vmatpush.bf16.msra.mxu0 %v12275
    %12660 = vmatmul.bf16.gmra.mxu0 %v7782
    %v12661 = vpop.f32.mrf.mxu0
    %v12662 = vadd.f32 %v12643, %v12661
    %v12663 = vpop.f32.mrf.mxu0
    %v12664 = vadd.f32 %v12645, %v12663
    %12665 = vmatmul.bf16.gmra.mxu0 %v7798
    %v12666 = vpop.f32.mrf.mxu0
    %v12667 = vadd.f32 %v12648, %v12666
    %v12668 = vpop.f32.mrf.mxu0
    %v12669 = vadd.f32 %v12650, %v12668
    %12670 = vdwg.mxu0
    %12671 = vmatpush.bf16.msra.mxu0 %v12290
    %12672 = vmatpush.bf16.msra.mxu0 %v12289
    %12673 = vmatpush.bf16.msra.mxu0 %v12288
    %12674 = vmatpush.bf16.msra.mxu0 %v12287
    %12675 = vmatpush.bf16.msra.mxu0 %v12286
    %12676 = vmatpush.bf16.msra.mxu0 %v12285
    %12677 = vmatpush.bf16.msra.mxu0 %v12284
    %12678 = vmatpush.bf16.msra.mxu0 %v12283
    %12679 = vmatmul.bf16.gmra.mxu0 %v7783
    %v12680 = vpop.f32.mrf.mxu0
    %v12681 = vadd.f32 %v12662, %v12680
    %v12682 = vpop.f32.mrf.mxu0
    %v12683 = vadd.f32 %v12664, %v12682
    %12684 = vmatmul.bf16.gmra.mxu0 %v7799
    %v12685 = vpop.f32.mrf.mxu0
    %v12686 = vadd.f32 %v12667, %v12685
    %v12687 = vpop.f32.mrf.mxu0
    %v12688 = vadd.f32 %v12669, %v12687
    %12689 = vdwg.mxu0
    %12690 = vmatpush.bf16.msra.mxu0 %v12298
    %12691 = vmatpush.bf16.msra.mxu0 %v12297
    %12692 = vmatpush.bf16.msra.mxu0 %v12296
    %12693 = vmatpush.bf16.msra.mxu0 %v12295
    %12694 = vmatpush.bf16.msra.mxu0 %v12294
    %12695 = vmatpush.bf16.msra.mxu0 %v12293
    %12696 = vmatpush.bf16.msra.mxu0 %v12292
    %12697 = vmatpush.bf16.msra.mxu0 %v12291
    %12698 = vmatmul.bf16.gmra.mxu0 %v7784
    %v12699 = vpop.f32.mrf.mxu0
    %v12700 = vadd.f32 %v12681, %v12699
    %v12701 = vpop.f32.mrf.mxu0
    %v12702 = vadd.f32 %v12683, %v12701
    %12703 = vmatmul.bf16.gmra.mxu0 %v7800
    %v12704 = vpop.f32.mrf.mxu0
    %v12705 = vadd.f32 %v12686, %v12704
    %v12706 = vpop.f32.mrf.mxu0
    %v12707 = vadd.f32 %v12688, %v12706
    %12708 = vdwg.mxu0
    %12709 = vmatpush.bf16.msra.mxu0 %v12306
    %12710 = vmatpush.bf16.msra.mxu0 %v12305
    %12711 = vmatpush.bf16.msra.mxu0 %v12304
    %12712 = vmatpush.bf16.msra.mxu0 %v12303
    %12713 = vmatpush.bf16.msra.mxu0 %v12302
    %12714 = vmatpush.bf16.msra.mxu0 %v12301
    %12715 = vmatpush.bf16.msra.mxu0 %v12300
    %12716 = vmatpush.bf16.msra.mxu0 %v12299
    %12717 = vmatmul.bf16.gmra.mxu0 %v7785
    %v12718 = vpop.f32.mrf.mxu0
    %v12719 = vadd.f32 %v12700, %v12718
    %v12720 = vpop.f32.mrf.mxu0
    %v12721 = vadd.f32 %v12702, %v12720
    %12722 = vmatmul.bf16.gmra.mxu0 %v7801
    %v12723 = vpop.f32.mrf.mxu0
    %v12724 = vadd.f32 %v12705, %v12723
    %v12725 = vpop.f32.mrf.mxu0
    %v12726 = vadd.f32 %v12707, %v12725
    %12727 = vdwg.mxu0
    %12728 = vmatpush.bf16.msra.mxu0 %v12314
    %12729 = vmatpush.bf16.msra.mxu0 %v12313
    %12730 = vmatpush.bf16.msra.mxu0 %v12312
    %12731 = vmatpush.bf16.msra.mxu0 %v12311
    %12732 = vmatpush.bf16.msra.mxu0 %v12310
    %12733 = vmatpush.bf16.msra.mxu0 %v12309
    %12734 = vmatpush.bf16.msra.mxu0 %v12308
    %12735 = vmatpush.bf16.msra.mxu0 %v12307
    %12736 = vmatmul.bf16.gmra.mxu0 %v7786
    %v12737 = vpop.f32.mrf.mxu0
    %v12738 = vadd.f32 %v12719, %v12737
    %v12739 = vpop.f32.mrf.mxu0
    %v12740 = vadd.f32 %v12721, %v12739
    %12741 = vmatmul.bf16.gmra.mxu0 %v7802
    %v12742 = vpop.f32.mrf.mxu0
    %v12743 = vadd.f32 %v12724, %v12742
    %v12744 = vpop.f32.mrf.mxu0
    %v12745 = vadd.f32 %v12726, %v12744
    %12746 = vdwg.mxu0
    %v12747 = vld [vmem:[%s3] sm:$0xf]
    %v12749 = vperm.slane %v12747, 0
    %v12750 = vperm.slane %v12747, 1
    %v12751 = vperm.slane %v12747, 2
    %v12752 = vperm.slane %v12747, 3
    %v12757 = vadd.f32 %v10645, %v12749
    %v12758 = vadd.f32 %v10902, %v12750
    %v12759 = vadd.f32 %v11160, %v12751
    %v12760 = vadd.f32 %v11417, %v12752
    %v12761 = vmul.f32 %v12757, %v12757
    %v12762 = vmul.f32 %v12758, %v12758
    %v12763 = vmul.f32 %v12759, %v12759
    %v12764 = vmul.f32 %v12760, %v12760
    %v12765 = vsel %vm157, %v12761, 0.0
    %v12766 = vsel %vm157, %v12762, 0.0
    %v12767 = vadd.f32 %v12765, %v12766
    %v12768 = vsel %vm157, %v12763, 0.0
    %v12769 = vadd.f32 %v12767, %v12768
    %v12770 = vsel %vm157, %v12764, 0.0
    %v12771 = vadd.f32 %v12769, %v12770
    %12772 = vadd.xlane.f32.xlu0 %v12771
    %v12773 = vpop.xlane.xlu0 %12772
    %v12774 = vrsqrt.pop %v12773
    %v12775 = vmul.f32 %v12774, %v12773
    %v12776 = vmul.f32 %v12775, %v12774
    %v12777 = vmul.f32 0.5, %v12776
    %v12778 = vsub.f32 1.5, %v12777
    %v12779 = vmul.f32 %v12774, %v12778
    %vm12780 = vweird.f32 %v12773
    %vm12781 = vweird.f32 %v12774
    %vm12782 = vmor %vm12780, %vm12781
    %v12783 = vsel %vm12782, %v12774, %v12779
    %v12784 = vmul.f32 %v12757, %v12783
    %v12785 = vmul.f32 %v12758, %v12783
    %v12786 = vmul.f32 %v12759, %v12783
    %v12787 = vmul.f32 %v12760, %v12783
    %v12792 = vrot.slane %v12785, 4
    %v12793 = vrot.slane %v12787, 4
    %v12794 = vsel %vm157, %v12784, %v12792
    %v12795 = vsel %vm157, %v12786, %v12793
    %12798 = vst [vmem:[#allocation5] sm:$0xff] %v12794
    %12799 = vst [vmem:[#allocation5 + $0x8] sm:$0xff] %v12795
    %vm12800 = vcmask 130048
    %v12801 = vsel %vm12800, %v12738, %v12740
    %vm12802 = vcmask 261120
    %v12803 = vsel %vm12802, %v12801, %v12743
    %vm12804 = vcmask 392192
    %v12805 = vsel %vm12804, %v12803, %v12745
    %v12806 = vld [vmem:[%s5] sm:$0x1]
    %v12808 = vperm.slane %v12806, 0
    %v12810 = vadd.f32 %v12805, %v12808
    %vm12811 = vcmask 523264
    %v12812 = vsel %vm12811, %v12810, 0.0
    %12813 = vst [vmem:[%s8] sm:$0xf] %v12812
    // Predicated region
    $region26: #{embed_net_graph_forward.1} parent=1 // pred_check
      _
    $region27: #{embed_net_graph_forward.1} parent=1 // pred_check_branch
      %12815 = sbr.rel (0) target = $region29
    $region28: #{embed_net_graph_forward.1} parent=1 // pred_region
      %12817 = vsyncadd [#allocation4], 0
      %s12819 = sshll.u32 [#allocation3], 4
      %s12820 = int_to_ptr.vmem [resolvable:$true] %s12819
      %s12821 = sshll.u32 %s6, 4
      %s12822 = int_to_ptr.hbm [resolvable:$true] %s12821
      %12824 = dma.vmem_to_hbm [thread:$0]  %s12820, 4096, %s12822, [#allocation4]
    $region29: #{embed_net_graph_forward.1} parent=1 // pred_fallthru
      _
    // Predicated region
    $region30: #{embed_net_graph_forward.1} parent=1 // pred_check
      _
    $region31: #{embed_net_graph_forward.1} parent=1 // pred_check_branch
      %12826 = sbr.rel (0) target = $region33
    $region32: #{embed_net_graph_forward.1} parent=1 // pred_region
      %12828 = vsyncadd [#allocation6], 0
      %s12830 = sshll.u32 [#allocation5], 4
      %s12831 = int_to_ptr.vmem [resolvable:$true] %s12830
      %s12832 = sshll.u32 %s7, 4
      %s12833 = int_to_ptr.hbm [resolvable:$true] %s12832
      %12835 = dma.vmem_to_hbm [thread:$0]  %s12831, 256, %s12833, [#allocation6]
    $region33: #{embed_net_graph_forward.1} parent=1 // pred_fallthru
      _
    // Predicated region
    $region34: #{embed_net_graph_forward.1} parent=1 // pred_check
      _
    $region35: #{embed_net_graph_forward.1} parent=1 // pred_check_branch
      %12837 = sbr.rel (0) target = $region37
    $region36: #{embed_net_graph_forward.1} parent=1 // pred_region
      _
    $region37: #{embed_net_graph_forward.1} parent=1 // pred_fallthru
      _
    // Predicated region
    $region38: #{embed_net_graph_forward.1} parent=1 // pred_check
      _
    $region39: #{embed_net_graph_forward.1} parent=1 // pred_check_branch
      %12839 = sbr.rel (0) target = $region41
    $region40: #{embed_net_graph_forward.1} parent=1 // pred_region
      %12841 = dma.done [#allocation4], 4096
    $region41: #{embed_net_graph_forward.1} parent=1 // pred_fallthru
      _
    // Predicated region
    $region42: #{embed_net_graph_forward.1} parent=1 // pred_check
      _
    $region43: #{embed_net_graph_forward.1} parent=1 // pred_check_branch
      %12843 = sbr.rel (0) target = $region45
    $region44: #{embed_net_graph_forward.1} parent=1 // pred_region
      %12845 = dma.done [#allocation6], 256
    $region45: #{embed_net_graph_forward.1} parent=1 // pred_fallthru
      _
    // Predicated region
    $region46: #{embed_net_graph_forward.1} parent=1 // pred_check
      _
    $region47: #{embed_net_graph_forward.1} parent=1 // pred_check_branch
      %12847 = sbr.rel (0) target = $region49
    $region48: #{embed_net_graph_forward.1} parent=1 // pred_region
      _
    $region49: #{embed_net_graph_forward.1} parent=1 // pred_fallthru
      _
    %12848 = vsyncpa [#allocation4], 1
    %12849 = vsyncpa [#allocation6], 1

</llo_original>
